<compile_context>
chip_gen: v7x
topology: tpu7x:2x2x1
jax: 0.10.0
libtpu: 0.0.40
codegen_flags: <defaults>
</compile_context>

<pallas_src>
import functools

import jax
import jax.numpy as jnp
from jax.experimental import pallas as pl
from jax.experimental.pallas import tpu as pltpu

_NUM_CLASSES = 8
_CLS_PAD = 128          # lane-dense classifier width
_TEXT_DIM = 384
_IMG_CH = 2048
_HID = 512
_POOL_CHUNK = 8         # HW sublanes pooled per step (f32 accumulation)


def _round_up(x, m):
    return (x + m - 1) // m * m


def _vmem_capacity_bytes():
    """Physical VMEM capacity; conservative 64 MiB fallback (v7x per-core)."""
    try:
        return int(pltpu.get_tpu_info().vmem_capacity_bytes)
    except Exception:
        return 64 << 20


def fused_head_kernel(text_ref, imgf_ref,
                      fc1_w_ref, fc1_b_ref,
                      fc2_w_ref, fc2_b_ref,
                      fc3_w_ref, fc3_b_ref,
                      cls_w_ref, cls_b_ref,
                      out_ref):
    """One batch tile: pool -> (BN-folded) fc1/fc2+tanh -> fc3+tanh -> cls -> softmax."""
    tn, hw, ch = imgf_ref.shape

    # Global average pool as a spatial SUM, accumulated in f32 chunk-by-chunk
    # so no full-block f32 temp is materialized.  The 1/HW scale and the
    # BatchNorm2 affine are folded into fc1_w / fc1_b offline.
    n_full = hw // _POOL_CHUNK
    rem = hw - n_full * _POOL_CHUNK

    def _chunk_sum(start, size):
        blk = imgf_ref[:, pl.ds(start, size), :].astype(jnp.float32)
        return jnp.sum(blk, axis=1)

    img_sum = jnp.zeros((tn, ch), jnp.float32)
    if n_full > 0:
        def _body(c, acc):
            start = pl.multiple_of(c * _POOL_CHUNK, _POOL_CHUNK)
            return acc + _chunk_sum(start, _POOL_CHUNK)
        img_sum = jax.lax.fori_loop(0, n_full, _body, img_sum, unroll=True)
    if rem > 0:
        img_sum = img_sum + _chunk_sum(n_full * _POOL_CHUNK, rem)        # (TN, 2048)

    # fc2 / fc1 + tanh.  BatchNorm1 folded into fc2; Dropout(0.5) is identity (eval).
    t = jnp.tanh(
        jnp.dot(text_ref[...].astype(jnp.bfloat16), fc2_w_ref[...],
                preferred_element_type=jnp.float32) + fc2_b_ref[...])    # (TN, 512)
    i = jnp.tanh(
        jnp.dot(img_sum.astype(jnp.bfloat16), fc1_w_ref[...],
                preferred_element_type=jnp.float32) + fc1_b_ref[...])    # (TN, 512)

    # cat([text, img], dim=1) @ W3^T as a single fused (TN,1024) x (1024,512) matmul.
    cat = jnp.concatenate([t, i], axis=1).astype(jnp.bfloat16)           # (TN, 1024)
    h = jnp.tanh(
        jnp.dot(cat, fc3_w_ref[...], preferred_element_type=jnp.float32)
        + fc3_b_ref[...])                                                # (TN, 512)

    # classifier1, lane-padded to 128 columns.  Padded lanes have zero weights
    # and bias = -1e30, so the softmax over 128 lanes equals the softmax over
    # the 8 real classes.
    logits = jnp.dot(h.astype(jnp.bfloat16), cls_w_ref[...],
                     preferred_element_type=jnp.float32) + cls_b_ref[...]
    m = jnp.max(logits, axis=1, keepdims=True)
    e = jnp.exp(logits - m)
    denom = jnp.sum(e, axis=1, keepdims=True)
    out_ref[...] = e * pl.reciprocal(denom, approx=True)   # EUP divide, off the VPU


def model4_1_forward(params, text_pooled, img_featmap, *, tn=None):
    """text_pooled: (N, 384), img_featmap: (N, HW, 2048) channels-last -> (N, 8) f32."""
    n = text_pooled.shape[0]
    hw = img_featmap.shape[1]
    img_itemsize = jnp.dtype(img_featmap.dtype).itemsize

    weights = (
        params["fc1_w"], params["fc1_b"],
        params["fc2_w"], params["fc2_b"],
        params["fc3_w"], params["fc3_b"],
        params["cls_w"], params["cls_b"],
    )
    weight_bytes = sum(int(w.size) * w.dtype.itemsize for w in weights)

    # --- generation-aware batch tile -----------------------------------------
    cap = _vmem_capacity_bytes()
    per_row_bytes = (
        2 * hw * _IMG_CH * img_itemsize              # double-buffered image stream
        + 2 * (_TEXT_DIM * 4 + _CLS_PAD * 4)         # double-buffered text / out blocks
        + 2 * _POOL_CHUNK * _IMG_CH * 4              # ~2 live f32 pool chunks
        + (_IMG_CH + 4 * _HID + _CLS_PAD) * 4)       # pooled sum + t/i/cat/h/logits
    # Resident weights are double-buffered by default (constant index_map);
    # count both copies rather than relying on pl.Buffered(1) support.
    budget = cap - (12 << 20) - 2 * weight_bytes
    if tn is None:
        tn = max(budget // per_row_bytes, 8)
        tn = min(tn, 64 if cap <= (96 << 20) else 128)   # cap at 64 on 64-MiB VMEM (v7x)
        if tn >= 16:
            tn -= tn % 16
    tn = int(max(8, min(tn, _round_up(n, 8))))
    if n >= 16:                                          # keep >=2 grid steps (v7x megacore)
        tn = min(tn, _round_up((n + 1) // 2, 8))
    tn = max(8, tn - tn % 8)

    n_blocks = -(-n // tn)
    n_pad = n_blocks * tn

    # Stream img_featmap AS-IS: no wrapper astype / pad pass over the dominant
    # bytes.  A (possibly) partial last batch tile reads unspecified rows; every
    # op is row-independent and the wrapper slices back to [:n] at the end.
    imgf = img_featmap
    text = text_pooled
    if n_pad != n:                                       # tiny tensor, cheap to pad
        text = jnp.pad(text, ((0, n_pad - n), (0, 0)))

    def _const_spec(arr):
        nd = arr.ndim
        return pl.BlockSpec(arr.shape, lambda g, _nd=nd: (0,) * _nd)  # resident weights

    in_specs = [
        pl.BlockSpec((tn, _TEXT_DIM), lambda g: (g, 0)),
        pl.BlockSpec((tn, hw, _IMG_CH), lambda g: (g, 0, 0)),
    ] + [_const_spec(w) for w in weights]
    out_specs = pl.BlockSpec((tn, _CLS_PAD), lambda g: (g, 0))

    vmem_limit = int(min(cap, 2 * weight_bytes + tn * per_row_bytes + (16 << 20)))

    cost = pl.CostEstimate(
        flops=2 * n_pad * (hw * _IMG_CH
                           + _IMG_CH * _HID + _TEXT_DIM * _HID
                           + 2 * _HID * _HID + _HID * _CLS_PAD),
        transcendentals=n_pad * (3 * _HID + _CLS_PAD),
        bytes_accessed=int(imgf.size * img_itemsize
                           + text.size * text.dtype.itemsize
                           + weight_bytes + n_pad * _CLS_PAD * 4),
    )

    out_padded = pl.pallas_call(
        fused_head_kernel,
        out_shape=jax.ShapeDtypeStruct((n_pad, _CLS_PAD), jnp.float32),
        grid=(n_blocks,),
        in_specs=in_specs,
        out_specs=out_specs,
        compiler_params=pltpu.CompilerParams(
            dimension_semantics=("parallel",),   # batch tiles shard across TCs on v7x
            vmem_limit_bytes=vmem_limit,
        ),
        cost_estimate=cost,
    )(text, imgf, *weights)

    return out_padded[:n, :_NUM_CLASSES]


def init_params(key, hw):
    """Synthetic parameters matching model4_1's head, pre-folded for the kernel:
    BatchNorm1d (eval-mode stats) and the 1/HW pool scale folded into fc1/fc2,
    fc3 kept fused (rows 0:512 -> text, 512:1024 -> image, matching
    cat([text, img], dim=1)), classifier lane-padded to 128."""
    def linear(k, fan_in, fan_out):
        kw, kb = jax.random.split(k)
        bound = 1.0 / (fan_in ** 0.5)
        w = jax.random.uniform(kw, (fan_in, fan_out), jnp.float32, -bound, bound)
        b = jax.random.uniform(kb, (1, fan_out), jnp.float32, -bound, bound)
        return w, b

    k_fc1, k_fc2, k_fc3, k_cls = jax.random.split(key, 4)
    fc1_w, fc1_b = linear(k_fc1, _IMG_CH, _HID)
    fc2_w, fc2_b = linear(k_fc2, _TEXT_DIM, _HID)
    fc3_w, fc3_b = linear(k_fc3, 2 * _HID, _HID)
    cls_w, cls_b = linear(k_cls, _HID, _NUM_CLASSES)

    # BatchNorm1d eval-mode affine (default running stats here; with a trained
    # checkpoint substitute the real running_mean/var/gamma/beta — same fold).
    eps = 1e-5
    def bn_fold(c):
        gamma = jnp.ones((c,), jnp.float32)
        beta = jnp.zeros((c,), jnp.float32)
        mean = jnp.zeros((c,), jnp.float32)
        var = jnp.ones((c,), jnp.float32)
        scale = gamma / jnp.sqrt(var + eps)
        shift = beta - mean * scale
        return scale, shift

    bn1_s, bn1_b = bn_fold(_TEXT_DIM)   # bn_input1 on the text pooled vector
    bn2_s, bn2_b = bn_fold(_IMG_CH)     # bn_input2 on the pooled image vector

    # fc2(bn1(x)) = x @ (s1 * W2) + (b1 @ W2 + c2)
    fc2_wf = fc2_w * bn1_s[:, None]
    fc2_bf = fc2_b + bn1_b[None, :] @ fc2_w
    # fc1(bn2(sum/HW)) = sum @ ((s2/HW) * W1) + (b2 @ W1 + c1)
    fc1_wf = fc1_w * (bn2_s / float(hw))[:, None]
    fc1_bf = fc1_b + bn2_b[None, :] @ fc1_w

    # Lane-pad classifier 8 -> 128; padded bias = -1e30 so softmax ignores pads.
    cls_w_pad = jnp.zeros((_HID, _CLS_PAD), jnp.float32).at[:, :_NUM_CLASSES].set(cls_w)
    cls_b_pad = jnp.full((1, _CLS_PAD), -1e30, jnp.float32).at[:, :_NUM_CLASSES].set(cls_b)

    bf16 = jnp.bfloat16
    # TODO(synk): img_vec / text_vec / ln_input exist in __init__ but are unused in
    # forward(); frozen MiniLM + resnet50 backbones are supplied as precomputed features.
    return {
        "fc1_w": fc1_wf.astype(bf16), "fc1_b": fc1_bf,
        "fc2_w": fc2_wf.astype(bf16), "fc2_b": fc2_bf,
        "fc3_w": fc3_w.astype(bf16),   # fused; rows 0:512 text, 512:1024 image
        "fc3_b": fc3_b,
        "cls_w": cls_w_pad.astype(bf16), "cls_b": cls_b_pad,
    }


if __name__ == "__main__":
    key = jax.random.PRNGKey(0)
    k_p, k_text, k_img = jax.random.split(key, 3)

    # Small demo: batch 16, 3x3 spatial map from the (frozen) resnet50 backbone.
    N, HW = 16, 9
    params = init_params(k_p, HW)
    text_pooled = jax.random.normal(k_text, (N, _TEXT_DIM), jnp.float32)
    # The frozen backbone is assumed to emit bf16 features (single HBM read);
    # the kernel also accepts f32 and downcasts per block inside.
    img_featmap = jax.random.normal(k_img, (N, HW, _IMG_CH), jnp.bfloat16)
    # (the `target` and `source` arguments of the PyTorch forward are unused)

    fwd = jax.jit(functools.partial(model4_1_forward))
    out = jax.block_until_ready(fwd(params, text_pooled, img_featmap))

    assert out.shape == (N, _NUM_CLASSES)
    assert bool(jnp.all(jnp.isfinite(out)))
    assert bool(jnp.allclose(jnp.sum(out, axis=1), 1.0, atol=5e-3))
    print("KERNEL_OK")
</pallas_src>

<mosaic_0001>
module attributes {stable_mosaic.version = 11 : i64} {
  func.func @fused_head_kernel(%arg0: i32, %arg1: memref<8x384xf32, #tpu.memory_space<vmem>>, %arg2: memref<8x9x2048xbf16, #tpu.memory_space<vmem>>, %arg3: memref<2048x512xbf16, #tpu.memory_space<vmem>>, %arg4: memref<1x512xf32, #tpu.memory_space<vmem>>, %arg5: memref<384x512xbf16, #tpu.memory_space<vmem>>, %arg6: memref<1x512xf32, #tpu.memory_space<vmem>>, %arg7: memref<1024x512xbf16, #tpu.memory_space<vmem>>, %arg8: memref<1x512xf32, #tpu.memory_space<vmem>>, %arg9: memref<512x128xbf16, #tpu.memory_space<vmem>>, %arg10: memref<1x128xf32, #tpu.memory_space<vmem>>, %arg11: memref<8x128xf32, #tpu.memory_space<vmem>>) attributes {dimension_semantics = [#tpu.dimension_semantics<parallel>], iteration_bounds = array<i64: 2>, scalar_prefetch = 0 : i64, scratch_operands = 0 : i64, tpu.core_type = #tpu.core_type<tc>, window_params = [{transform_indices = @transform_0, window_bounds = array<i64: 8, 384>}, {transform_indices = @transform_1, window_bounds = array<i64: 8, 9, 2048>}, {pipeline_mode = #tpu.pipeline_mode<synchronous>, transform_indices = @transform_2, window_bounds = array<i64: 2048, 512>}, {pipeline_mode = #tpu.pipeline_mode<synchronous>, transform_indices = @transform_3, window_bounds = array<i64: 1, 512>}, {pipeline_mode = #tpu.pipeline_mode<synchronous>, transform_indices = @transform_4, window_bounds = array<i64: 384, 512>}, {pipeline_mode = #tpu.pipeline_mode<synchronous>, transform_indices = @transform_5, window_bounds = array<i64: 1, 512>}, {pipeline_mode = #tpu.pipeline_mode<synchronous>, transform_indices = @transform_6, window_bounds = array<i64: 1024, 512>}, {pipeline_mode = #tpu.pipeline_mode<synchronous>, transform_indices = @transform_7, window_bounds = array<i64: 1, 512>}, {pipeline_mode = #tpu.pipeline_mode<synchronous>, transform_indices = @transform_8, window_bounds = array<i64: 512, 128>}, {pipeline_mode = #tpu.pipeline_mode<synchronous>, transform_indices = @transform_9, window_bounds = array<i64: 1, 128>}, {transform_indices = @transform_10, window_bounds = array<i64: 8, 128>}]} {
    %cst = arith.constant 0.000000e+00 : f32
    %0 = vector.broadcast %cst : f32 to vector<8x2048xf32>
    %c0_i32 = arith.constant 0 : i32
    %c8_i32 = arith.constant 8 : i32
    %1 = arith.muli %c0_i32, %c8_i32 : i32
    %2 = tpu.assume_multiple %1, 8 : i32
    %c0 = arith.constant 0 : index
    %3 = arith.index_cast %2 : i32 to index
    %c0_0 = arith.constant 0 : index
    %4 = vector.load %arg2[%c0, %3, %c0_0] : memref<8x9x2048xbf16, #tpu.memory_space<vmem>>, vector<8x8x2048xbf16>
    %5 = arith.extf %4 : vector<8x8x2048xbf16> to vector<8x8x2048xf32>
    %cst_1 = arith.constant dense<0.000000e+00> : vector<8x2048xf32>
    %6 = vector.multi_reduction <add>, %5, %cst_1 [1] : vector<8x8x2048xf32> to vector<8x2048xf32>
    %7 = arith.addf %0, %6 : vector<8x2048xf32>
    %c1_i32 = arith.constant 1 : i32
    %c0_2 = arith.constant 0 : index
    %c8 = arith.constant 8 : index
    %c0_3 = arith.constant 0 : index
    %8 = vector.load %arg2[%c0_2, %c8, %c0_3] : memref<8x9x2048xbf16, #tpu.memory_space<vmem>>, vector<8x1x2048xbf16>
    %9 = arith.extf %8 : vector<8x1x2048xbf16> to vector<8x1x2048xf32>
    %cst_4 = arith.constant dense<0.000000e+00> : vector<8x2048xf32>
    %10 = vector.multi_reduction <add>, %9, %cst_4 [1] : vector<8x1x2048xf32> to vector<8x2048xf32>
    %11 = arith.addf %7, %10 : vector<8x2048xf32>
    %c0_5 = arith.constant 0 : index
    %c0_6 = arith.constant 0 : index
    %12 = vector.load %arg1[%c0_5, %c0_6] : memref<8x384xf32, #tpu.memory_space<vmem>>, vector<8x384xf32>
    %13 = arith.truncf %12 : vector<8x384xf32> to vector<8x384xbf16>
    %c0_7 = arith.constant 0 : index
    %c0_8 = arith.constant 0 : index
    %14 = vector.load %arg5[%c0_7, %c0_8] : memref<384x512xbf16, #tpu.memory_space<vmem>>, vector<384x512xbf16>
    %cst_9 = arith.constant dense<0.000000e+00> : vector<8x512xf32>
    %15 = tpu.matmul %13, %14, %cst_9 {dimension_numbers = #tpu.dot_dimension_numbers<[1], [0], [0], [1], [0, 0, 1, 1], [], []>} : vector<8x384xbf16>, vector<384x512xbf16>, vector<8x512xf32> -> vector<8x512xf32>
    %c0_10 = arith.constant 0 : index
    %c0_11 = arith.constant 0 : index
    %16 = vector.load %arg6[%c0_10, %c0_11] : memref<1x512xf32, #tpu.memory_space<vmem>>, vector<1x512xf32>
    %17 = vector.broadcast %16 : vector<1x512xf32> to vector<8x512xf32>
    %18 = arith.addf %15, %17 : vector<8x512xf32>
    %19 = math.tanh %18 : vector<8x512xf32>
    %20 = arith.truncf %11 : vector<8x2048xf32> to vector<8x2048xbf16>
    %c0_12 = arith.constant 0 : index
    %c0_13 = arith.constant 0 : index
    %21 = vector.load %arg3[%c0_12, %c0_13] : memref<2048x512xbf16, #tpu.memory_space<vmem>>, vector<2048x512xbf16>
    %cst_14 = arith.constant dense<0.000000e+00> : vector<8x512xf32>
    %22 = tpu.matmul %20, %21, %cst_14 {dimension_numbers = #tpu.dot_dimension_numbers<[1], [0], [0], [1], [0, 0, 1, 1], [], []>} : vector<8x2048xbf16>, vector<2048x512xbf16>, vector<8x512xf32> -> vector<8x512xf32>
    %c0_15 = arith.constant 0 : index
    %c0_16 = arith.constant 0 : index
    %23 = vector.load %arg4[%c0_15, %c0_16] : memref<1x512xf32, #tpu.memory_space<vmem>>, vector<1x512xf32>
    %24 = vector.broadcast %23 : vector<1x512xf32> to vector<8x512xf32>
    %25 = arith.addf %22, %24 : vector<8x512xf32>
    %26 = math.tanh %25 : vector<8x512xf32>
    %27 = tpu.concatenate %19, %26 in 1 : vector<8x512xf32>, vector<8x512xf32> -> vector<8x1024xf32>
    %28 = arith.truncf %27 : vector<8x1024xf32> to vector<8x1024xbf16>
    %c0_17 = arith.constant 0 : index
    %c0_18 = arith.constant 0 : index
    %29 = vector.load %arg7[%c0_17, %c0_18] : memref<1024x512xbf16, #tpu.memory_space<vmem>>, vector<1024x512xbf16>
    %cst_19 = arith.constant dense<0.000000e+00> : vector<8x512xf32>
    %30 = tpu.matmul %28, %29, %cst_19 {dimension_numbers = #tpu.dot_dimension_numbers<[1], [0], [0], [1], [0, 0, 1, 1], [], []>} : vector<8x1024xbf16>, vector<1024x512xbf16>, vector<8x512xf32> -> vector<8x512xf32>
    %c0_20 = arith.constant 0 : index
    %c0_21 = arith.constant 0 : index
    %31 = vector.load %arg8[%c0_20, %c0_21] : memref<1x512xf32, #tpu.memory_space<vmem>>, vector<1x512xf32>
    %32 = vector.broadcast %31 : vector<1x512xf32> to vector<8x512xf32>
    %33 = arith.addf %30, %32 : vector<8x512xf32>
    %34 = math.tanh %33 : vector<8x512xf32>
    %35 = arith.truncf %34 : vector<8x512xf32> to vector<8x512xbf16>
    %c0_22 = arith.constant 0 : index
    %c0_23 = arith.constant 0 : index
    %36 = vector.load %arg9[%c0_22, %c0_23] : memref<512x128xbf16, #tpu.memory_space<vmem>>, vector<512x128xbf16>
    %cst_24 = arith.constant dense<0.000000e+00> : vector<8x128xf32>
    %37 = tpu.matmul %35, %36, %cst_24 {dimension_numbers = #tpu.dot_dimension_numbers<[1], [0], [0], [1], [0, 0, 1, 1], [], []>} : vector<8x512xbf16>, vector<512x128xbf16>, vector<8x128xf32> -> vector<8x128xf32>
    %c0_25 = arith.constant 0 : index
    %c0_26 = arith.constant 0 : index
    %38 = vector.load %arg10[%c0_25, %c0_26] : memref<1x128xf32, #tpu.memory_space<vmem>>, vector<1x128xf32>
    %39 = vector.broadcast %38 : vector<1x128xf32> to vector<8x128xf32>
    %40 = arith.addf %37, %39 : vector<8x128xf32>
    %cst_27 = arith.constant dense<0xFF800000> : vector<8xf32>
    %41 = vector.multi_reduction <maximumf>, %40, %cst_27 [1] : vector<8x128xf32> to vector<8xf32>
    %42 = vector.shape_cast %41 : vector<8xf32> to vector<8x1xf32>
    %43 = vector.broadcast %42 : vector<8x1xf32> to vector<8x128xf32>
    %44 = arith.subf %40, %43 : vector<8x128xf32>
    %45 = math.exp %44 : vector<8x128xf32>
    %cst_28 = arith.constant dense<0.000000e+00> : vector<8xf32>
    %46 = vector.multi_reduction <add>, %45, %cst_28 [1] : vector<8x128xf32> to vector<8xf32>
    %47 = vector.shape_cast %46 : vector<8xf32> to vector<8x1xf32>
    %48 = tpu.reciprocal %47 {approx = true} : vector<8x1xf32> -> vector<8x1xf32>
    %49 = vector.broadcast %48 : vector<8x1xf32> to vector<8x128xf32>
    %50 = arith.mulf %45, %49 : vector<8x128xf32>
    %c0_29 = arith.constant 0 : index
    %c0_30 = arith.constant 0 : index
    %51 = vector.load %arg11[%c0_29, %c0_30] : memref<8x128xf32, #tpu.memory_space<vmem>>, vector<8x128xf32>
    tpu.vector_store %arg11[%c0_29, %c0_30], %50 {strides = array<i32>} : memref<8x128xf32, #tpu.memory_space<vmem>>, vector<8x128xf32>,
    return
  }
  func.func @transform_0(%arg0: i32) -> (i32, i32) {
    %c0_i32 = arith.constant 0 : i32
    %c0_i32_0 = arith.constant 0 : i32
    return %arg0, %c0_i32 : i32, i32
  }
  func.func @transform_1(%arg0: i32) -> (i32, i32, i32) {
    %c0_i32 = arith.constant 0 : i32
    %c0_i32_0 = arith.constant 0 : i32
    %c0_i32_1 = arith.constant 0 : i32
    return %arg0, %c0_i32, %c0_i32_0 : i32, i32, i32
  }
  func.func @transform_2(%arg0: i32) -> (i32, i32) {
    %c0_i32 = arith.constant 0 : i32
    %c0_i32_0 = arith.constant 0 : i32
    %c0_i32_1 = arith.constant 0 : i32
    return %c0_i32, %c0_i32_0 : i32, i32
  }
  func.func @transform_3(%arg0: i32) -> (i32, i32) {
    %c0_i32 = arith.constant 0 : i32
    %c0_i32_0 = arith.constant 0 : i32
    %c0_i32_1 = arith.constant 0 : i32
    return %c0_i32, %c0_i32_0 : i32, i32
  }
  func.func @transform_4(%arg0: i32) -> (i32, i32) {
    %c0_i32 = arith.constant 0 : i32
    %c0_i32_0 = arith.constant 0 : i32
    %c0_i32_1 = arith.constant 0 : i32
    return %c0_i32, %c0_i32_0 : i32, i32
  }
  func.func @transform_5(%arg0: i32) -> (i32, i32) {
    %c0_i32 = arith.constant 0 : i32
    %c0_i32_0 = arith.constant 0 : i32
    %c0_i32_1 = arith.constant 0 : i32
    return %c0_i32, %c0_i32_0 : i32, i32
  }
  func.func @transform_6(%arg0: i32) -> (i32, i32) {
    %c0_i32 = arith.constant 0 : i32
    %c0_i32_0 = arith.constant 0 : i32
    %c0_i32_1 = arith.constant 0 : i32
    return %c0_i32, %c0_i32_0 : i32, i32
  }
  func.func @transform_7(%arg0: i32) -> (i32, i32) {
    %c0_i32 = arith.constant 0 : i32
    %c0_i32_0 = arith.constant 0 : i32
    %c0_i32_1 = arith.constant 0 : i32
    return %c0_i32, %c0_i32_0 : i32, i32
  }
  func.func @transform_8(%arg0: i32) -> (i32, i32) {
    %c0_i32 = arith.constant 0 : i32
    %c0_i32_0 = arith.constant 0 : i32
    %c0_i32_1 = arith.constant 0 : i32
    return %c0_i32, %c0_i32_0 : i32, i32
  }
  func.func @transform_9(%arg0: i32) -> (i32, i32) {
    %c0_i32 = arith.constant 0 : i32
    %c0_i32_0 = arith.constant 0 : i32
    %c0_i32_1 = arith.constant 0 : i32
    return %c0_i32, %c0_i32_0 : i32, i32
  }
  func.func @transform_10(%arg0: i32) -> (i32, i32) {
    %c0_i32 = arith.constant 0 : i32
    %c0_i32_0 = arith.constant 0 : i32
    return %arg0, %c0_i32 : i32, i32
  }
}

</mosaic_0001>

<llo_original>
// kernel: model4_1_forward.1
$region0: #{model4_1_forward.1}
  #allocation0 [shape = 'u32[]', space=smem, size = 0x4, offset = 0x4, fixed_abs, tag = 'smem constant byte address 0x4 - core index']
  #allocation1 [shape = 'u32[144,128]{1,0:T(1,128)}', space=vmem, size = 0x12000, scoped, tag = 'internal scratch']
  %s0 = inlined_call_operand.hbm [shape: f32[16,384], index: 0, kind: input, shape index: {}]
  %s1 = inlined_call_operand.vmem [shape: bf16[16,9,2048], index: 1, kind: input, shape index: {}]
  %s2 = inlined_call_operand.hbm [shape: bf16[2048,512], index: 2, kind: input, shape index: {}]
  %s3 = inlined_call_operand.hbm [shape: f32[1,512], index: 3, kind: input, shape index: {}]
  %s4 = inlined_call_operand.hbm [shape: bf16[384,512], index: 4, kind: input, shape index: {}]
  %s5 = inlined_call_operand.hbm [shape: f32[1,512], index: 5, kind: input, shape index: {}]
  %s6 = inlined_call_operand.vmem [shape: bf16[1024,512], index: 6, kind: input, shape index: {}]
  %s7 = inlined_call_operand.hbm [shape: f32[1,512], index: 7, kind: input, shape index: {}]
  %s8 = inlined_call_operand.hbm [shape: bf16[512,128], index: 8, kind: input, shape index: {}]
  %s9 = inlined_call_operand.hbm [shape: f32[1,128], index: 9, kind: input, shape index: {}]
  %s10 = inlined_call_operand.vmem [shape: f32[16,128], index: 10, kind: output, shape index: {}]
  %s11 = sld [smem:[#allocation0]]
  $region105: #{model4_1_forward.1} parent=0
    _
  %s13 = ssub.s32 1, %s11
  %s14 = scalar_select 0, %s13, %s11
  $region1: #{model4_1_forward.1} parent=0
    #allocation2 [shape = 'u8[24576]{0}', space=vmem, size = 0x6000, scoped, tag = 'input window, operand 0']
    #allocation3 [shape = 's32[2]{0}', space=sflag, size = 0x8, scoped, tag = 'scoped memory for model4_1_forward.1']
    #allocation4 [shape = 'u8[2097152]{0}', space=vmem, size = 0x200000, scoped, tag = 'input window, operand 2, single buffered']
    #allocation5 [shape = 's32[1]{0}', space=sflag, size = 0x4, scoped, tag = 'scoped memory for model4_1_forward.1']
    #allocation6 [shape = 'u8[2048]{0}', space=vmem, size = 0x800, scoped, tag = 'input window, operand 3, single buffered']
    #allocation7 [shape = 'u8[393216]{0}', space=vmem, size = 0x60000, scoped, tag = 'input window, operand 4, single buffered']
    #allocation8 [shape = 's32[1]{0}', space=sflag, size = 0x4, scoped, tag = 'scoped memory for model4_1_forward.1']
    #allocation9 [shape = 'u8[2048]{0}', space=vmem, size = 0x800, scoped, tag = 'input window, operand 5, single buffered']
    #allocation10 [shape = 'u8[2048]{0}', space=vmem, size = 0x800, scoped, tag = 'input window, operand 7, single buffered']
    #allocation11 [shape = 's32[1]{0}', space=sflag, size = 0x4, scoped, tag = 'scoped memory for model4_1_forward.1']
    #allocation12 [shape = 'u8[131072]{0}', space=vmem, size = 0x20000, scoped, tag = 'input window, operand 8, single buffered']
    #allocation13 [shape = 'u8[512]{0}', space=vmem, size = 0x400, scoped, tag = 'input window, operand 9, single buffered']
    #allocation14 [shape = 's32[1]{0}', space=sflag, size = 0x4, scoped, tag = 'scoped memory for model4_1_forward.1']
    %15 = vsyncpa [#allocation3], 0
    %s16 = scalar_lea.sflag [#allocation3], 1
    %17 = vsyncpa %s16, 0
    %18 = vsyncpa [#allocation5], 0
    %19 = vsyncpa [#allocation8], 0
    %20 = vsyncpa [#allocation11], 0
    %21 = vsyncpa [#allocation14], 0
    loop: start=0, step=1, limit=4
    $region2: #{model4_1_forward.1} parent=1 // loop_pre_header
      _
    $region3: #{model4_1_forward.1} parent=1 // loop_header
      %s23 = sphi 0, %s27
      %p24 = scmp.ge.s32.totalorder %s23, 4
      %s33 = sphi 0, %s35
      %s36 = sphi 0, %s33
      %s37 = sphi 0, %s36
      %s53 = sphi 0, %s37
      %s59 = sphi 0, %s61
      %s62 = sphi 0, %s59
      %s63 = sphi 0, %s62
      %s79 = sphi 0, %s63
      %s83 = sphi 0, %s83
      %s85 = sphi 0, %s83
      %s86 = sphi 0, %s85
      %s100 = sphi 0, %s86
      %s104 = sphi 0, %s104
      %s106 = sphi 0, %s104
      %s107 = sphi 0, %s106
      %s121 = sphi 0, %s107
      %s125 = sphi 0, %s125
      %s127 = sphi 0, %s125
      %s128 = sphi 0, %s127
      %s142 = sphi 0, %s128
      %s146 = sphi 0, %s146
      %s148 = sphi 0, %s146
      %s149 = sphi 0, %s148
      %s163 = sphi 0, %s149
      %s167 = sphi 0, %s167
      %s169 = sphi 0, %s167
      %s170 = sphi 0, %s169
      %s184 = sphi 0, %s170
      %s188 = sphi 0, %s188
      %s190 = sphi 0, %s188
      %s191 = sphi 0, %s190
      %s205 = sphi 0, %s191
      %s209 = sphi 0, %s209
      %s211 = sphi 0, %s209
      %s212 = sphi 0, %s211
      %s226 = sphi 0, %s212
      %s230 = sphi 0, %s230
      %s232 = sphi 0, %s230
      %s233 = sphi 0, %s232
      %s247 = sphi 0, %s233
      %s253 = sphi 0, %s255
      %s256 = sphi 0, %s253
      %s257 = sphi 0, %s256
      %s273 = sphi 0, %s257
    $region4: #{model4_1_forward.1} parent=1 // loop_header_branch
      %26 = sbr.rel (%p24) target = $region8
    $region5: #{model4_1_forward.1} parent=1 // loop_body
      %s28 = ssub.s32 %s23, 1
      %s29 = ssub.s32 %s23, 2
      %s30 = sadd.s32 %s23, 1
      %s31 = ssub.s32 %s23, %s30
      %p32 = scmp.eq.s32.totalorder %s31, 0
      %s34 = sadd.s32 %s33, 1
      %s35 = scalar_select %p32, %s33, %s34
      %p38 = pneg %p32
      %p39 = scmp.eq.s32.totalorder %s23, 1
      %p40 = por %p38, %p39
      %p41 = scmp.ne.s32.totalorder %s33, %s36
      %p42 = scmp.eq.s32.totalorder %s23, 0
      %p43 = por %p41, %p42
      %p44 = scmp.ne.s32.totalorder %s33, %s36
      %p45 = scmp.eq.s32.totalorder %s28, 1
      %p46 = por %p44, %p45
      %p47 = scmp.ne.s32.totalorder %s36, %s37
      %p48 = scmp.eq.s32.totalorder %s28, 0
      %p49 = por %p47, %p48
      %p50 = scmp.ne.s32.totalorder %s36, %s37
      %p51 = scmp.eq.s32.totalorder %s29, 1
      %p52 = por %p50, %p51
      %p54 = scmp.ne.s32.totalorder %s37, %s53
      %p55 = scmp.eq.s32.totalorder %s29, 0
      %p56 = por %p54, %p55
      %s57 = ssub.s32 %s23, %s30
      %p58 = scmp.eq.s32.totalorder %s57, 0
      %s60 = sadd.s32 %s59, 1
      %s61 = scalar_select %p58, %s59, %s60
      %p64 = pneg %p58
      %p65 = scmp.eq.s32.totalorder %s23, 1
      %p66 = por %p64, %p65
      %p67 = scmp.ne.s32.totalorder %s59, %s62
      %p68 = scmp.eq.s32.totalorder %s23, 0
      %p69 = por %p67, %p68
      %p70 = scmp.ne.s32.totalorder %s59, %s62
      %p71 = scmp.eq.s32.totalorder %s28, 1
      %p72 = por %p70, %p71
      %p73 = scmp.ne.s32.totalorder %s62, %s63
      %p74 = scmp.eq.s32.totalorder %s28, 0
      %p75 = por %p73, %p74
      %p76 = scmp.ne.s32.totalorder %s62, %s63
      %p77 = scmp.eq.s32.totalorder %s29, 1
      %p78 = por %p76, %p77
      %p80 = scmp.ne.s32.totalorder %s63, %s79
      %p81 = scmp.eq.s32.totalorder %s29, 0
      %p82 = por %p80, %p81
      %s84 = sadd.s32 %s83, 1
      %p87 = scmp.eq.s32.totalorder %s23, 1
      %p88 = scmp.ne.s32.totalorder %s83, %s85
      %p89 = scmp.eq.s32.totalorder %s23, 0
      %p90 = por %p88, %p89
      %p91 = scmp.ne.s32.totalorder %s83, %s85
      %p92 = scmp.eq.s32.totalorder %s28, 1
      %p93 = por %p91, %p92
      %p94 = scmp.ne.s32.totalorder %s85, %s86
      %p95 = scmp.eq.s32.totalorder %s28, 0
      %p96 = por %p94, %p95
      %p97 = scmp.ne.s32.totalorder %s85, %s86
      %p98 = scmp.eq.s32.totalorder %s29, 1
      %p99 = por %p97, %p98
      %p101 = scmp.ne.s32.totalorder %s86, %s100
      %p102 = scmp.eq.s32.totalorder %s29, 0
      %p103 = por %p101, %p102
      %s105 = sadd.s32 %s104, 1
      %p108 = scmp.eq.s32.totalorder %s23, 1
      %p109 = scmp.ne.s32.totalorder %s104, %s106
      %p110 = scmp.eq.s32.totalorder %s23, 0
      %p111 = por %p109, %p110
      %p112 = scmp.ne.s32.totalorder %s104, %s106
      %p113 = scmp.eq.s32.totalorder %s28, 1
      %p114 = por %p112, %p113
      %p115 = scmp.ne.s32.totalorder %s106, %s107
      %p116 = scmp.eq.s32.totalorder %s28, 0
      %p117 = por %p115, %p116
      %p118 = scmp.ne.s32.totalorder %s106, %s107
      %p119 = scmp.eq.s32.totalorder %s29, 1
      %p120 = por %p118, %p119
      %p122 = scmp.ne.s32.totalorder %s107, %s121
      %p123 = scmp.eq.s32.totalorder %s29, 0
      %p124 = por %p122, %p123
      %s126 = sadd.s32 %s125, 1
      %p129 = scmp.eq.s32.totalorder %s23, 1
      %p130 = scmp.ne.s32.totalorder %s125, %s127
      %p131 = scmp.eq.s32.totalorder %s23, 0
      %p132 = por %p130, %p131
      %p133 = scmp.ne.s32.totalorder %s125, %s127
      %p134 = scmp.eq.s32.totalorder %s28, 1
      %p135 = por %p133, %p134
      %p136 = scmp.ne.s32.totalorder %s127, %s128
      %p137 = scmp.eq.s32.totalorder %s28, 0
      %p138 = por %p136, %p137
      %p139 = scmp.ne.s32.totalorder %s127, %s128
      %p140 = scmp.eq.s32.totalorder %s29, 1
      %p141 = por %p139, %p140
      %p143 = scmp.ne.s32.totalorder %s128, %s142
      %p144 = scmp.eq.s32.totalorder %s29, 0
      %p145 = por %p143, %p144
      %s147 = sadd.s32 %s146, 1
      %p150 = scmp.eq.s32.totalorder %s23, 1
      %p151 = scmp.ne.s32.totalorder %s146, %s148
      %p152 = scmp.eq.s32.totalorder %s23, 0
      %p153 = por %p151, %p152
      %p154 = scmp.ne.s32.totalorder %s146, %s148
      %p155 = scmp.eq.s32.totalorder %s28, 1
      %p156 = por %p154, %p155
      %p157 = scmp.ne.s32.totalorder %s148, %s149
      %p158 = scmp.eq.s32.totalorder %s28, 0
      %p159 = por %p157, %p158
      %p160 = scmp.ne.s32.totalorder %s148, %s149
      %p161 = scmp.eq.s32.totalorder %s29, 1
      %p162 = por %p160, %p161
      %p164 = scmp.ne.s32.totalorder %s149, %s163
      %p165 = scmp.eq.s32.totalorder %s29, 0
      %p166 = por %p164, %p165
      %s168 = sadd.s32 %s167, 1
      %p171 = scmp.eq.s32.totalorder %s23, 1
      %p172 = scmp.ne.s32.totalorder %s167, %s169
      %p173 = scmp.eq.s32.totalorder %s23, 0
      %p174 = por %p172, %p173
      %p175 = scmp.ne.s32.totalorder %s167, %s169
      %p176 = scmp.eq.s32.totalorder %s28, 1
      %p177 = por %p175, %p176
      %p178 = scmp.ne.s32.totalorder %s169, %s170
      %p179 = scmp.eq.s32.totalorder %s28, 0
      %p180 = por %p178, %p179
      %p181 = scmp.ne.s32.totalorder %s169, %s170
      %p182 = scmp.eq.s32.totalorder %s29, 1
      %p183 = por %p181, %p182
      %p185 = scmp.ne.s32.totalorder %s170, %s184
      %p186 = scmp.eq.s32.totalorder %s29, 0
      %p187 = por %p185, %p186
      %s189 = sadd.s32 %s188, 1
      %p192 = scmp.eq.s32.totalorder %s23, 1
      %p193 = scmp.ne.s32.totalorder %s188, %s190
      %p194 = scmp.eq.s32.totalorder %s23, 0
      %p195 = por %p193, %p194
      %p196 = scmp.ne.s32.totalorder %s188, %s190
      %p197 = scmp.eq.s32.totalorder %s28, 1
      %p198 = por %p196, %p197
      %p199 = scmp.ne.s32.totalorder %s190, %s191
      %p200 = scmp.eq.s32.totalorder %s28, 0
      %p201 = por %p199, %p200
      %p202 = scmp.ne.s32.totalorder %s190, %s191
      %p203 = scmp.eq.s32.totalorder %s29, 1
      %p204 = por %p202, %p203
      %p206 = scmp.ne.s32.totalorder %s191, %s205
      %p207 = scmp.eq.s32.totalorder %s29, 0
      %p208 = por %p206, %p207
      %s210 = sadd.s32 %s209, 1
      %p213 = scmp.eq.s32.totalorder %s23, 1
      %p214 = scmp.ne.s32.totalorder %s209, %s211
      %p215 = scmp.eq.s32.totalorder %s23, 0
      %p216 = por %p214, %p215
      %p217 = scmp.ne.s32.totalorder %s209, %s211
      %p218 = scmp.eq.s32.totalorder %s28, 1
      %p219 = por %p217, %p218
      %p220 = scmp.ne.s32.totalorder %s211, %s212
      %p221 = scmp.eq.s32.totalorder %s28, 0
      %p222 = por %p220, %p221
      %p223 = scmp.ne.s32.totalorder %s211, %s212
      %p224 = scmp.eq.s32.totalorder %s29, 1
      %p225 = por %p223, %p224
      %p227 = scmp.ne.s32.totalorder %s212, %s226
      %p228 = scmp.eq.s32.totalorder %s29, 0
      %p229 = por %p227, %p228
      %s231 = sadd.s32 %s230, 1
      %p234 = scmp.eq.s32.totalorder %s23, 1
      %p235 = scmp.ne.s32.totalorder %s230, %s232
      %p236 = scmp.eq.s32.totalorder %s23, 0
      %p237 = por %p235, %p236
      %p238 = scmp.ne.s32.totalorder %s230, %s232
      %p239 = scmp.eq.s32.totalorder %s28, 1
      %p240 = por %p238, %p239
      %p241 = scmp.ne.s32.totalorder %s232, %s233
      %p242 = scmp.eq.s32.totalorder %s28, 0
      %p243 = por %p241, %p242
      %p244 = scmp.ne.s32.totalorder %s232, %s233
      %p245 = scmp.eq.s32.totalorder %s29, 1
      %p246 = por %p244, %p245
      %p248 = scmp.ne.s32.totalorder %s233, %s247
      %p249 = scmp.eq.s32.totalorder %s29, 0
      %p250 = por %p248, %p249
      %s251 = ssub.s32 %s23, %s30
      %p252 = scmp.eq.s32.totalorder %s251, 0
      %s254 = sadd.s32 %s253, 1
      %s255 = scalar_select %p252, %s253, %s254
      %p258 = pneg %p252
      %p259 = scmp.eq.s32.totalorder %s23, 1
      %p260 = por %p258, %p259
      %p261 = scmp.ne.s32.totalorder %s253, %s256
      %p262 = scmp.eq.s32.totalorder %s23, 0
      %p263 = por %p261, %p262
      %p264 = scmp.ne.s32.totalorder %s253, %s256
      %p265 = scmp.eq.s32.totalorder %s28, 1
      %p266 = por %p264, %p265
      %p267 = scmp.ne.s32.totalorder %s256, %s257
      %p268 = scmp.eq.s32.totalorder %s28, 0
      %p269 = por %p267, %p268
      %p270 = scmp.ne.s32.totalorder %s256, %s257
      %p271 = scmp.eq.s32.totalorder %s29, 1
      %p272 = por %p270, %p271
      %p274 = scmp.ne.s32.totalorder %s257, %s273
      %p275 = scmp.eq.s32.totalorder %s29, 0
      %p276 = por %p274, %p275
      %p277 = scmp.le.s32.totalorder 1, %s23
      %p278 = scmp.lt.s32.totalorder %s23, 3
      %p279 = pnand %p277, %p278
      %p280 = pneg %p279
      // Predicated region
      $region9: #{model4_1_forward.1} parent=5 // pred_check
        _
      $region10: #{model4_1_forward.1} parent=5 // pred_check_branch
        %282 = sbr.rel (%p279) target = $region12
      $region11: #{model4_1_forward.1} parent=5 // pred_region
        %s283 = ssub.s32 %s23, 1
        // Predicated region
        $region13: #{model4_1_forward.1} parent=11 // pred_check
          %p284 = pneg %p96
        $region14: #{model4_1_forward.1} parent=11 // pred_check_branch
          %286 = sbr.rel (%p284) target = $region16
        $region15: #{model4_1_forward.1} parent=11 // pred_region
          %s288 = ssub.s32 65536, 65536
          %289 = vsyncadd [#allocation5], %s288
          %s290 = sshll.u32 [#allocation4], 4
          %s291 = int_to_ptr.vmem [resolvable:$true] %s290
          %296 = dma.hbm_to_vmem [thread:$0]  %s2, 65536, %s291, [#allocation5], 256, 256, 16
        $region16: #{model4_1_forward.1} parent=11 // pred_fallthru
          _
        // Predicated region
        $region17: #{model4_1_forward.1} parent=11 // pred_check
          %p297 = pneg %p117
        $region18: #{model4_1_forward.1} parent=11 // pred_check_branch
          %299 = sbr.rel (%p297) target = $region20
        $region19: #{model4_1_forward.1} parent=11 // pred_region
          %s301 = ssub.s32 64, 64
          %302 = vsyncadd [#allocation5], %s301
          %s304 = sshll.u32 [#allocation6], 4
          %s305 = int_to_ptr.vmem [resolvable:$true] %s304
          %307 = dma.hbm_to_vmem [thread:$0]  %s3, 64, %s305, [#allocation5]
        $region20: #{model4_1_forward.1} parent=11 // pred_fallthru
          _
        // Predicated region
        $region21: #{model4_1_forward.1} parent=11 // pred_check
          %p308 = pneg %p138
        $region22: #{model4_1_forward.1} parent=11 // pred_check_branch
          %310 = sbr.rel (%p308) target = $region24
        $region23: #{model4_1_forward.1} parent=11 // pred_region
          %s312 = ssub.s32 12288, 12288
          %313 = vsyncadd [#allocation8], %s312
          %s314 = sshll.u32 [#allocation7], 4
          %s315 = int_to_ptr.vmem [resolvable:$true] %s314
          %320 = dma.hbm_to_vmem [thread:$0]  %s4, 12288, %s315, [#allocation8], 256, 256, 16
        $region24: #{model4_1_forward.1} parent=11 // pred_fallthru
          _
        // Predicated region
        $region25: #{model4_1_forward.1} parent=11 // pred_check
          %p321 = pneg %p159
        $region26: #{model4_1_forward.1} parent=11 // pred_check_branch
          %323 = sbr.rel (%p321) target = $region28
        $region27: #{model4_1_forward.1} parent=11 // pred_region
          %s325 = ssub.s32 64, 64
          %326 = vsyncadd [#allocation8], %s325
          %s328 = sshll.u32 [#allocation9], 4
          %s329 = int_to_ptr.vmem [resolvable:$true] %s328
          %331 = dma.hbm_to_vmem [thread:$0]  %s5, 64, %s329, [#allocation8]
        $region28: #{model4_1_forward.1} parent=11 // pred_fallthru
          _
        // Predicated region
        $region29: #{model4_1_forward.1} parent=11 // pred_check
          %p332 = pneg %p180
        $region30: #{model4_1_forward.1} parent=11 // pred_check_branch
          %334 = sbr.rel (%p332) target = $region32
        $region31: #{model4_1_forward.1} parent=11 // pred_region
          _
        $region32: #{model4_1_forward.1} parent=11 // pred_fallthru
          _
        // Predicated region
        $region33: #{model4_1_forward.1} parent=11 // pred_check
          %p335 = pneg %p201
        $region34: #{model4_1_forward.1} parent=11 // pred_check_branch
          %337 = sbr.rel (%p335) target = $region36
        $region35: #{model4_1_forward.1} parent=11 // pred_region
          %s339 = ssub.s32 64, 64
          %340 = vsyncadd [#allocation11], %s339
          %s342 = sshll.u32 [#allocation10], 4
          %s343 = int_to_ptr.vmem [resolvable:$true] %s342
          %345 = dma.hbm_to_vmem [thread:$0]  %s7, 64, %s343, [#allocation11]
        $region36: #{model4_1_forward.1} parent=11 // pred_fallthru
          _
        // Predicated region
        $region37: #{model4_1_forward.1} parent=11 // pred_check
          %p346 = pneg %p222
        $region38: #{model4_1_forward.1} parent=11 // pred_check_branch
          %348 = sbr.rel (%p346) target = $region40
        $region39: #{model4_1_forward.1} parent=11 // pred_region
          %s350 = ssub.s32 4096, 4096
          %351 = vsyncadd [#allocation11], %s350
          %s352 = sshll.u32 [#allocation12], 4
          %s353 = int_to_ptr.vmem [resolvable:$true] %s352
          %358 = dma.hbm_to_vmem [thread:$0]  %s8, 4096, %s353, [#allocation11], 64, 64, 4
        $region40: #{model4_1_forward.1} parent=11 // pred_fallthru
          _
        // Predicated region
        $region41: #{model4_1_forward.1} parent=11 // pred_check
          %p359 = pneg %p243
        $region42: #{model4_1_forward.1} parent=11 // pred_check_branch
          %361 = sbr.rel (%p359) target = $region44
        $region43: #{model4_1_forward.1} parent=11 // pred_region
          %s363 = ssub.s32 16, 16
          %364 = vsyncadd [#allocation14], %s363
          %s366 = sshll.u32 [#allocation13], 4
          %s367 = int_to_ptr.vmem [resolvable:$true] %s366
          %369 = dma.hbm_to_vmem [thread:$0]  %s9, 16, %s367, [#allocation14]
        $region44: #{model4_1_forward.1} parent=11 // pred_fallthru
          _
      $region12: #{model4_1_forward.1} parent=5 // pred_fallthru
        _
      %p370 = scmp.lt.s32.totalorder %s23, 2
      // Predicated region
      $region45: #{model4_1_forward.1} parent=5 // pred_check
        %p371 = pneg %p370
      $region46: #{model4_1_forward.1} parent=5 // pred_check_branch
        %373 = sbr.rel (%p371) target = $region48
      $region47: #{model4_1_forward.1} parent=5 // pred_region
        // Predicated region
        $region49: #{model4_1_forward.1} parent=47 // pred_check
          %p374 = pneg %p43
        $region50: #{model4_1_forward.1} parent=47 // pred_check_branch
          %376 = sbr.rel (%p374) target = $region52
        $region51: #{model4_1_forward.1} parent=47 // pred_region
          %s377 = sand.u32 %s33, 1
          %s378 = scalar_lea.sflag [#allocation3], %s377
          %s379 = sand.u32 %s33, 1
          %s380 = smul.addr %s379, 24
          %s381 = scalar_lea.vmem [#allocation2], %s380
          %s383 = ssub.s32 384, 384
          %384 = vsyncadd %s378, %s383
          %s385 = smul.addr %s23, 3
          %s386 = smul.addr %s385, 128
          %s387 = scalar_lea.hbm %s0, %s386
          %s389 = sshll.u32 %s381, 4
          %s390 = int_to_ptr.vmem [resolvable:$true] %s389
          %392 = dma.hbm_to_vmem [thread:$0]  %s387, 384, %s390, %s378
        $region52: #{model4_1_forward.1} parent=47 // pred_fallthru
          _
        // Predicated region
        $region53: #{model4_1_forward.1} parent=47 // pred_check
          %p393 = pneg %p69
        $region54: #{model4_1_forward.1} parent=47 // pred_check_branch
          %395 = sbr.rel (%p393) target = $region56
        $region55: #{model4_1_forward.1} parent=47 // pred_region
          %s396 = smul.u32 8, %s23
          %p397 = scmp.lt.s32.totalorder %s396, 15
          %s398 = scalar_select %p397, %s396, 15
          %s399 = smul.addr %s398, 32
          %s400 = smul.addr %s399, 4
          %s401 = scalar_lea.vmem %s1, %s400
          %s402 = smul.u32 8, %s23
        $region56: #{model4_1_forward.1} parent=47 // pred_fallthru
          _
      $region48: #{model4_1_forward.1} parent=5 // pred_fallthru
        _
      %p403 = scmp.le.s32.totalorder 1, %s23
      %p404 = scmp.lt.s32.totalorder %s23, 3
      %p405 = pnand %p403, %p404
      %p406 = pneg %p405
      // Predicated region
      $region57: #{model4_1_forward.1} parent=5 // pred_check
        _
      $region58: #{model4_1_forward.1} parent=5 // pred_check_branch
        %408 = sbr.rel (%p405) target = $region60
      $region59: #{model4_1_forward.1} parent=5 // pred_region
        %s409 = ssub.s32 %s23, 1
        %s410 = sand.u32 %s36, 1
        %s411 = scalar_lea.sflag [#allocation3], %s410
        %s412 = sand.u32 %s36, 1
        %s413 = smul.addr %s412, 24
        %s414 = scalar_lea.vmem [#allocation2], %s413
        // Predicated region
        $region61: #{model4_1_forward.1} parent=59 // pred_check
          %p415 = pneg %p49
        $region62: #{model4_1_forward.1} parent=59 // pred_check_branch
          %417 = sbr.rel (%p415) target = $region64
        $region63: #{model4_1_forward.1} parent=59 // pred_region
          %418 = dma.done %s411, 384
        $region64: #{model4_1_forward.1} parent=59 // pred_fallthru
          _
        // Predicated region
        $region65: #{model4_1_forward.1} parent=59 // pred_check
          %p419 = pneg %p96
        $region66: #{model4_1_forward.1} parent=59 // pred_check_branch
          %421 = sbr.rel (%p419) target = $region68
        $region67: #{model4_1_forward.1} parent=59 // pred_region
          %422 = dma.done [#allocation5], 65536
        $region68: #{model4_1_forward.1} parent=59 // pred_fallthru
          _
        // Predicated region
        $region69: #{model4_1_forward.1} parent=59 // pred_check
          %p423 = pneg %p117
        $region70: #{model4_1_forward.1} parent=59 // pred_check_branch
          %425 = sbr.rel (%p423) target = $region72
        $region71: #{model4_1_forward.1} parent=59 // pred_region
          %426 = dma.done [#allocation5], 64
        $region72: #{model4_1_forward.1} parent=59 // pred_fallthru
          _
        // Predicated region
        $region73: #{model4_1_forward.1} parent=59 // pred_check
          %p427 = pneg %p138
        $region74: #{model4_1_forward.1} parent=59 // pred_check_branch
          %429 = sbr.rel (%p427) target = $region76
        $region75: #{model4_1_forward.1} parent=59 // pred_region
          %430 = dma.done [#allocation8], 12288
        $region76: #{model4_1_forward.1} parent=59 // pred_fallthru
          _
        // Predicated region
        $region77: #{model4_1_forward.1} parent=59 // pred_check
          %p431 = pneg %p159
        $region78: #{model4_1_forward.1} parent=59 // pred_check_branch
          %433 = sbr.rel (%p431) target = $region80
        $region79: #{model4_1_forward.1} parent=59 // pred_region
          %434 = dma.done [#allocation8], 64
        $region80: #{model4_1_forward.1} parent=59 // pred_fallthru
          _
        // Predicated region
        $region81: #{model4_1_forward.1} parent=59 // pred_check
          %p435 = pneg %p201
        $region82: #{model4_1_forward.1} parent=59 // pred_check_branch
          %437 = sbr.rel (%p435) target = $region84
        $region83: #{model4_1_forward.1} parent=59 // pred_region
          %438 = dma.done [#allocation11], 64
        $region84: #{model4_1_forward.1} parent=59 // pred_fallthru
          _
        // Predicated region
        $region85: #{model4_1_forward.1} parent=59 // pred_check
          %p439 = pneg %p222
        $region86: #{model4_1_forward.1} parent=59 // pred_check_branch
          %441 = sbr.rel (%p439) target = $region88
        $region87: #{model4_1_forward.1} parent=59 // pred_region
          %442 = dma.done [#allocation11], 4096
        $region88: #{model4_1_forward.1} parent=59 // pred_fallthru
          _
        // Predicated region
        $region89: #{model4_1_forward.1} parent=59 // pred_check
          %p443 = pneg %p243
        $region90: #{model4_1_forward.1} parent=59 // pred_check_branch
          %445 = sbr.rel (%p443) target = $region92
        $region91: #{model4_1_forward.1} parent=59 // pred_region
          %446 = dma.done [#allocation14], 16
        $region92: #{model4_1_forward.1} parent=59 // pred_fallthru
          _
        %s447 = sand.u32 %s36, 1
        %s448 = scalar_lea.sflag [#allocation3], %s447
        %s449 = sand.u32 %s36, 1
        %s450 = smul.addr %s449, 24
        %s451 = scalar_lea.vmem [#allocation2], %s450
        %p452 = pneg %p49
        %p453 = pneg %p46
        %s454 = smul.u32 8, %s28
        %p455 = scmp.lt.s32.totalorder %s454, 15
        %s456 = scalar_select %p455, %s454, 15
        %s457 = smul.addr %s456, 32
        %s458 = smul.addr %s457, 4
        %s459 = scalar_lea.vmem %s1, %s458
        %p460 = pneg %p75
        %p461 = pneg %p72
        %p462 = pneg %p96
        %p463 = pneg %p93
        %p464 = pneg %p117
        %p465 = pneg %p114
        %p466 = pneg %p138
        %p467 = pneg %p135
        %p468 = pneg %p159
        %p469 = pneg %p156
        %p470 = pneg %p180
        %p471 = pneg %p177
        %p472 = pneg %p201
        %p473 = pneg %p198
        %p474 = pneg %p222
        %p475 = pneg %p219
        %p476 = pneg %p243
        %p477 = pneg %p240
        %p478 = pneg %p269
        %p479 = pneg %p266
        %p480 = scmp.lt.s32.totalorder %s28, 1
        %s481 = scalar_select %p480, %s28, 1
        %s482 = smul.addr %s481, 8
        %s483 = scalar_lea.vmem %s10, %s482
        %s484 = smul.u32 8, %s28
        %p485 = scmp.lt.s32.totalorder %s484, 15
        %s486 = scalar_select %p485, %s484, 15
        %s487 = smul.addr %s486, 32
        %s488 = smul.addr %s487, 4
        %s489 = scalar_lea.vmem %s1, %s488
        %s490 = smul.u32 8, %s28
        %p491 = scmp.lt.s32.totalorder %s28, 1
        %s492 = scalar_select %p491, %s28, 1
        %s493 = smul.addr %s492, 8
        %s494 = scalar_lea.vmem %s10, %s493
        %s496 = smul.u32 0, 16
        %s497 = smul.addr %s496, 4
        %s498 = scalar_lea.vmem %s489, %s497
        %v499 = vld [vmem:[%s498] sm:$0xff]
        %v500 = vld [vmem:[%s498 + $0x8] sm:$0xff]
        %v501 = vld [vmem:[%s498 + $0x10] sm:$0xff]
        %v502 = vld [vmem:[%s498 + $0x18] sm:$0xff]
        %v503 = vld [vmem:[%s498 + $0x20] sm:$0xff]
        %v504 = vld [vmem:[%s498 + $0x28] sm:$0xff]
        %v505 = vld [vmem:[%s498 + $0x30] sm:$0xff]
        %v506 = vld [vmem:[%s498 + $0x38] sm:$0xff]
        %v507 = vld [vmem:[%s498 + $0x80] sm:$0xff]
        %v508 = vld [vmem:[%s498 + $0x88] sm:$0xff]
        %v509 = vld [vmem:[%s498 + $0x90] sm:$0xff]
        %v510 = vld [vmem:[%s498 + $0x98] sm:$0xff]
        %v511 = vld [vmem:[%s498 + $0xa0] sm:$0xff]
        %v512 = vld [vmem:[%s498 + $0xa8] sm:$0xff]
        %v513 = vld [vmem:[%s498 + $0xb0] sm:$0xff]
        %v514 = vld [vmem:[%s498 + $0xb8] sm:$0xff]
        %v515 = vld [vmem:[%s498 + $0x100] sm:$0xff]
        %v516 = vld [vmem:[%s498 + $0x108] sm:$0xff]
        %v517 = vld [vmem:[%s498 + $0x110] sm:$0xff]
        %v518 = vld [vmem:[%s498 + $0x118] sm:$0xff]
        %v519 = vld [vmem:[%s498 + $0x120] sm:$0xff]
        %v520 = vld [vmem:[%s498 + $0x128] sm:$0xff]
        %v521 = vld [vmem:[%s498 + $0x130] sm:$0xff]
        %v522 = vld [vmem:[%s498 + $0x138] sm:$0xff]
        %v523 = vld [vmem:[%s498 + $0x180] sm:$0xff]
        %v524 = vld [vmem:[%s498 + $0x188] sm:$0xff]
        %v525 = vld [vmem:[%s498 + $0x190] sm:$0xff]
        %v526 = vld [vmem:[%s498 + $0x198] sm:$0xff]
        %v527 = vld [vmem:[%s498 + $0x1a0] sm:$0xff]
        %v528 = vld [vmem:[%s498 + $0x1a8] sm:$0xff]
        %v529 = vld [vmem:[%s498 + $0x1b0] sm:$0xff]
        %v530 = vld [vmem:[%s498 + $0x1b8] sm:$0xff]
        %v531 = vld [vmem:[%s498 + $0x200] sm:$0xff]
        %v532 = vld [vmem:[%s498 + $0x208] sm:$0xff]
        %v533 = vld [vmem:[%s498 + $0x210] sm:$0xff]
        %v534 = vld [vmem:[%s498 + $0x218] sm:$0xff]
        %v535 = vld [vmem:[%s498 + $0x220] sm:$0xff]
        %v536 = vld [vmem:[%s498 + $0x228] sm:$0xff]
        %v537 = vld [vmem:[%s498 + $0x230] sm:$0xff]
        %v538 = vld [vmem:[%s498 + $0x238] sm:$0xff]
        %v539 = vld [vmem:[%s498 + $0x280] sm:$0xff]
        %v540 = vld [vmem:[%s498 + $0x288] sm:$0xff]
        %v541 = vld [vmem:[%s498 + $0x290] sm:$0xff]
        %v542 = vld [vmem:[%s498 + $0x298] sm:$0xff]
        %v543 = vld [vmem:[%s498 + $0x2a0] sm:$0xff]
        %v544 = vld [vmem:[%s498 + $0x2a8] sm:$0xff]
        %v545 = vld [vmem:[%s498 + $0x2b0] sm:$0xff]
        %v546 = vld [vmem:[%s498 + $0x2b8] sm:$0xff]
        %v547 = vld [vmem:[%s498 + $0x300] sm:$0xff]
        %v548 = vld [vmem:[%s498 + $0x308] sm:$0xff]
        %v549 = vld [vmem:[%s498 + $0x310] sm:$0xff]
        %v550 = vld [vmem:[%s498 + $0x318] sm:$0xff]
        %v551 = vld [vmem:[%s498 + $0x320] sm:$0xff]
        %v552 = vld [vmem:[%s498 + $0x328] sm:$0xff]
        %v553 = vld [vmem:[%s498 + $0x330] sm:$0xff]
        %v554 = vld [vmem:[%s498 + $0x338] sm:$0xff]
        %v555 = vld [vmem:[%s498 + $0x380] sm:$0xff]
        %v556 = vld [vmem:[%s498 + $0x388] sm:$0xff]
        %v557 = vld [vmem:[%s498 + $0x390] sm:$0xff]
        %v558 = vld [vmem:[%s498 + $0x398] sm:$0xff]
        %v559 = vld [vmem:[%s498 + $0x3a0] sm:$0xff]
        %v560 = vld [vmem:[%s498 + $0x3a8] sm:$0xff]
        %v561 = vld [vmem:[%s498 + $0x3b0] sm:$0xff]
        %v562 = vld [vmem:[%s498 + $0x3b8] sm:$0xff]
        %v563 = vunpack.c.l.bf16 %v499
        %v564 = vunpack.c.h.bf16 %v499
        %v565 = vunpack.c.l.bf16 %v500
        %v566 = vunpack.c.h.bf16 %v500
        %v567 = vunpack.c.l.bf16 %v501
        %v568 = vunpack.c.h.bf16 %v501
        %v569 = vunpack.c.l.bf16 %v502
        %v570 = vunpack.c.h.bf16 %v502
        %v571 = vunpack.c.l.bf16 %v503
        %v572 = vunpack.c.h.bf16 %v503
        %v573 = vunpack.c.l.bf16 %v504
        %v574 = vunpack.c.h.bf16 %v504
        %v575 = vunpack.c.l.bf16 %v505
        %v576 = vunpack.c.h.bf16 %v505
        %v577 = vunpack.c.l.bf16 %v506
        %v578 = vunpack.c.h.bf16 %v506
        %v579 = vunpack.c.l.bf16 %v507
        %v580 = vunpack.c.h.bf16 %v507
        %v581 = vunpack.c.l.bf16 %v508
        %v582 = vunpack.c.h.bf16 %v508
        %v583 = vunpack.c.l.bf16 %v509
        %v584 = vunpack.c.h.bf16 %v509
        %v585 = vunpack.c.l.bf16 %v510
        %v586 = vunpack.c.h.bf16 %v510
        %v587 = vunpack.c.l.bf16 %v511
        %v588 = vunpack.c.h.bf16 %v511
        %v589 = vunpack.c.l.bf16 %v512
        %v590 = vunpack.c.h.bf16 %v512
        %v591 = vunpack.c.l.bf16 %v513
        %v592 = vunpack.c.h.bf16 %v513
        %v593 = vunpack.c.l.bf16 %v514
        %v594 = vunpack.c.h.bf16 %v514
        %v595 = vunpack.c.l.bf16 %v515
        %v596 = vunpack.c.h.bf16 %v515
        %v597 = vunpack.c.l.bf16 %v516
        %v598 = vunpack.c.h.bf16 %v516
        %v599 = vunpack.c.l.bf16 %v517
        %v600 = vunpack.c.h.bf16 %v517
        %v601 = vunpack.c.l.bf16 %v518
        %v602 = vunpack.c.h.bf16 %v518
        %v603 = vunpack.c.l.bf16 %v519
        %v604 = vunpack.c.h.bf16 %v519
        %v605 = vunpack.c.l.bf16 %v520
        %v606 = vunpack.c.h.bf16 %v520
        %v607 = vunpack.c.l.bf16 %v521
        %v608 = vunpack.c.h.bf16 %v521
        %v609 = vunpack.c.l.bf16 %v522
        %v610 = vunpack.c.h.bf16 %v522
        %v611 = vunpack.c.l.bf16 %v523
        %v612 = vunpack.c.h.bf16 %v523
        %v613 = vunpack.c.l.bf16 %v524
        %v614 = vunpack.c.h.bf16 %v524
        %v615 = vunpack.c.l.bf16 %v525
        %v616 = vunpack.c.h.bf16 %v525
        %v617 = vunpack.c.l.bf16 %v526
        %v618 = vunpack.c.h.bf16 %v526
        %v619 = vunpack.c.l.bf16 %v527
        %v620 = vunpack.c.h.bf16 %v527
        %v621 = vunpack.c.l.bf16 %v528
        %v622 = vunpack.c.h.bf16 %v528
        %v623 = vunpack.c.l.bf16 %v529
        %v624 = vunpack.c.h.bf16 %v529
        %v625 = vunpack.c.l.bf16 %v530
        %v626 = vunpack.c.h.bf16 %v530
        %v627 = vunpack.c.l.bf16 %v531
        %v628 = vunpack.c.h.bf16 %v531
        %v629 = vunpack.c.l.bf16 %v532
        %v630 = vunpack.c.h.bf16 %v532
        %v631 = vunpack.c.l.bf16 %v533
        %v632 = vunpack.c.h.bf16 %v533
        %v633 = vunpack.c.l.bf16 %v534
        %v634 = vunpack.c.h.bf16 %v534
        %v635 = vunpack.c.l.bf16 %v535
        %v636 = vunpack.c.h.bf16 %v535
        %v637 = vunpack.c.l.bf16 %v536
        %v638 = vunpack.c.h.bf16 %v536
        %v639 = vunpack.c.l.bf16 %v537
        %v640 = vunpack.c.h.bf16 %v537
        %v641 = vunpack.c.l.bf16 %v538
        %v642 = vunpack.c.h.bf16 %v538
        %v643 = vunpack.c.l.bf16 %v539
        %v644 = vunpack.c.h.bf16 %v539
        %v645 = vunpack.c.l.bf16 %v540
        %v646 = vunpack.c.h.bf16 %v540
        %v647 = vunpack.c.l.bf16 %v541
        %v648 = vunpack.c.h.bf16 %v541
        %v649 = vunpack.c.l.bf16 %v542
        %v650 = vunpack.c.h.bf16 %v542
        %v651 = vunpack.c.l.bf16 %v543
        %v652 = vunpack.c.h.bf16 %v543
        %v653 = vunpack.c.l.bf16 %v544
        %v654 = vunpack.c.h.bf16 %v544
        %v655 = vunpack.c.l.bf16 %v545
        %v656 = vunpack.c.h.bf16 %v545
        %v657 = vunpack.c.l.bf16 %v546
        %v658 = vunpack.c.h.bf16 %v546
        %v659 = vunpack.c.l.bf16 %v547
        %v660 = vunpack.c.h.bf16 %v547
        %v661 = vunpack.c.l.bf16 %v548
        %v662 = vunpack.c.h.bf16 %v548
        %v663 = vunpack.c.l.bf16 %v549
        %v664 = vunpack.c.h.bf16 %v549
        %v665 = vunpack.c.l.bf16 %v550
        %v666 = vunpack.c.h.bf16 %v550
        %v667 = vunpack.c.l.bf16 %v551
        %v668 = vunpack.c.h.bf16 %v551
        %v669 = vunpack.c.l.bf16 %v552
        %v670 = vunpack.c.h.bf16 %v552
        %v671 = vunpack.c.l.bf16 %v553
        %v672 = vunpack.c.h.bf16 %v553
        %v673 = vunpack.c.l.bf16 %v554
        %v674 = vunpack.c.h.bf16 %v554
        %v675 = vunpack.c.l.bf16 %v555
        %v676 = vunpack.c.h.bf16 %v555
        %v677 = vunpack.c.l.bf16 %v556
        %v678 = vunpack.c.h.bf16 %v556
        %v679 = vunpack.c.l.bf16 %v557
        %v680 = vunpack.c.h.bf16 %v557
        %v681 = vunpack.c.l.bf16 %v558
        %v682 = vunpack.c.h.bf16 %v558
        %v683 = vunpack.c.l.bf16 %v559
        %v684 = vunpack.c.h.bf16 %v559
        %v685 = vunpack.c.l.bf16 %v560
        %v686 = vunpack.c.h.bf16 %v560
        %v687 = vunpack.c.l.bf16 %v561
        %v688 = vunpack.c.h.bf16 %v561
        %v689 = vunpack.c.l.bf16 %v562
        %v690 = vunpack.c.h.bf16 %v562
        %v691 = vrot.slane %v563, 4
        %v692 = vadd.f32 %v563, %v691
        %v693 = vrot.slane %v692, 2
        %v694 = vadd.f32 %v692, %v693
        %v695 = vrot.slane %v694, 1
        %v696 = vadd.f32 %v694, %v695
        %v697 = vrot.slane %v564, 4
        %v698 = vadd.f32 %v564, %v697
        %v699 = vrot.slane %v698, 2
        %v700 = vadd.f32 %v698, %v699
        %v701 = vrot.slane %v700, 1
        %v702 = vadd.f32 %v700, %v701
        %v703 = vrot.slane %v565, 4
        %v704 = vadd.f32 %v565, %v703
        %v705 = vrot.slane %v704, 2
        %v706 = vadd.f32 %v704, %v705
        %v707 = vrot.slane %v706, 1
        %v708 = vadd.f32 %v706, %v707
        %v709 = vrot.slane %v566, 4
        %v710 = vadd.f32 %v566, %v709
        %v711 = vrot.slane %v710, 2
        %v712 = vadd.f32 %v710, %v711
        %v713 = vrot.slane %v712, 1
        %v714 = vadd.f32 %v712, %v713
        %v715 = vrot.slane %v567, 4
        %v716 = vadd.f32 %v567, %v715
        %v717 = vrot.slane %v716, 2
        %v718 = vadd.f32 %v716, %v717
        %v719 = vrot.slane %v718, 1
        %v720 = vadd.f32 %v718, %v719
        %v721 = vrot.slane %v568, 4
        %v722 = vadd.f32 %v568, %v721
        %v723 = vrot.slane %v722, 2
        %v724 = vadd.f32 %v722, %v723
        %v725 = vrot.slane %v724, 1
        %v726 = vadd.f32 %v724, %v725
        %v727 = vrot.slane %v569, 4
        %v728 = vadd.f32 %v569, %v727
        %v729 = vrot.slane %v728, 2
        %v730 = vadd.f32 %v728, %v729
        %v731 = vrot.slane %v730, 1
        %v732 = vadd.f32 %v730, %v731
        %v733 = vrot.slane %v570, 4
        %v734 = vadd.f32 %v570, %v733
        %v735 = vrot.slane %v734, 2
        %v736 = vadd.f32 %v734, %v735
        %v737 = vrot.slane %v736, 1
        %v738 = vadd.f32 %v736, %v737
        %v739 = vrot.slane %v571, 4
        %v740 = vadd.f32 %v571, %v739
        %v741 = vrot.slane %v740, 2
        %v742 = vadd.f32 %v740, %v741
        %v743 = vrot.slane %v742, 1
        %v744 = vadd.f32 %v742, %v743
        %v745 = vrot.slane %v572, 4
        %v746 = vadd.f32 %v572, %v745
        %v747 = vrot.slane %v746, 2
        %v748 = vadd.f32 %v746, %v747
        %v749 = vrot.slane %v748, 1
        %v750 = vadd.f32 %v748, %v749
        %v751 = vrot.slane %v573, 4
        %v752 = vadd.f32 %v573, %v751
        %v753 = vrot.slane %v752, 2
        %v754 = vadd.f32 %v752, %v753
        %v755 = vrot.slane %v754, 1
        %v756 = vadd.f32 %v754, %v755
        %v757 = vrot.slane %v574, 4
        %v758 = vadd.f32 %v574, %v757
        %v759 = vrot.slane %v758, 2
        %v760 = vadd.f32 %v758, %v759
        %v761 = vrot.slane %v760, 1
        %v762 = vadd.f32 %v760, %v761
        %v763 = vrot.slane %v575, 4
        %v764 = vadd.f32 %v575, %v763
        %v765 = vrot.slane %v764, 2
        %v766 = vadd.f32 %v764, %v765
        %v767 = vrot.slane %v766, 1
        %v768 = vadd.f32 %v766, %v767
        %v769 = vrot.slane %v576, 4
        %v770 = vadd.f32 %v576, %v769
        %v771 = vrot.slane %v770, 2
        %v772 = vadd.f32 %v770, %v771
        %v773 = vrot.slane %v772, 1
        %v774 = vadd.f32 %v772, %v773
        %v775 = vrot.slane %v577, 4
        %v776 = vadd.f32 %v577, %v775
        %v777 = vrot.slane %v776, 2
        %v778 = vadd.f32 %v776, %v777
        %v779 = vrot.slane %v778, 1
        %v780 = vadd.f32 %v778, %v779
        %v781 = vrot.slane %v578, 4
        %v782 = vadd.f32 %v578, %v781
        %v783 = vrot.slane %v782, 2
        %v784 = vadd.f32 %v782, %v783
        %v785 = vrot.slane %v784, 1
        %v786 = vadd.f32 %v784, %v785
        %v787 = vrot.slane %v579, 4
        %v788 = vadd.f32 %v579, %v787
        %v789 = vrot.slane %v788, 2
        %v790 = vadd.f32 %v788, %v789
        %v791 = vrot.slane %v790, 1
        %v792 = vadd.f32 %v790, %v791
        %v793 = vrot.slane %v580, 4
        %v794 = vadd.f32 %v580, %v793
        %v795 = vrot.slane %v794, 2
        %v796 = vadd.f32 %v794, %v795
        %v797 = vrot.slane %v796, 1
        %v798 = vadd.f32 %v796, %v797
        %v799 = vrot.slane %v581, 4
        %v800 = vadd.f32 %v581, %v799
        %v801 = vrot.slane %v800, 2
        %v802 = vadd.f32 %v800, %v801
        %v803 = vrot.slane %v802, 1
        %v804 = vadd.f32 %v802, %v803
        %v805 = vrot.slane %v582, 4
        %v806 = vadd.f32 %v582, %v805
        %v807 = vrot.slane %v806, 2
        %v808 = vadd.f32 %v806, %v807
        %v809 = vrot.slane %v808, 1
        %v810 = vadd.f32 %v808, %v809
        %v811 = vrot.slane %v583, 4
        %v812 = vadd.f32 %v583, %v811
        %v813 = vrot.slane %v812, 2
        %v814 = vadd.f32 %v812, %v813
        %v815 = vrot.slane %v814, 1
        %v816 = vadd.f32 %v814, %v815
        %v817 = vrot.slane %v584, 4
        %v818 = vadd.f32 %v584, %v817
        %v819 = vrot.slane %v818, 2
        %v820 = vadd.f32 %v818, %v819
        %v821 = vrot.slane %v820, 1
        %v822 = vadd.f32 %v820, %v821
        %v823 = vrot.slane %v585, 4
        %v824 = vadd.f32 %v585, %v823
        %v825 = vrot.slane %v824, 2
        %v826 = vadd.f32 %v824, %v825
        %v827 = vrot.slane %v826, 1
        %v828 = vadd.f32 %v826, %v827
        %v829 = vrot.slane %v586, 4
        %v830 = vadd.f32 %v586, %v829
        %v831 = vrot.slane %v830, 2
        %v832 = vadd.f32 %v830, %v831
        %v833 = vrot.slane %v832, 1
        %v834 = vadd.f32 %v832, %v833
        %v835 = vrot.slane %v587, 4
        %v836 = vadd.f32 %v587, %v835
        %v837 = vrot.slane %v836, 2
        %v838 = vadd.f32 %v836, %v837
        %v839 = vrot.slane %v838, 1
        %v840 = vadd.f32 %v838, %v839
        %v841 = vrot.slane %v588, 4
        %v842 = vadd.f32 %v588, %v841
        %v843 = vrot.slane %v842, 2
        %v844 = vadd.f32 %v842, %v843
        %v845 = vrot.slane %v844, 1
        %v846 = vadd.f32 %v844, %v845
        %v847 = vrot.slane %v589, 4
        %v848 = vadd.f32 %v589, %v847
        %v849 = vrot.slane %v848, 2
        %v850 = vadd.f32 %v848, %v849
        %v851 = vrot.slane %v850, 1
        %v852 = vadd.f32 %v850, %v851
        %v853 = vrot.slane %v590, 4
        %v854 = vadd.f32 %v590, %v853
        %v855 = vrot.slane %v854, 2
        %v856 = vadd.f32 %v854, %v855
        %v857 = vrot.slane %v856, 1
        %v858 = vadd.f32 %v856, %v857
        %v859 = vrot.slane %v591, 4
        %v860 = vadd.f32 %v591, %v859
        %v861 = vrot.slane %v860, 2
        %v862 = vadd.f32 %v860, %v861
        %v863 = vrot.slane %v862, 1
        %v864 = vadd.f32 %v862, %v863
        %v865 = vrot.slane %v592, 4
        %v866 = vadd.f32 %v592, %v865
        %v867 = vrot.slane %v866, 2
        %v868 = vadd.f32 %v866, %v867
        %v869 = vrot.slane %v868, 1
        %v870 = vadd.f32 %v868, %v869
        %v871 = vrot.slane %v593, 4
        %v872 = vadd.f32 %v593, %v871
        %v873 = vrot.slane %v872, 2
        %v874 = vadd.f32 %v872, %v873
        %v875 = vrot.slane %v874, 1
        %v876 = vadd.f32 %v874, %v875
        %v877 = vrot.slane %v594, 4
        %v878 = vadd.f32 %v594, %v877
        %v879 = vrot.slane %v878, 2
        %v880 = vadd.f32 %v878, %v879
        %v881 = vrot.slane %v880, 1
        %v882 = vadd.f32 %v880, %v881
        %v883 = vrot.slane %v595, 4
        %v884 = vadd.f32 %v595, %v883
        %v885 = vrot.slane %v884, 2
        %v886 = vadd.f32 %v884, %v885
        %v887 = vrot.slane %v886, 1
        %v888 = vadd.f32 %v886, %v887
        %v889 = vrot.slane %v596, 4
        %v890 = vadd.f32 %v596, %v889
        %v891 = vrot.slane %v890, 2
        %v892 = vadd.f32 %v890, %v891
        %v893 = vrot.slane %v892, 1
        %v894 = vadd.f32 %v892, %v893
        %v895 = vrot.slane %v597, 4
        %v896 = vadd.f32 %v597, %v895
        %v897 = vrot.slane %v896, 2
        %v898 = vadd.f32 %v896, %v897
        %v899 = vrot.slane %v898, 1
        %v900 = vadd.f32 %v898, %v899
        %v901 = vrot.slane %v598, 4
        %v902 = vadd.f32 %v598, %v901
        %v903 = vrot.slane %v902, 2
        %v904 = vadd.f32 %v902, %v903
        %v905 = vrot.slane %v904, 1
        %v906 = vadd.f32 %v904, %v905
        %v907 = vrot.slane %v599, 4
        %v908 = vadd.f32 %v599, %v907
        %v909 = vrot.slane %v908, 2
        %v910 = vadd.f32 %v908, %v909
        %v911 = vrot.slane %v910, 1
        %v912 = vadd.f32 %v910, %v911
        %v913 = vrot.slane %v600, 4
        %v914 = vadd.f32 %v600, %v913
        %v915 = vrot.slane %v914, 2
        %v916 = vadd.f32 %v914, %v915
        %v917 = vrot.slane %v916, 1
        %v918 = vadd.f32 %v916, %v917
        %v919 = vrot.slane %v601, 4
        %v920 = vadd.f32 %v601, %v919
        %v921 = vrot.slane %v920, 2
        %v922 = vadd.f32 %v920, %v921
        %v923 = vrot.slane %v922, 1
        %v924 = vadd.f32 %v922, %v923
        %v925 = vrot.slane %v602, 4
        %v926 = vadd.f32 %v602, %v925
        %v927 = vrot.slane %v926, 2
        %v928 = vadd.f32 %v926, %v927
        %v929 = vrot.slane %v928, 1
        %v930 = vadd.f32 %v928, %v929
        %v931 = vrot.slane %v603, 4
        %v932 = vadd.f32 %v603, %v931
        %v933 = vrot.slane %v932, 2
        %v934 = vadd.f32 %v932, %v933
        %v935 = vrot.slane %v934, 1
        %v936 = vadd.f32 %v934, %v935
        %v937 = vrot.slane %v604, 4
        %v938 = vadd.f32 %v604, %v937
        %v939 = vrot.slane %v938, 2
        %v940 = vadd.f32 %v938, %v939
        %v941 = vrot.slane %v940, 1
        %v942 = vadd.f32 %v940, %v941
        %v943 = vrot.slane %v605, 4
        %v944 = vadd.f32 %v605, %v943
        %v945 = vrot.slane %v944, 2
        %v946 = vadd.f32 %v944, %v945
        %v947 = vrot.slane %v946, 1
        %v948 = vadd.f32 %v946, %v947
        %v949 = vrot.slane %v606, 4
        %v950 = vadd.f32 %v606, %v949
        %v951 = vrot.slane %v950, 2
        %v952 = vadd.f32 %v950, %v951
        %v953 = vrot.slane %v952, 1
        %v954 = vadd.f32 %v952, %v953
        %v955 = vrot.slane %v607, 4
        %v956 = vadd.f32 %v607, %v955
        %v957 = vrot.slane %v956, 2
        %v958 = vadd.f32 %v956, %v957
        %v959 = vrot.slane %v958, 1
        %v960 = vadd.f32 %v958, %v959
        %v961 = vrot.slane %v608, 4
        %v962 = vadd.f32 %v608, %v961
        %v963 = vrot.slane %v962, 2
        %v964 = vadd.f32 %v962, %v963
        %v965 = vrot.slane %v964, 1
        %v966 = vadd.f32 %v964, %v965
        %v967 = vrot.slane %v609, 4
        %v968 = vadd.f32 %v609, %v967
        %v969 = vrot.slane %v968, 2
        %v970 = vadd.f32 %v968, %v969
        %v971 = vrot.slane %v970, 1
        %v972 = vadd.f32 %v970, %v971
        %v973 = vrot.slane %v610, 4
        %v974 = vadd.f32 %v610, %v973
        %v975 = vrot.slane %v974, 2
        %v976 = vadd.f32 %v974, %v975
        %v977 = vrot.slane %v976, 1
        %v978 = vadd.f32 %v976, %v977
        %v979 = vrot.slane %v611, 4
        %v980 = vadd.f32 %v611, %v979
        %v981 = vrot.slane %v980, 2
        %v982 = vadd.f32 %v980, %v981
        %v983 = vrot.slane %v982, 1
        %v984 = vadd.f32 %v982, %v983
        %v985 = vrot.slane %v612, 4
        %v986 = vadd.f32 %v612, %v985
        %v987 = vrot.slane %v986, 2
        %v988 = vadd.f32 %v986, %v987
        %v989 = vrot.slane %v988, 1
        %v990 = vadd.f32 %v988, %v989
        %v991 = vrot.slane %v613, 4
        %v992 = vadd.f32 %v613, %v991
        %v993 = vrot.slane %v992, 2
        %v994 = vadd.f32 %v992, %v993
        %v995 = vrot.slane %v994, 1
        %v996 = vadd.f32 %v994, %v995
        %v997 = vrot.slane %v614, 4
        %v998 = vadd.f32 %v614, %v997
        %v999 = vrot.slane %v998, 2
        %v1000 = vadd.f32 %v998, %v999
        %v1001 = vrot.slane %v1000, 1
        %v1002 = vadd.f32 %v1000, %v1001
        %v1003 = vrot.slane %v615, 4
        %v1004 = vadd.f32 %v615, %v1003
        %v1005 = vrot.slane %v1004, 2
        %v1006 = vadd.f32 %v1004, %v1005
        %v1007 = vrot.slane %v1006, 1
        %v1008 = vadd.f32 %v1006, %v1007
        %v1009 = vrot.slane %v616, 4
        %v1010 = vadd.f32 %v616, %v1009
        %v1011 = vrot.slane %v1010, 2
        %v1012 = vadd.f32 %v1010, %v1011
        %v1013 = vrot.slane %v1012, 1
        %v1014 = vadd.f32 %v1012, %v1013
        %v1015 = vrot.slane %v617, 4
        %v1016 = vadd.f32 %v617, %v1015
        %v1017 = vrot.slane %v1016, 2
        %v1018 = vadd.f32 %v1016, %v1017
        %v1019 = vrot.slane %v1018, 1
        %v1020 = vadd.f32 %v1018, %v1019
        %v1021 = vrot.slane %v618, 4
        %v1022 = vadd.f32 %v618, %v1021
        %v1023 = vrot.slane %v1022, 2
        %v1024 = vadd.f32 %v1022, %v1023
        %v1025 = vrot.slane %v1024, 1
        %v1026 = vadd.f32 %v1024, %v1025
        %v1027 = vrot.slane %v619, 4
        %v1028 = vadd.f32 %v619, %v1027
        %v1029 = vrot.slane %v1028, 2
        %v1030 = vadd.f32 %v1028, %v1029
        %v1031 = vrot.slane %v1030, 1
        %v1032 = vadd.f32 %v1030, %v1031
        %v1033 = vrot.slane %v620, 4
        %v1034 = vadd.f32 %v620, %v1033
        %v1035 = vrot.slane %v1034, 2
        %v1036 = vadd.f32 %v1034, %v1035
        %v1037 = vrot.slane %v1036, 1
        %v1038 = vadd.f32 %v1036, %v1037
        %v1039 = vrot.slane %v621, 4
        %v1040 = vadd.f32 %v621, %v1039
        %v1041 = vrot.slane %v1040, 2
        %v1042 = vadd.f32 %v1040, %v1041
        %v1043 = vrot.slane %v1042, 1
        %v1044 = vadd.f32 %v1042, %v1043
        %v1045 = vrot.slane %v622, 4
        %v1046 = vadd.f32 %v622, %v1045
        %v1047 = vrot.slane %v1046, 2
        %v1048 = vadd.f32 %v1046, %v1047
        %v1049 = vrot.slane %v1048, 1
        %v1050 = vadd.f32 %v1048, %v1049
        %v1051 = vrot.slane %v623, 4
        %v1052 = vadd.f32 %v623, %v1051
        %v1053 = vrot.slane %v1052, 2
        %v1054 = vadd.f32 %v1052, %v1053
        %v1055 = vrot.slane %v1054, 1
        %v1056 = vadd.f32 %v1054, %v1055
        %v1057 = vrot.slane %v624, 4
        %v1058 = vadd.f32 %v624, %v1057
        %v1059 = vrot.slane %v1058, 2
        %v1060 = vadd.f32 %v1058, %v1059
        %v1061 = vrot.slane %v1060, 1
        %v1062 = vadd.f32 %v1060, %v1061
        %v1063 = vrot.slane %v625, 4
        %v1064 = vadd.f32 %v625, %v1063
        %v1065 = vrot.slane %v1064, 2
        %v1066 = vadd.f32 %v1064, %v1065
        %v1067 = vrot.slane %v1066, 1
        %v1068 = vadd.f32 %v1066, %v1067
        %v1069 = vrot.slane %v626, 4
        %v1070 = vadd.f32 %v626, %v1069
        %v1071 = vrot.slane %v1070, 2
        %v1072 = vadd.f32 %v1070, %v1071
        %v1073 = vrot.slane %v1072, 1
        %v1074 = vadd.f32 %v1072, %v1073
        %v1075 = vrot.slane %v627, 4
        %v1076 = vadd.f32 %v627, %v1075
        %v1077 = vrot.slane %v1076, 2
        %v1078 = vadd.f32 %v1076, %v1077
        %v1079 = vrot.slane %v1078, 1
        %v1080 = vadd.f32 %v1078, %v1079
        %v1081 = vrot.slane %v628, 4
        %v1082 = vadd.f32 %v628, %v1081
        %v1083 = vrot.slane %v1082, 2
        %v1084 = vadd.f32 %v1082, %v1083
        %v1085 = vrot.slane %v1084, 1
        %v1086 = vadd.f32 %v1084, %v1085
        %v1087 = vrot.slane %v629, 4
        %v1088 = vadd.f32 %v629, %v1087
        %v1089 = vrot.slane %v1088, 2
        %v1090 = vadd.f32 %v1088, %v1089
        %v1091 = vrot.slane %v1090, 1
        %v1092 = vadd.f32 %v1090, %v1091
        %v1093 = vrot.slane %v630, 4
        %v1094 = vadd.f32 %v630, %v1093
        %v1095 = vrot.slane %v1094, 2
        %v1096 = vadd.f32 %v1094, %v1095
        %v1097 = vrot.slane %v1096, 1
        %v1098 = vadd.f32 %v1096, %v1097
        %v1099 = vrot.slane %v631, 4
        %v1100 = vadd.f32 %v631, %v1099
        %v1101 = vrot.slane %v1100, 2
        %v1102 = vadd.f32 %v1100, %v1101
        %v1103 = vrot.slane %v1102, 1
        %v1104 = vadd.f32 %v1102, %v1103
        %v1105 = vrot.slane %v632, 4
        %v1106 = vadd.f32 %v632, %v1105
        %v1107 = vrot.slane %v1106, 2
        %v1108 = vadd.f32 %v1106, %v1107
        %v1109 = vrot.slane %v1108, 1
        %v1110 = vadd.f32 %v1108, %v1109
        %v1111 = vrot.slane %v633, 4
        %v1112 = vadd.f32 %v633, %v1111
        %v1113 = vrot.slane %v1112, 2
        %v1114 = vadd.f32 %v1112, %v1113
        %v1115 = vrot.slane %v1114, 1
        %v1116 = vadd.f32 %v1114, %v1115
        %v1117 = vrot.slane %v634, 4
        %v1118 = vadd.f32 %v634, %v1117
        %v1119 = vrot.slane %v1118, 2
        %v1120 = vadd.f32 %v1118, %v1119
        %v1121 = vrot.slane %v1120, 1
        %v1122 = vadd.f32 %v1120, %v1121
        %v1123 = vrot.slane %v635, 4
        %v1124 = vadd.f32 %v635, %v1123
        %v1125 = vrot.slane %v1124, 2
        %v1126 = vadd.f32 %v1124, %v1125
        %v1127 = vrot.slane %v1126, 1
        %v1128 = vadd.f32 %v1126, %v1127
        %v1129 = vrot.slane %v636, 4
        %v1130 = vadd.f32 %v636, %v1129
        %v1131 = vrot.slane %v1130, 2
        %v1132 = vadd.f32 %v1130, %v1131
        %v1133 = vrot.slane %v1132, 1
        %v1134 = vadd.f32 %v1132, %v1133
        %v1135 = vrot.slane %v637, 4
        %v1136 = vadd.f32 %v637, %v1135
        %v1137 = vrot.slane %v1136, 2
        %v1138 = vadd.f32 %v1136, %v1137
        %v1139 = vrot.slane %v1138, 1
        %v1140 = vadd.f32 %v1138, %v1139
        %v1141 = vrot.slane %v638, 4
        %v1142 = vadd.f32 %v638, %v1141
        %v1143 = vrot.slane %v1142, 2
        %v1144 = vadd.f32 %v1142, %v1143
        %v1145 = vrot.slane %v1144, 1
        %v1146 = vadd.f32 %v1144, %v1145
        %v1147 = vrot.slane %v639, 4
        %v1148 = vadd.f32 %v639, %v1147
        %v1149 = vrot.slane %v1148, 2
        %v1150 = vadd.f32 %v1148, %v1149
        %v1151 = vrot.slane %v1150, 1
        %v1152 = vadd.f32 %v1150, %v1151
        %v1153 = vrot.slane %v640, 4
        %v1154 = vadd.f32 %v640, %v1153
        %v1155 = vrot.slane %v1154, 2
        %v1156 = vadd.f32 %v1154, %v1155
        %v1157 = vrot.slane %v1156, 1
        %v1158 = vadd.f32 %v1156, %v1157
        %v1159 = vrot.slane %v641, 4
        %v1160 = vadd.f32 %v641, %v1159
        %v1161 = vrot.slane %v1160, 2
        %v1162 = vadd.f32 %v1160, %v1161
        %v1163 = vrot.slane %v1162, 1
        %v1164 = vadd.f32 %v1162, %v1163
        %v1165 = vrot.slane %v642, 4
        %v1166 = vadd.f32 %v642, %v1165
        %v1167 = vrot.slane %v1166, 2
        %v1168 = vadd.f32 %v1166, %v1167
        %v1169 = vrot.slane %v1168, 1
        %v1170 = vadd.f32 %v1168, %v1169
        %v1171 = vrot.slane %v643, 4
        %v1172 = vadd.f32 %v643, %v1171
        %v1173 = vrot.slane %v1172, 2
        %v1174 = vadd.f32 %v1172, %v1173
        %v1175 = vrot.slane %v1174, 1
        %v1176 = vadd.f32 %v1174, %v1175
        %v1177 = vrot.slane %v644, 4
        %v1178 = vadd.f32 %v644, %v1177
        %v1179 = vrot.slane %v1178, 2
        %v1180 = vadd.f32 %v1178, %v1179
        %v1181 = vrot.slane %v1180, 1
        %v1182 = vadd.f32 %v1180, %v1181
        %v1183 = vrot.slane %v645, 4
        %v1184 = vadd.f32 %v645, %v1183
        %v1185 = vrot.slane %v1184, 2
        %v1186 = vadd.f32 %v1184, %v1185
        %v1187 = vrot.slane %v1186, 1
        %v1188 = vadd.f32 %v1186, %v1187
        %v1189 = vrot.slane %v646, 4
        %v1190 = vadd.f32 %v646, %v1189
        %v1191 = vrot.slane %v1190, 2
        %v1192 = vadd.f32 %v1190, %v1191
        %v1193 = vrot.slane %v1192, 1
        %v1194 = vadd.f32 %v1192, %v1193
        %v1195 = vrot.slane %v647, 4
        %v1196 = vadd.f32 %v647, %v1195
        %v1197 = vrot.slane %v1196, 2
        %v1198 = vadd.f32 %v1196, %v1197
        %v1199 = vrot.slane %v1198, 1
        %v1200 = vadd.f32 %v1198, %v1199
        %v1201 = vrot.slane %v648, 4
        %v1202 = vadd.f32 %v648, %v1201
        %v1203 = vrot.slane %v1202, 2
        %v1204 = vadd.f32 %v1202, %v1203
        %v1205 = vrot.slane %v1204, 1
        %v1206 = vadd.f32 %v1204, %v1205
        %v1207 = vrot.slane %v649, 4
        %v1208 = vadd.f32 %v649, %v1207
        %v1209 = vrot.slane %v1208, 2
        %v1210 = vadd.f32 %v1208, %v1209
        %v1211 = vrot.slane %v1210, 1
        %v1212 = vadd.f32 %v1210, %v1211
        %v1213 = vrot.slane %v650, 4
        %v1214 = vadd.f32 %v650, %v1213
        %v1215 = vrot.slane %v1214, 2
        %v1216 = vadd.f32 %v1214, %v1215
        %v1217 = vrot.slane %v1216, 1
        %v1218 = vadd.f32 %v1216, %v1217
        %v1219 = vrot.slane %v651, 4
        %v1220 = vadd.f32 %v651, %v1219
        %v1221 = vrot.slane %v1220, 2
        %v1222 = vadd.f32 %v1220, %v1221
        %v1223 = vrot.slane %v1222, 1
        %v1224 = vadd.f32 %v1222, %v1223
        %v1225 = vrot.slane %v652, 4
        %v1226 = vadd.f32 %v652, %v1225
        %v1227 = vrot.slane %v1226, 2
        %v1228 = vadd.f32 %v1226, %v1227
        %v1229 = vrot.slane %v1228, 1
        %v1230 = vadd.f32 %v1228, %v1229
        %v1231 = vrot.slane %v653, 4
        %v1232 = vadd.f32 %v653, %v1231
        %v1233 = vrot.slane %v1232, 2
        %v1234 = vadd.f32 %v1232, %v1233
        %v1235 = vrot.slane %v1234, 1
        %v1236 = vadd.f32 %v1234, %v1235
        %v1237 = vrot.slane %v654, 4
        %v1238 = vadd.f32 %v654, %v1237
        %v1239 = vrot.slane %v1238, 2
        %v1240 = vadd.f32 %v1238, %v1239
        %v1241 = vrot.slane %v1240, 1
        %v1242 = vadd.f32 %v1240, %v1241
        %v1243 = vrot.slane %v655, 4
        %v1244 = vadd.f32 %v655, %v1243
        %v1245 = vrot.slane %v1244, 2
        %v1246 = vadd.f32 %v1244, %v1245
        %v1247 = vrot.slane %v1246, 1
        %v1248 = vadd.f32 %v1246, %v1247
        %v1249 = vrot.slane %v656, 4
        %v1250 = vadd.f32 %v656, %v1249
        %v1251 = vrot.slane %v1250, 2
        %v1252 = vadd.f32 %v1250, %v1251
        %v1253 = vrot.slane %v1252, 1
        %v1254 = vadd.f32 %v1252, %v1253
        %v1255 = vrot.slane %v657, 4
        %v1256 = vadd.f32 %v657, %v1255
        %v1257 = vrot.slane %v1256, 2
        %v1258 = vadd.f32 %v1256, %v1257
        %v1259 = vrot.slane %v1258, 1
        %v1260 = vadd.f32 %v1258, %v1259
        %v1261 = vrot.slane %v658, 4
        %v1262 = vadd.f32 %v658, %v1261
        %v1263 = vrot.slane %v1262, 2
        %v1264 = vadd.f32 %v1262, %v1263
        %v1265 = vrot.slane %v1264, 1
        %v1266 = vadd.f32 %v1264, %v1265
        %v1267 = vrot.slane %v659, 4
        %v1268 = vadd.f32 %v659, %v1267
        %v1269 = vrot.slane %v1268, 2
        %v1270 = vadd.f32 %v1268, %v1269
        %v1271 = vrot.slane %v1270, 1
        %v1272 = vadd.f32 %v1270, %v1271
        %v1273 = vrot.slane %v660, 4
        %v1274 = vadd.f32 %v660, %v1273
        %v1275 = vrot.slane %v1274, 2
        %v1276 = vadd.f32 %v1274, %v1275
        %v1277 = vrot.slane %v1276, 1
        %v1278 = vadd.f32 %v1276, %v1277
        %v1279 = vrot.slane %v661, 4
        %v1280 = vadd.f32 %v661, %v1279
        %v1281 = vrot.slane %v1280, 2
        %v1282 = vadd.f32 %v1280, %v1281
        %v1283 = vrot.slane %v1282, 1
        %v1284 = vadd.f32 %v1282, %v1283
        %v1285 = vrot.slane %v662, 4
        %v1286 = vadd.f32 %v662, %v1285
        %v1287 = vrot.slane %v1286, 2
        %v1288 = vadd.f32 %v1286, %v1287
        %v1289 = vrot.slane %v1288, 1
        %v1290 = vadd.f32 %v1288, %v1289
        %v1291 = vrot.slane %v663, 4
        %v1292 = vadd.f32 %v663, %v1291
        %v1293 = vrot.slane %v1292, 2
        %v1294 = vadd.f32 %v1292, %v1293
        %v1295 = vrot.slane %v1294, 1
        %v1296 = vadd.f32 %v1294, %v1295
        %v1297 = vrot.slane %v664, 4
        %v1298 = vadd.f32 %v664, %v1297
        %v1299 = vrot.slane %v1298, 2
        %v1300 = vadd.f32 %v1298, %v1299
        %v1301 = vrot.slane %v1300, 1
        %v1302 = vadd.f32 %v1300, %v1301
        %v1303 = vrot.slane %v665, 4
        %v1304 = vadd.f32 %v665, %v1303
        %v1305 = vrot.slane %v1304, 2
        %v1306 = vadd.f32 %v1304, %v1305
        %v1307 = vrot.slane %v1306, 1
        %v1308 = vadd.f32 %v1306, %v1307
        %v1309 = vrot.slane %v666, 4
        %v1310 = vadd.f32 %v666, %v1309
        %v1311 = vrot.slane %v1310, 2
        %v1312 = vadd.f32 %v1310, %v1311
        %v1313 = vrot.slane %v1312, 1
        %v1314 = vadd.f32 %v1312, %v1313
        %v1315 = vrot.slane %v667, 4
        %v1316 = vadd.f32 %v667, %v1315
        %v1317 = vrot.slane %v1316, 2
        %v1318 = vadd.f32 %v1316, %v1317
        %v1319 = vrot.slane %v1318, 1
        %v1320 = vadd.f32 %v1318, %v1319
        %v1321 = vrot.slane %v668, 4
        %v1322 = vadd.f32 %v668, %v1321
        %v1323 = vrot.slane %v1322, 2
        %v1324 = vadd.f32 %v1322, %v1323
        %v1325 = vrot.slane %v1324, 1
        %v1326 = vadd.f32 %v1324, %v1325
        %v1327 = vrot.slane %v669, 4
        %v1328 = vadd.f32 %v669, %v1327
        %v1329 = vrot.slane %v1328, 2
        %v1330 = vadd.f32 %v1328, %v1329
        %v1331 = vrot.slane %v1330, 1
        %v1332 = vadd.f32 %v1330, %v1331
        %v1333 = vrot.slane %v670, 4
        %v1334 = vadd.f32 %v670, %v1333
        %v1335 = vrot.slane %v1334, 2
        %v1336 = vadd.f32 %v1334, %v1335
        %v1337 = vrot.slane %v1336, 1
        %v1338 = vadd.f32 %v1336, %v1337
        %v1339 = vrot.slane %v671, 4
        %v1340 = vadd.f32 %v671, %v1339
        %v1341 = vrot.slane %v1340, 2
        %v1342 = vadd.f32 %v1340, %v1341
        %v1343 = vrot.slane %v1342, 1
        %v1344 = vadd.f32 %v1342, %v1343
        %v1345 = vrot.slane %v672, 4
        %v1346 = vadd.f32 %v672, %v1345
        %v1347 = vrot.slane %v1346, 2
        %v1348 = vadd.f32 %v1346, %v1347
        %v1349 = vrot.slane %v1348, 1
        %v1350 = vadd.f32 %v1348, %v1349
        %v1351 = vrot.slane %v673, 4
        %v1352 = vadd.f32 %v673, %v1351
        %v1353 = vrot.slane %v1352, 2
        %v1354 = vadd.f32 %v1352, %v1353
        %v1355 = vrot.slane %v1354, 1
        %v1356 = vadd.f32 %v1354, %v1355
        %v1357 = vrot.slane %v674, 4
        %v1358 = vadd.f32 %v674, %v1357
        %v1359 = vrot.slane %v1358, 2
        %v1360 = vadd.f32 %v1358, %v1359
        %v1361 = vrot.slane %v1360, 1
        %v1362 = vadd.f32 %v1360, %v1361
        %v1363 = vrot.slane %v675, 4
        %v1364 = vadd.f32 %v675, %v1363
        %v1365 = vrot.slane %v1364, 2
        %v1366 = vadd.f32 %v1364, %v1365
        %v1367 = vrot.slane %v1366, 1
        %v1368 = vadd.f32 %v1366, %v1367
        %v1369 = vrot.slane %v676, 4
        %v1370 = vadd.f32 %v676, %v1369
        %v1371 = vrot.slane %v1370, 2
        %v1372 = vadd.f32 %v1370, %v1371
        %v1373 = vrot.slane %v1372, 1
        %v1374 = vadd.f32 %v1372, %v1373
        %v1375 = vrot.slane %v677, 4
        %v1376 = vadd.f32 %v677, %v1375
        %v1377 = vrot.slane %v1376, 2
        %v1378 = vadd.f32 %v1376, %v1377
        %v1379 = vrot.slane %v1378, 1
        %v1380 = vadd.f32 %v1378, %v1379
        %v1381 = vrot.slane %v678, 4
        %v1382 = vadd.f32 %v678, %v1381
        %v1383 = vrot.slane %v1382, 2
        %v1384 = vadd.f32 %v1382, %v1383
        %v1385 = vrot.slane %v1384, 1
        %v1386 = vadd.f32 %v1384, %v1385
        %v1387 = vrot.slane %v679, 4
        %v1388 = vadd.f32 %v679, %v1387
        %v1389 = vrot.slane %v1388, 2
        %v1390 = vadd.f32 %v1388, %v1389
        %v1391 = vrot.slane %v1390, 1
        %v1392 = vadd.f32 %v1390, %v1391
        %v1393 = vrot.slane %v680, 4
        %v1394 = vadd.f32 %v680, %v1393
        %v1395 = vrot.slane %v1394, 2
        %v1396 = vadd.f32 %v1394, %v1395
        %v1397 = vrot.slane %v1396, 1
        %v1398 = vadd.f32 %v1396, %v1397
        %v1399 = vrot.slane %v681, 4
        %v1400 = vadd.f32 %v681, %v1399
        %v1401 = vrot.slane %v1400, 2
        %v1402 = vadd.f32 %v1400, %v1401
        %v1403 = vrot.slane %v1402, 1
        %v1404 = vadd.f32 %v1402, %v1403
        %v1405 = vrot.slane %v682, 4
        %v1406 = vadd.f32 %v682, %v1405
        %v1407 = vrot.slane %v1406, 2
        %v1408 = vadd.f32 %v1406, %v1407
        %v1409 = vrot.slane %v1408, 1
        %v1410 = vadd.f32 %v1408, %v1409
        %v1411 = vrot.slane %v683, 4
        %v1412 = vadd.f32 %v683, %v1411
        %v1413 = vrot.slane %v1412, 2
        %v1414 = vadd.f32 %v1412, %v1413
        %v1415 = vrot.slane %v1414, 1
        %v1416 = vadd.f32 %v1414, %v1415
        %v1417 = vrot.slane %v684, 4
        %v1418 = vadd.f32 %v684, %v1417
        %v1419 = vrot.slane %v1418, 2
        %v1420 = vadd.f32 %v1418, %v1419
        %v1421 = vrot.slane %v1420, 1
        %v1422 = vadd.f32 %v1420, %v1421
        %v1423 = vrot.slane %v685, 4
        %v1424 = vadd.f32 %v685, %v1423
        %v1425 = vrot.slane %v1424, 2
        %v1426 = vadd.f32 %v1424, %v1425
        %v1427 = vrot.slane %v1426, 1
        %v1428 = vadd.f32 %v1426, %v1427
        %v1429 = vrot.slane %v686, 4
        %v1430 = vadd.f32 %v686, %v1429
        %v1431 = vrot.slane %v1430, 2
        %v1432 = vadd.f32 %v1430, %v1431
        %v1433 = vrot.slane %v1432, 1
        %v1434 = vadd.f32 %v1432, %v1433
        %v1435 = vrot.slane %v687, 4
        %v1436 = vadd.f32 %v687, %v1435
        %v1437 = vrot.slane %v1436, 2
        %v1438 = vadd.f32 %v1436, %v1437
        %v1439 = vrot.slane %v1438, 1
        %v1440 = vadd.f32 %v1438, %v1439
        %v1441 = vrot.slane %v688, 4
        %v1442 = vadd.f32 %v688, %v1441
        %v1443 = vrot.slane %v1442, 2
        %v1444 = vadd.f32 %v1442, %v1443
        %v1445 = vrot.slane %v1444, 1
        %v1446 = vadd.f32 %v1444, %v1445
        %v1447 = vrot.slane %v689, 4
        %v1448 = vadd.f32 %v689, %v1447
        %v1449 = vrot.slane %v1448, 2
        %v1450 = vadd.f32 %v1448, %v1449
        %v1451 = vrot.slane %v1450, 1
        %v1452 = vadd.f32 %v1450, %v1451
        %v1453 = vrot.slane %v690, 4
        %v1454 = vadd.f32 %v690, %v1453
        %v1455 = vrot.slane %v1454, 2
        %v1456 = vadd.f32 %v1454, %v1455
        %v1457 = vrot.slane %v1456, 1
        %v1458 = vadd.f32 %v1456, %v1457
        %v1459 = vadd.f32 %v696, 0.0
        %v1460 = vadd.f32 %v702, 0.0
        %v1461 = vadd.f32 %v708, 0.0
        %v1462 = vadd.f32 %v714, 0.0
        %v1463 = vadd.f32 %v720, 0.0
        %v1464 = vadd.f32 %v726, 0.0
        %v1465 = vadd.f32 %v732, 0.0
        %v1466 = vadd.f32 %v738, 0.0
        %v1467 = vadd.f32 %v744, 0.0
        %v1468 = vadd.f32 %v750, 0.0
        %v1469 = vadd.f32 %v756, 0.0
        %v1470 = vadd.f32 %v762, 0.0
        %v1471 = vadd.f32 %v768, 0.0
        %v1472 = vadd.f32 %v774, 0.0
        %v1473 = vadd.f32 %v780, 0.0
        %v1474 = vadd.f32 %v786, 0.0
        %v1475 = vadd.f32 %v792, 0.0
        %v1476 = vadd.f32 %v798, 0.0
        %v1477 = vadd.f32 %v804, 0.0
        %v1478 = vadd.f32 %v810, 0.0
        %v1479 = vadd.f32 %v816, 0.0
        %v1480 = vadd.f32 %v822, 0.0
        %v1481 = vadd.f32 %v828, 0.0
        %v1482 = vadd.f32 %v834, 0.0
        %v1483 = vadd.f32 %v840, 0.0
        %v1484 = vadd.f32 %v846, 0.0
        %v1485 = vadd.f32 %v852, 0.0
        %v1486 = vadd.f32 %v858, 0.0
        %v1487 = vadd.f32 %v864, 0.0
        %v1488 = vadd.f32 %v870, 0.0
        %v1489 = vadd.f32 %v876, 0.0
        %v1490 = vadd.f32 %v882, 0.0
        %v1491 = vadd.f32 %v888, 0.0
        %v1492 = vadd.f32 %v894, 0.0
        %v1493 = vadd.f32 %v900, 0.0
        %v1494 = vadd.f32 %v906, 0.0
        %v1495 = vadd.f32 %v912, 0.0
        %v1496 = vadd.f32 %v918, 0.0
        %v1497 = vadd.f32 %v924, 0.0
        %v1498 = vadd.f32 %v930, 0.0
        %v1499 = vadd.f32 %v936, 0.0
        %v1500 = vadd.f32 %v942, 0.0
        %v1501 = vadd.f32 %v948, 0.0
        %v1502 = vadd.f32 %v954, 0.0
        %v1503 = vadd.f32 %v960, 0.0
        %v1504 = vadd.f32 %v966, 0.0
        %v1505 = vadd.f32 %v972, 0.0
        %v1506 = vadd.f32 %v978, 0.0
        %v1507 = vadd.f32 %v984, 0.0
        %v1508 = vadd.f32 %v990, 0.0
        %v1509 = vadd.f32 %v996, 0.0
        %v1510 = vadd.f32 %v1002, 0.0
        %v1511 = vadd.f32 %v1008, 0.0
        %v1512 = vadd.f32 %v1014, 0.0
        %v1513 = vadd.f32 %v1020, 0.0
        %v1514 = vadd.f32 %v1026, 0.0
        %v1515 = vadd.f32 %v1032, 0.0
        %v1516 = vadd.f32 %v1038, 0.0
        %v1517 = vadd.f32 %v1044, 0.0
        %v1518 = vadd.f32 %v1050, 0.0
        %v1519 = vadd.f32 %v1056, 0.0
        %v1520 = vadd.f32 %v1062, 0.0
        %v1521 = vadd.f32 %v1068, 0.0
        %v1522 = vadd.f32 %v1074, 0.0
        %v1523 = vadd.f32 %v1080, 0.0
        %v1524 = vadd.f32 %v1086, 0.0
        %v1525 = vadd.f32 %v1092, 0.0
        %v1526 = vadd.f32 %v1098, 0.0
        %v1527 = vadd.f32 %v1104, 0.0
        %v1528 = vadd.f32 %v1110, 0.0
        %v1529 = vadd.f32 %v1116, 0.0
        %v1530 = vadd.f32 %v1122, 0.0
        %v1531 = vadd.f32 %v1128, 0.0
        %v1532 = vadd.f32 %v1134, 0.0
        %v1533 = vadd.f32 %v1140, 0.0
        %v1534 = vadd.f32 %v1146, 0.0
        %v1535 = vadd.f32 %v1152, 0.0
        %v1536 = vadd.f32 %v1158, 0.0
        %v1537 = vadd.f32 %v1164, 0.0
        %v1538 = vadd.f32 %v1170, 0.0
        %v1539 = vadd.f32 %v1176, 0.0
        %v1540 = vadd.f32 %v1182, 0.0
        %v1541 = vadd.f32 %v1188, 0.0
        %v1542 = vadd.f32 %v1194, 0.0
        %v1543 = vadd.f32 %v1200, 0.0
        %v1544 = vadd.f32 %v1206, 0.0
        %v1545 = vadd.f32 %v1212, 0.0
        %v1546 = vadd.f32 %v1218, 0.0
        %v1547 = vadd.f32 %v1224, 0.0
        %v1548 = vadd.f32 %v1230, 0.0
        %v1549 = vadd.f32 %v1236, 0.0
        %v1550 = vadd.f32 %v1242, 0.0
        %v1551 = vadd.f32 %v1248, 0.0
        %v1552 = vadd.f32 %v1254, 0.0
        %v1553 = vadd.f32 %v1260, 0.0
        %v1554 = vadd.f32 %v1266, 0.0
        %v1555 = vadd.f32 %v1272, 0.0
        %v1556 = vadd.f32 %v1278, 0.0
        %v1557 = vadd.f32 %v1284, 0.0
        %v1558 = vadd.f32 %v1290, 0.0
        %v1559 = vadd.f32 %v1296, 0.0
        %v1560 = vadd.f32 %v1302, 0.0
        %v1561 = vadd.f32 %v1308, 0.0
        %v1562 = vadd.f32 %v1314, 0.0
        %v1563 = vadd.f32 %v1320, 0.0
        %v1564 = vadd.f32 %v1326, 0.0
        %v1565 = vadd.f32 %v1332, 0.0
        %v1566 = vadd.f32 %v1338, 0.0
        %v1567 = vadd.f32 %v1344, 0.0
        %v1568 = vadd.f32 %v1350, 0.0
        %v1569 = vadd.f32 %v1356, 0.0
        %v1570 = vadd.f32 %v1362, 0.0
        %v1571 = vadd.f32 %v1368, 0.0
        %v1572 = vadd.f32 %v1374, 0.0
        %v1573 = vadd.f32 %v1380, 0.0
        %v1574 = vadd.f32 %v1386, 0.0
        %v1575 = vadd.f32 %v1392, 0.0
        %v1576 = vadd.f32 %v1398, 0.0
        %v1577 = vadd.f32 %v1404, 0.0
        %v1578 = vadd.f32 %v1410, 0.0
        %v1579 = vadd.f32 %v1416, 0.0
        %v1580 = vadd.f32 %v1422, 0.0
        %v1581 = vadd.f32 %v1428, 0.0
        %v1582 = vadd.f32 %v1434, 0.0
        %v1583 = vadd.f32 %v1440, 0.0
        %v1584 = vadd.f32 %v1446, 0.0
        %v1585 = vadd.f32 %v1452, 0.0
        %v1586 = vadd.f32 %v1458, 0.0
        %v1587 = vld [vmem:[%s489 + $0x40] sm:$0x11]
        %v1588 = vld [vmem:[%s489 + $0x48] sm:$0x11]
        %v1589 = vld [vmem:[%s489 + $0x50] sm:$0x11]
        %v1590 = vld [vmem:[%s489 + $0x58] sm:$0x11]
        %v1591 = vld [vmem:[%s489 + $0x60] sm:$0x11]
        %v1592 = vld [vmem:[%s489 + $0x68] sm:$0x11]
        %v1593 = vld [vmem:[%s489 + $0x70] sm:$0x11]
        %v1594 = vld [vmem:[%s489 + $0x78] sm:$0x11]
        %v1595 = vld [vmem:[%s489 + $0xc0] sm:$0x11]
        %v1596 = vld [vmem:[%s489 + $0xc8] sm:$0x11]
        %v1597 = vld [vmem:[%s489 + $0xd0] sm:$0x11]
        %v1598 = vld [vmem:[%s489 + $0xd8] sm:$0x11]
        %v1599 = vld [vmem:[%s489 + $0xe0] sm:$0x11]
        %v1600 = vld [vmem:[%s489 + $0xe8] sm:$0x11]
        %v1601 = vld [vmem:[%s489 + $0xf0] sm:$0x11]
        %v1602 = vld [vmem:[%s489 + $0xf8] sm:$0x11]
        %v1603 = vld [vmem:[%s489 + $0x140] sm:$0x11]
        %v1604 = vld [vmem:[%s489 + $0x148] sm:$0x11]
        %v1605 = vld [vmem:[%s489 + $0x150] sm:$0x11]
        %v1606 = vld [vmem:[%s489 + $0x158] sm:$0x11]
        %v1607 = vld [vmem:[%s489 + $0x160] sm:$0x11]
        %v1608 = vld [vmem:[%s489 + $0x168] sm:$0x11]
        %v1609 = vld [vmem:[%s489 + $0x170] sm:$0x11]
        %v1610 = vld [vmem:[%s489 + $0x178] sm:$0x11]
        %v1611 = vld [vmem:[%s489 + $0x1c0] sm:$0x11]
        %v1612 = vld [vmem:[%s489 + $0x1c8] sm:$0x11]
        %v1613 = vld [vmem:[%s489 + $0x1d0] sm:$0x11]
        %v1614 = vld [vmem:[%s489 + $0x1d8] sm:$0x11]
        %v1615 = vld [vmem:[%s489 + $0x1e0] sm:$0x11]
        %v1616 = vld [vmem:[%s489 + $0x1e8] sm:$0x11]
        %v1617 = vld [vmem:[%s489 + $0x1f0] sm:$0x11]
        %v1618 = vld [vmem:[%s489 + $0x1f8] sm:$0x11]
        %v1619 = vld [vmem:[%s489 + $0x240] sm:$0x11]
        %v1620 = vld [vmem:[%s489 + $0x248] sm:$0x11]
        %v1621 = vld [vmem:[%s489 + $0x250] sm:$0x11]
        %v1622 = vld [vmem:[%s489 + $0x258] sm:$0x11]
        %v1623 = vld [vmem:[%s489 + $0x260] sm:$0x11]
        %v1624 = vld [vmem:[%s489 + $0x268] sm:$0x11]
        %v1625 = vld [vmem:[%s489 + $0x270] sm:$0x11]
        %v1626 = vld [vmem:[%s489 + $0x278] sm:$0x11]
        %v1627 = vld [vmem:[%s489 + $0x2c0] sm:$0x11]
        %v1628 = vld [vmem:[%s489 + $0x2c8] sm:$0x11]
        %v1629 = vld [vmem:[%s489 + $0x2d0] sm:$0x11]
        %v1630 = vld [vmem:[%s489 + $0x2d8] sm:$0x11]
        %v1631 = vld [vmem:[%s489 + $0x2e0] sm:$0x11]
        %v1632 = vld [vmem:[%s489 + $0x2e8] sm:$0x11]
        %v1633 = vld [vmem:[%s489 + $0x2f0] sm:$0x11]
        %v1634 = vld [vmem:[%s489 + $0x2f8] sm:$0x11]
        %v1635 = vld [vmem:[%s489 + $0x340] sm:$0x11]
        %v1636 = vld [vmem:[%s489 + $0x348] sm:$0x11]
        %v1637 = vld [vmem:[%s489 + $0x350] sm:$0x11]
        %v1638 = vld [vmem:[%s489 + $0x358] sm:$0x11]
        %v1639 = vld [vmem:[%s489 + $0x360] sm:$0x11]
        %v1640 = vld [vmem:[%s489 + $0x368] sm:$0x11]
        %v1641 = vld [vmem:[%s489 + $0x370] sm:$0x11]
        %v1642 = vld [vmem:[%s489 + $0x378] sm:$0x11]
        %v1643 = vld [vmem:[%s489 + $0x3c0] sm:$0x11]
        %v1644 = vld [vmem:[%s489 + $0x3c8] sm:$0x11]
        %v1645 = vld [vmem:[%s489 + $0x3d0] sm:$0x11]
        %v1646 = vld [vmem:[%s489 + $0x3d8] sm:$0x11]
        %v1647 = vld [vmem:[%s489 + $0x3e0] sm:$0x11]
        %v1648 = vld [vmem:[%s489 + $0x3e8] sm:$0x11]
        %v1649 = vld [vmem:[%s489 + $0x3f0] sm:$0x11]
        %v1650 = vld [vmem:[%s489 + $0x3f8] sm:$0x11]
        %v1651 = vunpack.c.l.bf16 %v1587
        %v1652 = vunpack.c.h.bf16 %v1587
        %v1653 = vunpack.c.l.bf16 %v1588
        %v1654 = vunpack.c.h.bf16 %v1588
        %v1655 = vunpack.c.l.bf16 %v1589
        %v1656 = vunpack.c.h.bf16 %v1589
        %v1657 = vunpack.c.l.bf16 %v1590
        %v1658 = vunpack.c.h.bf16 %v1590
        %v1659 = vunpack.c.l.bf16 %v1591
        %v1660 = vunpack.c.h.bf16 %v1591
        %v1661 = vunpack.c.l.bf16 %v1592
        %v1662 = vunpack.c.h.bf16 %v1592
        %v1663 = vunpack.c.l.bf16 %v1593
        %v1664 = vunpack.c.h.bf16 %v1593
        %v1665 = vunpack.c.l.bf16 %v1594
        %v1666 = vunpack.c.h.bf16 %v1594
        %v1667 = vunpack.c.l.bf16 %v1595
        %v1668 = vunpack.c.h.bf16 %v1595
        %v1669 = vunpack.c.l.bf16 %v1596
        %v1670 = vunpack.c.h.bf16 %v1596
        %v1671 = vunpack.c.l.bf16 %v1597
        %v1672 = vunpack.c.h.bf16 %v1597
        %v1673 = vunpack.c.l.bf16 %v1598
        %v1674 = vunpack.c.h.bf16 %v1598
        %v1675 = vunpack.c.l.bf16 %v1599
        %v1676 = vunpack.c.h.bf16 %v1599
        %v1677 = vunpack.c.l.bf16 %v1600
        %v1678 = vunpack.c.h.bf16 %v1600
        %v1679 = vunpack.c.l.bf16 %v1601
        %v1680 = vunpack.c.h.bf16 %v1601
        %v1681 = vunpack.c.l.bf16 %v1602
        %v1682 = vunpack.c.h.bf16 %v1602
        %v1683 = vunpack.c.l.bf16 %v1603
        %v1684 = vunpack.c.h.bf16 %v1603
        %v1685 = vunpack.c.l.bf16 %v1604
        %v1686 = vunpack.c.h.bf16 %v1604
        %v1687 = vunpack.c.l.bf16 %v1605
        %v1688 = vunpack.c.h.bf16 %v1605
        %v1689 = vunpack.c.l.bf16 %v1606
        %v1690 = vunpack.c.h.bf16 %v1606
        %v1691 = vunpack.c.l.bf16 %v1607
        %v1692 = vunpack.c.h.bf16 %v1607
        %v1693 = vunpack.c.l.bf16 %v1608
        %v1694 = vunpack.c.h.bf16 %v1608
        %v1695 = vunpack.c.l.bf16 %v1609
        %v1696 = vunpack.c.h.bf16 %v1609
        %v1697 = vunpack.c.l.bf16 %v1610
        %v1698 = vunpack.c.h.bf16 %v1610
        %v1699 = vunpack.c.l.bf16 %v1611
        %v1700 = vunpack.c.h.bf16 %v1611
        %v1701 = vunpack.c.l.bf16 %v1612
        %v1702 = vunpack.c.h.bf16 %v1612
        %v1703 = vunpack.c.l.bf16 %v1613
        %v1704 = vunpack.c.h.bf16 %v1613
        %v1705 = vunpack.c.l.bf16 %v1614
        %v1706 = vunpack.c.h.bf16 %v1614
        %v1707 = vunpack.c.l.bf16 %v1615
        %v1708 = vunpack.c.h.bf16 %v1615
        %v1709 = vunpack.c.l.bf16 %v1616
        %v1710 = vunpack.c.h.bf16 %v1616
        %v1711 = vunpack.c.l.bf16 %v1617
        %v1712 = vunpack.c.h.bf16 %v1617
        %v1713 = vunpack.c.l.bf16 %v1618
        %v1714 = vunpack.c.h.bf16 %v1618
        %v1715 = vunpack.c.l.bf16 %v1619
        %v1716 = vunpack.c.h.bf16 %v1619
        %v1717 = vunpack.c.l.bf16 %v1620
        %v1718 = vunpack.c.h.bf16 %v1620
        %v1719 = vunpack.c.l.bf16 %v1621
        %v1720 = vunpack.c.h.bf16 %v1621
        %v1721 = vunpack.c.l.bf16 %v1622
        %v1722 = vunpack.c.h.bf16 %v1622
        %v1723 = vunpack.c.l.bf16 %v1623
        %v1724 = vunpack.c.h.bf16 %v1623
        %v1725 = vunpack.c.l.bf16 %v1624
        %v1726 = vunpack.c.h.bf16 %v1624
        %v1727 = vunpack.c.l.bf16 %v1625
        %v1728 = vunpack.c.h.bf16 %v1625
        %v1729 = vunpack.c.l.bf16 %v1626
        %v1730 = vunpack.c.h.bf16 %v1626
        %v1731 = vunpack.c.l.bf16 %v1627
        %v1732 = vunpack.c.h.bf16 %v1627
        %v1733 = vunpack.c.l.bf16 %v1628
        %v1734 = vunpack.c.h.bf16 %v1628
        %v1735 = vunpack.c.l.bf16 %v1629
        %v1736 = vunpack.c.h.bf16 %v1629
        %v1737 = vunpack.c.l.bf16 %v1630
        %v1738 = vunpack.c.h.bf16 %v1630
        %v1739 = vunpack.c.l.bf16 %v1631
        %v1740 = vunpack.c.h.bf16 %v1631
        %v1741 = vunpack.c.l.bf16 %v1632
        %v1742 = vunpack.c.h.bf16 %v1632
        %v1743 = vunpack.c.l.bf16 %v1633
        %v1744 = vunpack.c.h.bf16 %v1633
        %v1745 = vunpack.c.l.bf16 %v1634
        %v1746 = vunpack.c.h.bf16 %v1634
        %v1747 = vunpack.c.l.bf16 %v1635
        %v1748 = vunpack.c.h.bf16 %v1635
        %v1749 = vunpack.c.l.bf16 %v1636
        %v1750 = vunpack.c.h.bf16 %v1636
        %v1751 = vunpack.c.l.bf16 %v1637
        %v1752 = vunpack.c.h.bf16 %v1637
        %v1753 = vunpack.c.l.bf16 %v1638
        %v1754 = vunpack.c.h.bf16 %v1638
        %v1755 = vunpack.c.l.bf16 %v1639
        %v1756 = vunpack.c.h.bf16 %v1639
        %v1757 = vunpack.c.l.bf16 %v1640
        %v1758 = vunpack.c.h.bf16 %v1640
        %v1759 = vunpack.c.l.bf16 %v1641
        %v1760 = vunpack.c.h.bf16 %v1641
        %v1761 = vunpack.c.l.bf16 %v1642
        %v1762 = vunpack.c.h.bf16 %v1642
        %v1763 = vunpack.c.l.bf16 %v1643
        %v1764 = vunpack.c.h.bf16 %v1643
        %v1765 = vunpack.c.l.bf16 %v1644
        %v1766 = vunpack.c.h.bf16 %v1644
        %v1767 = vunpack.c.l.bf16 %v1645
        %v1768 = vunpack.c.h.bf16 %v1645
        %v1769 = vunpack.c.l.bf16 %v1646
        %v1770 = vunpack.c.h.bf16 %v1646
        %v1771 = vunpack.c.l.bf16 %v1647
        %v1772 = vunpack.c.h.bf16 %v1647
        %v1773 = vunpack.c.l.bf16 %v1648
        %v1774 = vunpack.c.h.bf16 %v1648
        %v1775 = vunpack.c.l.bf16 %v1649
        %v1776 = vunpack.c.h.bf16 %v1649
        %v1777 = vunpack.c.l.bf16 %v1650
        %v1778 = vunpack.c.h.bf16 %v1650
        %v1779 = vadd.f32 %v1651, 0.0
        %v1780 = vadd.f32 %v1652, 0.0
        %v1781 = vadd.f32 %v1653, 0.0
        %v1782 = vadd.f32 %v1654, 0.0
        %v1783 = vadd.f32 %v1655, 0.0
        %v1784 = vadd.f32 %v1656, 0.0
        %v1785 = vadd.f32 %v1657, 0.0
        %v1786 = vadd.f32 %v1658, 0.0
        %v1787 = vadd.f32 %v1659, 0.0
        %v1788 = vadd.f32 %v1660, 0.0
        %v1789 = vadd.f32 %v1661, 0.0
        %v1790 = vadd.f32 %v1662, 0.0
        %v1791 = vadd.f32 %v1663, 0.0
        %v1792 = vadd.f32 %v1664, 0.0
        %v1793 = vadd.f32 %v1665, 0.0
        %v1794 = vadd.f32 %v1666, 0.0
        %v1795 = vadd.f32 %v1667, 0.0
        %v1796 = vadd.f32 %v1668, 0.0
        %v1797 = vadd.f32 %v1669, 0.0
        %v1798 = vadd.f32 %v1670, 0.0
        %v1799 = vadd.f32 %v1671, 0.0
        %v1800 = vadd.f32 %v1672, 0.0
        %v1801 = vadd.f32 %v1673, 0.0
        %v1802 = vadd.f32 %v1674, 0.0
        %v1803 = vadd.f32 %v1675, 0.0
        %v1804 = vadd.f32 %v1676, 0.0
        %v1805 = vadd.f32 %v1677, 0.0
        %v1806 = vadd.f32 %v1678, 0.0
        %v1807 = vadd.f32 %v1679, 0.0
        %v1808 = vadd.f32 %v1680, 0.0
        %v1809 = vadd.f32 %v1681, 0.0
        %v1810 = vadd.f32 %v1682, 0.0
        %v1811 = vadd.f32 %v1683, 0.0
        %v1812 = vadd.f32 %v1684, 0.0
        %v1813 = vadd.f32 %v1685, 0.0
        %v1814 = vadd.f32 %v1686, 0.0
        %v1815 = vadd.f32 %v1687, 0.0
        %v1816 = vadd.f32 %v1688, 0.0
        %v1817 = vadd.f32 %v1689, 0.0
        %v1818 = vadd.f32 %v1690, 0.0
        %v1819 = vadd.f32 %v1691, 0.0
        %v1820 = vadd.f32 %v1692, 0.0
        %v1821 = vadd.f32 %v1693, 0.0
        %v1822 = vadd.f32 %v1694, 0.0
        %v1823 = vadd.f32 %v1695, 0.0
        %v1824 = vadd.f32 %v1696, 0.0
        %v1825 = vadd.f32 %v1697, 0.0
        %v1826 = vadd.f32 %v1698, 0.0
        %v1827 = vadd.f32 %v1699, 0.0
        %v1828 = vadd.f32 %v1700, 0.0
        %v1829 = vadd.f32 %v1701, 0.0
        %v1830 = vadd.f32 %v1702, 0.0
        %v1831 = vadd.f32 %v1703, 0.0
        %v1832 = vadd.f32 %v1704, 0.0
        %v1833 = vadd.f32 %v1705, 0.0
        %v1834 = vadd.f32 %v1706, 0.0
        %v1835 = vadd.f32 %v1707, 0.0
        %v1836 = vadd.f32 %v1708, 0.0
        %v1837 = vadd.f32 %v1709, 0.0
        %v1838 = vadd.f32 %v1710, 0.0
        %v1839 = vadd.f32 %v1711, 0.0
        %v1840 = vadd.f32 %v1712, 0.0
        %v1841 = vadd.f32 %v1713, 0.0
        %v1842 = vadd.f32 %v1714, 0.0
        %v1843 = vadd.f32 %v1715, 0.0
        %v1844 = vadd.f32 %v1716, 0.0
        %v1845 = vadd.f32 %v1717, 0.0
        %v1846 = vadd.f32 %v1718, 0.0
        %v1847 = vadd.f32 %v1719, 0.0
        %v1848 = vadd.f32 %v1720, 0.0
        %v1849 = vadd.f32 %v1721, 0.0
        %v1850 = vadd.f32 %v1722, 0.0
        %v1851 = vadd.f32 %v1723, 0.0
        %v1852 = vadd.f32 %v1724, 0.0
        %v1853 = vadd.f32 %v1725, 0.0
        %v1854 = vadd.f32 %v1726, 0.0
        %v1855 = vadd.f32 %v1727, 0.0
        %v1856 = vadd.f32 %v1728, 0.0
        %v1857 = vadd.f32 %v1729, 0.0
        %v1858 = vadd.f32 %v1730, 0.0
        %v1859 = vadd.f32 %v1731, 0.0
        %v1860 = vadd.f32 %v1732, 0.0
        %v1861 = vadd.f32 %v1733, 0.0
        %v1862 = vadd.f32 %v1734, 0.0
        %v1863 = vadd.f32 %v1735, 0.0
        %v1864 = vadd.f32 %v1736, 0.0
        %v1865 = vadd.f32 %v1737, 0.0
        %v1866 = vadd.f32 %v1738, 0.0
        %v1867 = vadd.f32 %v1739, 0.0
        %v1868 = vadd.f32 %v1740, 0.0
        %v1869 = vadd.f32 %v1741, 0.0
        %v1870 = vadd.f32 %v1742, 0.0
        %v1871 = vadd.f32 %v1743, 0.0
        %v1872 = vadd.f32 %v1744, 0.0
        %v1873 = vadd.f32 %v1745, 0.0
        %v1874 = vadd.f32 %v1746, 0.0
        %v1875 = vadd.f32 %v1747, 0.0
        %v1876 = vadd.f32 %v1748, 0.0
        %v1877 = vadd.f32 %v1749, 0.0
        %v1878 = vadd.f32 %v1750, 0.0
        %v1879 = vadd.f32 %v1751, 0.0
        %v1880 = vadd.f32 %v1752, 0.0
        %v1881 = vadd.f32 %v1753, 0.0
        %v1882 = vadd.f32 %v1754, 0.0
        %v1883 = vadd.f32 %v1755, 0.0
        %v1884 = vadd.f32 %v1756, 0.0
        %v1885 = vadd.f32 %v1757, 0.0
        %v1886 = vadd.f32 %v1758, 0.0
        %v1887 = vadd.f32 %v1759, 0.0
        %v1888 = vadd.f32 %v1760, 0.0
        %v1889 = vadd.f32 %v1761, 0.0
        %v1890 = vadd.f32 %v1762, 0.0
        %v1891 = vadd.f32 %v1763, 0.0
        %v1892 = vadd.f32 %v1764, 0.0
        %v1893 = vadd.f32 %v1765, 0.0
        %v1894 = vadd.f32 %v1766, 0.0
        %v1895 = vadd.f32 %v1767, 0.0
        %v1896 = vadd.f32 %v1768, 0.0
        %v1897 = vadd.f32 %v1769, 0.0
        %v1898 = vadd.f32 %v1770, 0.0
        %v1899 = vadd.f32 %v1771, 0.0
        %v1900 = vadd.f32 %v1772, 0.0
        %v1901 = vadd.f32 %v1773, 0.0
        %v1902 = vadd.f32 %v1774, 0.0
        %v1903 = vadd.f32 %v1775, 0.0
        %v1904 = vadd.f32 %v1776, 0.0
        %v1905 = vadd.f32 %v1777, 0.0
        %v1906 = vadd.f32 %v1778, 0.0
        %v1907 = vadd.f32 %v1459, %v1779
        %v1908 = vadd.f32 %v1460, %v1780
        %v1909 = vadd.f32 %v1461, %v1781
        %v1910 = vadd.f32 %v1462, %v1782
        %v1911 = vadd.f32 %v1463, %v1783
        %v1912 = vadd.f32 %v1464, %v1784
        %v1913 = vadd.f32 %v1465, %v1785
        %v1914 = vadd.f32 %v1466, %v1786
        %v1915 = vadd.f32 %v1467, %v1787
        %v1916 = vadd.f32 %v1468, %v1788
        %v1917 = vadd.f32 %v1469, %v1789
        %v1918 = vadd.f32 %v1470, %v1790
        %v1919 = vadd.f32 %v1471, %v1791
        %v1920 = vadd.f32 %v1472, %v1792
        %v1921 = vadd.f32 %v1473, %v1793
        %v1922 = vadd.f32 %v1474, %v1794
        %v1923 = vadd.f32 %v1475, %v1795
        %v1924 = vadd.f32 %v1476, %v1796
        %v1925 = vadd.f32 %v1477, %v1797
        %v1926 = vadd.f32 %v1478, %v1798
        %v1927 = vadd.f32 %v1479, %v1799
        %v1928 = vadd.f32 %v1480, %v1800
        %v1929 = vadd.f32 %v1481, %v1801
        %v1930 = vadd.f32 %v1482, %v1802
        %v1931 = vadd.f32 %v1483, %v1803
        %v1932 = vadd.f32 %v1484, %v1804
        %v1933 = vadd.f32 %v1485, %v1805
        %v1934 = vadd.f32 %v1486, %v1806
        %v1935 = vadd.f32 %v1487, %v1807
        %v1936 = vadd.f32 %v1488, %v1808
        %v1937 = vadd.f32 %v1489, %v1809
        %v1938 = vadd.f32 %v1490, %v1810
        %v1939 = vadd.f32 %v1491, %v1811
        %v1940 = vadd.f32 %v1492, %v1812
        %v1941 = vadd.f32 %v1493, %v1813
        %v1942 = vadd.f32 %v1494, %v1814
        %v1943 = vadd.f32 %v1495, %v1815
        %v1944 = vadd.f32 %v1496, %v1816
        %v1945 = vadd.f32 %v1497, %v1817
        %v1946 = vadd.f32 %v1498, %v1818
        %v1947 = vadd.f32 %v1499, %v1819
        %v1948 = vadd.f32 %v1500, %v1820
        %v1949 = vadd.f32 %v1501, %v1821
        %v1950 = vadd.f32 %v1502, %v1822
        %v1951 = vadd.f32 %v1503, %v1823
        %v1952 = vadd.f32 %v1504, %v1824
        %v1953 = vadd.f32 %v1505, %v1825
        %v1954 = vadd.f32 %v1506, %v1826
        %v1955 = vadd.f32 %v1507, %v1827
        %v1956 = vadd.f32 %v1508, %v1828
        %v1957 = vadd.f32 %v1509, %v1829
        %v1958 = vadd.f32 %v1510, %v1830
        %v1959 = vadd.f32 %v1511, %v1831
        %v1960 = vadd.f32 %v1512, %v1832
        %v1961 = vadd.f32 %v1513, %v1833
        %v1962 = vadd.f32 %v1514, %v1834
        %v1963 = vadd.f32 %v1515, %v1835
        %v1964 = vadd.f32 %v1516, %v1836
        %v1965 = vadd.f32 %v1517, %v1837
        %v1966 = vadd.f32 %v1518, %v1838
        %v1967 = vadd.f32 %v1519, %v1839
        %v1968 = vadd.f32 %v1520, %v1840
        %v1969 = vadd.f32 %v1521, %v1841
        %v1970 = vadd.f32 %v1522, %v1842
        %v1971 = vadd.f32 %v1523, %v1843
        %v1972 = vadd.f32 %v1524, %v1844
        %v1973 = vadd.f32 %v1525, %v1845
        %v1974 = vadd.f32 %v1526, %v1846
        %v1975 = vadd.f32 %v1527, %v1847
        %v1976 = vadd.f32 %v1528, %v1848
        %v1977 = vadd.f32 %v1529, %v1849
        %v1978 = vadd.f32 %v1530, %v1850
        %v1979 = vadd.f32 %v1531, %v1851
        %v1980 = vadd.f32 %v1532, %v1852
        %v1981 = vadd.f32 %v1533, %v1853
        %v1982 = vadd.f32 %v1534, %v1854
        %v1983 = vadd.f32 %v1535, %v1855
        %v1984 = vadd.f32 %v1536, %v1856
        %v1985 = vadd.f32 %v1537, %v1857
        %v1986 = vadd.f32 %v1538, %v1858
        %v1987 = vadd.f32 %v1539, %v1859
        %v1988 = vadd.f32 %v1540, %v1860
        %v1989 = vadd.f32 %v1541, %v1861
        %v1990 = vadd.f32 %v1542, %v1862
        %v1991 = vadd.f32 %v1543, %v1863
        %v1992 = vadd.f32 %v1544, %v1864
        %v1993 = vadd.f32 %v1545, %v1865
        %v1994 = vadd.f32 %v1546, %v1866
        %v1995 = vadd.f32 %v1547, %v1867
        %v1996 = vadd.f32 %v1548, %v1868
        %v1997 = vadd.f32 %v1549, %v1869
        %v1998 = vadd.f32 %v1550, %v1870
        %v1999 = vadd.f32 %v1551, %v1871
        %v2000 = vadd.f32 %v1552, %v1872
        %v2001 = vadd.f32 %v1553, %v1873
        %v2002 = vadd.f32 %v1554, %v1874
        %v2003 = vadd.f32 %v1555, %v1875
        %v2004 = vadd.f32 %v1556, %v1876
        %v2005 = vadd.f32 %v1557, %v1877
        %v2006 = vadd.f32 %v1558, %v1878
        %v2007 = vadd.f32 %v1559, %v1879
        %v2008 = vadd.f32 %v1560, %v1880
        %v2009 = vadd.f32 %v1561, %v1881
        %v2010 = vadd.f32 %v1562, %v1882
        %v2011 = vadd.f32 %v1563, %v1883
        %v2012 = vadd.f32 %v1564, %v1884
        %v2013 = vadd.f32 %v1565, %v1885
        %v2014 = vadd.f32 %v1566, %v1886
        %v2015 = vadd.f32 %v1567, %v1887
        %v2016 = vadd.f32 %v1568, %v1888
        %v2017 = vadd.f32 %v1569, %v1889
        %v2018 = vadd.f32 %v1570, %v1890
        %v2019 = vadd.f32 %v1571, %v1891
        %v2020 = vadd.f32 %v1572, %v1892
        %v2021 = vadd.f32 %v1573, %v1893
        %v2022 = vadd.f32 %v1574, %v1894
        %v2023 = vadd.f32 %v1575, %v1895
        %v2024 = vadd.f32 %v1576, %v1896
        %v2025 = vadd.f32 %v1577, %v1897
        %v2026 = vadd.f32 %v1578, %v1898
        %v2027 = vadd.f32 %v1579, %v1899
        %v2028 = vadd.f32 %v1580, %v1900
        %v2029 = vadd.f32 %v1581, %v1901
        %v2030 = vadd.f32 %v1582, %v1902
        %v2031 = vadd.f32 %v1583, %v1903
        %v2032 = vadd.f32 %v1584, %v1904
        %v2033 = vadd.f32 %v1585, %v1905
        %v2034 = vadd.f32 %v1586, %v1906
        %v2035 = vld [vmem:[%s414] sm:$0xff]
        %v2036 = vld [vmem:[%s414 + $0x8] sm:$0xff]
        %v2037 = vld [vmem:[%s414 + $0x10] sm:$0xff]
        %v2038 = vpack.c.bf16 %v2035, %v2035
        %v2039 = vpack.c.bf16 %v2036, %v2036
        %v2040 = vpack.c.bf16 %v2037, %v2037
        %v2041 = vld [vmem:[#allocation7] sm:$0xff]
        %v2042 = vld [vmem:[#allocation7 + $0x8] sm:$0xff]
        %v2043 = vld [vmem:[#allocation7 + $0x10] sm:$0xff]
        %v2044 = vld [vmem:[#allocation7 + $0x18] sm:$0xff]
        %v2045 = vld [vmem:[#allocation7 + $0x20] sm:$0xff]
        %v2046 = vld [vmem:[#allocation7 + $0x28] sm:$0xff]
        %v2047 = vld [vmem:[#allocation7 + $0x30] sm:$0xff]
        %v2048 = vld [vmem:[#allocation7 + $0x38] sm:$0xff]
        %v2049 = vld [vmem:[#allocation7 + $0x40] sm:$0xff]
        %v2050 = vld [vmem:[#allocation7 + $0x48] sm:$0xff]
        %v2051 = vld [vmem:[#allocation7 + $0x50] sm:$0xff]
        %v2052 = vld [vmem:[#allocation7 + $0x58] sm:$0xff]
        %v2053 = vld [vmem:[#allocation7 + $0x60] sm:$0xff]
        %v2054 = vld [vmem:[#allocation7 + $0x68] sm:$0xff]
        %v2055 = vld [vmem:[#allocation7 + $0x70] sm:$0xff]
        %v2056 = vld [vmem:[#allocation7 + $0x78] sm:$0xff]
        %v2057 = vld [vmem:[#allocation7 + $0x80] sm:$0xff]
        %v2058 = vld [vmem:[#allocation7 + $0x88] sm:$0xff]
        %v2059 = vld [vmem:[#allocation7 + $0x90] sm:$0xff]
        %v2060 = vld [vmem:[#allocation7 + $0x98] sm:$0xff]
        %v2061 = vld [vmem:[#allocation7 + $0xa0] sm:$0xff]
        %v2062 = vld [vmem:[#allocation7 + $0xa8] sm:$0xff]
        %v2063 = vld [vmem:[#allocation7 + $0xb0] sm:$0xff]
        %v2064 = vld [vmem:[#allocation7 + $0xb8] sm:$0xff]
        %v2065 = vld [vmem:[#allocation7 + $0xc0] sm:$0xff]
        %v2066 = vld [vmem:[#allocation7 + $0xc8] sm:$0xff]
        %v2067 = vld [vmem:[#allocation7 + $0xd0] sm:$0xff]
        %v2068 = vld [vmem:[#allocation7 + $0xd8] sm:$0xff]
        %v2069 = vld [vmem:[#allocation7 + $0xe0] sm:$0xff]
        %v2070 = vld [vmem:[#allocation7 + $0xe8] sm:$0xff]
        %v2071 = vld [vmem:[#allocation7 + $0xf0] sm:$0xff]
        %v2072 = vld [vmem:[#allocation7 + $0xf8] sm:$0xff]
        %v2073 = vld [vmem:[#allocation7 + $0x100] sm:$0xff]
        %v2074 = vld [vmem:[#allocation7 + $0x108] sm:$0xff]
        %v2075 = vld [vmem:[#allocation7 + $0x110] sm:$0xff]
        %v2076 = vld [vmem:[#allocation7 + $0x118] sm:$0xff]
        %v2077 = vld [vmem:[#allocation7 + $0x120] sm:$0xff]
        %v2078 = vld [vmem:[#allocation7 + $0x128] sm:$0xff]
        %v2079 = vld [vmem:[#allocation7 + $0x130] sm:$0xff]
        %v2080 = vld [vmem:[#allocation7 + $0x138] sm:$0xff]
        %v2081 = vld [vmem:[#allocation7 + $0x140] sm:$0xff]
        %v2082 = vld [vmem:[#allocation7 + $0x148] sm:$0xff]
        %v2083 = vld [vmem:[#allocation7 + $0x150] sm:$0xff]
        %v2084 = vld [vmem:[#allocation7 + $0x158] sm:$0xff]
        %v2085 = vld [vmem:[#allocation7 + $0x160] sm:$0xff]
        %v2086 = vld [vmem:[#allocation7 + $0x168] sm:$0xff]
        %v2087 = vld [vmem:[#allocation7 + $0x170] sm:$0xff]
        %v2088 = vld [vmem:[#allocation7 + $0x178] sm:$0xff]
        %v2089 = vld [vmem:[#allocation7 + $0x180] sm:$0xff]
        %v2090 = vld [vmem:[#allocation7 + $0x188] sm:$0xff]
        %v2091 = vld [vmem:[#allocation7 + $0x190] sm:$0xff]
        %v2092 = vld [vmem:[#allocation7 + $0x198] sm:$0xff]
        %v2093 = vld [vmem:[#allocation7 + $0x1a0] sm:$0xff]
        %v2094 = vld [vmem:[#allocation7 + $0x1a8] sm:$0xff]
        %v2095 = vld [vmem:[#allocation7 + $0x1b0] sm:$0xff]
        %v2096 = vld [vmem:[#allocation7 + $0x1b8] sm:$0xff]
        %v2097 = vld [vmem:[#allocation7 + $0x1c0] sm:$0xff]
        %v2098 = vld [vmem:[#allocation7 + $0x1c8] sm:$0xff]
        %v2099 = vld [vmem:[#allocation7 + $0x1d0] sm:$0xff]
        %v2100 = vld [vmem:[#allocation7 + $0x1d8] sm:$0xff]
        %v2101 = vld [vmem:[#allocation7 + $0x1e0] sm:$0xff]
        %v2102 = vld [vmem:[#allocation7 + $0x1e8] sm:$0xff]
        %v2103 = vld [vmem:[#allocation7 + $0x1f0] sm:$0xff]
        %v2104 = vld [vmem:[#allocation7 + $0x1f8] sm:$0xff]
        %v2105 = vld [vmem:[#allocation7 + $0x200] sm:$0xff]
        %v2106 = vld [vmem:[#allocation7 + $0x208] sm:$0xff]
        %v2107 = vld [vmem:[#allocation7 + $0x210] sm:$0xff]
        %v2108 = vld [vmem:[#allocation7 + $0x218] sm:$0xff]
        %v2109 = vld [vmem:[#allocation7 + $0x220] sm:$0xff]
        %v2110 = vld [vmem:[#allocation7 + $0x228] sm:$0xff]
        %v2111 = vld [vmem:[#allocation7 + $0x230] sm:$0xff]
        %v2112 = vld [vmem:[#allocation7 + $0x238] sm:$0xff]
        %v2113 = vld [vmem:[#allocation7 + $0x240] sm:$0xff]
        %v2114 = vld [vmem:[#allocation7 + $0x248] sm:$0xff]
        %v2115 = vld [vmem:[#allocation7 + $0x250] sm:$0xff]
        %v2116 = vld [vmem:[#allocation7 + $0x258] sm:$0xff]
        %v2117 = vld [vmem:[#allocation7 + $0x260] sm:$0xff]
        %v2118 = vld [vmem:[#allocation7 + $0x268] sm:$0xff]
        %v2119 = vld [vmem:[#allocation7 + $0x270] sm:$0xff]
        %v2120 = vld [vmem:[#allocation7 + $0x278] sm:$0xff]
        %v2121 = vld [vmem:[#allocation7 + $0x280] sm:$0xff]
        %v2122 = vld [vmem:[#allocation7 + $0x288] sm:$0xff]
        %v2123 = vld [vmem:[#allocation7 + $0x290] sm:$0xff]
        %v2124 = vld [vmem:[#allocation7 + $0x298] sm:$0xff]
        %v2125 = vld [vmem:[#allocation7 + $0x2a0] sm:$0xff]
        %v2126 = vld [vmem:[#allocation7 + $0x2a8] sm:$0xff]
        %v2127 = vld [vmem:[#allocation7 + $0x2b0] sm:$0xff]
        %v2128 = vld [vmem:[#allocation7 + $0x2b8] sm:$0xff]
        %v2129 = vld [vmem:[#allocation7 + $0x2c0] sm:$0xff]
        %v2130 = vld [vmem:[#allocation7 + $0x2c8] sm:$0xff]
        %v2131 = vld [vmem:[#allocation7 + $0x2d0] sm:$0xff]
        %v2132 = vld [vmem:[#allocation7 + $0x2d8] sm:$0xff]
        %v2133 = vld [vmem:[#allocation7 + $0x2e0] sm:$0xff]
        %v2134 = vld [vmem:[#allocation7 + $0x2e8] sm:$0xff]
        %v2135 = vld [vmem:[#allocation7 + $0x2f0] sm:$0xff]
        %v2136 = vld [vmem:[#allocation7 + $0x2f8] sm:$0xff]
        %v2137 = vld [vmem:[#allocation9] sm:$0xf]
        %v2139 = vlaneseq
        %v2140 = vshrl.u32 %v2139, 7
        %v2141 = vsub.s32 0, %v2140
        %v2142 = vrot.slane %v2137, %v2141
        %v2143 = vlaneseq
        %v2144 = vshrl.u32 %v2143, 7
        %v2145 = vsub.s32 1, %v2144
        %v2146 = vrot.slane %v2137, %v2145
        %v2147 = vlaneseq
        %v2148 = vshrl.u32 %v2147, 7
        %v2149 = vsub.s32 2, %v2148
        %v2150 = vrot.slane %v2137, %v2149
        %v2151 = vlaneseq
        %v2152 = vshrl.u32 %v2151, 7
        %v2153 = vsub.s32 3, %v2152
        %v2154 = vrot.slane %v2137, %v2153
        %v2255 = vunpack.c.l.b16 %v2041
        %v2256 = vunpack.c.h.b16 %v2041
        %v2257 = vunpack.c.l.b16 %v2042
        %v2258 = vunpack.c.h.b16 %v2042
        %v2259 = vunpack.c.l.b16 %v2043
        %v2260 = vunpack.c.h.b16 %v2043
        %v2261 = vunpack.c.l.b16 %v2044
        %v2262 = vunpack.c.h.b16 %v2044
        %v2263 = vunpack.c.l.b16 %v2045
        %v2264 = vunpack.c.h.b16 %v2045
        %v2265 = vunpack.c.l.b16 %v2046
        %v2266 = vunpack.c.h.b16 %v2046
        %v2267 = vunpack.c.l.b16 %v2047
        %v2268 = vunpack.c.h.b16 %v2047
        %v2269 = vunpack.c.l.b16 %v2048
        %v2270 = vunpack.c.h.b16 %v2048
        %v2271 = vunpack.c.l.b16 %v2049
        %v2272 = vunpack.c.h.b16 %v2049
        %v2273 = vunpack.c.l.b16 %v2050
        %v2274 = vunpack.c.h.b16 %v2050
        %v2275 = vunpack.c.l.b16 %v2051
        %v2276 = vunpack.c.h.b16 %v2051
        %v2277 = vunpack.c.l.b16 %v2052
        %v2278 = vunpack.c.h.b16 %v2052
        %v2279 = vunpack.c.l.b16 %v2053
        %v2280 = vunpack.c.h.b16 %v2053
        %v2281 = vunpack.c.l.b16 %v2054
        %v2282 = vunpack.c.h.b16 %v2054
        %v2283 = vunpack.c.l.b16 %v2055
        %v2284 = vunpack.c.h.b16 %v2055
        %v2285 = vunpack.c.l.b16 %v2056
        %v2286 = vunpack.c.h.b16 %v2056
        %v2287 = vunpack.c.l.b16 %v2057
        %v2288 = vunpack.c.h.b16 %v2057
        %v2289 = vunpack.c.l.b16 %v2058
        %v2290 = vunpack.c.h.b16 %v2058
        %v2291 = vunpack.c.l.b16 %v2059
        %v2292 = vunpack.c.h.b16 %v2059
        %v2293 = vunpack.c.l.b16 %v2060
        %v2294 = vunpack.c.h.b16 %v2060
        %v2295 = vunpack.c.l.b16 %v2061
        %v2296 = vunpack.c.h.b16 %v2061
        %v2297 = vunpack.c.l.b16 %v2062
        %v2298 = vunpack.c.h.b16 %v2062
        %v2299 = vunpack.c.l.b16 %v2063
        %v2300 = vunpack.c.h.b16 %v2063
        %v2301 = vunpack.c.l.b16 %v2064
        %v2302 = vunpack.c.h.b16 %v2064
        %v2303 = vunpack.c.l.b16 %v2065
        %v2304 = vunpack.c.h.b16 %v2065
        %v2305 = vunpack.c.l.b16 %v2066
        %v2306 = vunpack.c.h.b16 %v2066
        %v2307 = vunpack.c.l.b16 %v2067
        %v2308 = vunpack.c.h.b16 %v2067
        %v2309 = vunpack.c.l.b16 %v2068
        %v2310 = vunpack.c.h.b16 %v2068
        %v2311 = vunpack.c.l.b16 %v2069
        %v2312 = vunpack.c.h.b16 %v2069
        %v2313 = vunpack.c.l.b16 %v2070
        %v2314 = vunpack.c.h.b16 %v2070
        %v2315 = vunpack.c.l.b16 %v2071
        %v2316 = vunpack.c.h.b16 %v2071
        %v2317 = vunpack.c.l.b16 %v2072
        %v2318 = vunpack.c.h.b16 %v2072
        %v2319 = vunpack.c.l.b16 %v2073
        %v2320 = vunpack.c.h.b16 %v2073
        %v2321 = vunpack.c.l.b16 %v2074
        %v2322 = vunpack.c.h.b16 %v2074
        %v2323 = vunpack.c.l.b16 %v2075
        %v2324 = vunpack.c.h.b16 %v2075
        %v2325 = vunpack.c.l.b16 %v2076
        %v2326 = vunpack.c.h.b16 %v2076
        %v2327 = vunpack.c.l.b16 %v2077
        %v2328 = vunpack.c.h.b16 %v2077
        %v2329 = vunpack.c.l.b16 %v2078
        %v2330 = vunpack.c.h.b16 %v2078
        %v2331 = vunpack.c.l.b16 %v2079
        %v2332 = vunpack.c.h.b16 %v2079
        %v2333 = vunpack.c.l.b16 %v2080
        %v2334 = vunpack.c.h.b16 %v2080
        %v2335 = vunpack.c.l.b16 %v2081
        %v2336 = vunpack.c.h.b16 %v2081
        %v2337 = vunpack.c.l.b16 %v2082
        %v2338 = vunpack.c.h.b16 %v2082
        %v2339 = vunpack.c.l.b16 %v2083
        %v2340 = vunpack.c.h.b16 %v2083
        %v2341 = vunpack.c.l.b16 %v2084
        %v2342 = vunpack.c.h.b16 %v2084
        %v2343 = vunpack.c.l.b16 %v2085
        %v2344 = vunpack.c.h.b16 %v2085
        %v2345 = vunpack.c.l.b16 %v2086
        %v2346 = vunpack.c.h.b16 %v2086
        %v2347 = vunpack.c.l.b16 %v2087
        %v2348 = vunpack.c.h.b16 %v2087
        %v2349 = vunpack.c.l.b16 %v2088
        %v2350 = vunpack.c.h.b16 %v2088
        %v2351 = vunpack.c.l.b16 %v2089
        %v2352 = vunpack.c.h.b16 %v2089
        %v2353 = vunpack.c.l.b16 %v2090
        %v2354 = vunpack.c.h.b16 %v2090
        %v2355 = vunpack.c.l.b16 %v2091
        %v2356 = vunpack.c.h.b16 %v2091
        %v2357 = vunpack.c.l.b16 %v2092
        %v2358 = vunpack.c.h.b16 %v2092
        %v2359 = vunpack.c.l.b16 %v2093
        %v2360 = vunpack.c.h.b16 %v2093
        %v2361 = vunpack.c.l.b16 %v2094
        %v2362 = vunpack.c.h.b16 %v2094
        %v2363 = vunpack.c.l.b16 %v2095
        %v2364 = vunpack.c.h.b16 %v2095
        %v2365 = vunpack.c.l.b16 %v2096
        %v2366 = vunpack.c.h.b16 %v2096
        %v2367 = vunpack.c.l.b16 %v2097
        %v2368 = vunpack.c.h.b16 %v2097
        %v2369 = vunpack.c.l.b16 %v2098
        %v2370 = vunpack.c.h.b16 %v2098
        %v2371 = vunpack.c.l.b16 %v2099
        %v2372 = vunpack.c.h.b16 %v2099
        %v2373 = vunpack.c.l.b16 %v2100
        %v2374 = vunpack.c.h.b16 %v2100
        %v2375 = vunpack.c.l.b16 %v2101
        %v2376 = vunpack.c.h.b16 %v2101
        %v2377 = vunpack.c.l.b16 %v2102
        %v2378 = vunpack.c.h.b16 %v2102
        %v2379 = vunpack.c.l.b16 %v2103
        %v2380 = vunpack.c.h.b16 %v2103
        %v2381 = vunpack.c.l.b16 %v2104
        %v2382 = vunpack.c.h.b16 %v2104
        %v2383 = vunpack.c.l.b16 %v2105
        %v2384 = vunpack.c.h.b16 %v2105
        %v2385 = vunpack.c.l.b16 %v2106
        %v2386 = vunpack.c.h.b16 %v2106
        %v2387 = vunpack.c.l.b16 %v2107
        %v2388 = vunpack.c.h.b16 %v2107
        %v2389 = vunpack.c.l.b16 %v2108
        %v2390 = vunpack.c.h.b16 %v2108
        %v2391 = vunpack.c.l.b16 %v2109
        %v2392 = vunpack.c.h.b16 %v2109
        %v2393 = vunpack.c.l.b16 %v2110
        %v2394 = vunpack.c.h.b16 %v2110
        %v2395 = vunpack.c.l.b16 %v2111
        %v2396 = vunpack.c.h.b16 %v2111
        %v2397 = vunpack.c.l.b16 %v2112
        %v2398 = vunpack.c.h.b16 %v2112
        %v2399 = vunpack.c.l.b16 %v2113
        %v2400 = vunpack.c.h.b16 %v2113
        %v2401 = vunpack.c.l.b16 %v2114
        %v2402 = vunpack.c.h.b16 %v2114
        %v2403 = vunpack.c.l.b16 %v2115
        %v2404 = vunpack.c.h.b16 %v2115
        %v2405 = vunpack.c.l.b16 %v2116
        %v2406 = vunpack.c.h.b16 %v2116
        %v2407 = vunpack.c.l.b16 %v2117
        %v2408 = vunpack.c.h.b16 %v2117
        %v2409 = vunpack.c.l.b16 %v2118
        %v2410 = vunpack.c.h.b16 %v2118
        %v2411 = vunpack.c.l.b16 %v2119
        %v2412 = vunpack.c.h.b16 %v2119
        %v2413 = vunpack.c.l.b16 %v2120
        %v2414 = vunpack.c.h.b16 %v2120
        %v2415 = vunpack.c.l.b16 %v2121
        %v2416 = vunpack.c.h.b16 %v2121
        %v2417 = vunpack.c.l.b16 %v2122
        %v2418 = vunpack.c.h.b16 %v2122
        %v2419 = vunpack.c.l.b16 %v2123
        %v2420 = vunpack.c.h.b16 %v2123
        %v2421 = vunpack.c.l.b16 %v2124
        %v2422 = vunpack.c.h.b16 %v2124
        %v2423 = vunpack.c.l.b16 %v2125
        %v2424 = vunpack.c.h.b16 %v2125
        %v2425 = vunpack.c.l.b16 %v2126
        %v2426 = vunpack.c.h.b16 %v2126
        %v2427 = vunpack.c.l.b16 %v2127
        %v2428 = vunpack.c.h.b16 %v2127
        %v2429 = vunpack.c.l.b16 %v2128
        %v2430 = vunpack.c.h.b16 %v2128
        %v2431 = vunpack.c.l.b16 %v2129
        %v2432 = vunpack.c.h.b16 %v2129
        %v2433 = vunpack.c.l.b16 %v2130
        %v2434 = vunpack.c.h.b16 %v2130
        %v2435 = vunpack.c.l.b16 %v2131
        %v2436 = vunpack.c.h.b16 %v2131
        %v2437 = vunpack.c.l.b16 %v2132
        %v2438 = vunpack.c.h.b16 %v2132
        %v2439 = vunpack.c.l.b16 %v2133
        %v2440 = vunpack.c.h.b16 %v2133
        %v2441 = vunpack.c.l.b16 %v2134
        %v2442 = vunpack.c.h.b16 %v2134
        %v2443 = vunpack.c.l.b16 %v2135
        %v2444 = vunpack.c.h.b16 %v2135
        %v2445 = vunpack.c.l.b16 %v2136
        %v2446 = vunpack.c.h.b16 %v2136
        %v2447 = vpack.c.b16 %v2259, %v2255
        %v2448 = vpack.c.b16 %v2260, %v2256
        %v2449 = vpack.c.b16 %v2261, %v2257
        %v2450 = vpack.c.b16 %v2262, %v2258
        %v2451 = vpack.c.b16 %v2267, %v2263
        %v2452 = vpack.c.b16 %v2268, %v2264
        %v2453 = vpack.c.b16 %v2269, %v2265
        %v2454 = vpack.c.b16 %v2270, %v2266
        %v2455 = vpack.c.b16 %v2275, %v2271
        %v2456 = vpack.c.b16 %v2276, %v2272
        %v2457 = vpack.c.b16 %v2277, %v2273
        %v2458 = vpack.c.b16 %v2278, %v2274
        %v2459 = vpack.c.b16 %v2283, %v2279
        %v2460 = vpack.c.b16 %v2284, %v2280
        %v2461 = vpack.c.b16 %v2285, %v2281
        %v2462 = vpack.c.b16 %v2286, %v2282
        %v2463 = vpack.c.b16 %v2291, %v2287
        %v2464 = vpack.c.b16 %v2292, %v2288
        %v2465 = vpack.c.b16 %v2293, %v2289
        %v2466 = vpack.c.b16 %v2294, %v2290
        %v2467 = vpack.c.b16 %v2299, %v2295
        %v2468 = vpack.c.b16 %v2300, %v2296
        %v2469 = vpack.c.b16 %v2301, %v2297
        %v2470 = vpack.c.b16 %v2302, %v2298
        %v2471 = vpack.c.b16 %v2307, %v2303
        %v2472 = vpack.c.b16 %v2308, %v2304
        %v2473 = vpack.c.b16 %v2309, %v2305
        %v2474 = vpack.c.b16 %v2310, %v2306
        %v2475 = vpack.c.b16 %v2315, %v2311
        %v2476 = vpack.c.b16 %v2316, %v2312
        %v2477 = vpack.c.b16 %v2317, %v2313
        %v2478 = vpack.c.b16 %v2318, %v2314
        %v2479 = vpack.c.b16 %v2323, %v2319
        %v2480 = vpack.c.b16 %v2324, %v2320
        %v2481 = vpack.c.b16 %v2325, %v2321
        %v2482 = vpack.c.b16 %v2326, %v2322
        %v2483 = vpack.c.b16 %v2331, %v2327
        %v2484 = vpack.c.b16 %v2332, %v2328
        %v2485 = vpack.c.b16 %v2333, %v2329
        %v2486 = vpack.c.b16 %v2334, %v2330
        %v2487 = vpack.c.b16 %v2339, %v2335
        %v2488 = vpack.c.b16 %v2340, %v2336
        %v2489 = vpack.c.b16 %v2341, %v2337
        %v2490 = vpack.c.b16 %v2342, %v2338
        %v2491 = vpack.c.b16 %v2347, %v2343
        %v2492 = vpack.c.b16 %v2348, %v2344
        %v2493 = vpack.c.b16 %v2349, %v2345
        %v2494 = vpack.c.b16 %v2350, %v2346
        %v2495 = vpack.c.b16 %v2355, %v2351
        %v2496 = vpack.c.b16 %v2356, %v2352
        %v2497 = vpack.c.b16 %v2357, %v2353
        %v2498 = vpack.c.b16 %v2358, %v2354
        %v2499 = vpack.c.b16 %v2363, %v2359
        %v2500 = vpack.c.b16 %v2364, %v2360
        %v2501 = vpack.c.b16 %v2365, %v2361
        %v2502 = vpack.c.b16 %v2366, %v2362
        %v2503 = vpack.c.b16 %v2371, %v2367
        %v2504 = vpack.c.b16 %v2372, %v2368
        %v2505 = vpack.c.b16 %v2373, %v2369
        %v2506 = vpack.c.b16 %v2374, %v2370
        %v2507 = vpack.c.b16 %v2379, %v2375
        %v2508 = vpack.c.b16 %v2380, %v2376
        %v2509 = vpack.c.b16 %v2381, %v2377
        %v2510 = vpack.c.b16 %v2382, %v2378
        %v2511 = vpack.c.b16 %v2387, %v2383
        %v2512 = vpack.c.b16 %v2388, %v2384
        %v2513 = vpack.c.b16 %v2389, %v2385
        %v2514 = vpack.c.b16 %v2390, %v2386
        %v2515 = vpack.c.b16 %v2395, %v2391
        %v2516 = vpack.c.b16 %v2396, %v2392
        %v2517 = vpack.c.b16 %v2397, %v2393
        %v2518 = vpack.c.b16 %v2398, %v2394
        %v2519 = vpack.c.b16 %v2403, %v2399
        %v2520 = vpack.c.b16 %v2404, %v2400
        %v2521 = vpack.c.b16 %v2405, %v2401
        %v2522 = vpack.c.b16 %v2406, %v2402
        %v2523 = vpack.c.b16 %v2411, %v2407
        %v2524 = vpack.c.b16 %v2412, %v2408
        %v2525 = vpack.c.b16 %v2413, %v2409
        %v2526 = vpack.c.b16 %v2414, %v2410
        %v2527 = vpack.c.b16 %v2419, %v2415
        %v2528 = vpack.c.b16 %v2420, %v2416
        %v2529 = vpack.c.b16 %v2421, %v2417
        %v2530 = vpack.c.b16 %v2422, %v2418
        %v2531 = vpack.c.b16 %v2427, %v2423
        %v2532 = vpack.c.b16 %v2428, %v2424
        %v2533 = vpack.c.b16 %v2429, %v2425
        %v2534 = vpack.c.b16 %v2430, %v2426
        %v2535 = vpack.c.b16 %v2435, %v2431
        %v2536 = vpack.c.b16 %v2436, %v2432
        %v2537 = vpack.c.b16 %v2437, %v2433
        %v2538 = vpack.c.b16 %v2438, %v2434
        %v2539 = vpack.c.b16 %v2443, %v2439
        %v2540 = vpack.c.b16 %v2444, %v2440
        %v2541 = vpack.c.b16 %v2445, %v2441
        %v2542 = vpack.c.b16 %v2446, %v2442
        %2639 = vmatprep.subr.bf16.mxu0 %v2448
        %2640 = vmatpush1.bf16.msra.mxu0 %v2447
        %2641 = vmatprep.subr.bf16.mxu0 %v2452
        %2642 = vmatpush1.bf16.msra.mxu0 %v2451
        %2643 = vmatprep.subr.bf16.mxu0 %v2456
        %2644 = vmatpush1.bf16.msra.mxu0 %v2455
        %2645 = vmatprep.subr.bf16.mxu0 %v2460
        %2646 = vmatpush1.bf16.msra.mxu0 %v2459
        %2647 = vmatprep.subr.bf16.mxu0 %v2464
        %2648 = vmatpush1.bf16.msra.mxu0 %v2463
        %2649 = vmatprep.subr.bf16.mxu0 %v2468
        %2650 = vmatpush1.bf16.msra.mxu0 %v2467
        %2651 = vmatprep.subr.bf16.mxu0 %v2472
        %2652 = vmatpush1.bf16.msra.mxu0 %v2471
        %2653 = vmatprep.subr.bf16.mxu0 %v2476
        %2654 = vmatpush1.bf16.msra.mxu0 %v2475
        %2655 = vmatprep.subr.bf16.mxu0 %v2480
        %2656 = vmatpush1.bf16.msra.mxu0 %v2479
        %2657 = vmatprep.subr.bf16.mxu0 %v2484
        %2658 = vmatpush1.bf16.msra.mxu0 %v2483
        %2659 = vmatprep.subr.bf16.mxu0 %v2488
        %2660 = vmatpush1.bf16.msra.mxu0 %v2487
        %2661 = vmatprep.subr.bf16.mxu0 %v2492
        %2662 = vmatpush1.bf16.msra.mxu0 %v2491
        %2663 = vmatprep.subr.bf16.mxu0 %v2496
        %2664 = vmatpush1.bf16.msra.mxu0 %v2495
        %2665 = vmatprep.subr.bf16.mxu0 %v2500
        %2666 = vmatpush1.bf16.msra.mxu0 %v2499
        %2667 = vmatprep.subr.bf16.mxu0 %v2504
        %2668 = vmatpush1.bf16.msra.mxu0 %v2503
        %2669 = vmatprep.subr.bf16.mxu0 %v2508
        %2670 = vmatpush1.bf16.msra.mxu0 %v2507
        %2671 = vmatprep.mubr.bf16.mxu0 %v2039
        %2672 = vmatmul.mubr.bf16.gmra.mrb[0].mxu0 %v2038
        %v2673 = vpop.f32.mrb[0].mxu0
        %v2674 = vadd.f32 %v2142, %v2673
        %v2675 = vpop.f32.mrb[0].mxu0
        %v2676 = vadd.f32 %v2146, %v2675
        %v2677 = vpop.f32.mrb[0].mxu0
        %v2678 = vpop.f32.mrb[0].mxu0
        %2679 = vdwg.mxu0
        %2680 = vmatprep.subr.bf16.mxu0 %v2512
        %2681 = vmatpush1.bf16.msra.mxu0 %v2511
        %2682 = vmatprep.subr.bf16.mxu0 %v2516
        %2683 = vmatpush1.bf16.msra.mxu0 %v2515
        %2684 = vmatprep.subr.bf16.mxu0 %v2520
        %2685 = vmatpush1.bf16.msra.mxu0 %v2519
        %2686 = vmatprep.subr.bf16.mxu0 %v2524
        %2687 = vmatpush1.bf16.msra.mxu0 %v2523
        %2688 = vmatprep.subr.bf16.mxu0 %v2528
        %2689 = vmatpush1.bf16.msra.mxu0 %v2527
        %2690 = vmatprep.subr.bf16.mxu0 %v2532
        %2691 = vmatpush1.bf16.msra.mxu0 %v2531
        %2692 = vmatprep.subr.bf16.mxu0 %v2536
        %2693 = vmatpush1.bf16.msra.mxu0 %v2535
        %2694 = vmatprep.subr.bf16.mxu0 %v2540
        %2695 = vmatpush1.bf16.msra.mxu0 %v2539
        %2696 = vmatprep.subr.bf16.mxu0 0
        %2697 = vmatpush1.bf16.msra.mxu0 0
        %2698 = vmatprep.subr.bf16.mxu0 0
        %2699 = vmatpush1.bf16.msra.mxu0 0
        %2700 = vmatprep.subr.bf16.mxu0 0
        %2701 = vmatpush1.bf16.msra.mxu0 0
        %2702 = vmatprep.subr.bf16.mxu0 0
        %2703 = vmatpush1.bf16.msra.mxu0 0
        %2704 = vmatprep.subr.bf16.mxu0 0
        %2705 = vmatpush1.bf16.msra.mxu0 0
        %2706 = vmatprep.subr.bf16.mxu0 0
        %2707 = vmatpush1.bf16.msra.mxu0 0
        %2708 = vmatprep.subr.bf16.mxu0 0
        %2709 = vmatpush1.bf16.msra.mxu0 0
        %2710 = vmatprep.subr.bf16.mxu0 0
        %2711 = vmatpush1.bf16.msra.mxu0 0
        %2712 = vmatprep.mubr.bf16.mxu0 0
        %2713 = vmatmul.mubr.bf16.gmra.mrb[0].mxu0 %v2040
        %v2714 = vpop.f32.mrb[0].mxu0
        %v2715 = vadd.f32 %v2674, %v2714
        %v2716 = vpop.f32.mrb[0].mxu0
        %v2717 = vadd.f32 %v2676, %v2716
        %v2718 = vpop.f32.mrb[0].mxu0
        %v2719 = vpop.f32.mrb[0].mxu0
        %2720 = vdwg.mxu0
        %2721 = vmatprep.subr.bf16.mxu0 %v2450
        %2722 = vmatpush1.bf16.msra.mxu0 %v2449
        %2723 = vmatprep.subr.bf16.mxu0 %v2454
        %2724 = vmatpush1.bf16.msra.mxu0 %v2453
        %2725 = vmatprep.subr.bf16.mxu0 %v2458
        %2726 = vmatpush1.bf16.msra.mxu0 %v2457
        %2727 = vmatprep.subr.bf16.mxu0 %v2462
        %2728 = vmatpush1.bf16.msra.mxu0 %v2461
        %2729 = vmatprep.subr.bf16.mxu0 %v2466
        %2730 = vmatpush1.bf16.msra.mxu0 %v2465
        %2731 = vmatprep.subr.bf16.mxu0 %v2470
        %2732 = vmatpush1.bf16.msra.mxu0 %v2469
        %2733 = vmatprep.subr.bf16.mxu0 %v2474
        %2734 = vmatpush1.bf16.msra.mxu0 %v2473
        %2735 = vmatprep.subr.bf16.mxu0 %v2478
        %2736 = vmatpush1.bf16.msra.mxu0 %v2477
        %2737 = vmatprep.subr.bf16.mxu0 %v2482
        %2738 = vmatpush1.bf16.msra.mxu0 %v2481
        %2739 = vmatprep.subr.bf16.mxu0 %v2486
        %2740 = vmatpush1.bf16.msra.mxu0 %v2485
        %2741 = vmatprep.subr.bf16.mxu0 %v2490
        %2742 = vmatpush1.bf16.msra.mxu0 %v2489
        %2743 = vmatprep.subr.bf16.mxu0 %v2494
        %2744 = vmatpush1.bf16.msra.mxu0 %v2493
        %2745 = vmatprep.subr.bf16.mxu0 %v2498
        %2746 = vmatpush1.bf16.msra.mxu0 %v2497
        %2747 = vmatprep.subr.bf16.mxu0 %v2502
        %2748 = vmatpush1.bf16.msra.mxu0 %v2501
        %2749 = vmatprep.subr.bf16.mxu0 %v2506
        %2750 = vmatpush1.bf16.msra.mxu0 %v2505
        %2751 = vmatprep.subr.bf16.mxu0 %v2510
        %2752 = vmatpush1.bf16.msra.mxu0 %v2509
        %2753 = vmatprep.mubr.bf16.mxu0 %v2039
        %2754 = vmatmul.mubr.bf16.gmra.mrb[0].mxu0 %v2038
        %v2755 = vpop.f32.mrb[0].mxu0
        %v2756 = vadd.f32 %v2150, %v2755
        %v2757 = vpop.f32.mrb[0].mxu0
        %v2758 = vadd.f32 %v2154, %v2757
        %v2759 = vpop.f32.mrb[0].mxu0
        %v2760 = vpop.f32.mrb[0].mxu0
        %2761 = vdwg.mxu0
        %2762 = vmatprep.subr.bf16.mxu0 %v2514
        %2763 = vmatpush1.bf16.msra.mxu0 %v2513
        %2764 = vmatprep.subr.bf16.mxu0 %v2518
        %2765 = vmatpush1.bf16.msra.mxu0 %v2517
        %2766 = vmatprep.subr.bf16.mxu0 %v2522
        %2767 = vmatpush1.bf16.msra.mxu0 %v2521
        %2768 = vmatprep.subr.bf16.mxu0 %v2526
        %2769 = vmatpush1.bf16.msra.mxu0 %v2525
        %2770 = vmatprep.subr.bf16.mxu0 %v2530
        %2771 = vmatpush1.bf16.msra.mxu0 %v2529
        %2772 = vmatprep.subr.bf16.mxu0 %v2534
        %2773 = vmatpush1.bf16.msra.mxu0 %v2533
        %2774 = vmatprep.subr.bf16.mxu0 %v2538
        %2775 = vmatpush1.bf16.msra.mxu0 %v2537
        %2776 = vmatprep.subr.bf16.mxu0 %v2542
        %2777 = vmatpush1.bf16.msra.mxu0 %v2541
        %2778 = vmatprep.subr.bf16.mxu0 0
        %2779 = vmatpush1.bf16.msra.mxu0 0
        %2780 = vmatprep.subr.bf16.mxu0 0
        %2781 = vmatpush1.bf16.msra.mxu0 0
        %2782 = vmatprep.subr.bf16.mxu0 0
        %2783 = vmatpush1.bf16.msra.mxu0 0
        %2784 = vmatprep.subr.bf16.mxu0 0
        %2785 = vmatpush1.bf16.msra.mxu0 0
        %2786 = vmatprep.subr.bf16.mxu0 0
        %2787 = vmatpush1.bf16.msra.mxu0 0
        %2788 = vmatprep.subr.bf16.mxu0 0
        %2789 = vmatpush1.bf16.msra.mxu0 0
        %2790 = vmatprep.subr.bf16.mxu0 0
        %2791 = vmatpush1.bf16.msra.mxu0 0
        %2792 = vmatprep.subr.bf16.mxu0 0
        %2793 = vmatpush1.bf16.msra.mxu0 0
        %2794 = vmatprep.mubr.bf16.mxu0 0
        %2795 = vmatmul.mubr.bf16.gmra.mrb[0].mxu0 %v2040
        %v2796 = vpop.f32.mrb[0].mxu0
        %v2797 = vadd.f32 %v2756, %v2796
        %v2798 = vpop.f32.mrb[0].mxu0
        %v2799 = vadd.f32 %v2758, %v2798
        %v2800 = vpop.f32.mrb[0].mxu0
        %v2801 = vpop.f32.mrb[0].mxu0
        %2802 = vdwg.mxu0
        %v2803 = vtanh.pop %v2715
        %v2804 = vtanh.pop %v2717
        %v2805 = vtanh.pop %v2797
        %v2806 = vtanh.pop %v2799
        %v2807 = vpack.c.bf16 %v1907, %v1907
        %v2808 = vpack.c.bf16 %v1908, %v1908
        %v2809 = vpack.c.bf16 %v1909, %v1909
        %v2810 = vpack.c.bf16 %v1910, %v1910
        %v2811 = vpack.c.bf16 %v1911, %v1911
        %v2812 = vpack.c.bf16 %v1912, %v1912
        %v2813 = vpack.c.bf16 %v1913, %v1913
        %v2814 = vpack.c.bf16 %v1914, %v1914
        %v2815 = vpack.c.bf16 %v1915, %v1915
        %v2816 = vpack.c.bf16 %v1916, %v1916
        %v2817 = vpack.c.bf16 %v1917, %v1917
        %v2818 = vpack.c.bf16 %v1918, %v1918
        %v2819 = vpack.c.bf16 %v1919, %v1919
        %v2820 = vpack.c.bf16 %v1920, %v1920
        %v2821 = vpack.c.bf16 %v1921, %v1921
        %v2822 = vpack.c.bf16 %v1922, %v1922
        %v2823 = vpack.c.bf16 %v1923, %v1923
        %v2824 = vpack.c.bf16 %v1924, %v1924
        %v2825 = vpack.c.bf16 %v1925, %v1925
        %v2826 = vpack.c.bf16 %v1926, %v1926
        %v2827 = vpack.c.bf16 %v1927, %v1927
        %v2828 = vpack.c.bf16 %v1928, %v1928
        %v2829 = vpack.c.bf16 %v1929, %v1929
        %v2830 = vpack.c.bf16 %v1930, %v1930
        %v2831 = vpack.c.bf16 %v1931, %v1931
        %v2832 = vpack.c.bf16 %v1932, %v1932
        %v2833 = vpack.c.bf16 %v1933, %v1933
        %v2834 = vpack.c.bf16 %v1934, %v1934
        %v2835 = vpack.c.bf16 %v1935, %v1935
        %v2836 = vpack.c.bf16 %v1936, %v1936
        %v2837 = vpack.c.bf16 %v1937, %v1937
        %v2838 = vpack.c.bf16 %v1938, %v1938
        %v2839 = vpack.c.bf16 %v1939, %v1939
        %v2840 = vpack.c.bf16 %v1940, %v1940
        %v2841 = vpack.c.bf16 %v1941, %v1941
        %v2842 = vpack.c.bf16 %v1942, %v1942
        %v2843 = vpack.c.bf16 %v1943, %v1943
        %v2844 = vpack.c.bf16 %v1944, %v1944
        %v2845 = vpack.c.bf16 %v1945, %v1945
        %v2846 = vpack.c.bf16 %v1946, %v1946
        %v2847 = vpack.c.bf16 %v1947, %v1947
        %v2848 = vpack.c.bf16 %v1948, %v1948
        %v2849 = vpack.c.bf16 %v1949, %v1949
        %v2850 = vpack.c.bf16 %v1950, %v1950
        %v2851 = vpack.c.bf16 %v1951, %v1951
        %v2852 = vpack.c.bf16 %v1952, %v1952
        %v2853 = vpack.c.bf16 %v1953, %v1953
        %v2854 = vpack.c.bf16 %v1954, %v1954
        %v2855 = vpack.c.bf16 %v1955, %v1955
        %v2856 = vpack.c.bf16 %v1956, %v1956
        %v2857 = vpack.c.bf16 %v1957, %v1957
        %v2858 = vpack.c.bf16 %v1958, %v1958
        %v2859 = vpack.c.bf16 %v1959, %v1959
        %v2860 = vpack.c.bf16 %v1960, %v1960
        %v2861 = vpack.c.bf16 %v1961, %v1961
        %v2862 = vpack.c.bf16 %v1962, %v1962
        %v2863 = vpack.c.bf16 %v1963, %v1963
        %v2864 = vpack.c.bf16 %v1964, %v1964
        %v2865 = vpack.c.bf16 %v1965, %v1965
        %v2866 = vpack.c.bf16 %v1966, %v1966
        %v2867 = vpack.c.bf16 %v1967, %v1967
        %v2868 = vpack.c.bf16 %v1968, %v1968
        %v2869 = vpack.c.bf16 %v1969, %v1969
        %v2870 = vpack.c.bf16 %v1970, %v1970
        %v2871 = vpack.c.bf16 %v1971, %v1971
        %v2872 = vpack.c.bf16 %v1972, %v1972
        %v2873 = vpack.c.bf16 %v1973, %v1973
        %v2874 = vpack.c.bf16 %v1974, %v1974
        %v2875 = vpack.c.bf16 %v1975, %v1975
        %v2876 = vpack.c.bf16 %v1976, %v1976
        %v2877 = vpack.c.bf16 %v1977, %v1977
        %v2878 = vpack.c.bf16 %v1978, %v1978
        %v2879 = vpack.c.bf16 %v1979, %v1979
        %v2880 = vpack.c.bf16 %v1980, %v1980
        %v2881 = vpack.c.bf16 %v1981, %v1981
        %v2882 = vpack.c.bf16 %v1982, %v1982
        %v2883 = vpack.c.bf16 %v1983, %v1983
        %v2884 = vpack.c.bf16 %v1984, %v1984
        %v2885 = vpack.c.bf16 %v1985, %v1985
        %v2886 = vpack.c.bf16 %v1986, %v1986
        %v2887 = vpack.c.bf16 %v1987, %v1987
        %v2888 = vpack.c.bf16 %v1988, %v1988
        %v2889 = vpack.c.bf16 %v1989, %v1989
        %v2890 = vpack.c.bf16 %v1990, %v1990
        %v2891 = vpack.c.bf16 %v1991, %v1991
        %v2892 = vpack.c.bf16 %v1992, %v1992
        %v2893 = vpack.c.bf16 %v1993, %v1993
        %v2894 = vpack.c.bf16 %v1994, %v1994
        %v2895 = vpack.c.bf16 %v1995, %v1995
        %v2896 = vpack.c.bf16 %v1996, %v1996
        %v2897 = vpack.c.bf16 %v1997, %v1997
        %v2898 = vpack.c.bf16 %v1998, %v1998
        %v2899 = vpack.c.bf16 %v1999, %v1999
        %v2900 = vpack.c.bf16 %v2000, %v2000
        %v2901 = vpack.c.bf16 %v2001, %v2001
        %v2902 = vpack.c.bf16 %v2002, %v2002
        %v2903 = vpack.c.bf16 %v2003, %v2003
        %v2904 = vpack.c.bf16 %v2004, %v2004
        %v2905 = vpack.c.bf16 %v2005, %v2005
        %v2906 = vpack.c.bf16 %v2006, %v2006
        %v2907 = vpack.c.bf16 %v2007, %v2007
        %v2908 = vpack.c.bf16 %v2008, %v2008
        %v2909 = vpack.c.bf16 %v2009, %v2009
        %v2910 = vpack.c.bf16 %v2010, %v2010
        %v2911 = vpack.c.bf16 %v2011, %v2011
        %v2912 = vpack.c.bf16 %v2012, %v2012
        %v2913 = vpack.c.bf16 %v2013, %v2013
        %v2914 = vpack.c.bf16 %v2014, %v2014
        %v2915 = vpack.c.bf16 %v2015, %v2015
        %v2916 = vpack.c.bf16 %v2016, %v2016
        %v2917 = vpack.c.bf16 %v2017, %v2017
        %v2918 = vpack.c.bf16 %v2018, %v2018
        %v2919 = vpack.c.bf16 %v2019, %v2019
        %v2920 = vpack.c.bf16 %v2020, %v2020
        %v2921 = vpack.c.bf16 %v2021, %v2021
        %v2922 = vpack.c.bf16 %v2022, %v2022
        %v2923 = vpack.c.bf16 %v2023, %v2023
        %v2924 = vpack.c.bf16 %v2024, %v2024
        %v2925 = vpack.c.bf16 %v2025, %v2025
        %v2926 = vpack.c.bf16 %v2026, %v2026
        %v2927 = vpack.c.bf16 %v2027, %v2027
        %v2928 = vpack.c.bf16 %v2028, %v2028
        %v2929 = vpack.c.bf16 %v2029, %v2029
        %v2930 = vpack.c.bf16 %v2030, %v2030
        %v2931 = vpack.c.bf16 %v2031, %v2031
        %v2932 = vpack.c.bf16 %v2032, %v2032
        %v2933 = vpack.c.bf16 %v2033, %v2033
        %v2934 = vpack.c.bf16 %v2034, %v2034
        %v2935 = vld [vmem:[#allocation4] sm:$0xff]
        %v2936 = vld [vmem:[#allocation4 + $0x8] sm:$0xff]
        %v2937 = vld [vmem:[#allocation4 + $0x10] sm:$0xff]
        %v2938 = vld [vmem:[#allocation4 + $0x18] sm:$0xff]
        %v2939 = vld [vmem:[#allocation4 + $0x20] sm:$0xff]
        %v2940 = vld [vmem:[#allocation4 + $0x28] sm:$0xff]
        %v2941 = vld [vmem:[#allocation4 + $0x30] sm:$0xff]
        %v2942 = vld [vmem:[#allocation4 + $0x38] sm:$0xff]
        %v2943 = vld [vmem:[#allocation4 + $0x40] sm:$0xff]
        %v2944 = vld [vmem:[#allocation4 + $0x48] sm:$0xff]
        %v2945 = vld [vmem:[#allocation4 + $0x50] sm:$0xff]
        %v2946 = vld [vmem:[#allocation4 + $0x58] sm:$0xff]
        %v2947 = vld [vmem:[#allocation4 + $0x60] sm:$0xff]
        %v2948 = vld [vmem:[#allocation4 + $0x68] sm:$0xff]
        %v2949 = vld [vmem:[#allocation4 + $0x70] sm:$0xff]
        %v2950 = vld [vmem:[#allocation4 + $0x78] sm:$0xff]
        %v2951 = vld [vmem:[#allocation4 + $0x80] sm:$0xff]
        %v2952 = vld [vmem:[#allocation4 + $0x88] sm:$0xff]
        %v2953 = vld [vmem:[#allocation4 + $0x90] sm:$0xff]
        %v2954 = vld [vmem:[#allocation4 + $0x98] sm:$0xff]
        %v2955 = vld [vmem:[#allocation4 + $0xa0] sm:$0xff]
        %v2956 = vld [vmem:[#allocation4 + $0xa8] sm:$0xff]
        %v2957 = vld [vmem:[#allocation4 + $0xb0] sm:$0xff]
        %v2958 = vld [vmem:[#allocation4 + $0xb8] sm:$0xff]
        %v2959 = vld [vmem:[#allocation4 + $0xc0] sm:$0xff]
        %v2960 = vld [vmem:[#allocation4 + $0xc8] sm:$0xff]
        %v2961 = vld [vmem:[#allocation4 + $0xd0] sm:$0xff]
        %v2962 = vld [vmem:[#allocation4 + $0xd8] sm:$0xff]
        %v2963 = vld [vmem:[#allocation4 + $0xe0] sm:$0xff]
        %v2964 = vld [vmem:[#allocation4 + $0xe8] sm:$0xff]
        %v2965 = vld [vmem:[#allocation4 + $0xf0] sm:$0xff]
        %v2966 = vld [vmem:[#allocation4 + $0xf8] sm:$0xff]
        %v2967 = vld [vmem:[#allocation4 + $0x100] sm:$0xff]
        %v2968 = vld [vmem:[#allocation4 + $0x108] sm:$0xff]
        %v2969 = vld [vmem:[#allocation4 + $0x110] sm:$0xff]
        %v2970 = vld [vmem:[#allocation4 + $0x118] sm:$0xff]
        %v2971 = vld [vmem:[#allocation4 + $0x120] sm:$0xff]
        %v2972 = vld [vmem:[#allocation4 + $0x128] sm:$0xff]
        %v2973 = vld [vmem:[#allocation4 + $0x130] sm:$0xff]
        %v2974 = vld [vmem:[#allocation4 + $0x138] sm:$0xff]
        %v2975 = vld [vmem:[#allocation4 + $0x140] sm:$0xff]
        %v2976 = vld [vmem:[#allocation4 + $0x148] sm:$0xff]
        %v2977 = vld [vmem:[#allocation4 + $0x150] sm:$0xff]
        %v2978 = vld [vmem:[#allocation4 + $0x158] sm:$0xff]
        %v2979 = vld [vmem:[#allocation4 + $0x160] sm:$0xff]
        %v2980 = vld [vmem:[#allocation4 + $0x168] sm:$0xff]
        %v2981 = vld [vmem:[#allocation4 + $0x170] sm:$0xff]
        %v2982 = vld [vmem:[#allocation4 + $0x178] sm:$0xff]
        %v2983 = vld [vmem:[#allocation4 + $0x180] sm:$0xff]
        %v2984 = vld [vmem:[#allocation4 + $0x188] sm:$0xff]
        %v2985 = vld [vmem:[#allocation4 + $0x190] sm:$0xff]
        %v2986 = vld [vmem:[#allocation4 + $0x198] sm:$0xff]
        %v2987 = vld [vmem:[#allocation4 + $0x1a0] sm:$0xff]
        %v2988 = vld [vmem:[#allocation4 + $0x1a8] sm:$0xff]
        %v2989 = vld [vmem:[#allocation4 + $0x1b0] sm:$0xff]
        %v2990 = vld [vmem:[#allocation4 + $0x1b8] sm:$0xff]
        %v2991 = vld [vmem:[#allocation4 + $0x1c0] sm:$0xff]
        %v2992 = vld [vmem:[#allocation4 + $0x1c8] sm:$0xff]
        %v2993 = vld [vmem:[#allocation4 + $0x1d0] sm:$0xff]
        %v2994 = vld [vmem:[#allocation4 + $0x1d8] sm:$0xff]
        %v2995 = vld [vmem:[#allocation4 + $0x1e0] sm:$0xff]
        %v2996 = vld [vmem:[#allocation4 + $0x1e8] sm:$0xff]
        %v2997 = vld [vmem:[#allocation4 + $0x1f0] sm:$0xff]
        %v2998 = vld [vmem:[#allocation4 + $0x1f8] sm:$0xff]
        %v2999 = vld [vmem:[#allocation4 + $0x200] sm:$0xff]
        %v3000 = vld [vmem:[#allocation4 + $0x208] sm:$0xff]
        %v3001 = vld [vmem:[#allocation4 + $0x210] sm:$0xff]
        %v3002 = vld [vmem:[#allocation4 + $0x218] sm:$0xff]
        %v3003 = vld [vmem:[#allocation4 + $0x220] sm:$0xff]
        %v3004 = vld [vmem:[#allocation4 + $0x228] sm:$0xff]
        %v3005 = vld [vmem:[#allocation4 + $0x230] sm:$0xff]
        %v3006 = vld [vmem:[#allocation4 + $0x238] sm:$0xff]
        %v3007 = vld [vmem:[#allocation4 + $0x240] sm:$0xff]
        %v3008 = vld [vmem:[#allocation4 + $0x248] sm:$0xff]
        %v3009 = vld [vmem:[#allocation4 + $0x250] sm:$0xff]
        %v3010 = vld [vmem:[#allocation4 + $0x258] sm:$0xff]
        %v3011 = vld [vmem:[#allocation4 + $0x260] sm:$0xff]
        %v3012 = vld [vmem:[#allocation4 + $0x268] sm:$0xff]
        %v3013 = vld [vmem:[#allocation4 + $0x270] sm:$0xff]
        %v3014 = vld [vmem:[#allocation4 + $0x278] sm:$0xff]
        %v3015 = vld [vmem:[#allocation4 + $0x280] sm:$0xff]
        %v3016 = vld [vmem:[#allocation4 + $0x288] sm:$0xff]
        %v3017 = vld [vmem:[#allocation4 + $0x290] sm:$0xff]
        %v3018 = vld [vmem:[#allocation4 + $0x298] sm:$0xff]
        %v3019 = vld [vmem:[#allocation4 + $0x2a0] sm:$0xff]
        %v3020 = vld [vmem:[#allocation4 + $0x2a8] sm:$0xff]
        %v3021 = vld [vmem:[#allocation4 + $0x2b0] sm:$0xff]
        %v3022 = vld [vmem:[#allocation4 + $0x2b8] sm:$0xff]
        %v3023 = vld [vmem:[#allocation4 + $0x2c0] sm:$0xff]
        %v3024 = vld [vmem:[#allocation4 + $0x2c8] sm:$0xff]
        %v3025 = vld [vmem:[#allocation4 + $0x2d0] sm:$0xff]
        %v3026 = vld [vmem:[#allocation4 + $0x2d8] sm:$0xff]
        %v3027 = vld [vmem:[#allocation4 + $0x2e0] sm:$0xff]
        %v3028 = vld [vmem:[#allocation4 + $0x2e8] sm:$0xff]
        %v3029 = vld [vmem:[#allocation4 + $0x2f0] sm:$0xff]
        %v3030 = vld [vmem:[#allocation4 + $0x2f8] sm:$0xff]
        %v3031 = vld [vmem:[#allocation4 + $0x300] sm:$0xff]
        %v3032 = vld [vmem:[#allocation4 + $0x308] sm:$0xff]
        %v3033 = vld [vmem:[#allocation4 + $0x310] sm:$0xff]
        %v3034 = vld [vmem:[#allocation4 + $0x318] sm:$0xff]
        %v3035 = vld [vmem:[#allocation4 + $0x320] sm:$0xff]
        %v3036 = vld [vmem:[#allocation4 + $0x328] sm:$0xff]
        %v3037 = vld [vmem:[#allocation4 + $0x330] sm:$0xff]
        %v3038 = vld [vmem:[#allocation4 + $0x338] sm:$0xff]
        %v3039 = vld [vmem:[#allocation4 + $0x340] sm:$0xff]
        %v3040 = vld [vmem:[#allocation4 + $0x348] sm:$0xff]
        %v3041 = vld [vmem:[#allocation4 + $0x350] sm:$0xff]
        %v3042 = vld [vmem:[#allocation4 + $0x358] sm:$0xff]
        %v3043 = vld [vmem:[#allocation4 + $0x360] sm:$0xff]
        %v3044 = vld [vmem:[#allocation4 + $0x368] sm:$0xff]
        %v3045 = vld [vmem:[#allocation4 + $0x370] sm:$0xff]
        %v3046 = vld [vmem:[#allocation4 + $0x378] sm:$0xff]
        %v3047 = vld [vmem:[#allocation4 + $0x380] sm:$0xff]
        %v3048 = vld [vmem:[#allocation4 + $0x388] sm:$0xff]
        %v3049 = vld [vmem:[#allocation4 + $0x390] sm:$0xff]
        %v3050 = vld [vmem:[#allocation4 + $0x398] sm:$0xff]
        %v3051 = vld [vmem:[#allocation4 + $0x3a0] sm:$0xff]
        %v3052 = vld [vmem:[#allocation4 + $0x3a8] sm:$0xff]
        %v3053 = vld [vmem:[#allocation4 + $0x3b0] sm:$0xff]
        %v3054 = vld [vmem:[#allocation4 + $0x3b8] sm:$0xff]
        %v3055 = vld [vmem:[#allocation4 + $0x3c0] sm:$0xff]
        %v3056 = vld [vmem:[#allocation4 + $0x3c8] sm:$0xff]
        %v3057 = vld [vmem:[#allocation4 + $0x3d0] sm:$0xff]
        %v3058 = vld [vmem:[#allocation4 + $0x3d8] sm:$0xff]
        %v3059 = vld [vmem:[#allocation4 + $0x3e0] sm:$0xff]
        %v3060 = vld [vmem:[#allocation4 + $0x3e8] sm:$0xff]
        %v3061 = vld [vmem:[#allocation4 + $0x3f0] sm:$0xff]
        %v3062 = vld [vmem:[#allocation4 + $0x3f8] sm:$0xff]
        %v3063 = vld [vmem:[#allocation4 + $0x400] sm:$0xff]
        %v3064 = vld [vmem:[#allocation4 + $0x408] sm:$0xff]
        %v3065 = vld [vmem:[#allocation4 + $0x410] sm:$0xff]
        %v3066 = vld [vmem:[#allocation4 + $0x418] sm:$0xff]
        %v3067 = vld [vmem:[#allocation4 + $0x420] sm:$0xff]
        %v3068 = vld [vmem:[#allocation4 + $0x428] sm:$0xff]
        %v3069 = vld [vmem:[#allocation4 + $0x430] sm:$0xff]
        %v3070 = vld [vmem:[#allocation4 + $0x438] sm:$0xff]
        %v3071 = vld [vmem:[#allocation4 + $0x440] sm:$0xff]
        %v3072 = vld [vmem:[#allocation4 + $0x448] sm:$0xff]
        %v3073 = vld [vmem:[#allocation4 + $0x450] sm:$0xff]
        %v3074 = vld [vmem:[#allocation4 + $0x458] sm:$0xff]
        %v3075 = vld [vmem:[#allocation4 + $0x460] sm:$0xff]
        %v3076 = vld [vmem:[#allocation4 + $0x468] sm:$0xff]
        %v3077 = vld [vmem:[#allocation4 + $0x470] sm:$0xff]
        %v3078 = vld [vmem:[#allocation4 + $0x478] sm:$0xff]
        %v3079 = vld [vmem:[#allocation4 + $0x480] sm:$0xff]
        %v3080 = vld [vmem:[#allocation4 + $0x488] sm:$0xff]
        %v3081 = vld [vmem:[#allocation4 + $0x490] sm:$0xff]
        %v3082 = vld [vmem:[#allocation4 + $0x498] sm:$0xff]
        %v3083 = vld [vmem:[#allocation4 + $0x4a0] sm:$0xff]
        %v3084 = vld [vmem:[#allocation4 + $0x4a8] sm:$0xff]
        %v3085 = vld [vmem:[#allocation4 + $0x4b0] sm:$0xff]
        %v3086 = vld [vmem:[#allocation4 + $0x4b8] sm:$0xff]
        %v3087 = vld [vmem:[#allocation4 + $0x4c0] sm:$0xff]
        %v3088 = vld [vmem:[#allocation4 + $0x4c8] sm:$0xff]
        %v3089 = vld [vmem:[#allocation4 + $0x4d0] sm:$0xff]
        %v3090 = vld [vmem:[#allocation4 + $0x4d8] sm:$0xff]
        %v3091 = vld [vmem:[#allocation4 + $0x4e0] sm:$0xff]
        %v3092 = vld [vmem:[#allocation4 + $0x4e8] sm:$0xff]
        %v3093 = vld [vmem:[#allocation4 + $0x4f0] sm:$0xff]
        %v3094 = vld [vmem:[#allocation4 + $0x4f8] sm:$0xff]
        %v3095 = vld [vmem:[#allocation4 + $0x500] sm:$0xff]
        %v3096 = vld [vmem:[#allocation4 + $0x508] sm:$0xff]
        %v3097 = vld [vmem:[#allocation4 + $0x510] sm:$0xff]
        %v3098 = vld [vmem:[#allocation4 + $0x518] sm:$0xff]
        %v3099 = vld [vmem:[#allocation4 + $0x520] sm:$0xff]
        %v3100 = vld [vmem:[#allocation4 + $0x528] sm:$0xff]
        %v3101 = vld [vmem:[#allocation4 + $0x530] sm:$0xff]
        %v3102 = vld [vmem:[#allocation4 + $0x538] sm:$0xff]
        %v3103 = vld [vmem:[#allocation4 + $0x540] sm:$0xff]
        %v3104 = vld [vmem:[#allocation4 + $0x548] sm:$0xff]
        %v3105 = vld [vmem:[#allocation4 + $0x550] sm:$0xff]
        %v3106 = vld [vmem:[#allocation4 + $0x558] sm:$0xff]
        %v3107 = vld [vmem:[#allocation4 + $0x560] sm:$0xff]
        %v3108 = vld [vmem:[#allocation4 + $0x568] sm:$0xff]
        %v3109 = vld [vmem:[#allocation4 + $0x570] sm:$0xff]
        %v3110 = vld [vmem:[#allocation4 + $0x578] sm:$0xff]
        %v3111 = vld [vmem:[#allocation4 + $0x580] sm:$0xff]
        %v3112 = vld [vmem:[#allocation4 + $0x588] sm:$0xff]
        %v3113 = vld [vmem:[#allocation4 + $0x590] sm:$0xff]
        %v3114 = vld [vmem:[#allocation4 + $0x598] sm:$0xff]
        %v3115 = vld [vmem:[#allocation4 + $0x5a0] sm:$0xff]
        %v3116 = vld [vmem:[#allocation4 + $0x5a8] sm:$0xff]
        %v3117 = vld [vmem:[#allocation4 + $0x5b0] sm:$0xff]
        %v3118 = vld [vmem:[#allocation4 + $0x5b8] sm:$0xff]
        %v3119 = vld [vmem:[#allocation4 + $0x5c0] sm:$0xff]
        %v3120 = vld [vmem:[#allocation4 + $0x5c8] sm:$0xff]
        %v3121 = vld [vmem:[#allocation4 + $0x5d0] sm:$0xff]
        %v3122 = vld [vmem:[#allocation4 + $0x5d8] sm:$0xff]
        %v3123 = vld [vmem:[#allocation4 + $0x5e0] sm:$0xff]
        %v3124 = vld [vmem:[#allocation4 + $0x5e8] sm:$0xff]
        %v3125 = vld [vmem:[#allocation4 + $0x5f0] sm:$0xff]
        %v3126 = vld [vmem:[#allocation4 + $0x5f8] sm:$0xff]
        %v3127 = vld [vmem:[#allocation4 + $0x600] sm:$0xff]
        %v3128 = vld [vmem:[#allocation4 + $0x608] sm:$0xff]
        %v3129 = vld [vmem:[#allocation4 + $0x610] sm:$0xff]
        %v3130 = vld [vmem:[#allocation4 + $0x618] sm:$0xff]
        %v3131 = vld [vmem:[#allocation4 + $0x620] sm:$0xff]
        %v3132 = vld [vmem:[#allocation4 + $0x628] sm:$0xff]
        %v3133 = vld [vmem:[#allocation4 + $0x630] sm:$0xff]
        %v3134 = vld [vmem:[#allocation4 + $0x638] sm:$0xff]
        %v3135 = vld [vmem:[#allocation4 + $0x640] sm:$0xff]
        %v3136 = vld [vmem:[#allocation4 + $0x648] sm:$0xff]
        %v3137 = vld [vmem:[#allocation4 + $0x650] sm:$0xff]
        %v3138 = vld [vmem:[#allocation4 + $0x658] sm:$0xff]
        %v3139 = vld [vmem:[#allocation4 + $0x660] sm:$0xff]
        %v3140 = vld [vmem:[#allocation4 + $0x668] sm:$0xff]
        %v3141 = vld [vmem:[#allocation4 + $0x670] sm:$0xff]
        %v3142 = vld [vmem:[#allocation4 + $0x678] sm:$0xff]
        %v3143 = vld [vmem:[#allocation4 + $0x680] sm:$0xff]
        %v3144 = vld [vmem:[#allocation4 + $0x688] sm:$0xff]
        %v3145 = vld [vmem:[#allocation4 + $0x690] sm:$0xff]
        %v3146 = vld [vmem:[#allocation4 + $0x698] sm:$0xff]
        %v3147 = vld [vmem:[#allocation4 + $0x6a0] sm:$0xff]
        %v3148 = vld [vmem:[#allocation4 + $0x6a8] sm:$0xff]
        %v3149 = vld [vmem:[#allocation4 + $0x6b0] sm:$0xff]
        %v3150 = vld [vmem:[#allocation4 + $0x6b8] sm:$0xff]
        %v3151 = vld [vmem:[#allocation4 + $0x6c0] sm:$0xff]
        %v3152 = vld [vmem:[#allocation4 + $0x6c8] sm:$0xff]
        %v3153 = vld [vmem:[#allocation4 + $0x6d0] sm:$0xff]
        %v3154 = vld [vmem:[#allocation4 + $0x6d8] sm:$0xff]
        %v3155 = vld [vmem:[#allocation4 + $0x6e0] sm:$0xff]
        %v3156 = vld [vmem:[#allocation4 + $0x6e8] sm:$0xff]
        %v3157 = vld [vmem:[#allocation4 + $0x6f0] sm:$0xff]
        %v3158 = vld [vmem:[#allocation4 + $0x6f8] sm:$0xff]
        %v3159 = vld [vmem:[#allocation4 + $0x700] sm:$0xff]
        %v3160 = vld [vmem:[#allocation4 + $0x708] sm:$0xff]
        %v3161 = vld [vmem:[#allocation4 + $0x710] sm:$0xff]
        %v3162 = vld [vmem:[#allocation4 + $0x718] sm:$0xff]
        %v3163 = vld [vmem:[#allocation4 + $0x720] sm:$0xff]
        %v3164 = vld [vmem:[#allocation4 + $0x728] sm:$0xff]
        %v3165 = vld [vmem:[#allocation4 + $0x730] sm:$0xff]
        %v3166 = vld [vmem:[#allocation4 + $0x738] sm:$0xff]
        %v3167 = vld [vmem:[#allocation4 + $0x740] sm:$0xff]
        %v3168 = vld [vmem:[#allocation4 + $0x748] sm:$0xff]
        %v3169 = vld [vmem:[#allocation4 + $0x750] sm:$0xff]
        %v3170 = vld [vmem:[#allocation4 + $0x758] sm:$0xff]
        %v3171 = vld [vmem:[#allocation4 + $0x760] sm:$0xff]
        %v3172 = vld [vmem:[#allocation4 + $0x768] sm:$0xff]
        %v3173 = vld [vmem:[#allocation4 + $0x770] sm:$0xff]
        %v3174 = vld [vmem:[#allocation4 + $0x778] sm:$0xff]
        %v3175 = vld [vmem:[#allocation4 + $0x780] sm:$0xff]
        %v3176 = vld [vmem:[#allocation4 + $0x788] sm:$0xff]
        %v3177 = vld [vmem:[#allocation4 + $0x790] sm:$0xff]
        %v3178 = vld [vmem:[#allocation4 + $0x798] sm:$0xff]
        %v3179 = vld [vmem:[#allocation4 + $0x7a0] sm:$0xff]
        %v3180 = vld [vmem:[#allocation4 + $0x7a8] sm:$0xff]
        %v3181 = vld [vmem:[#allocation4 + $0x7b0] sm:$0xff]
        %v3182 = vld [vmem:[#allocation4 + $0x7b8] sm:$0xff]
        %v3183 = vld [vmem:[#allocation4 + $0x7c0] sm:$0xff]
        %v3184 = vld [vmem:[#allocation4 + $0x7c8] sm:$0xff]
        %v3185 = vld [vmem:[#allocation4 + $0x7d0] sm:$0xff]
        %v3186 = vld [vmem:[#allocation4 + $0x7d8] sm:$0xff]
        %v3187 = vld [vmem:[#allocation4 + $0x7e0] sm:$0xff]
        %v3188 = vld [vmem:[#allocation4 + $0x7e8] sm:$0xff]
        %v3189 = vld [vmem:[#allocation4 + $0x7f0] sm:$0xff]
        %v3190 = vld [vmem:[#allocation4 + $0x7f8] sm:$0xff]
        %v3191 = vld [vmem:[#allocation4 + $0x800] sm:$0xff]
        %v3192 = vld [vmem:[#allocation4 + $0x808] sm:$0xff]
        %v3193 = vld [vmem:[#allocation4 + $0x810] sm:$0xff]
        %v3194 = vld [vmem:[#allocation4 + $0x818] sm:$0xff]
        %v3195 = vld [vmem:[#allocation4 + $0x820] sm:$0xff]
        %v3196 = vld [vmem:[#allocation4 + $0x828] sm:$0xff]
        %v3197 = vld [vmem:[#allocation4 + $0x830] sm:$0xff]
        %v3198 = vld [vmem:[#allocation4 + $0x838] sm:$0xff]
        %v3199 = vld [vmem:[#allocation4 + $0x840] sm:$0xff]
        %v3200 = vld [vmem:[#allocation4 + $0x848] sm:$0xff]
        %v3201 = vld [vmem:[#allocation4 + $0x850] sm:$0xff]
        %v3202 = vld [vmem:[#allocation4 + $0x858] sm:$0xff]
        %v3203 = vld [vmem:[#allocation4 + $0x860] sm:$0xff]
        %v3204 = vld [vmem:[#allocation4 + $0x868] sm:$0xff]
        %v3205 = vld [vmem:[#allocation4 + $0x870] sm:$0xff]
        %v3206 = vld [vmem:[#allocation4 + $0x878] sm:$0xff]
        %v3207 = vld [vmem:[#allocation4 + $0x880] sm:$0xff]
        %v3208 = vld [vmem:[#allocation4 + $0x888] sm:$0xff]
        %v3209 = vld [vmem:[#allocation4 + $0x890] sm:$0xff]
        %v3210 = vld [vmem:[#allocation4 + $0x898] sm:$0xff]
        %v3211 = vld [vmem:[#allocation4 + $0x8a0] sm:$0xff]
        %v3212 = vld [vmem:[#allocation4 + $0x8a8] sm:$0xff]
        %v3213 = vld [vmem:[#allocation4 + $0x8b0] sm:$0xff]
        %v3214 = vld [vmem:[#allocation4 + $0x8b8] sm:$0xff]
        %v3215 = vld [vmem:[#allocation4 + $0x8c0] sm:$0xff]
        %v3216 = vld [vmem:[#allocation4 + $0x8c8] sm:$0xff]
        %v3217 = vld [vmem:[#allocation4 + $0x8d0] sm:$0xff]
        %v3218 = vld [vmem:[#allocation4 + $0x8d8] sm:$0xff]
        %v3219 = vld [vmem:[#allocation4 + $0x8e0] sm:$0xff]
        %v3220 = vld [vmem:[#allocation4 + $0x8e8] sm:$0xff]
        %v3221 = vld [vmem:[#allocation4 + $0x8f0] sm:$0xff]
        %v3222 = vld [vmem:[#allocation4 + $0x8f8] sm:$0xff]
        %v3223 = vld [vmem:[#allocation4 + $0x900] sm:$0xff]
        %v3224 = vld [vmem:[#allocation4 + $0x908] sm:$0xff]
        %v3225 = vld [vmem:[#allocation4 + $0x910] sm:$0xff]
        %v3226 = vld [vmem:[#allocation4 + $0x918] sm:$0xff]
        %v3227 = vld [vmem:[#allocation4 + $0x920] sm:$0xff]
        %v3228 = vld [vmem:[#allocation4 + $0x928] sm:$0xff]
        %v3229 = vld [vmem:[#allocation4 + $0x930] sm:$0xff]
        %v3230 = vld [vmem:[#allocation4 + $0x938] sm:$0xff]
        %v3231 = vld [vmem:[#allocation4 + $0x940] sm:$0xff]
        %v3232 = vld [vmem:[#allocation4 + $0x948] sm:$0xff]
        %v3233 = vld [vmem:[#allocation4 + $0x950] sm:$0xff]
        %v3234 = vld [vmem:[#allocation4 + $0x958] sm:$0xff]
        %v3235 = vld [vmem:[#allocation4 + $0x960] sm:$0xff]
        %v3236 = vld [vmem:[#allocation4 + $0x968] sm:$0xff]
        %v3237 = vld [vmem:[#allocation4 + $0x970] sm:$0xff]
        %v3238 = vld [vmem:[#allocation4 + $0x978] sm:$0xff]
        %v3239 = vld [vmem:[#allocation4 + $0x980] sm:$0xff]
        %v3240 = vld [vmem:[#allocation4 + $0x988] sm:$0xff]
        %v3241 = vld [vmem:[#allocation4 + $0x990] sm:$0xff]
        %v3242 = vld [vmem:[#allocation4 + $0x998] sm:$0xff]
        %v3243 = vld [vmem:[#allocation4 + $0x9a0] sm:$0xff]
        %v3244 = vld [vmem:[#allocation4 + $0x9a8] sm:$0xff]
        %v3245 = vld [vmem:[#allocation4 + $0x9b0] sm:$0xff]
        %v3246 = vld [vmem:[#allocation4 + $0x9b8] sm:$0xff]
        %v3247 = vld [vmem:[#allocation4 + $0x9c0] sm:$0xff]
        %v3248 = vld [vmem:[#allocation4 + $0x9c8] sm:$0xff]
        %v3249 = vld [vmem:[#allocation4 + $0x9d0] sm:$0xff]
        %v3250 = vld [vmem:[#allocation4 + $0x9d8] sm:$0xff]
        %v3251 = vld [vmem:[#allocation4 + $0x9e0] sm:$0xff]
        %v3252 = vld [vmem:[#allocation4 + $0x9e8] sm:$0xff]
        %v3253 = vld [vmem:[#allocation4 + $0x9f0] sm:$0xff]
        %v3254 = vld [vmem:[#allocation4 + $0x9f8] sm:$0xff]
        %v3255 = vld [vmem:[#allocation4 + $0xa00] sm:$0xff]
        %v3256 = vld [vmem:[#allocation4 + $0xa08] sm:$0xff]
        %v3257 = vld [vmem:[#allocation4 + $0xa10] sm:$0xff]
        %v3258 = vld [vmem:[#allocation4 + $0xa18] sm:$0xff]
        %v3259 = vld [vmem:[#allocation4 + $0xa20] sm:$0xff]
        %v3260 = vld [vmem:[#allocation4 + $0xa28] sm:$0xff]
        %v3261 = vld [vmem:[#allocation4 + $0xa30] sm:$0xff]
        %v3262 = vld [vmem:[#allocation4 + $0xa38] sm:$0xff]
        %v3263 = vld [vmem:[#allocation4 + $0xa40] sm:$0xff]
        %v3264 = vld [vmem:[#allocation4 + $0xa48] sm:$0xff]
        %v3265 = vld [vmem:[#allocation4 + $0xa50] sm:$0xff]
        %v3266 = vld [vmem:[#allocation4 + $0xa58] sm:$0xff]
        %v3267 = vld [vmem:[#allocation4 + $0xa60] sm:$0xff]
        %v3268 = vld [vmem:[#allocation4 + $0xa68] sm:$0xff]
        %v3269 = vld [vmem:[#allocation4 + $0xa70] sm:$0xff]
        %v3270 = vld [vmem:[#allocation4 + $0xa78] sm:$0xff]
        %v3271 = vld [vmem:[#allocation4 + $0xa80] sm:$0xff]
        %v3272 = vld [vmem:[#allocation4 + $0xa88] sm:$0xff]
        %v3273 = vld [vmem:[#allocation4 + $0xa90] sm:$0xff]
        %v3274 = vld [vmem:[#allocation4 + $0xa98] sm:$0xff]
        %v3275 = vld [vmem:[#allocation4 + $0xaa0] sm:$0xff]
        %v3276 = vld [vmem:[#allocation4 + $0xaa8] sm:$0xff]
        %v3277 = vld [vmem:[#allocation4 + $0xab0] sm:$0xff]
        %v3278 = vld [vmem:[#allocation4 + $0xab8] sm:$0xff]
        %v3279 = vld [vmem:[#allocation4 + $0xac0] sm:$0xff]
        %v3280 = vld [vmem:[#allocation4 + $0xac8] sm:$0xff]
        %v3281 = vld [vmem:[#allocation4 + $0xad0] sm:$0xff]
        %v3282 = vld [vmem:[#allocation4 + $0xad8] sm:$0xff]
        %v3283 = vld [vmem:[#allocation4 + $0xae0] sm:$0xff]
        %v3284 = vld [vmem:[#allocation4 + $0xae8] sm:$0xff]
        %v3285 = vld [vmem:[#allocation4 + $0xaf0] sm:$0xff]
        %v3286 = vld [vmem:[#allocation4 + $0xaf8] sm:$0xff]
        %v3287 = vld [vmem:[#allocation4 + $0xb00] sm:$0xff]
        %v3288 = vld [vmem:[#allocation4 + $0xb08] sm:$0xff]
        %v3289 = vld [vmem:[#allocation4 + $0xb10] sm:$0xff]
        %v3290 = vld [vmem:[#allocation4 + $0xb18] sm:$0xff]
        %v3291 = vld [vmem:[#allocation4 + $0xb20] sm:$0xff]
        %v3292 = vld [vmem:[#allocation4 + $0xb28] sm:$0xff]
        %v3293 = vld [vmem:[#allocation4 + $0xb30] sm:$0xff]
        %v3294 = vld [vmem:[#allocation4 + $0xb38] sm:$0xff]
        %v3295 = vld [vmem:[#allocation4 + $0xb40] sm:$0xff]
        %v3296 = vld [vmem:[#allocation4 + $0xb48] sm:$0xff]
        %v3297 = vld [vmem:[#allocation4 + $0xb50] sm:$0xff]
        %v3298 = vld [vmem:[#allocation4 + $0xb58] sm:$0xff]
        %v3299 = vld [vmem:[#allocation4 + $0xb60] sm:$0xff]
        %v3300 = vld [vmem:[#allocation4 + $0xb68] sm:$0xff]
        %v3301 = vld [vmem:[#allocation4 + $0xb70] sm:$0xff]
        %v3302 = vld [vmem:[#allocation4 + $0xb78] sm:$0xff]
        %v3303 = vld [vmem:[#allocation4 + $0xb80] sm:$0xff]
        %v3304 = vld [vmem:[#allocation4 + $0xb88] sm:$0xff]
        %v3305 = vld [vmem:[#allocation4 + $0xb90] sm:$0xff]
        %v3306 = vld [vmem:[#allocation4 + $0xb98] sm:$0xff]
        %v3307 = vld [vmem:[#allocation4 + $0xba0] sm:$0xff]
        %v3308 = vld [vmem:[#allocation4 + $0xba8] sm:$0xff]
        %v3309 = vld [vmem:[#allocation4 + $0xbb0] sm:$0xff]
        %v3310 = vld [vmem:[#allocation4 + $0xbb8] sm:$0xff]
        %v3311 = vld [vmem:[#allocation4 + $0xbc0] sm:$0xff]
        %v3312 = vld [vmem:[#allocation4 + $0xbc8] sm:$0xff]
        %v3313 = vld [vmem:[#allocation4 + $0xbd0] sm:$0xff]
        %v3314 = vld [vmem:[#allocation4 + $0xbd8] sm:$0xff]
        %v3315 = vld [vmem:[#allocation4 + $0xbe0] sm:$0xff]
        %v3316 = vld [vmem:[#allocation4 + $0xbe8] sm:$0xff]
        %v3317 = vld [vmem:[#allocation4 + $0xbf0] sm:$0xff]
        %v3318 = vld [vmem:[#allocation4 + $0xbf8] sm:$0xff]
        %v3319 = vld [vmem:[#allocation4 + $0xc00] sm:$0xff]
        %v3320 = vld [vmem:[#allocation4 + $0xc08] sm:$0xff]
        %v3321 = vld [vmem:[#allocation4 + $0xc10] sm:$0xff]
        %v3322 = vld [vmem:[#allocation4 + $0xc18] sm:$0xff]
        %v3323 = vld [vmem:[#allocation4 + $0xc20] sm:$0xff]
        %v3324 = vld [vmem:[#allocation4 + $0xc28] sm:$0xff]
        %v3325 = vld [vmem:[#allocation4 + $0xc30] sm:$0xff]
        %v3326 = vld [vmem:[#allocation4 + $0xc38] sm:$0xff]
        %v3327 = vld [vmem:[#allocation4 + $0xc40] sm:$0xff]
        %v3328 = vld [vmem:[#allocation4 + $0xc48] sm:$0xff]
        %v3329 = vld [vmem:[#allocation4 + $0xc50] sm:$0xff]
        %v3330 = vld [vmem:[#allocation4 + $0xc58] sm:$0xff]
        %v3331 = vld [vmem:[#allocation4 + $0xc60] sm:$0xff]
        %v3332 = vld [vmem:[#allocation4 + $0xc68] sm:$0xff]
        %v3333 = vld [vmem:[#allocation4 + $0xc70] sm:$0xff]
        %v3334 = vld [vmem:[#allocation4 + $0xc78] sm:$0xff]
        %v3335 = vld [vmem:[#allocation4 + $0xc80] sm:$0xff]
        %v3336 = vld [vmem:[#allocation4 + $0xc88] sm:$0xff]
        %v3337 = vld [vmem:[#allocation4 + $0xc90] sm:$0xff]
        %v3338 = vld [vmem:[#allocation4 + $0xc98] sm:$0xff]
        %v3339 = vld [vmem:[#allocation4 + $0xca0] sm:$0xff]
        %v3340 = vld [vmem:[#allocation4 + $0xca8] sm:$0xff]
        %v3341 = vld [vmem:[#allocation4 + $0xcb0] sm:$0xff]
        %v3342 = vld [vmem:[#allocation4 + $0xcb8] sm:$0xff]
        %v3343 = vld [vmem:[#allocation4 + $0xcc0] sm:$0xff]
        %v3344 = vld [vmem:[#allocation4 + $0xcc8] sm:$0xff]
        %v3345 = vld [vmem:[#allocation4 + $0xcd0] sm:$0xff]
        %v3346 = vld [vmem:[#allocation4 + $0xcd8] sm:$0xff]
        %v3347 = vld [vmem:[#allocation4 + $0xce0] sm:$0xff]
        %v3348 = vld [vmem:[#allocation4 + $0xce8] sm:$0xff]
        %v3349 = vld [vmem:[#allocation4 + $0xcf0] sm:$0xff]
        %v3350 = vld [vmem:[#allocation4 + $0xcf8] sm:$0xff]
        %v3351 = vld [vmem:[#allocation4 + $0xd00] sm:$0xff]
        %v3352 = vld [vmem:[#allocation4 + $0xd08] sm:$0xff]
        %v3353 = vld [vmem:[#allocation4 + $0xd10] sm:$0xff]
        %v3354 = vld [vmem:[#allocation4 + $0xd18] sm:$0xff]
        %v3355 = vld [vmem:[#allocation4 + $0xd20] sm:$0xff]
        %v3356 = vld [vmem:[#allocation4 + $0xd28] sm:$0xff]
        %v3357 = vld [vmem:[#allocation4 + $0xd30] sm:$0xff]
        %v3358 = vld [vmem:[#allocation4 + $0xd38] sm:$0xff]
        %v3359 = vld [vmem:[#allocation4 + $0xd40] sm:$0xff]
        %v3360 = vld [vmem:[#allocation4 + $0xd48] sm:$0xff]
        %v3361 = vld [vmem:[#allocation4 + $0xd50] sm:$0xff]
        %v3362 = vld [vmem:[#allocation4 + $0xd58] sm:$0xff]
        %v3363 = vld [vmem:[#allocation4 + $0xd60] sm:$0xff]
        %v3364 = vld [vmem:[#allocation4 + $0xd68] sm:$0xff]
        %v3365 = vld [vmem:[#allocation4 + $0xd70] sm:$0xff]
        %v3366 = vld [vmem:[#allocation4 + $0xd78] sm:$0xff]
        %v3367 = vld [vmem:[#allocation4 + $0xd80] sm:$0xff]
        %v3368 = vld [vmem:[#allocation4 + $0xd88] sm:$0xff]
        %v3369 = vld [vmem:[#allocation4 + $0xd90] sm:$0xff]
        %v3370 = vld [vmem:[#allocation4 + $0xd98] sm:$0xff]
        %v3371 = vld [vmem:[#allocation4 + $0xda0] sm:$0xff]
        %v3372 = vld [vmem:[#allocation4 + $0xda8] sm:$0xff]
        %v3373 = vld [vmem:[#allocation4 + $0xdb0] sm:$0xff]
        %v3374 = vld [vmem:[#allocation4 + $0xdb8] sm:$0xff]
        %v3375 = vld [vmem:[#allocation4 + $0xdc0] sm:$0xff]
        %v3376 = vld [vmem:[#allocation4 + $0xdc8] sm:$0xff]
        %v3377 = vld [vmem:[#allocation4 + $0xdd0] sm:$0xff]
        %v3378 = vld [vmem:[#allocation4 + $0xdd8] sm:$0xff]
        %v3379 = vld [vmem:[#allocation4 + $0xde0] sm:$0xff]
        %v3380 = vld [vmem:[#allocation4 + $0xde8] sm:$0xff]
        %v3381 = vld [vmem:[#allocation4 + $0xdf0] sm:$0xff]
        %v3382 = vld [vmem:[#allocation4 + $0xdf8] sm:$0xff]
        %v3383 = vld [vmem:[#allocation4 + $0xe00] sm:$0xff]
        %v3384 = vld [vmem:[#allocation4 + $0xe08] sm:$0xff]
        %v3385 = vld [vmem:[#allocation4 + $0xe10] sm:$0xff]
        %v3386 = vld [vmem:[#allocation4 + $0xe18] sm:$0xff]
        %v3387 = vld [vmem:[#allocation4 + $0xe20] sm:$0xff]
        %v3388 = vld [vmem:[#allocation4 + $0xe28] sm:$0xff]
        %v3389 = vld [vmem:[#allocation4 + $0xe30] sm:$0xff]
        %v3390 = vld [vmem:[#allocation4 + $0xe38] sm:$0xff]
        %v3391 = vld [vmem:[#allocation4 + $0xe40] sm:$0xff]
        %v3392 = vld [vmem:[#allocation4 + $0xe48] sm:$0xff]
        %v3393 = vld [vmem:[#allocation4 + $0xe50] sm:$0xff]
        %v3394 = vld [vmem:[#allocation4 + $0xe58] sm:$0xff]
        %v3395 = vld [vmem:[#allocation4 + $0xe60] sm:$0xff]
        %v3396 = vld [vmem:[#allocation4 + $0xe68] sm:$0xff]
        %v3397 = vld [vmem:[#allocation4 + $0xe70] sm:$0xff]
        %v3398 = vld [vmem:[#allocation4 + $0xe78] sm:$0xff]
        %v3399 = vld [vmem:[#allocation4 + $0xe80] sm:$0xff]
        %v3400 = vld [vmem:[#allocation4 + $0xe88] sm:$0xff]
        %v3401 = vld [vmem:[#allocation4 + $0xe90] sm:$0xff]
        %v3402 = vld [vmem:[#allocation4 + $0xe98] sm:$0xff]
        %v3403 = vld [vmem:[#allocation4 + $0xea0] sm:$0xff]
        %v3404 = vld [vmem:[#allocation4 + $0xea8] sm:$0xff]
        %v3405 = vld [vmem:[#allocation4 + $0xeb0] sm:$0xff]
        %v3406 = vld [vmem:[#allocation4 + $0xeb8] sm:$0xff]
        %v3407 = vld [vmem:[#allocation4 + $0xec0] sm:$0xff]
        %v3408 = vld [vmem:[#allocation4 + $0xec8] sm:$0xff]
        %v3409 = vld [vmem:[#allocation4 + $0xed0] sm:$0xff]
        %v3410 = vld [vmem:[#allocation4 + $0xed8] sm:$0xff]
        %v3411 = vld [vmem:[#allocation4 + $0xee0] sm:$0xff]
        %v3412 = vld [vmem:[#allocation4 + $0xee8] sm:$0xff]
        %v3413 = vld [vmem:[#allocation4 + $0xef0] sm:$0xff]
        %v3414 = vld [vmem:[#allocation4 + $0xef8] sm:$0xff]
        %v3415 = vld [vmem:[#allocation4 + $0xf00] sm:$0xff]
        %v3416 = vld [vmem:[#allocation4 + $0xf08] sm:$0xff]
        %v3417 = vld [vmem:[#allocation4 + $0xf10] sm:$0xff]
        %v3418 = vld [vmem:[#allocation4 + $0xf18] sm:$0xff]
        %v3419 = vld [vmem:[#allocation4 + $0xf20] sm:$0xff]
        %v3420 = vld [vmem:[#allocation4 + $0xf28] sm:$0xff]
        %v3421 = vld [vmem:[#allocation4 + $0xf30] sm:$0xff]
        %v3422 = vld [vmem:[#allocation4 + $0xf38] sm:$0xff]
        %v3423 = vld [vmem:[#allocation4 + $0xf40] sm:$0xff]
        %v3424 = vld [vmem:[#allocation4 + $0xf48] sm:$0xff]
        %v3425 = vld [vmem:[#allocation4 + $0xf50] sm:$0xff]
        %v3426 = vld [vmem:[#allocation4 + $0xf58] sm:$0xff]
        %v3427 = vld [vmem:[#allocation4 + $0xf60] sm:$0xff]
        %v3428 = vld [vmem:[#allocation4 + $0xf68] sm:$0xff]
        %v3429 = vld [vmem:[#allocation4 + $0xf70] sm:$0xff]
        %v3430 = vld [vmem:[#allocation4 + $0xf78] sm:$0xff]
        %v3431 = vld [vmem:[#allocation4 + $0xf80] sm:$0xff]
        %v3432 = vld [vmem:[#allocation4 + $0xf88] sm:$0xff]
        %v3433 = vld [vmem:[#allocation4 + $0xf90] sm:$0xff]
        %v3434 = vld [vmem:[#allocation4 + $0xf98] sm:$0xff]
        %v3435 = vld [vmem:[#allocation4 + $0xfa0] sm:$0xff]
        %v3436 = vld [vmem:[#allocation4 + $0xfa8] sm:$0xff]
        %v3437 = vld [vmem:[#allocation4 + $0xfb0] sm:$0xff]
        %v3438 = vld [vmem:[#allocation4 + $0xfb8] sm:$0xff]
        %v3439 = vld [vmem:[#allocation4 + $0xfc0] sm:$0xff]
        %v3440 = vld [vmem:[#allocation4 + $0xfc8] sm:$0xff]
        %v3441 = vld [vmem:[#allocation4 + $0xfd0] sm:$0xff]
        %v3442 = vld [vmem:[#allocation4 + $0xfd8] sm:$0xff]
        %v3443 = vld [vmem:[#allocation4 + $0xfe0] sm:$0xff]
        %v3444 = vld [vmem:[#allocation4 + $0xfe8] sm:$0xff]
        %v3445 = vld [vmem:[#allocation4 + $0xff0] sm:$0xff]
        %v3446 = vld [vmem:[#allocation4 + $0xff8] sm:$0xff]
        %v3447 = vld [vmem:[#allocation6] sm:$0xf]
        %v3449 = vlaneseq
        %v3450 = vshrl.u32 %v3449, 7
        %v3451 = vsub.s32 0, %v3450
        %v3452 = vrot.slane %v3447, %v3451
        %v3453 = vlaneseq
        %v3454 = vshrl.u32 %v3453, 7
        %v3455 = vsub.s32 1, %v3454
        %v3456 = vrot.slane %v3447, %v3455
        %v3457 = vlaneseq
        %v3458 = vshrl.u32 %v3457, 7
        %v3459 = vsub.s32 2, %v3458
        %v3460 = vrot.slane %v3447, %v3459
        %v3461 = vlaneseq
        %v3462 = vshrl.u32 %v3461, 7
        %v3463 = vsub.s32 3, %v3462
        %v3464 = vrot.slane %v3447, %v3463
        %v3597 = vunpack.c.l.b16 %v2807
        %v3598 = vunpack.c.l.b16 %v2808
        %v3599 = vunpack.c.l.b16 %v2809
        %v3600 = vunpack.c.l.b16 %v2810
        %v3601 = vunpack.c.l.b16 %v2811
        %v3602 = vunpack.c.l.b16 %v2812
        %v3603 = vunpack.c.l.b16 %v2813
        %v3604 = vunpack.c.l.b16 %v2814
        %v3605 = vunpack.c.l.b16 %v2815
        %v3606 = vunpack.c.l.b16 %v2816
        %v3607 = vunpack.c.l.b16 %v2817
        %v3608 = vunpack.c.l.b16 %v2818
        %v3609 = vunpack.c.l.b16 %v2819
        %v3610 = vunpack.c.l.b16 %v2820
        %v3611 = vunpack.c.l.b16 %v2821
        %v3612 = vunpack.c.l.b16 %v2822
        %v3613 = vunpack.c.l.b16 %v2823
        %v3614 = vunpack.c.l.b16 %v2824
        %v3615 = vunpack.c.l.b16 %v2825
        %v3616 = vunpack.c.l.b16 %v2826
        %v3617 = vunpack.c.l.b16 %v2827
        %v3618 = vunpack.c.l.b16 %v2828
        %v3619 = vunpack.c.l.b16 %v2829
        %v3620 = vunpack.c.l.b16 %v2830
        %v3621 = vunpack.c.l.b16 %v2831
        %v3622 = vunpack.c.l.b16 %v2832
        %v3623 = vunpack.c.l.b16 %v2833
        %v3624 = vunpack.c.l.b16 %v2834
        %v3625 = vunpack.c.l.b16 %v2835
        %v3626 = vunpack.c.l.b16 %v2836
        %v3627 = vunpack.c.l.b16 %v2837
        %v3628 = vunpack.c.l.b16 %v2838
        %v3629 = vunpack.c.l.b16 %v2839
        %v3630 = vunpack.c.l.b16 %v2840
        %v3631 = vunpack.c.l.b16 %v2841
        %v3632 = vunpack.c.l.b16 %v2842
        %v3633 = vunpack.c.l.b16 %v2843
        %v3634 = vunpack.c.l.b16 %v2844
        %v3635 = vunpack.c.l.b16 %v2845
        %v3636 = vunpack.c.l.b16 %v2846
        %v3637 = vunpack.c.l.b16 %v2847
        %v3638 = vunpack.c.l.b16 %v2848
        %v3639 = vunpack.c.l.b16 %v2849
        %v3640 = vunpack.c.l.b16 %v2850
        %v3641 = vunpack.c.l.b16 %v2851
        %v3642 = vunpack.c.l.b16 %v2852
        %v3643 = vunpack.c.l.b16 %v2853
        %v3644 = vunpack.c.l.b16 %v2854
        %v3645 = vunpack.c.l.b16 %v2855
        %v3646 = vunpack.c.l.b16 %v2856
        %v3647 = vunpack.c.l.b16 %v2857
        %v3648 = vunpack.c.l.b16 %v2858
        %v3649 = vunpack.c.l.b16 %v2859
        %v3650 = vunpack.c.l.b16 %v2860
        %v3651 = vunpack.c.l.b16 %v2861
        %v3652 = vunpack.c.l.b16 %v2862
        %v3653 = vunpack.c.l.b16 %v2863
        %v3654 = vunpack.c.l.b16 %v2864
        %v3655 = vunpack.c.l.b16 %v2865
        %v3656 = vunpack.c.l.b16 %v2866
        %v3657 = vunpack.c.l.b16 %v2867
        %v3658 = vunpack.c.l.b16 %v2868
        %v3659 = vunpack.c.l.b16 %v2869
        %v3660 = vunpack.c.l.b16 %v2870
        %v3661 = vunpack.c.l.b16 %v2871
        %v3662 = vunpack.c.l.b16 %v2872
        %v3663 = vunpack.c.l.b16 %v2873
        %v3664 = vunpack.c.l.b16 %v2874
        %v3665 = vunpack.c.l.b16 %v2875
        %v3666 = vunpack.c.l.b16 %v2876
        %v3667 = vunpack.c.l.b16 %v2877
        %v3668 = vunpack.c.l.b16 %v2878
        %v3669 = vunpack.c.l.b16 %v2879
        %v3670 = vunpack.c.l.b16 %v2880
        %v3671 = vunpack.c.l.b16 %v2881
        %v3672 = vunpack.c.l.b16 %v2882
        %v3673 = vunpack.c.l.b16 %v2883
        %v3674 = vunpack.c.l.b16 %v2884
        %v3675 = vunpack.c.l.b16 %v2885
        %v3676 = vunpack.c.l.b16 %v2886
        %v3677 = vunpack.c.l.b16 %v2887
        %v3678 = vunpack.c.l.b16 %v2888
        %v3679 = vunpack.c.l.b16 %v2889
        %v3680 = vunpack.c.l.b16 %v2890
        %v3681 = vunpack.c.l.b16 %v2891
        %v3682 = vunpack.c.l.b16 %v2892
        %v3683 = vunpack.c.l.b16 %v2893
        %v3684 = vunpack.c.l.b16 %v2894
        %v3685 = vunpack.c.l.b16 %v2895
        %v3686 = vunpack.c.l.b16 %v2896
        %v3687 = vunpack.c.l.b16 %v2897
        %v3688 = vunpack.c.l.b16 %v2898
        %v3689 = vunpack.c.l.b16 %v2899
        %v3690 = vunpack.c.l.b16 %v2900
        %v3691 = vunpack.c.l.b16 %v2901
        %v3692 = vunpack.c.l.b16 %v2902
        %v3693 = vunpack.c.l.b16 %v2903
        %v3694 = vunpack.c.l.b16 %v2904
        %v3695 = vunpack.c.l.b16 %v2905
        %v3696 = vunpack.c.l.b16 %v2906
        %v3697 = vunpack.c.l.b16 %v2907
        %v3698 = vunpack.c.l.b16 %v2908
        %v3699 = vunpack.c.l.b16 %v2909
        %v3700 = vunpack.c.l.b16 %v2910
        %v3701 = vunpack.c.l.b16 %v2911
        %v3702 = vunpack.c.l.b16 %v2912
        %v3703 = vunpack.c.l.b16 %v2913
        %v3704 = vunpack.c.l.b16 %v2914
        %v3705 = vunpack.c.l.b16 %v2915
        %v3706 = vunpack.c.l.b16 %v2916
        %v3707 = vunpack.c.l.b16 %v2917
        %v3708 = vunpack.c.l.b16 %v2918
        %v3709 = vunpack.c.l.b16 %v2919
        %v3710 = vunpack.c.l.b16 %v2920
        %v3711 = vunpack.c.l.b16 %v2921
        %v3712 = vunpack.c.l.b16 %v2922
        %v3713 = vunpack.c.l.b16 %v2923
        %v3714 = vunpack.c.l.b16 %v2924
        %v3715 = vunpack.c.l.b16 %v2925
        %v3716 = vunpack.c.l.b16 %v2926
        %v3717 = vunpack.c.l.b16 %v2927
        %v3718 = vunpack.c.l.b16 %v2928
        %v3719 = vunpack.c.l.b16 %v2929
        %v3720 = vunpack.c.l.b16 %v2930
        %v3721 = vunpack.c.l.b16 %v2931
        %v3722 = vunpack.c.l.b16 %v2932
        %v3723 = vunpack.c.l.b16 %v2933
        %v3724 = vunpack.c.l.b16 %v2934
        %v3725 = vrot.slane %v3613, 7
        %vm3726 = vcmask 1041409
        %v3727 = vsel %vm3726, %v3725, %v3597
        %v3728 = vrot.slane %v3629, 6
        %vm3729 = vcmask 1042434
        %v3730 = vsel %vm3729, %v3728, %v3727
        %v3731 = vrot.slane %v3645, 5
        %vm3732 = vcmask 1043459
        %v3733 = vsel %vm3732, %v3731, %v3730
        %v3734 = vrot.slane %v3661, 4
        %vm3735 = vcmask 1044484
        %v3736 = vsel %vm3735, %v3734, %v3733
        %v3737 = vrot.slane %v3677, 3
        %vm3738 = vcmask 1045509
        %v3739 = vsel %vm3738, %v3737, %v3736
        %v3740 = vrot.slane %v3693, 2
        %vm3741 = vcmask 1046534
        %v3742 = vsel %vm3741, %v3740, %v3739
        %v3743 = vrot.slane %v3709, 1
        %vm3744 = vcmask 1047559
        %v3745 = vsel %vm3744, %v3743, %v3742
        %v3746 = vrot.slane %v3614, 7
        %v3747 = vsel %vm3726, %v3746, %v3598
        %v3748 = vrot.slane %v3630, 6
        %v3749 = vsel %vm3729, %v3748, %v3747
        %v3750 = vrot.slane %v3646, 5
        %v3751 = vsel %vm3732, %v3750, %v3749
        %v3752 = vrot.slane %v3662, 4
        %v3753 = vsel %vm3735, %v3752, %v3751
        %v3754 = vrot.slane %v3678, 3
        %v3755 = vsel %vm3738, %v3754, %v3753
        %v3756 = vrot.slane %v3694, 2
        %v3757 = vsel %vm3741, %v3756, %v3755
        %v3758 = vrot.slane %v3710, 1
        %v3759 = vsel %vm3744, %v3758, %v3757
        %v3760 = vrot.slane %v3615, 7
        %v3761 = vsel %vm3726, %v3760, %v3599
        %v3762 = vrot.slane %v3631, 6
        %v3763 = vsel %vm3729, %v3762, %v3761
        %v3764 = vrot.slane %v3647, 5
        %v3765 = vsel %vm3732, %v3764, %v3763
        %v3766 = vrot.slane %v3663, 4
        %v3767 = vsel %vm3735, %v3766, %v3765
        %v3768 = vrot.slane %v3679, 3
        %v3769 = vsel %vm3738, %v3768, %v3767
        %v3770 = vrot.slane %v3695, 2
        %v3771 = vsel %vm3741, %v3770, %v3769
        %v3772 = vrot.slane %v3711, 1
        %v3773 = vsel %vm3744, %v3772, %v3771
        %v3774 = vrot.slane %v3616, 7
        %v3775 = vsel %vm3726, %v3774, %v3600
        %v3776 = vrot.slane %v3632, 6
        %v3777 = vsel %vm3729, %v3776, %v3775
        %v3778 = vrot.slane %v3648, 5
        %v3779 = vsel %vm3732, %v3778, %v3777
        %v3780 = vrot.slane %v3664, 4
        %v3781 = vsel %vm3735, %v3780, %v3779
        %v3782 = vrot.slane %v3680, 3
        %v3783 = vsel %vm3738, %v3782, %v3781
        %v3784 = vrot.slane %v3696, 2
        %v3785 = vsel %vm3741, %v3784, %v3783
        %v3786 = vrot.slane %v3712, 1
        %v3787 = vsel %vm3744, %v3786, %v3785
        %v3788 = vrot.slane %v3617, 7
        %v3789 = vsel %vm3726, %v3788, %v3601
        %v3790 = vrot.slane %v3633, 6
        %v3791 = vsel %vm3729, %v3790, %v3789
        %v3792 = vrot.slane %v3649, 5
        %v3793 = vsel %vm3732, %v3792, %v3791
        %v3794 = vrot.slane %v3665, 4
        %v3795 = vsel %vm3735, %v3794, %v3793
        %v3796 = vrot.slane %v3681, 3
        %v3797 = vsel %vm3738, %v3796, %v3795
        %v3798 = vrot.slane %v3697, 2
        %v3799 = vsel %vm3741, %v3798, %v3797
        %v3800 = vrot.slane %v3713, 1
        %v3801 = vsel %vm3744, %v3800, %v3799
        %v3802 = vrot.slane %v3618, 7
        %v3803 = vsel %vm3726, %v3802, %v3602
        %v3804 = vrot.slane %v3634, 6
        %v3805 = vsel %vm3729, %v3804, %v3803
        %v3806 = vrot.slane %v3650, 5
        %v3807 = vsel %vm3732, %v3806, %v3805
        %v3808 = vrot.slane %v3666, 4
        %v3809 = vsel %vm3735, %v3808, %v3807
        %v3810 = vrot.slane %v3682, 3
        %v3811 = vsel %vm3738, %v3810, %v3809
        %v3812 = vrot.slane %v3698, 2
        %v3813 = vsel %vm3741, %v3812, %v3811
        %v3814 = vrot.slane %v3714, 1
        %v3815 = vsel %vm3744, %v3814, %v3813
        %v3816 = vrot.slane %v3619, 7
        %v3817 = vsel %vm3726, %v3816, %v3603
        %v3818 = vrot.slane %v3635, 6
        %v3819 = vsel %vm3729, %v3818, %v3817
        %v3820 = vrot.slane %v3651, 5
        %v3821 = vsel %vm3732, %v3820, %v3819
        %v3822 = vrot.slane %v3667, 4
        %v3823 = vsel %vm3735, %v3822, %v3821
        %v3824 = vrot.slane %v3683, 3
        %v3825 = vsel %vm3738, %v3824, %v3823
        %v3826 = vrot.slane %v3699, 2
        %v3827 = vsel %vm3741, %v3826, %v3825
        %v3828 = vrot.slane %v3715, 1
        %v3829 = vsel %vm3744, %v3828, %v3827
        %v3830 = vrot.slane %v3620, 7
        %v3831 = vsel %vm3726, %v3830, %v3604
        %v3832 = vrot.slane %v3636, 6
        %v3833 = vsel %vm3729, %v3832, %v3831
        %v3834 = vrot.slane %v3652, 5
        %v3835 = vsel %vm3732, %v3834, %v3833
        %v3836 = vrot.slane %v3668, 4
        %v3837 = vsel %vm3735, %v3836, %v3835
        %v3838 = vrot.slane %v3684, 3
        %v3839 = vsel %vm3738, %v3838, %v3837
        %v3840 = vrot.slane %v3700, 2
        %v3841 = vsel %vm3741, %v3840, %v3839
        %v3842 = vrot.slane %v3716, 1
        %v3843 = vsel %vm3744, %v3842, %v3841
        %v3844 = vrot.slane %v3621, 7
        %v3845 = vsel %vm3726, %v3844, %v3605
        %v3846 = vrot.slane %v3637, 6
        %v3847 = vsel %vm3729, %v3846, %v3845
        %v3848 = vrot.slane %v3653, 5
        %v3849 = vsel %vm3732, %v3848, %v3847
        %v3850 = vrot.slane %v3669, 4
        %v3851 = vsel %vm3735, %v3850, %v3849
        %v3852 = vrot.slane %v3685, 3
        %v3853 = vsel %vm3738, %v3852, %v3851
        %v3854 = vrot.slane %v3701, 2
        %v3855 = vsel %vm3741, %v3854, %v3853
        %v3856 = vrot.slane %v3717, 1
        %v3857 = vsel %vm3744, %v3856, %v3855
        %v3858 = vrot.slane %v3622, 7
        %v3859 = vsel %vm3726, %v3858, %v3606
        %v3860 = vrot.slane %v3638, 6
        %v3861 = vsel %vm3729, %v3860, %v3859
        %v3862 = vrot.slane %v3654, 5
        %v3863 = vsel %vm3732, %v3862, %v3861
        %v3864 = vrot.slane %v3670, 4
        %v3865 = vsel %vm3735, %v3864, %v3863
        %v3866 = vrot.slane %v3686, 3
        %v3867 = vsel %vm3738, %v3866, %v3865
        %v3868 = vrot.slane %v3702, 2
        %v3869 = vsel %vm3741, %v3868, %v3867
        %v3870 = vrot.slane %v3718, 1
        %v3871 = vsel %vm3744, %v3870, %v3869
        %v3872 = vrot.slane %v3623, 7
        %v3873 = vsel %vm3726, %v3872, %v3607
        %v3874 = vrot.slane %v3639, 6
        %v3875 = vsel %vm3729, %v3874, %v3873
        %v3876 = vrot.slane %v3655, 5
        %v3877 = vsel %vm3732, %v3876, %v3875
        %v3878 = vrot.slane %v3671, 4
        %v3879 = vsel %vm3735, %v3878, %v3877
        %v3880 = vrot.slane %v3687, 3
        %v3881 = vsel %vm3738, %v3880, %v3879
        %v3882 = vrot.slane %v3703, 2
        %v3883 = vsel %vm3741, %v3882, %v3881
        %v3884 = vrot.slane %v3719, 1
        %v3885 = vsel %vm3744, %v3884, %v3883
        %v3886 = vrot.slane %v3624, 7
        %v3887 = vsel %vm3726, %v3886, %v3608
        %v3888 = vrot.slane %v3640, 6
        %v3889 = vsel %vm3729, %v3888, %v3887
        %v3890 = vrot.slane %v3656, 5
        %v3891 = vsel %vm3732, %v3890, %v3889
        %v3892 = vrot.slane %v3672, 4
        %v3893 = vsel %vm3735, %v3892, %v3891
        %v3894 = vrot.slane %v3688, 3
        %v3895 = vsel %vm3738, %v3894, %v3893
        %v3896 = vrot.slane %v3704, 2
        %v3897 = vsel %vm3741, %v3896, %v3895
        %v3898 = vrot.slane %v3720, 1
        %v3899 = vsel %vm3744, %v3898, %v3897
        %v3900 = vrot.slane %v3625, 7
        %v3901 = vsel %vm3726, %v3900, %v3609
        %v3902 = vrot.slane %v3641, 6
        %v3903 = vsel %vm3729, %v3902, %v3901
        %v3904 = vrot.slane %v3657, 5
        %v3905 = vsel %vm3732, %v3904, %v3903
        %v3906 = vrot.slane %v3673, 4
        %v3907 = vsel %vm3735, %v3906, %v3905
        %v3908 = vrot.slane %v3689, 3
        %v3909 = vsel %vm3738, %v3908, %v3907
        %v3910 = vrot.slane %v3705, 2
        %v3911 = vsel %vm3741, %v3910, %v3909
        %v3912 = vrot.slane %v3721, 1
        %v3913 = vsel %vm3744, %v3912, %v3911
        %v3914 = vrot.slane %v3626, 7
        %v3915 = vsel %vm3726, %v3914, %v3610
        %v3916 = vrot.slane %v3642, 6
        %v3917 = vsel %vm3729, %v3916, %v3915
        %v3918 = vrot.slane %v3658, 5
        %v3919 = vsel %vm3732, %v3918, %v3917
        %v3920 = vrot.slane %v3674, 4
        %v3921 = vsel %vm3735, %v3920, %v3919
        %v3922 = vrot.slane %v3690, 3
        %v3923 = vsel %vm3738, %v3922, %v3921
        %v3924 = vrot.slane %v3706, 2
        %v3925 = vsel %vm3741, %v3924, %v3923
        %v3926 = vrot.slane %v3722, 1
        %v3927 = vsel %vm3744, %v3926, %v3925
        %v3928 = vrot.slane %v3627, 7
        %v3929 = vsel %vm3726, %v3928, %v3611
        %v3930 = vrot.slane %v3643, 6
        %v3931 = vsel %vm3729, %v3930, %v3929
        %v3932 = vrot.slane %v3659, 5
        %v3933 = vsel %vm3732, %v3932, %v3931
        %v3934 = vrot.slane %v3675, 4
        %v3935 = vsel %vm3735, %v3934, %v3933
        %v3936 = vrot.slane %v3691, 3
        %v3937 = vsel %vm3738, %v3936, %v3935
        %v3938 = vrot.slane %v3707, 2
        %v3939 = vsel %vm3741, %v3938, %v3937
        %v3940 = vrot.slane %v3723, 1
        %v3941 = vsel %vm3744, %v3940, %v3939
        %v3942 = vrot.slane %v3628, 7
        %v3943 = vsel %vm3726, %v3942, %v3612
        %v3944 = vrot.slane %v3644, 6
        %v3945 = vsel %vm3729, %v3944, %v3943
        %v3946 = vrot.slane %v3660, 5
        %v3947 = vsel %vm3732, %v3946, %v3945
        %v3948 = vrot.slane %v3676, 4
        %v3949 = vsel %vm3735, %v3948, %v3947
        %v3950 = vrot.slane %v3692, 3
        %v3951 = vsel %vm3738, %v3950, %v3949
        %v3952 = vrot.slane %v3708, 2
        %v3953 = vsel %vm3741, %v3952, %v3951
        %v3954 = vrot.slane %v3724, 1
        %v3955 = vsel %vm3744, %v3954, %v3953
        %v3956 = vpack.c.b16 %v3745, %v3745
        %v3957 = vpack.c.b16 %v3759, %v3759
        %v3958 = vpack.c.b16 %v3773, %v3773
        %v3959 = vpack.c.b16 %v3787, %v3787
        %v3960 = vpack.c.b16 %v3801, %v3801
        %v3961 = vpack.c.b16 %v3815, %v3815
        %v3962 = vpack.c.b16 %v3829, %v3829
        %v3963 = vpack.c.b16 %v3843, %v3843
        %v3964 = vpack.c.b16 %v3857, %v3857
        %v3965 = vpack.c.b16 %v3871, %v3871
        %v3966 = vpack.c.b16 %v3885, %v3885
        %v3967 = vpack.c.b16 %v3899, %v3899
        %v3968 = vpack.c.b16 %v3913, %v3913
        %v3969 = vpack.c.b16 %v3927, %v3927
        %v3970 = vpack.c.b16 %v3941, %v3941
        %v3971 = vpack.c.b16 %v3955, %v3955
        %v4500 = vunpack.c.l.b16 %v2935
        %v4501 = vunpack.c.h.b16 %v2935
        %v4502 = vunpack.c.l.b16 %v2936
        %v4503 = vunpack.c.h.b16 %v2936
        %v4504 = vunpack.c.l.b16 %v2937
        %v4505 = vunpack.c.h.b16 %v2937
        %v4506 = vunpack.c.l.b16 %v2938
        %v4507 = vunpack.c.h.b16 %v2938
        %v4508 = vunpack.c.l.b16 %v2939
        %v4509 = vunpack.c.h.b16 %v2939
        %v4510 = vunpack.c.l.b16 %v2940
        %v4511 = vunpack.c.h.b16 %v2940
        %v4512 = vunpack.c.l.b16 %v2941
        %v4513 = vunpack.c.h.b16 %v2941
        %v4514 = vunpack.c.l.b16 %v2942
        %v4515 = vunpack.c.h.b16 %v2942
        %v4516 = vunpack.c.l.b16 %v2943
        %v4517 = vunpack.c.h.b16 %v2943
        %v4518 = vunpack.c.l.b16 %v2944
        %v4519 = vunpack.c.h.b16 %v2944
        %v4520 = vunpack.c.l.b16 %v2945
        %v4521 = vunpack.c.h.b16 %v2945
        %v4522 = vunpack.c.l.b16 %v2946
        %v4523 = vunpack.c.h.b16 %v2946
        %v4524 = vunpack.c.l.b16 %v2947
        %v4525 = vunpack.c.h.b16 %v2947
        %v4526 = vunpack.c.l.b16 %v2948
        %v4527 = vunpack.c.h.b16 %v2948
        %v4528 = vunpack.c.l.b16 %v2949
        %v4529 = vunpack.c.h.b16 %v2949
        %v4530 = vunpack.c.l.b16 %v2950
        %v4531 = vunpack.c.h.b16 %v2950
        %v4532 = vunpack.c.l.b16 %v2951
        %v4533 = vunpack.c.h.b16 %v2951
        %v4534 = vunpack.c.l.b16 %v2952
        %v4535 = vunpack.c.h.b16 %v2952
        %v4536 = vunpack.c.l.b16 %v2953
        %v4537 = vunpack.c.h.b16 %v2953
        %v4538 = vunpack.c.l.b16 %v2954
        %v4539 = vunpack.c.h.b16 %v2954
        %v4540 = vunpack.c.l.b16 %v2955
        %v4541 = vunpack.c.h.b16 %v2955
        %v4542 = vunpack.c.l.b16 %v2956
        %v4543 = vunpack.c.h.b16 %v2956
        %v4544 = vunpack.c.l.b16 %v2957
        %v4545 = vunpack.c.h.b16 %v2957
        %v4546 = vunpack.c.l.b16 %v2958
        %v4547 = vunpack.c.h.b16 %v2958
        %v4548 = vunpack.c.l.b16 %v2959
        %v4549 = vunpack.c.h.b16 %v2959
        %v4550 = vunpack.c.l.b16 %v2960
        %v4551 = vunpack.c.h.b16 %v2960
        %v4552 = vunpack.c.l.b16 %v2961
        %v4553 = vunpack.c.h.b16 %v2961
        %v4554 = vunpack.c.l.b16 %v2962
        %v4555 = vunpack.c.h.b16 %v2962
        %v4556 = vunpack.c.l.b16 %v2963
        %v4557 = vunpack.c.h.b16 %v2963
        %v4558 = vunpack.c.l.b16 %v2964
        %v4559 = vunpack.c.h.b16 %v2964
        %v4560 = vunpack.c.l.b16 %v2965
        %v4561 = vunpack.c.h.b16 %v2965
        %v4562 = vunpack.c.l.b16 %v2966
        %v4563 = vunpack.c.h.b16 %v2966
        %v4564 = vunpack.c.l.b16 %v2967
        %v4565 = vunpack.c.h.b16 %v2967
        %v4566 = vunpack.c.l.b16 %v2968
        %v4567 = vunpack.c.h.b16 %v2968
        %v4568 = vunpack.c.l.b16 %v2969
        %v4569 = vunpack.c.h.b16 %v2969
        %v4570 = vunpack.c.l.b16 %v2970
        %v4571 = vunpack.c.h.b16 %v2970
        %v4572 = vunpack.c.l.b16 %v2971
        %v4573 = vunpack.c.h.b16 %v2971
        %v4574 = vunpack.c.l.b16 %v2972
        %v4575 = vunpack.c.h.b16 %v2972
        %v4576 = vunpack.c.l.b16 %v2973
        %v4577 = vunpack.c.h.b16 %v2973
        %v4578 = vunpack.c.l.b16 %v2974
        %v4579 = vunpack.c.h.b16 %v2974
        %v4580 = vunpack.c.l.b16 %v2975
        %v4581 = vunpack.c.h.b16 %v2975
        %v4582 = vunpack.c.l.b16 %v2976
        %v4583 = vunpack.c.h.b16 %v2976
        %v4584 = vunpack.c.l.b16 %v2977
        %v4585 = vunpack.c.h.b16 %v2977
        %v4586 = vunpack.c.l.b16 %v2978
        %v4587 = vunpack.c.h.b16 %v2978
        %v4588 = vunpack.c.l.b16 %v2979
        %v4589 = vunpack.c.h.b16 %v2979
        %v4590 = vunpack.c.l.b16 %v2980
        %v4591 = vunpack.c.h.b16 %v2980
        %v4592 = vunpack.c.l.b16 %v2981
        %v4593 = vunpack.c.h.b16 %v2981
        %v4594 = vunpack.c.l.b16 %v2982
        %v4595 = vunpack.c.h.b16 %v2982
        %v4596 = vunpack.c.l.b16 %v2983
        %v4597 = vunpack.c.h.b16 %v2983
        %v4598 = vunpack.c.l.b16 %v2984
        %v4599 = vunpack.c.h.b16 %v2984
        %v4600 = vunpack.c.l.b16 %v2985
        %v4601 = vunpack.c.h.b16 %v2985
        %v4602 = vunpack.c.l.b16 %v2986
        %v4603 = vunpack.c.h.b16 %v2986
        %v4604 = vunpack.c.l.b16 %v2987
        %v4605 = vunpack.c.h.b16 %v2987
        %v4606 = vunpack.c.l.b16 %v2988
        %v4607 = vunpack.c.h.b16 %v2988
        %v4608 = vunpack.c.l.b16 %v2989
        %v4609 = vunpack.c.h.b16 %v2989
        %v4610 = vunpack.c.l.b16 %v2990
        %v4611 = vunpack.c.h.b16 %v2990
        %v4612 = vunpack.c.l.b16 %v2991
        %v4613 = vunpack.c.h.b16 %v2991
        %v4614 = vunpack.c.l.b16 %v2992
        %v4615 = vunpack.c.h.b16 %v2992
        %v4616 = vunpack.c.l.b16 %v2993
        %v4617 = vunpack.c.h.b16 %v2993
        %v4618 = vunpack.c.l.b16 %v2994
        %v4619 = vunpack.c.h.b16 %v2994
        %v4620 = vunpack.c.l.b16 %v2995
        %v4621 = vunpack.c.h.b16 %v2995
        %v4622 = vunpack.c.l.b16 %v2996
        %v4623 = vunpack.c.h.b16 %v2996
        %v4624 = vunpack.c.l.b16 %v2997
        %v4625 = vunpack.c.h.b16 %v2997
        %v4626 = vunpack.c.l.b16 %v2998
        %v4627 = vunpack.c.h.b16 %v2998
        %v4628 = vunpack.c.l.b16 %v2999
        %v4629 = vunpack.c.h.b16 %v2999
        %v4630 = vunpack.c.l.b16 %v3000
        %v4631 = vunpack.c.h.b16 %v3000
        %v4632 = vunpack.c.l.b16 %v3001
        %v4633 = vunpack.c.h.b16 %v3001
        %v4634 = vunpack.c.l.b16 %v3002
        %v4635 = vunpack.c.h.b16 %v3002
        %v4636 = vunpack.c.l.b16 %v3003
        %v4637 = vunpack.c.h.b16 %v3003
        %v4638 = vunpack.c.l.b16 %v3004
        %v4639 = vunpack.c.h.b16 %v3004
        %v4640 = vunpack.c.l.b16 %v3005
        %v4641 = vunpack.c.h.b16 %v3005
        %v4642 = vunpack.c.l.b16 %v3006
        %v4643 = vunpack.c.h.b16 %v3006
        %v4644 = vunpack.c.l.b16 %v3007
        %v4645 = vunpack.c.h.b16 %v3007
        %v4646 = vunpack.c.l.b16 %v3008
        %v4647 = vunpack.c.h.b16 %v3008
        %v4648 = vunpack.c.l.b16 %v3009
        %v4649 = vunpack.c.h.b16 %v3009
        %v4650 = vunpack.c.l.b16 %v3010
        %v4651 = vunpack.c.h.b16 %v3010
        %v4652 = vunpack.c.l.b16 %v3011
        %v4653 = vunpack.c.h.b16 %v3011
        %v4654 = vunpack.c.l.b16 %v3012
        %v4655 = vunpack.c.h.b16 %v3012
        %v4656 = vunpack.c.l.b16 %v3013
        %v4657 = vunpack.c.h.b16 %v3013
        %v4658 = vunpack.c.l.b16 %v3014
        %v4659 = vunpack.c.h.b16 %v3014
        %v4660 = vunpack.c.l.b16 %v3015
        %v4661 = vunpack.c.h.b16 %v3015
        %v4662 = vunpack.c.l.b16 %v3016
        %v4663 = vunpack.c.h.b16 %v3016
        %v4664 = vunpack.c.l.b16 %v3017
        %v4665 = vunpack.c.h.b16 %v3017
        %v4666 = vunpack.c.l.b16 %v3018
        %v4667 = vunpack.c.h.b16 %v3018
        %v4668 = vunpack.c.l.b16 %v3019
        %v4669 = vunpack.c.h.b16 %v3019
        %v4670 = vunpack.c.l.b16 %v3020
        %v4671 = vunpack.c.h.b16 %v3020
        %v4672 = vunpack.c.l.b16 %v3021
        %v4673 = vunpack.c.h.b16 %v3021
        %v4674 = vunpack.c.l.b16 %v3022
        %v4675 = vunpack.c.h.b16 %v3022
        %v4676 = vunpack.c.l.b16 %v3023
        %v4677 = vunpack.c.h.b16 %v3023
        %v4678 = vunpack.c.l.b16 %v3024
        %v4679 = vunpack.c.h.b16 %v3024
        %v4680 = vunpack.c.l.b16 %v3025
        %v4681 = vunpack.c.h.b16 %v3025
        %v4682 = vunpack.c.l.b16 %v3026
        %v4683 = vunpack.c.h.b16 %v3026
        %v4684 = vunpack.c.l.b16 %v3027
        %v4685 = vunpack.c.h.b16 %v3027
        %v4686 = vunpack.c.l.b16 %v3028
        %v4687 = vunpack.c.h.b16 %v3028
        %v4688 = vunpack.c.l.b16 %v3029
        %v4689 = vunpack.c.h.b16 %v3029
        %v4690 = vunpack.c.l.b16 %v3030
        %v4691 = vunpack.c.h.b16 %v3030
        %v4692 = vunpack.c.l.b16 %v3031
        %v4693 = vunpack.c.h.b16 %v3031
        %v4694 = vunpack.c.l.b16 %v3032
        %v4695 = vunpack.c.h.b16 %v3032
        %v4696 = vunpack.c.l.b16 %v3033
        %v4697 = vunpack.c.h.b16 %v3033
        %v4698 = vunpack.c.l.b16 %v3034
        %v4699 = vunpack.c.h.b16 %v3034
        %v4700 = vunpack.c.l.b16 %v3035
        %v4701 = vunpack.c.h.b16 %v3035
        %v4702 = vunpack.c.l.b16 %v3036
        %v4703 = vunpack.c.h.b16 %v3036
        %v4704 = vunpack.c.l.b16 %v3037
        %v4705 = vunpack.c.h.b16 %v3037
        %v4706 = vunpack.c.l.b16 %v3038
        %v4707 = vunpack.c.h.b16 %v3038
        %v4708 = vunpack.c.l.b16 %v3039
        %v4709 = vunpack.c.h.b16 %v3039
        %v4710 = vunpack.c.l.b16 %v3040
        %v4711 = vunpack.c.h.b16 %v3040
        %v4712 = vunpack.c.l.b16 %v3041
        %v4713 = vunpack.c.h.b16 %v3041
        %v4714 = vunpack.c.l.b16 %v3042
        %v4715 = vunpack.c.h.b16 %v3042
        %v4716 = vunpack.c.l.b16 %v3043
        %v4717 = vunpack.c.h.b16 %v3043
        %v4718 = vunpack.c.l.b16 %v3044
        %v4719 = vunpack.c.h.b16 %v3044
        %v4720 = vunpack.c.l.b16 %v3045
        %v4721 = vunpack.c.h.b16 %v3045
        %v4722 = vunpack.c.l.b16 %v3046
        %v4723 = vunpack.c.h.b16 %v3046
        %v4724 = vunpack.c.l.b16 %v3047
        %v4725 = vunpack.c.h.b16 %v3047
        %v4726 = vunpack.c.l.b16 %v3048
        %v4727 = vunpack.c.h.b16 %v3048
        %v4728 = vunpack.c.l.b16 %v3049
        %v4729 = vunpack.c.h.b16 %v3049
        %v4730 = vunpack.c.l.b16 %v3050
        %v4731 = vunpack.c.h.b16 %v3050
        %v4732 = vunpack.c.l.b16 %v3051
        %v4733 = vunpack.c.h.b16 %v3051
        %v4734 = vunpack.c.l.b16 %v3052
        %v4735 = vunpack.c.h.b16 %v3052
        %v4736 = vunpack.c.l.b16 %v3053
        %v4737 = vunpack.c.h.b16 %v3053
        %v4738 = vunpack.c.l.b16 %v3054
        %v4739 = vunpack.c.h.b16 %v3054
        %v4740 = vunpack.c.l.b16 %v3055
        %v4741 = vunpack.c.h.b16 %v3055
        %v4742 = vunpack.c.l.b16 %v3056
        %v4743 = vunpack.c.h.b16 %v3056
        %v4744 = vunpack.c.l.b16 %v3057
        %v4745 = vunpack.c.h.b16 %v3057
        %v4746 = vunpack.c.l.b16 %v3058
        %v4747 = vunpack.c.h.b16 %v3058
        %v4748 = vunpack.c.l.b16 %v3059
        %v4749 = vunpack.c.h.b16 %v3059
        %v4750 = vunpack.c.l.b16 %v3060
        %v4751 = vunpack.c.h.b16 %v3060
        %v4752 = vunpack.c.l.b16 %v3061
        %v4753 = vunpack.c.h.b16 %v3061
        %v4754 = vunpack.c.l.b16 %v3062
        %v4755 = vunpack.c.h.b16 %v3062
        %v4756 = vunpack.c.l.b16 %v3063
        %v4757 = vunpack.c.h.b16 %v3063
        %v4758 = vunpack.c.l.b16 %v3064
        %v4759 = vunpack.c.h.b16 %v3064
        %v4760 = vunpack.c.l.b16 %v3065
        %v4761 = vunpack.c.h.b16 %v3065
        %v4762 = vunpack.c.l.b16 %v3066
        %v4763 = vunpack.c.h.b16 %v3066
        %v4764 = vunpack.c.l.b16 %v3067
        %v4765 = vunpack.c.h.b16 %v3067
        %v4766 = vunpack.c.l.b16 %v3068
        %v4767 = vunpack.c.h.b16 %v3068
        %v4768 = vunpack.c.l.b16 %v3069
        %v4769 = vunpack.c.h.b16 %v3069
        %v4770 = vunpack.c.l.b16 %v3070
        %v4771 = vunpack.c.h.b16 %v3070
        %v4772 = vunpack.c.l.b16 %v3071
        %v4773 = vunpack.c.h.b16 %v3071
        %v4774 = vunpack.c.l.b16 %v3072
        %v4775 = vunpack.c.h.b16 %v3072
        %v4776 = vunpack.c.l.b16 %v3073
        %v4777 = vunpack.c.h.b16 %v3073
        %v4778 = vunpack.c.l.b16 %v3074
        %v4779 = vunpack.c.h.b16 %v3074
        %v4780 = vunpack.c.l.b16 %v3075
        %v4781 = vunpack.c.h.b16 %v3075
        %v4782 = vunpack.c.l.b16 %v3076
        %v4783 = vunpack.c.h.b16 %v3076
        %v4784 = vunpack.c.l.b16 %v3077
        %v4785 = vunpack.c.h.b16 %v3077
        %v4786 = vunpack.c.l.b16 %v3078
        %v4787 = vunpack.c.h.b16 %v3078
        %v4788 = vunpack.c.l.b16 %v3079
        %v4789 = vunpack.c.h.b16 %v3079
        %v4790 = vunpack.c.l.b16 %v3080
        %v4791 = vunpack.c.h.b16 %v3080
        %v4792 = vunpack.c.l.b16 %v3081
        %v4793 = vunpack.c.h.b16 %v3081
        %v4794 = vunpack.c.l.b16 %v3082
        %v4795 = vunpack.c.h.b16 %v3082
        %v4796 = vunpack.c.l.b16 %v3083
        %v4797 = vunpack.c.h.b16 %v3083
        %v4798 = vunpack.c.l.b16 %v3084
        %v4799 = vunpack.c.h.b16 %v3084
        %v4800 = vunpack.c.l.b16 %v3085
        %v4801 = vunpack.c.h.b16 %v3085
        %v4802 = vunpack.c.l.b16 %v3086
        %v4803 = vunpack.c.h.b16 %v3086
        %v4804 = vunpack.c.l.b16 %v3087
        %v4805 = vunpack.c.h.b16 %v3087
        %v4806 = vunpack.c.l.b16 %v3088
        %v4807 = vunpack.c.h.b16 %v3088
        %v4808 = vunpack.c.l.b16 %v3089
        %v4809 = vunpack.c.h.b16 %v3089
        %v4810 = vunpack.c.l.b16 %v3090
        %v4811 = vunpack.c.h.b16 %v3090
        %v4812 = vunpack.c.l.b16 %v3091
        %v4813 = vunpack.c.h.b16 %v3091
        %v4814 = vunpack.c.l.b16 %v3092
        %v4815 = vunpack.c.h.b16 %v3092
        %v4816 = vunpack.c.l.b16 %v3093
        %v4817 = vunpack.c.h.b16 %v3093
        %v4818 = vunpack.c.l.b16 %v3094
        %v4819 = vunpack.c.h.b16 %v3094
        %v4820 = vunpack.c.l.b16 %v3095
        %v4821 = vunpack.c.h.b16 %v3095
        %v4822 = vunpack.c.l.b16 %v3096
        %v4823 = vunpack.c.h.b16 %v3096
        %v4824 = vunpack.c.l.b16 %v3097
        %v4825 = vunpack.c.h.b16 %v3097
        %v4826 = vunpack.c.l.b16 %v3098
        %v4827 = vunpack.c.h.b16 %v3098
        %v4828 = vunpack.c.l.b16 %v3099
        %v4829 = vunpack.c.h.b16 %v3099
        %v4830 = vunpack.c.l.b16 %v3100
        %v4831 = vunpack.c.h.b16 %v3100
        %v4832 = vunpack.c.l.b16 %v3101
        %v4833 = vunpack.c.h.b16 %v3101
        %v4834 = vunpack.c.l.b16 %v3102
        %v4835 = vunpack.c.h.b16 %v3102
        %v4836 = vunpack.c.l.b16 %v3103
        %v4837 = vunpack.c.h.b16 %v3103
        %v4838 = vunpack.c.l.b16 %v3104
        %v4839 = vunpack.c.h.b16 %v3104
        %v4840 = vunpack.c.l.b16 %v3105
        %v4841 = vunpack.c.h.b16 %v3105
        %v4842 = vunpack.c.l.b16 %v3106
        %v4843 = vunpack.c.h.b16 %v3106
        %v4844 = vunpack.c.l.b16 %v3107
        %v4845 = vunpack.c.h.b16 %v3107
        %v4846 = vunpack.c.l.b16 %v3108
        %v4847 = vunpack.c.h.b16 %v3108
        %v4848 = vunpack.c.l.b16 %v3109
        %v4849 = vunpack.c.h.b16 %v3109
        %v4850 = vunpack.c.l.b16 %v3110
        %v4851 = vunpack.c.h.b16 %v3110
        %v4852 = vunpack.c.l.b16 %v3111
        %v4853 = vunpack.c.h.b16 %v3111
        %v4854 = vunpack.c.l.b16 %v3112
        %v4855 = vunpack.c.h.b16 %v3112
        %v4856 = vunpack.c.l.b16 %v3113
        %v4857 = vunpack.c.h.b16 %v3113
        %v4858 = vunpack.c.l.b16 %v3114
        %v4859 = vunpack.c.h.b16 %v3114
        %v4860 = vunpack.c.l.b16 %v3115
        %v4861 = vunpack.c.h.b16 %v3115
        %v4862 = vunpack.c.l.b16 %v3116
        %v4863 = vunpack.c.h.b16 %v3116
        %v4864 = vunpack.c.l.b16 %v3117
        %v4865 = vunpack.c.h.b16 %v3117
        %v4866 = vunpack.c.l.b16 %v3118
        %v4867 = vunpack.c.h.b16 %v3118
        %v4868 = vunpack.c.l.b16 %v3119
        %v4869 = vunpack.c.h.b16 %v3119
        %v4870 = vunpack.c.l.b16 %v3120
        %v4871 = vunpack.c.h.b16 %v3120
        %v4872 = vunpack.c.l.b16 %v3121
        %v4873 = vunpack.c.h.b16 %v3121
        %v4874 = vunpack.c.l.b16 %v3122
        %v4875 = vunpack.c.h.b16 %v3122
        %v4876 = vunpack.c.l.b16 %v3123
        %v4877 = vunpack.c.h.b16 %v3123
        %v4878 = vunpack.c.l.b16 %v3124
        %v4879 = vunpack.c.h.b16 %v3124
        %v4880 = vunpack.c.l.b16 %v3125
        %v4881 = vunpack.c.h.b16 %v3125
        %v4882 = vunpack.c.l.b16 %v3126
        %v4883 = vunpack.c.h.b16 %v3126
        %v4884 = vunpack.c.l.b16 %v3127
        %v4885 = vunpack.c.h.b16 %v3127
        %v4886 = vunpack.c.l.b16 %v3128
        %v4887 = vunpack.c.h.b16 %v3128
        %v4888 = vunpack.c.l.b16 %v3129
        %v4889 = vunpack.c.h.b16 %v3129
        %v4890 = vunpack.c.l.b16 %v3130
        %v4891 = vunpack.c.h.b16 %v3130
        %v4892 = vunpack.c.l.b16 %v3131
        %v4893 = vunpack.c.h.b16 %v3131
        %v4894 = vunpack.c.l.b16 %v3132
        %v4895 = vunpack.c.h.b16 %v3132
        %v4896 = vunpack.c.l.b16 %v3133
        %v4897 = vunpack.c.h.b16 %v3133
        %v4898 = vunpack.c.l.b16 %v3134
        %v4899 = vunpack.c.h.b16 %v3134
        %v4900 = vunpack.c.l.b16 %v3135
        %v4901 = vunpack.c.h.b16 %v3135
        %v4902 = vunpack.c.l.b16 %v3136
        %v4903 = vunpack.c.h.b16 %v3136
        %v4904 = vunpack.c.l.b16 %v3137
        %v4905 = vunpack.c.h.b16 %v3137
        %v4906 = vunpack.c.l.b16 %v3138
        %v4907 = vunpack.c.h.b16 %v3138
        %v4908 = vunpack.c.l.b16 %v3139
        %v4909 = vunpack.c.h.b16 %v3139
        %v4910 = vunpack.c.l.b16 %v3140
        %v4911 = vunpack.c.h.b16 %v3140
        %v4912 = vunpack.c.l.b16 %v3141
        %v4913 = vunpack.c.h.b16 %v3141
        %v4914 = vunpack.c.l.b16 %v3142
        %v4915 = vunpack.c.h.b16 %v3142
        %v4916 = vunpack.c.l.b16 %v3143
        %v4917 = vunpack.c.h.b16 %v3143
        %v4918 = vunpack.c.l.b16 %v3144
        %v4919 = vunpack.c.h.b16 %v3144
        %v4920 = vunpack.c.l.b16 %v3145
        %v4921 = vunpack.c.h.b16 %v3145
        %v4922 = vunpack.c.l.b16 %v3146
        %v4923 = vunpack.c.h.b16 %v3146
        %v4924 = vunpack.c.l.b16 %v3147
        %v4925 = vunpack.c.h.b16 %v3147
        %v4926 = vunpack.c.l.b16 %v3148
        %v4927 = vunpack.c.h.b16 %v3148
        %v4928 = vunpack.c.l.b16 %v3149
        %v4929 = vunpack.c.h.b16 %v3149
        %v4930 = vunpack.c.l.b16 %v3150
        %v4931 = vunpack.c.h.b16 %v3150
        %v4932 = vunpack.c.l.b16 %v3151
        %v4933 = vunpack.c.h.b16 %v3151
        %v4934 = vunpack.c.l.b16 %v3152
        %v4935 = vunpack.c.h.b16 %v3152
        %v4936 = vunpack.c.l.b16 %v3153
        %v4937 = vunpack.c.h.b16 %v3153
        %v4938 = vunpack.c.l.b16 %v3154
        %v4939 = vunpack.c.h.b16 %v3154
        %v4940 = vunpack.c.l.b16 %v3155
        %v4941 = vunpack.c.h.b16 %v3155
        %v4942 = vunpack.c.l.b16 %v3156
        %v4943 = vunpack.c.h.b16 %v3156
        %v4944 = vunpack.c.l.b16 %v3157
        %v4945 = vunpack.c.h.b16 %v3157
        %v4946 = vunpack.c.l.b16 %v3158
        %v4947 = vunpack.c.h.b16 %v3158
        %v4948 = vunpack.c.l.b16 %v3159
        %v4949 = vunpack.c.h.b16 %v3159
        %v4950 = vunpack.c.l.b16 %v3160
        %v4951 = vunpack.c.h.b16 %v3160
        %v4952 = vunpack.c.l.b16 %v3161
        %v4953 = vunpack.c.h.b16 %v3161
        %v4954 = vunpack.c.l.b16 %v3162
        %v4955 = vunpack.c.h.b16 %v3162
        %v4956 = vunpack.c.l.b16 %v3163
        %v4957 = vunpack.c.h.b16 %v3163
        %v4958 = vunpack.c.l.b16 %v3164
        %v4959 = vunpack.c.h.b16 %v3164
        %v4960 = vunpack.c.l.b16 %v3165
        %v4961 = vunpack.c.h.b16 %v3165
        %v4962 = vunpack.c.l.b16 %v3166
        %v4963 = vunpack.c.h.b16 %v3166
        %v4964 = vunpack.c.l.b16 %v3167
        %v4965 = vunpack.c.h.b16 %v3167
        %v4966 = vunpack.c.l.b16 %v3168
        %v4967 = vunpack.c.h.b16 %v3168
        %v4968 = vunpack.c.l.b16 %v3169
        %v4969 = vunpack.c.h.b16 %v3169
        %v4970 = vunpack.c.l.b16 %v3170
        %v4971 = vunpack.c.h.b16 %v3170
        %v4972 = vunpack.c.l.b16 %v3171
        %v4973 = vunpack.c.h.b16 %v3171
        %v4974 = vunpack.c.l.b16 %v3172
        %v4975 = vunpack.c.h.b16 %v3172
        %v4976 = vunpack.c.l.b16 %v3173
        %v4977 = vunpack.c.h.b16 %v3173
        %v4978 = vunpack.c.l.b16 %v3174
        %v4979 = vunpack.c.h.b16 %v3174
        %v4980 = vunpack.c.l.b16 %v3175
        %v4981 = vunpack.c.h.b16 %v3175
        %v4982 = vunpack.c.l.b16 %v3176
        %v4983 = vunpack.c.h.b16 %v3176
        %v4984 = vunpack.c.l.b16 %v3177
        %v4985 = vunpack.c.h.b16 %v3177
        %v4986 = vunpack.c.l.b16 %v3178
        %v4987 = vunpack.c.h.b16 %v3178
        %v4988 = vunpack.c.l.b16 %v3179
        %v4989 = vunpack.c.h.b16 %v3179
        %v4990 = vunpack.c.l.b16 %v3180
        %v4991 = vunpack.c.h.b16 %v3180
        %v4992 = vunpack.c.l.b16 %v3181
        %v4993 = vunpack.c.h.b16 %v3181
        %v4994 = vunpack.c.l.b16 %v3182
        %v4995 = vunpack.c.h.b16 %v3182
        %v4996 = vunpack.c.l.b16 %v3183
        %v4997 = vunpack.c.h.b16 %v3183
        %v4998 = vunpack.c.l.b16 %v3184
        %v4999 = vunpack.c.h.b16 %v3184
        %v5000 = vunpack.c.l.b16 %v3185
        %v5001 = vunpack.c.h.b16 %v3185
        %v5002 = vunpack.c.l.b16 %v3186
        %v5003 = vunpack.c.h.b16 %v3186
        %v5004 = vunpack.c.l.b16 %v3187
        %v5005 = vunpack.c.h.b16 %v3187
        %v5006 = vunpack.c.l.b16 %v3188
        %v5007 = vunpack.c.h.b16 %v3188
        %v5008 = vunpack.c.l.b16 %v3189
        %v5009 = vunpack.c.h.b16 %v3189
        %v5010 = vunpack.c.l.b16 %v3190
        %v5011 = vunpack.c.h.b16 %v3190
        %v5012 = vunpack.c.l.b16 %v3191
        %v5013 = vunpack.c.h.b16 %v3191
        %v5014 = vunpack.c.l.b16 %v3192
        %v5015 = vunpack.c.h.b16 %v3192
        %v5016 = vunpack.c.l.b16 %v3193
        %v5017 = vunpack.c.h.b16 %v3193
        %v5018 = vunpack.c.l.b16 %v3194
        %v5019 = vunpack.c.h.b16 %v3194
        %v5020 = vunpack.c.l.b16 %v3195
        %v5021 = vunpack.c.h.b16 %v3195
        %v5022 = vunpack.c.l.b16 %v3196
        %v5023 = vunpack.c.h.b16 %v3196
        %v5024 = vunpack.c.l.b16 %v3197
        %v5025 = vunpack.c.h.b16 %v3197
        %v5026 = vunpack.c.l.b16 %v3198
        %v5027 = vunpack.c.h.b16 %v3198
        %v5028 = vunpack.c.l.b16 %v3199
        %v5029 = vunpack.c.h.b16 %v3199
        %v5030 = vunpack.c.l.b16 %v3200
        %v5031 = vunpack.c.h.b16 %v3200
        %v5032 = vunpack.c.l.b16 %v3201
        %v5033 = vunpack.c.h.b16 %v3201
        %v5034 = vunpack.c.l.b16 %v3202
        %v5035 = vunpack.c.h.b16 %v3202
        %v5036 = vunpack.c.l.b16 %v3203
        %v5037 = vunpack.c.h.b16 %v3203
        %v5038 = vunpack.c.l.b16 %v3204
        %v5039 = vunpack.c.h.b16 %v3204
        %v5040 = vunpack.c.l.b16 %v3205
        %v5041 = vunpack.c.h.b16 %v3205
        %v5042 = vunpack.c.l.b16 %v3206
        %v5043 = vunpack.c.h.b16 %v3206
        %v5044 = vunpack.c.l.b16 %v3207
        %v5045 = vunpack.c.h.b16 %v3207
        %v5046 = vunpack.c.l.b16 %v3208
        %v5047 = vunpack.c.h.b16 %v3208
        %v5048 = vunpack.c.l.b16 %v3209
        %v5049 = vunpack.c.h.b16 %v3209
        %v5050 = vunpack.c.l.b16 %v3210
        %v5051 = vunpack.c.h.b16 %v3210
        %v5052 = vunpack.c.l.b16 %v3211
        %v5053 = vunpack.c.h.b16 %v3211
        %v5054 = vunpack.c.l.b16 %v3212
        %v5055 = vunpack.c.h.b16 %v3212
        %v5056 = vunpack.c.l.b16 %v3213
        %v5057 = vunpack.c.h.b16 %v3213
        %v5058 = vunpack.c.l.b16 %v3214
        %v5059 = vunpack.c.h.b16 %v3214
        %v5060 = vunpack.c.l.b16 %v3215
        %v5061 = vunpack.c.h.b16 %v3215
        %v5062 = vunpack.c.l.b16 %v3216
        %v5063 = vunpack.c.h.b16 %v3216
        %v5064 = vunpack.c.l.b16 %v3217
        %v5065 = vunpack.c.h.b16 %v3217
        %v5066 = vunpack.c.l.b16 %v3218
        %v5067 = vunpack.c.h.b16 %v3218
        %v5068 = vunpack.c.l.b16 %v3219
        %v5069 = vunpack.c.h.b16 %v3219
        %v5070 = vunpack.c.l.b16 %v3220
        %v5071 = vunpack.c.h.b16 %v3220
        %v5072 = vunpack.c.l.b16 %v3221
        %v5073 = vunpack.c.h.b16 %v3221
        %v5074 = vunpack.c.l.b16 %v3222
        %v5075 = vunpack.c.h.b16 %v3222
        %v5076 = vunpack.c.l.b16 %v3223
        %v5077 = vunpack.c.h.b16 %v3223
        %v5078 = vunpack.c.l.b16 %v3224
        %v5079 = vunpack.c.h.b16 %v3224
        %v5080 = vunpack.c.l.b16 %v3225
        %v5081 = vunpack.c.h.b16 %v3225
        %v5082 = vunpack.c.l.b16 %v3226
        %v5083 = vunpack.c.h.b16 %v3226
        %v5084 = vunpack.c.l.b16 %v3227
        %v5085 = vunpack.c.h.b16 %v3227
        %v5086 = vunpack.c.l.b16 %v3228
        %v5087 = vunpack.c.h.b16 %v3228
        %v5088 = vunpack.c.l.b16 %v3229
        %v5089 = vunpack.c.h.b16 %v3229
        %v5090 = vunpack.c.l.b16 %v3230
        %v5091 = vunpack.c.h.b16 %v3230
        %v5092 = vunpack.c.l.b16 %v3231
        %v5093 = vunpack.c.h.b16 %v3231
        %v5094 = vunpack.c.l.b16 %v3232
        %v5095 = vunpack.c.h.b16 %v3232
        %v5096 = vunpack.c.l.b16 %v3233
        %v5097 = vunpack.c.h.b16 %v3233
        %v5098 = vunpack.c.l.b16 %v3234
        %v5099 = vunpack.c.h.b16 %v3234
        %v5100 = vunpack.c.l.b16 %v3235
        %v5101 = vunpack.c.h.b16 %v3235
        %v5102 = vunpack.c.l.b16 %v3236
        %v5103 = vunpack.c.h.b16 %v3236
        %v5104 = vunpack.c.l.b16 %v3237
        %v5105 = vunpack.c.h.b16 %v3237
        %v5106 = vunpack.c.l.b16 %v3238
        %v5107 = vunpack.c.h.b16 %v3238
        %v5108 = vunpack.c.l.b16 %v3239
        %v5109 = vunpack.c.h.b16 %v3239
        %v5110 = vunpack.c.l.b16 %v3240
        %v5111 = vunpack.c.h.b16 %v3240
        %v5112 = vunpack.c.l.b16 %v3241
        %v5113 = vunpack.c.h.b16 %v3241
        %v5114 = vunpack.c.l.b16 %v3242
        %v5115 = vunpack.c.h.b16 %v3242
        %v5116 = vunpack.c.l.b16 %v3243
        %v5117 = vunpack.c.h.b16 %v3243
        %v5118 = vunpack.c.l.b16 %v3244
        %v5119 = vunpack.c.h.b16 %v3244
        %v5120 = vunpack.c.l.b16 %v3245
        %v5121 = vunpack.c.h.b16 %v3245
        %v5122 = vunpack.c.l.b16 %v3246
        %v5123 = vunpack.c.h.b16 %v3246
        %v5124 = vunpack.c.l.b16 %v3247
        %v5125 = vunpack.c.h.b16 %v3247
        %v5126 = vunpack.c.l.b16 %v3248
        %v5127 = vunpack.c.h.b16 %v3248
        %v5128 = vunpack.c.l.b16 %v3249
        %v5129 = vunpack.c.h.b16 %v3249
        %v5130 = vunpack.c.l.b16 %v3250
        %v5131 = vunpack.c.h.b16 %v3250
        %v5132 = vunpack.c.l.b16 %v3251
        %v5133 = vunpack.c.h.b16 %v3251
        %v5134 = vunpack.c.l.b16 %v3252
        %v5135 = vunpack.c.h.b16 %v3252
        %v5136 = vunpack.c.l.b16 %v3253
        %v5137 = vunpack.c.h.b16 %v3253
        %v5138 = vunpack.c.l.b16 %v3254
        %v5139 = vunpack.c.h.b16 %v3254
        %v5140 = vunpack.c.l.b16 %v3255
        %v5141 = vunpack.c.h.b16 %v3255
        %v5142 = vunpack.c.l.b16 %v3256
        %v5143 = vunpack.c.h.b16 %v3256
        %v5144 = vunpack.c.l.b16 %v3257
        %v5145 = vunpack.c.h.b16 %v3257
        %v5146 = vunpack.c.l.b16 %v3258
        %v5147 = vunpack.c.h.b16 %v3258
        %v5148 = vunpack.c.l.b16 %v3259
        %v5149 = vunpack.c.h.b16 %v3259
        %v5150 = vunpack.c.l.b16 %v3260
        %v5151 = vunpack.c.h.b16 %v3260
        %v5152 = vunpack.c.l.b16 %v3261
        %v5153 = vunpack.c.h.b16 %v3261
        %v5154 = vunpack.c.l.b16 %v3262
        %v5155 = vunpack.c.h.b16 %v3262
        %v5156 = vunpack.c.l.b16 %v3263
        %v5157 = vunpack.c.h.b16 %v3263
        %v5158 = vunpack.c.l.b16 %v3264
        %v5159 = vunpack.c.h.b16 %v3264
        %v5160 = vunpack.c.l.b16 %v3265
        %v5161 = vunpack.c.h.b16 %v3265
        %v5162 = vunpack.c.l.b16 %v3266
        %v5163 = vunpack.c.h.b16 %v3266
        %v5164 = vunpack.c.l.b16 %v3267
        %v5165 = vunpack.c.h.b16 %v3267
        %v5166 = vunpack.c.l.b16 %v3268
        %v5167 = vunpack.c.h.b16 %v3268
        %v5168 = vunpack.c.l.b16 %v3269
        %v5169 = vunpack.c.h.b16 %v3269
        %v5170 = vunpack.c.l.b16 %v3270
        %v5171 = vunpack.c.h.b16 %v3270
        %v5172 = vunpack.c.l.b16 %v3271
        %v5173 = vunpack.c.h.b16 %v3271
        %v5174 = vunpack.c.l.b16 %v3272
        %v5175 = vunpack.c.h.b16 %v3272
        %v5176 = vunpack.c.l.b16 %v3273
        %v5177 = vunpack.c.h.b16 %v3273
        %v5178 = vunpack.c.l.b16 %v3274
        %v5179 = vunpack.c.h.b16 %v3274
        %v5180 = vunpack.c.l.b16 %v3275
        %v5181 = vunpack.c.h.b16 %v3275
        %v5182 = vunpack.c.l.b16 %v3276
        %v5183 = vunpack.c.h.b16 %v3276
        %v5184 = vunpack.c.l.b16 %v3277
        %v5185 = vunpack.c.h.b16 %v3277
        %v5186 = vunpack.c.l.b16 %v3278
        %v5187 = vunpack.c.h.b16 %v3278
        %v5188 = vunpack.c.l.b16 %v3279
        %v5189 = vunpack.c.h.b16 %v3279
        %v5190 = vunpack.c.l.b16 %v3280
        %v5191 = vunpack.c.h.b16 %v3280
        %v5192 = vunpack.c.l.b16 %v3281
        %v5193 = vunpack.c.h.b16 %v3281
        %v5194 = vunpack.c.l.b16 %v3282
        %v5195 = vunpack.c.h.b16 %v3282
        %v5196 = vunpack.c.l.b16 %v3283
        %v5197 = vunpack.c.h.b16 %v3283
        %v5198 = vunpack.c.l.b16 %v3284
        %v5199 = vunpack.c.h.b16 %v3284
        %v5200 = vunpack.c.l.b16 %v3285
        %v5201 = vunpack.c.h.b16 %v3285
        %v5202 = vunpack.c.l.b16 %v3286
        %v5203 = vunpack.c.h.b16 %v3286
        %v5204 = vunpack.c.l.b16 %v3287
        %v5205 = vunpack.c.h.b16 %v3287
        %v5206 = vunpack.c.l.b16 %v3288
        %v5207 = vunpack.c.h.b16 %v3288
        %v5208 = vunpack.c.l.b16 %v3289
        %v5209 = vunpack.c.h.b16 %v3289
        %v5210 = vunpack.c.l.b16 %v3290
        %v5211 = vunpack.c.h.b16 %v3290
        %v5212 = vunpack.c.l.b16 %v3291
        %v5213 = vunpack.c.h.b16 %v3291
        %v5214 = vunpack.c.l.b16 %v3292
        %v5215 = vunpack.c.h.b16 %v3292
        %v5216 = vunpack.c.l.b16 %v3293
        %v5217 = vunpack.c.h.b16 %v3293
        %v5218 = vunpack.c.l.b16 %v3294
        %v5219 = vunpack.c.h.b16 %v3294
        %v5220 = vunpack.c.l.b16 %v3295
        %v5221 = vunpack.c.h.b16 %v3295
        %v5222 = vunpack.c.l.b16 %v3296
        %v5223 = vunpack.c.h.b16 %v3296
        %v5224 = vunpack.c.l.b16 %v3297
        %v5225 = vunpack.c.h.b16 %v3297
        %v5226 = vunpack.c.l.b16 %v3298
        %v5227 = vunpack.c.h.b16 %v3298
        %v5228 = vunpack.c.l.b16 %v3299
        %v5229 = vunpack.c.h.b16 %v3299
        %v5230 = vunpack.c.l.b16 %v3300
        %v5231 = vunpack.c.h.b16 %v3300
        %v5232 = vunpack.c.l.b16 %v3301
        %v5233 = vunpack.c.h.b16 %v3301
        %v5234 = vunpack.c.l.b16 %v3302
        %v5235 = vunpack.c.h.b16 %v3302
        %v5236 = vunpack.c.l.b16 %v3303
        %v5237 = vunpack.c.h.b16 %v3303
        %v5238 = vunpack.c.l.b16 %v3304
        %v5239 = vunpack.c.h.b16 %v3304
        %v5240 = vunpack.c.l.b16 %v3305
        %v5241 = vunpack.c.h.b16 %v3305
        %v5242 = vunpack.c.l.b16 %v3306
        %v5243 = vunpack.c.h.b16 %v3306
        %v5244 = vunpack.c.l.b16 %v3307
        %v5245 = vunpack.c.h.b16 %v3307
        %v5246 = vunpack.c.l.b16 %v3308
        %v5247 = vunpack.c.h.b16 %v3308
        %v5248 = vunpack.c.l.b16 %v3309
        %v5249 = vunpack.c.h.b16 %v3309
        %v5250 = vunpack.c.l.b16 %v3310
        %v5251 = vunpack.c.h.b16 %v3310
        %v5252 = vunpack.c.l.b16 %v3311
        %v5253 = vunpack.c.h.b16 %v3311
        %v5254 = vunpack.c.l.b16 %v3312
        %v5255 = vunpack.c.h.b16 %v3312
        %v5256 = vunpack.c.l.b16 %v3313
        %v5257 = vunpack.c.h.b16 %v3313
        %v5258 = vunpack.c.l.b16 %v3314
        %v5259 = vunpack.c.h.b16 %v3314
        %v5260 = vunpack.c.l.b16 %v3315
        %v5261 = vunpack.c.h.b16 %v3315
        %v5262 = vunpack.c.l.b16 %v3316
        %v5263 = vunpack.c.h.b16 %v3316
        %v5264 = vunpack.c.l.b16 %v3317
        %v5265 = vunpack.c.h.b16 %v3317
        %v5266 = vunpack.c.l.b16 %v3318
        %v5267 = vunpack.c.h.b16 %v3318
        %v5268 = vunpack.c.l.b16 %v3319
        %v5269 = vunpack.c.h.b16 %v3319
        %v5270 = vunpack.c.l.b16 %v3320
        %v5271 = vunpack.c.h.b16 %v3320
        %v5272 = vunpack.c.l.b16 %v3321
        %v5273 = vunpack.c.h.b16 %v3321
        %v5274 = vunpack.c.l.b16 %v3322
        %v5275 = vunpack.c.h.b16 %v3322
        %v5276 = vunpack.c.l.b16 %v3323
        %v5277 = vunpack.c.h.b16 %v3323
        %v5278 = vunpack.c.l.b16 %v3324
        %v5279 = vunpack.c.h.b16 %v3324
        %v5280 = vunpack.c.l.b16 %v3325
        %v5281 = vunpack.c.h.b16 %v3325
        %v5282 = vunpack.c.l.b16 %v3326
        %v5283 = vunpack.c.h.b16 %v3326
        %v5284 = vunpack.c.l.b16 %v3327
        %v5285 = vunpack.c.h.b16 %v3327
        %v5286 = vunpack.c.l.b16 %v3328
        %v5287 = vunpack.c.h.b16 %v3328
        %v5288 = vunpack.c.l.b16 %v3329
        %v5289 = vunpack.c.h.b16 %v3329
        %v5290 = vunpack.c.l.b16 %v3330
        %v5291 = vunpack.c.h.b16 %v3330
        %v5292 = vunpack.c.l.b16 %v3331
        %v5293 = vunpack.c.h.b16 %v3331
        %v5294 = vunpack.c.l.b16 %v3332
        %v5295 = vunpack.c.h.b16 %v3332
        %v5296 = vunpack.c.l.b16 %v3333
        %v5297 = vunpack.c.h.b16 %v3333
        %v5298 = vunpack.c.l.b16 %v3334
        %v5299 = vunpack.c.h.b16 %v3334
        %v5300 = vunpack.c.l.b16 %v3335
        %v5301 = vunpack.c.h.b16 %v3335
        %v5302 = vunpack.c.l.b16 %v3336
        %v5303 = vunpack.c.h.b16 %v3336
        %v5304 = vunpack.c.l.b16 %v3337
        %v5305 = vunpack.c.h.b16 %v3337
        %v5306 = vunpack.c.l.b16 %v3338
        %v5307 = vunpack.c.h.b16 %v3338
        %v5308 = vunpack.c.l.b16 %v3339
        %v5309 = vunpack.c.h.b16 %v3339
        %v5310 = vunpack.c.l.b16 %v3340
        %v5311 = vunpack.c.h.b16 %v3340
        %v5312 = vunpack.c.l.b16 %v3341
        %v5313 = vunpack.c.h.b16 %v3341
        %v5314 = vunpack.c.l.b16 %v3342
        %v5315 = vunpack.c.h.b16 %v3342
        %v5316 = vunpack.c.l.b16 %v3343
        %v5317 = vunpack.c.h.b16 %v3343
        %v5318 = vunpack.c.l.b16 %v3344
        %v5319 = vunpack.c.h.b16 %v3344
        %v5320 = vunpack.c.l.b16 %v3345
        %v5321 = vunpack.c.h.b16 %v3345
        %v5322 = vunpack.c.l.b16 %v3346
        %v5323 = vunpack.c.h.b16 %v3346
        %v5324 = vunpack.c.l.b16 %v3347
        %v5325 = vunpack.c.h.b16 %v3347
        %v5326 = vunpack.c.l.b16 %v3348
        %v5327 = vunpack.c.h.b16 %v3348
        %v5328 = vunpack.c.l.b16 %v3349
        %v5329 = vunpack.c.h.b16 %v3349
        %v5330 = vunpack.c.l.b16 %v3350
        %v5331 = vunpack.c.h.b16 %v3350
        %v5332 = vunpack.c.l.b16 %v3351
        %v5333 = vunpack.c.h.b16 %v3351
        %v5334 = vunpack.c.l.b16 %v3352
        %v5335 = vunpack.c.h.b16 %v3352
        %v5336 = vunpack.c.l.b16 %v3353
        %v5337 = vunpack.c.h.b16 %v3353
        %v5338 = vunpack.c.l.b16 %v3354
        %v5339 = vunpack.c.h.b16 %v3354
        %v5340 = vunpack.c.l.b16 %v3355
        %v5341 = vunpack.c.h.b16 %v3355
        %v5342 = vunpack.c.l.b16 %v3356
        %v5343 = vunpack.c.h.b16 %v3356
        %v5344 = vunpack.c.l.b16 %v3357
        %v5345 = vunpack.c.h.b16 %v3357
        %v5346 = vunpack.c.l.b16 %v3358
        %v5347 = vunpack.c.h.b16 %v3358
        %v5348 = vunpack.c.l.b16 %v3359
        %v5349 = vunpack.c.h.b16 %v3359
        %v5350 = vunpack.c.l.b16 %v3360
        %v5351 = vunpack.c.h.b16 %v3360
        %v5352 = vunpack.c.l.b16 %v3361
        %v5353 = vunpack.c.h.b16 %v3361
        %v5354 = vunpack.c.l.b16 %v3362
        %v5355 = vunpack.c.h.b16 %v3362
        %v5356 = vunpack.c.l.b16 %v3363
        %v5357 = vunpack.c.h.b16 %v3363
        %v5358 = vunpack.c.l.b16 %v3364
        %v5359 = vunpack.c.h.b16 %v3364
        %v5360 = vunpack.c.l.b16 %v3365
        %v5361 = vunpack.c.h.b16 %v3365
        %v5362 = vunpack.c.l.b16 %v3366
        %v5363 = vunpack.c.h.b16 %v3366
        %v5364 = vunpack.c.l.b16 %v3367
        %v5365 = vunpack.c.h.b16 %v3367
        %v5366 = vunpack.c.l.b16 %v3368
        %v5367 = vunpack.c.h.b16 %v3368
        %v5368 = vunpack.c.l.b16 %v3369
        %v5369 = vunpack.c.h.b16 %v3369
        %v5370 = vunpack.c.l.b16 %v3370
        %v5371 = vunpack.c.h.b16 %v3370
        %v5372 = vunpack.c.l.b16 %v3371
        %v5373 = vunpack.c.h.b16 %v3371
        %v5374 = vunpack.c.l.b16 %v3372
        %v5375 = vunpack.c.h.b16 %v3372
        %v5376 = vunpack.c.l.b16 %v3373
        %v5377 = vunpack.c.h.b16 %v3373
        %v5378 = vunpack.c.l.b16 %v3374
        %v5379 = vunpack.c.h.b16 %v3374
        %v5380 = vunpack.c.l.b16 %v3375
        %v5381 = vunpack.c.h.b16 %v3375
        %v5382 = vunpack.c.l.b16 %v3376
        %v5383 = vunpack.c.h.b16 %v3376
        %v5384 = vunpack.c.l.b16 %v3377
        %v5385 = vunpack.c.h.b16 %v3377
        %v5386 = vunpack.c.l.b16 %v3378
        %v5387 = vunpack.c.h.b16 %v3378
        %v5388 = vunpack.c.l.b16 %v3379
        %v5389 = vunpack.c.h.b16 %v3379
        %v5390 = vunpack.c.l.b16 %v3380
        %v5391 = vunpack.c.h.b16 %v3380
        %v5392 = vunpack.c.l.b16 %v3381
        %v5393 = vunpack.c.h.b16 %v3381
        %v5394 = vunpack.c.l.b16 %v3382
        %v5395 = vunpack.c.h.b16 %v3382
        %v5396 = vunpack.c.l.b16 %v3383
        %v5397 = vunpack.c.h.b16 %v3383
        %v5398 = vunpack.c.l.b16 %v3384
        %v5399 = vunpack.c.h.b16 %v3384
        %v5400 = vunpack.c.l.b16 %v3385
        %v5401 = vunpack.c.h.b16 %v3385
        %v5402 = vunpack.c.l.b16 %v3386
        %v5403 = vunpack.c.h.b16 %v3386
        %v5404 = vunpack.c.l.b16 %v3387
        %v5405 = vunpack.c.h.b16 %v3387
        %v5406 = vunpack.c.l.b16 %v3388
        %v5407 = vunpack.c.h.b16 %v3388
        %v5408 = vunpack.c.l.b16 %v3389
        %v5409 = vunpack.c.h.b16 %v3389
        %v5410 = vunpack.c.l.b16 %v3390
        %v5411 = vunpack.c.h.b16 %v3390
        %v5412 = vunpack.c.l.b16 %v3391
        %v5413 = vunpack.c.h.b16 %v3391
        %v5414 = vunpack.c.l.b16 %v3392
        %v5415 = vunpack.c.h.b16 %v3392
        %v5416 = vunpack.c.l.b16 %v3393
        %v5417 = vunpack.c.h.b16 %v3393
        %v5418 = vunpack.c.l.b16 %v3394
        %v5419 = vunpack.c.h.b16 %v3394
        %v5420 = vunpack.c.l.b16 %v3395
        %v5421 = vunpack.c.h.b16 %v3395
        %v5422 = vunpack.c.l.b16 %v3396
        %v5423 = vunpack.c.h.b16 %v3396
        %v5424 = vunpack.c.l.b16 %v3397
        %v5425 = vunpack.c.h.b16 %v3397
        %v5426 = vunpack.c.l.b16 %v3398
        %v5427 = vunpack.c.h.b16 %v3398
        %v5428 = vunpack.c.l.b16 %v3399
        %v5429 = vunpack.c.h.b16 %v3399
        %v5430 = vunpack.c.l.b16 %v3400
        %v5431 = vunpack.c.h.b16 %v3400
        %v5432 = vunpack.c.l.b16 %v3401
        %v5433 = vunpack.c.h.b16 %v3401
        %v5434 = vunpack.c.l.b16 %v3402
        %v5435 = vunpack.c.h.b16 %v3402
        %v5436 = vunpack.c.l.b16 %v3403
        %v5437 = vunpack.c.h.b16 %v3403
        %v5438 = vunpack.c.l.b16 %v3404
        %v5439 = vunpack.c.h.b16 %v3404
        %v5440 = vunpack.c.l.b16 %v3405
        %v5441 = vunpack.c.h.b16 %v3405
        %v5442 = vunpack.c.l.b16 %v3406
        %v5443 = vunpack.c.h.b16 %v3406
        %v5444 = vunpack.c.l.b16 %v3407
        %v5445 = vunpack.c.h.b16 %v3407
        %v5446 = vunpack.c.l.b16 %v3408
        %v5447 = vunpack.c.h.b16 %v3408
        %v5448 = vunpack.c.l.b16 %v3409
        %v5449 = vunpack.c.h.b16 %v3409
        %v5450 = vunpack.c.l.b16 %v3410
        %v5451 = vunpack.c.h.b16 %v3410
        %v5452 = vunpack.c.l.b16 %v3411
        %v5453 = vunpack.c.h.b16 %v3411
        %v5454 = vunpack.c.l.b16 %v3412
        %v5455 = vunpack.c.h.b16 %v3412
        %v5456 = vunpack.c.l.b16 %v3413
        %v5457 = vunpack.c.h.b16 %v3413
        %v5458 = vunpack.c.l.b16 %v3414
        %v5459 = vunpack.c.h.b16 %v3414
        %v5460 = vunpack.c.l.b16 %v3415
        %v5461 = vunpack.c.h.b16 %v3415
        %v5462 = vunpack.c.l.b16 %v3416
        %v5463 = vunpack.c.h.b16 %v3416
        %v5464 = vunpack.c.l.b16 %v3417
        %v5465 = vunpack.c.h.b16 %v3417
        %v5466 = vunpack.c.l.b16 %v3418
        %v5467 = vunpack.c.h.b16 %v3418
        %v5468 = vunpack.c.l.b16 %v3419
        %v5469 = vunpack.c.h.b16 %v3419
        %v5470 = vunpack.c.l.b16 %v3420
        %v5471 = vunpack.c.h.b16 %v3420
        %v5472 = vunpack.c.l.b16 %v3421
        %v5473 = vunpack.c.h.b16 %v3421
        %v5474 = vunpack.c.l.b16 %v3422
        %v5475 = vunpack.c.h.b16 %v3422
        %v5476 = vunpack.c.l.b16 %v3423
        %v5477 = vunpack.c.h.b16 %v3423
        %v5478 = vunpack.c.l.b16 %v3424
        %v5479 = vunpack.c.h.b16 %v3424
        %v5480 = vunpack.c.l.b16 %v3425
        %v5481 = vunpack.c.h.b16 %v3425
        %v5482 = vunpack.c.l.b16 %v3426
        %v5483 = vunpack.c.h.b16 %v3426
        %v5484 = vunpack.c.l.b16 %v3427
        %v5485 = vunpack.c.h.b16 %v3427
        %v5486 = vunpack.c.l.b16 %v3428
        %v5487 = vunpack.c.h.b16 %v3428
        %v5488 = vunpack.c.l.b16 %v3429
        %v5489 = vunpack.c.h.b16 %v3429
        %v5490 = vunpack.c.l.b16 %v3430
        %v5491 = vunpack.c.h.b16 %v3430
        %v5492 = vunpack.c.l.b16 %v3431
        %v5493 = vunpack.c.h.b16 %v3431
        %v5494 = vunpack.c.l.b16 %v3432
        %v5495 = vunpack.c.h.b16 %v3432
        %v5496 = vunpack.c.l.b16 %v3433
        %v5497 = vunpack.c.h.b16 %v3433
        %v5498 = vunpack.c.l.b16 %v3434
        %v5499 = vunpack.c.h.b16 %v3434
        %v5500 = vunpack.c.l.b16 %v3435
        %v5501 = vunpack.c.h.b16 %v3435
        %v5502 = vunpack.c.l.b16 %v3436
        %v5503 = vunpack.c.h.b16 %v3436
        %v5504 = vunpack.c.l.b16 %v3437
        %v5505 = vunpack.c.h.b16 %v3437
        %v5506 = vunpack.c.l.b16 %v3438
        %v5507 = vunpack.c.h.b16 %v3438
        %v5508 = vunpack.c.l.b16 %v3439
        %v5509 = vunpack.c.h.b16 %v3439
        %v5510 = vunpack.c.l.b16 %v3440
        %v5511 = vunpack.c.h.b16 %v3440
        %v5512 = vunpack.c.l.b16 %v3441
        %v5513 = vunpack.c.h.b16 %v3441
        %v5514 = vunpack.c.l.b16 %v3442
        %v5515 = vunpack.c.h.b16 %v3442
        %v5516 = vunpack.c.l.b16 %v3443
        %v5517 = vunpack.c.h.b16 %v3443
        %v5518 = vunpack.c.l.b16 %v3444
        %v5519 = vunpack.c.h.b16 %v3444
        %v5520 = vunpack.c.l.b16 %v3445
        %v5521 = vunpack.c.h.b16 %v3445
        %v5522 = vunpack.c.l.b16 %v3446
        %v5523 = vunpack.c.h.b16 %v3446
        %v5524 = vpack.c.b16 %v4504, %v4500
        %v5525 = vpack.c.b16 %v4505, %v4501
        %v5526 = vpack.c.b16 %v4506, %v4502
        %v5527 = vpack.c.b16 %v4507, %v4503
        %v5528 = vpack.c.b16 %v4512, %v4508
        %v5529 = vpack.c.b16 %v4513, %v4509
        %v5530 = vpack.c.b16 %v4514, %v4510
        %v5531 = vpack.c.b16 %v4515, %v4511
        %v5532 = vpack.c.b16 %v4520, %v4516
        %v5533 = vpack.c.b16 %v4521, %v4517
        %v5534 = vpack.c.b16 %v4522, %v4518
        %v5535 = vpack.c.b16 %v4523, %v4519
        %v5536 = vpack.c.b16 %v4528, %v4524
        %v5537 = vpack.c.b16 %v4529, %v4525
        %v5538 = vpack.c.b16 %v4530, %v4526
        %v5539 = vpack.c.b16 %v4531, %v4527
        %v5540 = vpack.c.b16 %v4536, %v4532
        %v5541 = vpack.c.b16 %v4537, %v4533
        %v5542 = vpack.c.b16 %v4538, %v4534
        %v5543 = vpack.c.b16 %v4539, %v4535
        %v5544 = vpack.c.b16 %v4544, %v4540
        %v5545 = vpack.c.b16 %v4545, %v4541
        %v5546 = vpack.c.b16 %v4546, %v4542
        %v5547 = vpack.c.b16 %v4547, %v4543
        %v5548 = vpack.c.b16 %v4552, %v4548
        %v5549 = vpack.c.b16 %v4553, %v4549
        %v5550 = vpack.c.b16 %v4554, %v4550
        %v5551 = vpack.c.b16 %v4555, %v4551
        %v5552 = vpack.c.b16 %v4560, %v4556
        %v5553 = vpack.c.b16 %v4561, %v4557
        %v5554 = vpack.c.b16 %v4562, %v4558
        %v5555 = vpack.c.b16 %v4563, %v4559
        %v5556 = vpack.c.b16 %v4568, %v4564
        %v5557 = vpack.c.b16 %v4569, %v4565
        %v5558 = vpack.c.b16 %v4570, %v4566
        %v5559 = vpack.c.b16 %v4571, %v4567
        %v5560 = vpack.c.b16 %v4576, %v4572
        %v5561 = vpack.c.b16 %v4577, %v4573
        %v5562 = vpack.c.b16 %v4578, %v4574
        %v5563 = vpack.c.b16 %v4579, %v4575
        %v5564 = vpack.c.b16 %v4584, %v4580
        %v5565 = vpack.c.b16 %v4585, %v4581
        %v5566 = vpack.c.b16 %v4586, %v4582
        %v5567 = vpack.c.b16 %v4587, %v4583
        %v5568 = vpack.c.b16 %v4592, %v4588
        %v5569 = vpack.c.b16 %v4593, %v4589
        %v5570 = vpack.c.b16 %v4594, %v4590
        %v5571 = vpack.c.b16 %v4595, %v4591
        %v5572 = vpack.c.b16 %v4600, %v4596
        %v5573 = vpack.c.b16 %v4601, %v4597
        %v5574 = vpack.c.b16 %v4602, %v4598
        %v5575 = vpack.c.b16 %v4603, %v4599
        %v5576 = vpack.c.b16 %v4608, %v4604
        %v5577 = vpack.c.b16 %v4609, %v4605
        %v5578 = vpack.c.b16 %v4610, %v4606
        %v5579 = vpack.c.b16 %v4611, %v4607
        %v5580 = vpack.c.b16 %v4616, %v4612
        %v5581 = vpack.c.b16 %v4617, %v4613
        %v5582 = vpack.c.b16 %v4618, %v4614
        %v5583 = vpack.c.b16 %v4619, %v4615
        %v5584 = vpack.c.b16 %v4624, %v4620
        %v5585 = vpack.c.b16 %v4625, %v4621
        %v5586 = vpack.c.b16 %v4626, %v4622
        %v5587 = vpack.c.b16 %v4627, %v4623
        %v5588 = vpack.c.b16 %v4632, %v4628
        %v5589 = vpack.c.b16 %v4633, %v4629
        %v5590 = vpack.c.b16 %v4634, %v4630
        %v5591 = vpack.c.b16 %v4635, %v4631
        %v5592 = vpack.c.b16 %v4640, %v4636
        %v5593 = vpack.c.b16 %v4641, %v4637
        %v5594 = vpack.c.b16 %v4642, %v4638
        %v5595 = vpack.c.b16 %v4643, %v4639
        %v5596 = vpack.c.b16 %v4648, %v4644
        %v5597 = vpack.c.b16 %v4649, %v4645
        %v5598 = vpack.c.b16 %v4650, %v4646
        %v5599 = vpack.c.b16 %v4651, %v4647
        %v5600 = vpack.c.b16 %v4656, %v4652
        %v5601 = vpack.c.b16 %v4657, %v4653
        %v5602 = vpack.c.b16 %v4658, %v4654
        %v5603 = vpack.c.b16 %v4659, %v4655
        %v5604 = vpack.c.b16 %v4664, %v4660
        %v5605 = vpack.c.b16 %v4665, %v4661
        %v5606 = vpack.c.b16 %v4666, %v4662
        %v5607 = vpack.c.b16 %v4667, %v4663
        %v5608 = vpack.c.b16 %v4672, %v4668
        %v5609 = vpack.c.b16 %v4673, %v4669
        %v5610 = vpack.c.b16 %v4674, %v4670
        %v5611 = vpack.c.b16 %v4675, %v4671
        %v5612 = vpack.c.b16 %v4680, %v4676
        %v5613 = vpack.c.b16 %v4681, %v4677
        %v5614 = vpack.c.b16 %v4682, %v4678
        %v5615 = vpack.c.b16 %v4683, %v4679
        %v5616 = vpack.c.b16 %v4688, %v4684
        %v5617 = vpack.c.b16 %v4689, %v4685
        %v5618 = vpack.c.b16 %v4690, %v4686
        %v5619 = vpack.c.b16 %v4691, %v4687
        %v5620 = vpack.c.b16 %v4696, %v4692
        %v5621 = vpack.c.b16 %v4697, %v4693
        %v5622 = vpack.c.b16 %v4698, %v4694
        %v5623 = vpack.c.b16 %v4699, %v4695
        %v5624 = vpack.c.b16 %v4704, %v4700
        %v5625 = vpack.c.b16 %v4705, %v4701
        %v5626 = vpack.c.b16 %v4706, %v4702
        %v5627 = vpack.c.b16 %v4707, %v4703
        %v5628 = vpack.c.b16 %v4712, %v4708
        %v5629 = vpack.c.b16 %v4713, %v4709
        %v5630 = vpack.c.b16 %v4714, %v4710
        %v5631 = vpack.c.b16 %v4715, %v4711
        %v5632 = vpack.c.b16 %v4720, %v4716
        %v5633 = vpack.c.b16 %v4721, %v4717
        %v5634 = vpack.c.b16 %v4722, %v4718
        %v5635 = vpack.c.b16 %v4723, %v4719
        %v5636 = vpack.c.b16 %v4728, %v4724
        %v5637 = vpack.c.b16 %v4729, %v4725
        %v5638 = vpack.c.b16 %v4730, %v4726
        %v5639 = vpack.c.b16 %v4731, %v4727
        %v5640 = vpack.c.b16 %v4736, %v4732
        %v5641 = vpack.c.b16 %v4737, %v4733
        %v5642 = vpack.c.b16 %v4738, %v4734
        %v5643 = vpack.c.b16 %v4739, %v4735
        %v5644 = vpack.c.b16 %v4744, %v4740
        %v5645 = vpack.c.b16 %v4745, %v4741
        %v5646 = vpack.c.b16 %v4746, %v4742
        %v5647 = vpack.c.b16 %v4747, %v4743
        %v5648 = vpack.c.b16 %v4752, %v4748
        %v5649 = vpack.c.b16 %v4753, %v4749
        %v5650 = vpack.c.b16 %v4754, %v4750
        %v5651 = vpack.c.b16 %v4755, %v4751
        %v5652 = vpack.c.b16 %v4760, %v4756
        %v5653 = vpack.c.b16 %v4761, %v4757
        %v5654 = vpack.c.b16 %v4762, %v4758
        %v5655 = vpack.c.b16 %v4763, %v4759
        %v5656 = vpack.c.b16 %v4768, %v4764
        %v5657 = vpack.c.b16 %v4769, %v4765
        %v5658 = vpack.c.b16 %v4770, %v4766
        %v5659 = vpack.c.b16 %v4771, %v4767
        %v5660 = vpack.c.b16 %v4776, %v4772
        %v5661 = vpack.c.b16 %v4777, %v4773
        %v5662 = vpack.c.b16 %v4778, %v4774
        %v5663 = vpack.c.b16 %v4779, %v4775
        %v5664 = vpack.c.b16 %v4784, %v4780
        %v5665 = vpack.c.b16 %v4785, %v4781
        %v5666 = vpack.c.b16 %v4786, %v4782
        %v5667 = vpack.c.b16 %v4787, %v4783
        %v5668 = vpack.c.b16 %v4792, %v4788
        %v5669 = vpack.c.b16 %v4793, %v4789
        %v5670 = vpack.c.b16 %v4794, %v4790
        %v5671 = vpack.c.b16 %v4795, %v4791
        %v5672 = vpack.c.b16 %v4800, %v4796
        %v5673 = vpack.c.b16 %v4801, %v4797
        %v5674 = vpack.c.b16 %v4802, %v4798
        %v5675 = vpack.c.b16 %v4803, %v4799
        %v5676 = vpack.c.b16 %v4808, %v4804
        %v5677 = vpack.c.b16 %v4809, %v4805
        %v5678 = vpack.c.b16 %v4810, %v4806
        %v5679 = vpack.c.b16 %v4811, %v4807
        %v5680 = vpack.c.b16 %v4816, %v4812
        %v5681 = vpack.c.b16 %v4817, %v4813
        %v5682 = vpack.c.b16 %v4818, %v4814
        %v5683 = vpack.c.b16 %v4819, %v4815
        %v5684 = vpack.c.b16 %v4824, %v4820
        %v5685 = vpack.c.b16 %v4825, %v4821
        %v5686 = vpack.c.b16 %v4826, %v4822
        %v5687 = vpack.c.b16 %v4827, %v4823
        %v5688 = vpack.c.b16 %v4832, %v4828
        %v5689 = vpack.c.b16 %v4833, %v4829
        %v5690 = vpack.c.b16 %v4834, %v4830
        %v5691 = vpack.c.b16 %v4835, %v4831
        %v5692 = vpack.c.b16 %v4840, %v4836
        %v5693 = vpack.c.b16 %v4841, %v4837
        %v5694 = vpack.c.b16 %v4842, %v4838
        %v5695 = vpack.c.b16 %v4843, %v4839
        %v5696 = vpack.c.b16 %v4848, %v4844
        %v5697 = vpack.c.b16 %v4849, %v4845
        %v5698 = vpack.c.b16 %v4850, %v4846
        %v5699 = vpack.c.b16 %v4851, %v4847
        %v5700 = vpack.c.b16 %v4856, %v4852
        %v5701 = vpack.c.b16 %v4857, %v4853
        %v5702 = vpack.c.b16 %v4858, %v4854
        %v5703 = vpack.c.b16 %v4859, %v4855
        %v5704 = vpack.c.b16 %v4864, %v4860
        %v5705 = vpack.c.b16 %v4865, %v4861
        %v5706 = vpack.c.b16 %v4866, %v4862
        %v5707 = vpack.c.b16 %v4867, %v4863
        %v5708 = vpack.c.b16 %v4872, %v4868
        %v5709 = vpack.c.b16 %v4873, %v4869
        %v5710 = vpack.c.b16 %v4874, %v4870
        %v5711 = vpack.c.b16 %v4875, %v4871
        %v5712 = vpack.c.b16 %v4880, %v4876
        %v5713 = vpack.c.b16 %v4881, %v4877
        %v5714 = vpack.c.b16 %v4882, %v4878
        %v5715 = vpack.c.b16 %v4883, %v4879
        %v5716 = vpack.c.b16 %v4888, %v4884
        %v5717 = vpack.c.b16 %v4889, %v4885
        %v5718 = vpack.c.b16 %v4890, %v4886
        %v5719 = vpack.c.b16 %v4891, %v4887
        %v5720 = vpack.c.b16 %v4896, %v4892
        %v5721 = vpack.c.b16 %v4897, %v4893
        %v5722 = vpack.c.b16 %v4898, %v4894
        %v5723 = vpack.c.b16 %v4899, %v4895
        %v5724 = vpack.c.b16 %v4904, %v4900
        %v5725 = vpack.c.b16 %v4905, %v4901
        %v5726 = vpack.c.b16 %v4906, %v4902
        %v5727 = vpack.c.b16 %v4907, %v4903
        %v5728 = vpack.c.b16 %v4912, %v4908
        %v5729 = vpack.c.b16 %v4913, %v4909
        %v5730 = vpack.c.b16 %v4914, %v4910
        %v5731 = vpack.c.b16 %v4915, %v4911
        %v5732 = vpack.c.b16 %v4920, %v4916
        %v5733 = vpack.c.b16 %v4921, %v4917
        %v5734 = vpack.c.b16 %v4922, %v4918
        %v5735 = vpack.c.b16 %v4923, %v4919
        %v5736 = vpack.c.b16 %v4928, %v4924
        %v5737 = vpack.c.b16 %v4929, %v4925
        %v5738 = vpack.c.b16 %v4930, %v4926
        %v5739 = vpack.c.b16 %v4931, %v4927
        %v5740 = vpack.c.b16 %v4936, %v4932
        %v5741 = vpack.c.b16 %v4937, %v4933
        %v5742 = vpack.c.b16 %v4938, %v4934
        %v5743 = vpack.c.b16 %v4939, %v4935
        %v5744 = vpack.c.b16 %v4944, %v4940
        %v5745 = vpack.c.b16 %v4945, %v4941
        %v5746 = vpack.c.b16 %v4946, %v4942
        %v5747 = vpack.c.b16 %v4947, %v4943
        %v5748 = vpack.c.b16 %v4952, %v4948
        %v5749 = vpack.c.b16 %v4953, %v4949
        %v5750 = vpack.c.b16 %v4954, %v4950
        %v5751 = vpack.c.b16 %v4955, %v4951
        %v5752 = vpack.c.b16 %v4960, %v4956
        %v5753 = vpack.c.b16 %v4961, %v4957
        %v5754 = vpack.c.b16 %v4962, %v4958
        %v5755 = vpack.c.b16 %v4963, %v4959
        %v5756 = vpack.c.b16 %v4968, %v4964
        %v5757 = vpack.c.b16 %v4969, %v4965
        %v5758 = vpack.c.b16 %v4970, %v4966
        %v5759 = vpack.c.b16 %v4971, %v4967
        %v5760 = vpack.c.b16 %v4976, %v4972
        %v5761 = vpack.c.b16 %v4977, %v4973
        %v5762 = vpack.c.b16 %v4978, %v4974
        %v5763 = vpack.c.b16 %v4979, %v4975
        %v5764 = vpack.c.b16 %v4984, %v4980
        %v5765 = vpack.c.b16 %v4985, %v4981
        %v5766 = vpack.c.b16 %v4986, %v4982
        %v5767 = vpack.c.b16 %v4987, %v4983
        %v5768 = vpack.c.b16 %v4992, %v4988
        %v5769 = vpack.c.b16 %v4993, %v4989
        %v5770 = vpack.c.b16 %v4994, %v4990
        %v5771 = vpack.c.b16 %v4995, %v4991
        %v5772 = vpack.c.b16 %v5000, %v4996
        %v5773 = vpack.c.b16 %v5001, %v4997
        %v5774 = vpack.c.b16 %v5002, %v4998
        %v5775 = vpack.c.b16 %v5003, %v4999
        %v5776 = vpack.c.b16 %v5008, %v5004
        %v5777 = vpack.c.b16 %v5009, %v5005
        %v5778 = vpack.c.b16 %v5010, %v5006
        %v5779 = vpack.c.b16 %v5011, %v5007
        %v5780 = vpack.c.b16 %v5016, %v5012
        %v5781 = vpack.c.b16 %v5017, %v5013
        %v5782 = vpack.c.b16 %v5018, %v5014
        %v5783 = vpack.c.b16 %v5019, %v5015
        %v5784 = vpack.c.b16 %v5024, %v5020
        %v5785 = vpack.c.b16 %v5025, %v5021
        %v5786 = vpack.c.b16 %v5026, %v5022
        %v5787 = vpack.c.b16 %v5027, %v5023
        %v5788 = vpack.c.b16 %v5032, %v5028
        %v5789 = vpack.c.b16 %v5033, %v5029
        %v5790 = vpack.c.b16 %v5034, %v5030
        %v5791 = vpack.c.b16 %v5035, %v5031
        %v5792 = vpack.c.b16 %v5040, %v5036
        %v5793 = vpack.c.b16 %v5041, %v5037
        %v5794 = vpack.c.b16 %v5042, %v5038
        %v5795 = vpack.c.b16 %v5043, %v5039
        %v5796 = vpack.c.b16 %v5048, %v5044
        %v5797 = vpack.c.b16 %v5049, %v5045
        %v5798 = vpack.c.b16 %v5050, %v5046
        %v5799 = vpack.c.b16 %v5051, %v5047
        %v5800 = vpack.c.b16 %v5056, %v5052
        %v5801 = vpack.c.b16 %v5057, %v5053
        %v5802 = vpack.c.b16 %v5058, %v5054
        %v5803 = vpack.c.b16 %v5059, %v5055
        %v5804 = vpack.c.b16 %v5064, %v5060
        %v5805 = vpack.c.b16 %v5065, %v5061
        %v5806 = vpack.c.b16 %v5066, %v5062
        %v5807 = vpack.c.b16 %v5067, %v5063
        %v5808 = vpack.c.b16 %v5072, %v5068
        %v5809 = vpack.c.b16 %v5073, %v5069
        %v5810 = vpack.c.b16 %v5074, %v5070
        %v5811 = vpack.c.b16 %v5075, %v5071
        %v5812 = vpack.c.b16 %v5080, %v5076
        %v5813 = vpack.c.b16 %v5081, %v5077
        %v5814 = vpack.c.b16 %v5082, %v5078
        %v5815 = vpack.c.b16 %v5083, %v5079
        %v5816 = vpack.c.b16 %v5088, %v5084
        %v5817 = vpack.c.b16 %v5089, %v5085
        %v5818 = vpack.c.b16 %v5090, %v5086
        %v5819 = vpack.c.b16 %v5091, %v5087
        %v5820 = vpack.c.b16 %v5096, %v5092
        %v5821 = vpack.c.b16 %v5097, %v5093
        %v5822 = vpack.c.b16 %v5098, %v5094
        %v5823 = vpack.c.b16 %v5099, %v5095
        %v5824 = vpack.c.b16 %v5104, %v5100
        %v5825 = vpack.c.b16 %v5105, %v5101
        %v5826 = vpack.c.b16 %v5106, %v5102
        %v5827 = vpack.c.b16 %v5107, %v5103
        %v5828 = vpack.c.b16 %v5112, %v5108
        %v5829 = vpack.c.b16 %v5113, %v5109
        %v5830 = vpack.c.b16 %v5114, %v5110
        %v5831 = vpack.c.b16 %v5115, %v5111
        %v5832 = vpack.c.b16 %v5120, %v5116
        %v5833 = vpack.c.b16 %v5121, %v5117
        %v5834 = vpack.c.b16 %v5122, %v5118
        %v5835 = vpack.c.b16 %v5123, %v5119
        %v5836 = vpack.c.b16 %v5128, %v5124
        %v5837 = vpack.c.b16 %v5129, %v5125
        %v5838 = vpack.c.b16 %v5130, %v5126
        %v5839 = vpack.c.b16 %v5131, %v5127
        %v5840 = vpack.c.b16 %v5136, %v5132
        %v5841 = vpack.c.b16 %v5137, %v5133
        %v5842 = vpack.c.b16 %v5138, %v5134
        %v5843 = vpack.c.b16 %v5139, %v5135
        %v5844 = vpack.c.b16 %v5144, %v5140
        %v5845 = vpack.c.b16 %v5145, %v5141
        %v5846 = vpack.c.b16 %v5146, %v5142
        %v5847 = vpack.c.b16 %v5147, %v5143
        %v5848 = vpack.c.b16 %v5152, %v5148
        %v5849 = vpack.c.b16 %v5153, %v5149
        %v5850 = vpack.c.b16 %v5154, %v5150
        %v5851 = vpack.c.b16 %v5155, %v5151
        %v5852 = vpack.c.b16 %v5160, %v5156
        %v5853 = vpack.c.b16 %v5161, %v5157
        %v5854 = vpack.c.b16 %v5162, %v5158
        %v5855 = vpack.c.b16 %v5163, %v5159
        %v5856 = vpack.c.b16 %v5168, %v5164
        %v5857 = vpack.c.b16 %v5169, %v5165
        %v5858 = vpack.c.b16 %v5170, %v5166
        %v5859 = vpack.c.b16 %v5171, %v5167
        %v5860 = vpack.c.b16 %v5176, %v5172
        %v5861 = vpack.c.b16 %v5177, %v5173
        %v5862 = vpack.c.b16 %v5178, %v5174
        %v5863 = vpack.c.b16 %v5179, %v5175
        %v5864 = vpack.c.b16 %v5184, %v5180
        %v5865 = vpack.c.b16 %v5185, %v5181
        %v5866 = vpack.c.b16 %v5186, %v5182
        %v5867 = vpack.c.b16 %v5187, %v5183
        %v5868 = vpack.c.b16 %v5192, %v5188
        %v5869 = vpack.c.b16 %v5193, %v5189
        %v5870 = vpack.c.b16 %v5194, %v5190
        %v5871 = vpack.c.b16 %v5195, %v5191
        %v5872 = vpack.c.b16 %v5200, %v5196
        %v5873 = vpack.c.b16 %v5201, %v5197
        %v5874 = vpack.c.b16 %v5202, %v5198
        %v5875 = vpack.c.b16 %v5203, %v5199
        %v5876 = vpack.c.b16 %v5208, %v5204
        %v5877 = vpack.c.b16 %v5209, %v5205
        %v5878 = vpack.c.b16 %v5210, %v5206
        %v5879 = vpack.c.b16 %v5211, %v5207
        %v5880 = vpack.c.b16 %v5216, %v5212
        %v5881 = vpack.c.b16 %v5217, %v5213
        %v5882 = vpack.c.b16 %v5218, %v5214
        %v5883 = vpack.c.b16 %v5219, %v5215
        %v5884 = vpack.c.b16 %v5224, %v5220
        %v5885 = vpack.c.b16 %v5225, %v5221
        %v5886 = vpack.c.b16 %v5226, %v5222
        %v5887 = vpack.c.b16 %v5227, %v5223
        %v5888 = vpack.c.b16 %v5232, %v5228
        %v5889 = vpack.c.b16 %v5233, %v5229
        %v5890 = vpack.c.b16 %v5234, %v5230
        %v5891 = vpack.c.b16 %v5235, %v5231
        %v5892 = vpack.c.b16 %v5240, %v5236
        %v5893 = vpack.c.b16 %v5241, %v5237
        %v5894 = vpack.c.b16 %v5242, %v5238
        %v5895 = vpack.c.b16 %v5243, %v5239
        %v5896 = vpack.c.b16 %v5248, %v5244
        %v5897 = vpack.c.b16 %v5249, %v5245
        %v5898 = vpack.c.b16 %v5250, %v5246
        %v5899 = vpack.c.b16 %v5251, %v5247
        %v5900 = vpack.c.b16 %v5256, %v5252
        %v5901 = vpack.c.b16 %v5257, %v5253
        %v5902 = vpack.c.b16 %v5258, %v5254
        %v5903 = vpack.c.b16 %v5259, %v5255
        %v5904 = vpack.c.b16 %v5264, %v5260
        %v5905 = vpack.c.b16 %v5265, %v5261
        %v5906 = vpack.c.b16 %v5266, %v5262
        %v5907 = vpack.c.b16 %v5267, %v5263
        %v5908 = vpack.c.b16 %v5272, %v5268
        %v5909 = vpack.c.b16 %v5273, %v5269
        %v5910 = vpack.c.b16 %v5274, %v5270
        %v5911 = vpack.c.b16 %v5275, %v5271
        %v5912 = vpack.c.b16 %v5280, %v5276
        %v5913 = vpack.c.b16 %v5281, %v5277
        %v5914 = vpack.c.b16 %v5282, %v5278
        %v5915 = vpack.c.b16 %v5283, %v5279
        %v5916 = vpack.c.b16 %v5288, %v5284
        %v5917 = vpack.c.b16 %v5289, %v5285
        %v5918 = vpack.c.b16 %v5290, %v5286
        %v5919 = vpack.c.b16 %v5291, %v5287
        %v5920 = vpack.c.b16 %v5296, %v5292
        %v5921 = vpack.c.b16 %v5297, %v5293
        %v5922 = vpack.c.b16 %v5298, %v5294
        %v5923 = vpack.c.b16 %v5299, %v5295
        %v5924 = vpack.c.b16 %v5304, %v5300
        %v5925 = vpack.c.b16 %v5305, %v5301
        %v5926 = vpack.c.b16 %v5306, %v5302
        %v5927 = vpack.c.b16 %v5307, %v5303
        %v5928 = vpack.c.b16 %v5312, %v5308
        %v5929 = vpack.c.b16 %v5313, %v5309
        %v5930 = vpack.c.b16 %v5314, %v5310
        %v5931 = vpack.c.b16 %v5315, %v5311
        %v5932 = vpack.c.b16 %v5320, %v5316
        %v5933 = vpack.c.b16 %v5321, %v5317
        %v5934 = vpack.c.b16 %v5322, %v5318
        %v5935 = vpack.c.b16 %v5323, %v5319
        %v5936 = vpack.c.b16 %v5328, %v5324
        %v5937 = vpack.c.b16 %v5329, %v5325
        %v5938 = vpack.c.b16 %v5330, %v5326
        %v5939 = vpack.c.b16 %v5331, %v5327
        %v5940 = vpack.c.b16 %v5336, %v5332
        %v5941 = vpack.c.b16 %v5337, %v5333
        %v5942 = vpack.c.b16 %v5338, %v5334
        %v5943 = vpack.c.b16 %v5339, %v5335
        %v5944 = vpack.c.b16 %v5344, %v5340
        %v5945 = vpack.c.b16 %v5345, %v5341
        %v5946 = vpack.c.b16 %v5346, %v5342
        %v5947 = vpack.c.b16 %v5347, %v5343
        %v5948 = vpack.c.b16 %v5352, %v5348
        %v5949 = vpack.c.b16 %v5353, %v5349
        %v5950 = vpack.c.b16 %v5354, %v5350
        %v5951 = vpack.c.b16 %v5355, %v5351
        %v5952 = vpack.c.b16 %v5360, %v5356
        %v5953 = vpack.c.b16 %v5361, %v5357
        %v5954 = vpack.c.b16 %v5362, %v5358
        %v5955 = vpack.c.b16 %v5363, %v5359
        %v5956 = vpack.c.b16 %v5368, %v5364
        %v5957 = vpack.c.b16 %v5369, %v5365
        %v5958 = vpack.c.b16 %v5370, %v5366
        %v5959 = vpack.c.b16 %v5371, %v5367
        %v5960 = vpack.c.b16 %v5376, %v5372
        %v5961 = vpack.c.b16 %v5377, %v5373
        %v5962 = vpack.c.b16 %v5378, %v5374
        %v5963 = vpack.c.b16 %v5379, %v5375
        %v5964 = vpack.c.b16 %v5384, %v5380
        %v5965 = vpack.c.b16 %v5385, %v5381
        %v5966 = vpack.c.b16 %v5386, %v5382
        %v5967 = vpack.c.b16 %v5387, %v5383
        %v5968 = vpack.c.b16 %v5392, %v5388
        %v5969 = vpack.c.b16 %v5393, %v5389
        %v5970 = vpack.c.b16 %v5394, %v5390
        %v5971 = vpack.c.b16 %v5395, %v5391
        %v5972 = vpack.c.b16 %v5400, %v5396
        %v5973 = vpack.c.b16 %v5401, %v5397
        %v5974 = vpack.c.b16 %v5402, %v5398
        %v5975 = vpack.c.b16 %v5403, %v5399
        %v5976 = vpack.c.b16 %v5408, %v5404
        %v5977 = vpack.c.b16 %v5409, %v5405
        %v5978 = vpack.c.b16 %v5410, %v5406
        %v5979 = vpack.c.b16 %v5411, %v5407
        %v5980 = vpack.c.b16 %v5416, %v5412
        %v5981 = vpack.c.b16 %v5417, %v5413
        %v5982 = vpack.c.b16 %v5418, %v5414
        %v5983 = vpack.c.b16 %v5419, %v5415
        %v5984 = vpack.c.b16 %v5424, %v5420
        %v5985 = vpack.c.b16 %v5425, %v5421
        %v5986 = vpack.c.b16 %v5426, %v5422
        %v5987 = vpack.c.b16 %v5427, %v5423
        %v5988 = vpack.c.b16 %v5432, %v5428
        %v5989 = vpack.c.b16 %v5433, %v5429
        %v5990 = vpack.c.b16 %v5434, %v5430
        %v5991 = vpack.c.b16 %v5435, %v5431
        %v5992 = vpack.c.b16 %v5440, %v5436
        %v5993 = vpack.c.b16 %v5441, %v5437
        %v5994 = vpack.c.b16 %v5442, %v5438
        %v5995 = vpack.c.b16 %v5443, %v5439
        %v5996 = vpack.c.b16 %v5448, %v5444
        %v5997 = vpack.c.b16 %v5449, %v5445
        %v5998 = vpack.c.b16 %v5450, %v5446
        %v5999 = vpack.c.b16 %v5451, %v5447
        %v6000 = vpack.c.b16 %v5456, %v5452
        %v6001 = vpack.c.b16 %v5457, %v5453
        %v6002 = vpack.c.b16 %v5458, %v5454
        %v6003 = vpack.c.b16 %v5459, %v5455
        %v6004 = vpack.c.b16 %v5464, %v5460
        %v6005 = vpack.c.b16 %v5465, %v5461
        %v6006 = vpack.c.b16 %v5466, %v5462
        %v6007 = vpack.c.b16 %v5467, %v5463
        %v6008 = vpack.c.b16 %v5472, %v5468
        %v6009 = vpack.c.b16 %v5473, %v5469
        %v6010 = vpack.c.b16 %v5474, %v5470
        %v6011 = vpack.c.b16 %v5475, %v5471
        %v6012 = vpack.c.b16 %v5480, %v5476
        %v6013 = vpack.c.b16 %v5481, %v5477
        %v6014 = vpack.c.b16 %v5482, %v5478
        %v6015 = vpack.c.b16 %v5483, %v5479
        %v6016 = vpack.c.b16 %v5488, %v5484
        %v6017 = vpack.c.b16 %v5489, %v5485
        %v6018 = vpack.c.b16 %v5490, %v5486
        %v6019 = vpack.c.b16 %v5491, %v5487
        %v6020 = vpack.c.b16 %v5496, %v5492
        %v6021 = vpack.c.b16 %v5497, %v5493
        %v6022 = vpack.c.b16 %v5498, %v5494
        %v6023 = vpack.c.b16 %v5499, %v5495
        %v6024 = vpack.c.b16 %v5504, %v5500
        %v6025 = vpack.c.b16 %v5505, %v5501
        %v6026 = vpack.c.b16 %v5506, %v5502
        %v6027 = vpack.c.b16 %v5507, %v5503
        %v6028 = vpack.c.b16 %v5512, %v5508
        %v6029 = vpack.c.b16 %v5513, %v5509
        %v6030 = vpack.c.b16 %v5514, %v5510
        %v6031 = vpack.c.b16 %v5515, %v5511
        %v6032 = vpack.c.b16 %v5520, %v5516
        %v6033 = vpack.c.b16 %v5521, %v5517
        %v6034 = vpack.c.b16 %v5522, %v5518
        %v6035 = vpack.c.b16 %v5523, %v5519
        %6548 = vmatprep.subr.bf16.mxu0 %v5525
        %6549 = vmatpush1.bf16.msra.mxu0 %v5524
        %6550 = vmatprep.subr.bf16.mxu0 %v5529
        %6551 = vmatpush1.bf16.msra.mxu0 %v5528
        %6552 = vmatprep.subr.bf16.mxu0 %v5533
        %6553 = vmatpush1.bf16.msra.mxu0 %v5532
        %6554 = vmatprep.subr.bf16.mxu0 %v5537
        %6555 = vmatpush1.bf16.msra.mxu0 %v5536
        %6556 = vmatprep.subr.bf16.mxu0 %v5541
        %6557 = vmatpush1.bf16.msra.mxu0 %v5540
        %6558 = vmatprep.subr.bf16.mxu0 %v5545
        %6559 = vmatpush1.bf16.msra.mxu0 %v5544
        %6560 = vmatprep.subr.bf16.mxu0 %v5549
        %6561 = vmatpush1.bf16.msra.mxu0 %v5548
        %6562 = vmatprep.subr.bf16.mxu0 %v5553
        %6563 = vmatpush1.bf16.msra.mxu0 %v5552
        %6564 = vmatprep.subr.bf16.mxu0 %v5557
        %6565 = vmatpush1.bf16.msra.mxu0 %v5556
        %6566 = vmatprep.subr.bf16.mxu0 %v5561
        %6567 = vmatpush1.bf16.msra.mxu0 %v5560
        %6568 = vmatprep.subr.bf16.mxu0 %v5565
        %6569 = vmatpush1.bf16.msra.mxu0 %v5564
        %6570 = vmatprep.subr.bf16.mxu0 %v5569
        %6571 = vmatpush1.bf16.msra.mxu0 %v5568
        %6572 = vmatprep.subr.bf16.mxu0 %v5573
        %6573 = vmatpush1.bf16.msra.mxu0 %v5572
        %6574 = vmatprep.subr.bf16.mxu0 %v5577
        %6575 = vmatpush1.bf16.msra.mxu0 %v5576
        %6576 = vmatprep.subr.bf16.mxu0 %v5581
        %6577 = vmatpush1.bf16.msra.mxu0 %v5580
        %6578 = vmatprep.subr.bf16.mxu0 %v5585
        %6579 = vmatpush1.bf16.msra.mxu0 %v5584
        %6580 = vmatprep.mubr.bf16.mxu0 %v3957
        %6581 = vmatmul.mubr.bf16.gmra.mrb[0].mxu0 %v3956
        %v6582 = vpop.f32.mrb[0].mxu0
        %v6583 = vadd.f32 %v3452, %v6582
        %v6584 = vpop.f32.mrb[0].mxu0
        %v6585 = vadd.f32 %v3456, %v6584
        %v6586 = vpop.f32.mrb[0].mxu0
        %v6587 = vpop.f32.mrb[0].mxu0
        %6588 = vdwg.mxu0
        %6589 = vmatprep.subr.bf16.mxu0 %v5589
        %6590 = vmatpush1.bf16.msra.mxu0 %v5588
        %6591 = vmatprep.subr.bf16.mxu0 %v5593
        %6592 = vmatpush1.bf16.msra.mxu0 %v5592
        %6593 = vmatprep.subr.bf16.mxu0 %v5597
        %6594 = vmatpush1.bf16.msra.mxu0 %v5596
        %6595 = vmatprep.subr.bf16.mxu0 %v5601
        %6596 = vmatpush1.bf16.msra.mxu0 %v5600
        %6597 = vmatprep.subr.bf16.mxu0 %v5605
        %6598 = vmatpush1.bf16.msra.mxu0 %v5604
        %6599 = vmatprep.subr.bf16.mxu0 %v5609
        %6600 = vmatpush1.bf16.msra.mxu0 %v5608
        %6601 = vmatprep.subr.bf16.mxu0 %v5613
        %6602 = vmatpush1.bf16.msra.mxu0 %v5612
        %6603 = vmatprep.subr.bf16.mxu0 %v5617
        %6604 = vmatpush1.bf16.msra.mxu0 %v5616
        %6605 = vmatprep.subr.bf16.mxu0 %v5621
        %6606 = vmatpush1.bf16.msra.mxu0 %v5620
        %6607 = vmatprep.subr.bf16.mxu0 %v5625
        %6608 = vmatpush1.bf16.msra.mxu0 %v5624
        %6609 = vmatprep.subr.bf16.mxu0 %v5629
        %6610 = vmatpush1.bf16.msra.mxu0 %v5628
        %6611 = vmatprep.subr.bf16.mxu0 %v5633
        %6612 = vmatpush1.bf16.msra.mxu0 %v5632
        %6613 = vmatprep.subr.bf16.mxu0 %v5637
        %6614 = vmatpush1.bf16.msra.mxu0 %v5636
        %6615 = vmatprep.subr.bf16.mxu0 %v5641
        %6616 = vmatpush1.bf16.msra.mxu0 %v5640
        %6617 = vmatprep.subr.bf16.mxu0 %v5645
        %6618 = vmatpush1.bf16.msra.mxu0 %v5644
        %6619 = vmatprep.subr.bf16.mxu0 %v5649
        %6620 = vmatpush1.bf16.msra.mxu0 %v5648
        %6621 = vmatprep.mubr.bf16.mxu0 %v3959
        %6622 = vmatmul.mubr.bf16.gmra.mrb[0].mxu0 %v3958
        %v6623 = vpop.f32.mrb[0].mxu0
        %v6624 = vadd.f32 %v6583, %v6623
        %v6625 = vpop.f32.mrb[0].mxu0
        %v6626 = vadd.f32 %v6585, %v6625
        %v6627 = vpop.f32.mrb[0].mxu0
        %v6628 = vpop.f32.mrb[0].mxu0
        %6629 = vdwg.mxu0
        %6630 = vmatprep.subr.bf16.mxu0 %v5653
        %6631 = vmatpush1.bf16.msra.mxu0 %v5652
        %6632 = vmatprep.subr.bf16.mxu0 %v5657
        %6633 = vmatpush1.bf16.msra.mxu0 %v5656
        %6634 = vmatprep.subr.bf16.mxu0 %v5661
        %6635 = vmatpush1.bf16.msra.mxu0 %v5660
        %6636 = vmatprep.subr.bf16.mxu0 %v5665
        %6637 = vmatpush1.bf16.msra.mxu0 %v5664
        %6638 = vmatprep.subr.bf16.mxu0 %v5669
        %6639 = vmatpush1.bf16.msra.mxu0 %v5668
        %6640 = vmatprep.subr.bf16.mxu0 %v5673
        %6641 = vmatpush1.bf16.msra.mxu0 %v5672
        %6642 = vmatprep.subr.bf16.mxu0 %v5677
        %6643 = vmatpush1.bf16.msra.mxu0 %v5676
        %6644 = vmatprep.subr.bf16.mxu0 %v5681
        %6645 = vmatpush1.bf16.msra.mxu0 %v5680
        %6646 = vmatprep.subr.bf16.mxu0 %v5685
        %6647 = vmatpush1.bf16.msra.mxu0 %v5684
        %6648 = vmatprep.subr.bf16.mxu0 %v5689
        %6649 = vmatpush1.bf16.msra.mxu0 %v5688
        %6650 = vmatprep.subr.bf16.mxu0 %v5693
        %6651 = vmatpush1.bf16.msra.mxu0 %v5692
        %6652 = vmatprep.subr.bf16.mxu0 %v5697
        %6653 = vmatpush1.bf16.msra.mxu0 %v5696
        %6654 = vmatprep.subr.bf16.mxu0 %v5701
        %6655 = vmatpush1.bf16.msra.mxu0 %v5700
        %6656 = vmatprep.subr.bf16.mxu0 %v5705
        %6657 = vmatpush1.bf16.msra.mxu0 %v5704
        %6658 = vmatprep.subr.bf16.mxu0 %v5709
        %6659 = vmatpush1.bf16.msra.mxu0 %v5708
        %6660 = vmatprep.subr.bf16.mxu0 %v5713
        %6661 = vmatpush1.bf16.msra.mxu0 %v5712
        %6662 = vmatprep.mubr.bf16.mxu0 %v3961
        %6663 = vmatmul.mubr.bf16.gmra.mrb[0].mxu0 %v3960
        %v6664 = vpop.f32.mrb[0].mxu0
        %v6665 = vadd.f32 %v6624, %v6664
        %v6666 = vpop.f32.mrb[0].mxu0
        %v6667 = vadd.f32 %v6626, %v6666
        %v6668 = vpop.f32.mrb[0].mxu0
        %v6669 = vpop.f32.mrb[0].mxu0
        %6670 = vdwg.mxu0
        %6671 = vmatprep.subr.bf16.mxu0 %v5717
        %6672 = vmatpush1.bf16.msra.mxu0 %v5716
        %6673 = vmatprep.subr.bf16.mxu0 %v5721
        %6674 = vmatpush1.bf16.msra.mxu0 %v5720
        %6675 = vmatprep.subr.bf16.mxu0 %v5725
        %6676 = vmatpush1.bf16.msra.mxu0 %v5724
        %6677 = vmatprep.subr.bf16.mxu0 %v5729
        %6678 = vmatpush1.bf16.msra.mxu0 %v5728
        %6679 = vmatprep.subr.bf16.mxu0 %v5733
        %6680 = vmatpush1.bf16.msra.mxu0 %v5732
        %6681 = vmatprep.subr.bf16.mxu0 %v5737
        %6682 = vmatpush1.bf16.msra.mxu0 %v5736
        %6683 = vmatprep.subr.bf16.mxu0 %v5741
        %6684 = vmatpush1.bf16.msra.mxu0 %v5740
        %6685 = vmatprep.subr.bf16.mxu0 %v5745
        %6686 = vmatpush1.bf16.msra.mxu0 %v5744
        %6687 = vmatprep.subr.bf16.mxu0 %v5749
        %6688 = vmatpush1.bf16.msra.mxu0 %v5748
        %6689 = vmatprep.subr.bf16.mxu0 %v5753
        %6690 = vmatpush1.bf16.msra.mxu0 %v5752
        %6691 = vmatprep.subr.bf16.mxu0 %v5757
        %6692 = vmatpush1.bf16.msra.mxu0 %v5756
        %6693 = vmatprep.subr.bf16.mxu0 %v5761
        %6694 = vmatpush1.bf16.msra.mxu0 %v5760
        %6695 = vmatprep.subr.bf16.mxu0 %v5765
        %6696 = vmatpush1.bf16.msra.mxu0 %v5764
        %6697 = vmatprep.subr.bf16.mxu0 %v5769
        %6698 = vmatpush1.bf16.msra.mxu0 %v5768
        %6699 = vmatprep.subr.bf16.mxu0 %v5773
        %6700 = vmatpush1.bf16.msra.mxu0 %v5772
        %6701 = vmatprep.subr.bf16.mxu0 %v5777
        %6702 = vmatpush1.bf16.msra.mxu0 %v5776
        %6703 = vmatprep.mubr.bf16.mxu0 %v3963
        %6704 = vmatmul.mubr.bf16.gmra.mrb[0].mxu0 %v3962
        %v6705 = vpop.f32.mrb[0].mxu0
        %v6706 = vadd.f32 %v6665, %v6705
        %v6707 = vpop.f32.mrb[0].mxu0
        %v6708 = vadd.f32 %v6667, %v6707
        %v6709 = vpop.f32.mrb[0].mxu0
        %v6710 = vpop.f32.mrb[0].mxu0
        %6711 = vdwg.mxu0
        %6712 = vmatprep.subr.bf16.mxu0 %v5781
        %6713 = vmatpush1.bf16.msra.mxu0 %v5780
        %6714 = vmatprep.subr.bf16.mxu0 %v5785
        %6715 = vmatpush1.bf16.msra.mxu0 %v5784
        %6716 = vmatprep.subr.bf16.mxu0 %v5789
        %6717 = vmatpush1.bf16.msra.mxu0 %v5788
        %6718 = vmatprep.subr.bf16.mxu0 %v5793
        %6719 = vmatpush1.bf16.msra.mxu0 %v5792
        %6720 = vmatprep.subr.bf16.mxu0 %v5797
        %6721 = vmatpush1.bf16.msra.mxu0 %v5796
        %6722 = vmatprep.subr.bf16.mxu0 %v5801
        %6723 = vmatpush1.bf16.msra.mxu0 %v5800
        %6724 = vmatprep.subr.bf16.mxu0 %v5805
        %6725 = vmatpush1.bf16.msra.mxu0 %v5804
        %6726 = vmatprep.subr.bf16.mxu0 %v5809
        %6727 = vmatpush1.bf16.msra.mxu0 %v5808
        %6728 = vmatprep.subr.bf16.mxu0 %v5813
        %6729 = vmatpush1.bf16.msra.mxu0 %v5812
        %6730 = vmatprep.subr.bf16.mxu0 %v5817
        %6731 = vmatpush1.bf16.msra.mxu0 %v5816
        %6732 = vmatprep.subr.bf16.mxu0 %v5821
        %6733 = vmatpush1.bf16.msra.mxu0 %v5820
        %6734 = vmatprep.subr.bf16.mxu0 %v5825
        %6735 = vmatpush1.bf16.msra.mxu0 %v5824
        %6736 = vmatprep.subr.bf16.mxu0 %v5829
        %6737 = vmatpush1.bf16.msra.mxu0 %v5828
        %6738 = vmatprep.subr.bf16.mxu0 %v5833
        %6739 = vmatpush1.bf16.msra.mxu0 %v5832
        %6740 = vmatprep.subr.bf16.mxu0 %v5837
        %6741 = vmatpush1.bf16.msra.mxu0 %v5836
        %6742 = vmatprep.subr.bf16.mxu0 %v5841
        %6743 = vmatpush1.bf16.msra.mxu0 %v5840
        %6744 = vmatprep.mubr.bf16.mxu0 %v3965
        %6745 = vmatmul.mubr.bf16.gmra.mrb[0].mxu0 %v3964
        %v6746 = vpop.f32.mrb[0].mxu0
        %v6747 = vadd.f32 %v6706, %v6746
        %v6748 = vpop.f32.mrb[0].mxu0
        %v6749 = vadd.f32 %v6708, %v6748
        %v6750 = vpop.f32.mrb[0].mxu0
        %v6751 = vpop.f32.mrb[0].mxu0
        %6752 = vdwg.mxu0
        %6753 = vmatprep.subr.bf16.mxu0 %v5845
        %6754 = vmatpush1.bf16.msra.mxu0 %v5844
        %6755 = vmatprep.subr.bf16.mxu0 %v5849
        %6756 = vmatpush1.bf16.msra.mxu0 %v5848
        %6757 = vmatprep.subr.bf16.mxu0 %v5853
        %6758 = vmatpush1.bf16.msra.mxu0 %v5852
        %6759 = vmatprep.subr.bf16.mxu0 %v5857
        %6760 = vmatpush1.bf16.msra.mxu0 %v5856
        %6761 = vmatprep.subr.bf16.mxu0 %v5861
        %6762 = vmatpush1.bf16.msra.mxu0 %v5860
        %6763 = vmatprep.subr.bf16.mxu0 %v5865
        %6764 = vmatpush1.bf16.msra.mxu0 %v5864
        %6765 = vmatprep.subr.bf16.mxu0 %v5869
        %6766 = vmatpush1.bf16.msra.mxu0 %v5868
        %6767 = vmatprep.subr.bf16.mxu0 %v5873
        %6768 = vmatpush1.bf16.msra.mxu0 %v5872
        %6769 = vmatprep.subr.bf16.mxu0 %v5877
        %6770 = vmatpush1.bf16.msra.mxu0 %v5876
        %6771 = vmatprep.subr.bf16.mxu0 %v5881
        %6772 = vmatpush1.bf16.msra.mxu0 %v5880
        %6773 = vmatprep.subr.bf16.mxu0 %v5885
        %6774 = vmatpush1.bf16.msra.mxu0 %v5884
        %6775 = vmatprep.subr.bf16.mxu0 %v5889
        %6776 = vmatpush1.bf16.msra.mxu0 %v5888
        %6777 = vmatprep.subr.bf16.mxu0 %v5893
        %6778 = vmatpush1.bf16.msra.mxu0 %v5892
        %6779 = vmatprep.subr.bf16.mxu0 %v5897
        %6780 = vmatpush1.bf16.msra.mxu0 %v5896
        %6781 = vmatprep.subr.bf16.mxu0 %v5901
        %6782 = vmatpush1.bf16.msra.mxu0 %v5900
        %6783 = vmatprep.subr.bf16.mxu0 %v5905
        %6784 = vmatpush1.bf16.msra.mxu0 %v5904
        %6785 = vmatprep.mubr.bf16.mxu0 %v3967
        %6786 = vmatmul.mubr.bf16.gmra.mrb[0].mxu0 %v3966
        %v6787 = vpop.f32.mrb[0].mxu0
        %v6788 = vadd.f32 %v6747, %v6787
        %v6789 = vpop.f32.mrb[0].mxu0
        %v6790 = vadd.f32 %v6749, %v6789
        %v6791 = vpop.f32.mrb[0].mxu0
        %v6792 = vpop.f32.mrb[0].mxu0
        %6793 = vdwg.mxu0
        %6794 = vmatprep.subr.bf16.mxu0 %v5909
        %6795 = vmatpush1.bf16.msra.mxu0 %v5908
        %6796 = vmatprep.subr.bf16.mxu0 %v5913
        %6797 = vmatpush1.bf16.msra.mxu0 %v5912
        %6798 = vmatprep.subr.bf16.mxu0 %v5917
        %6799 = vmatpush1.bf16.msra.mxu0 %v5916
        %6800 = vmatprep.subr.bf16.mxu0 %v5921
        %6801 = vmatpush1.bf16.msra.mxu0 %v5920
        %6802 = vmatprep.subr.bf16.mxu0 %v5925
        %6803 = vmatpush1.bf16.msra.mxu0 %v5924
        %6804 = vmatprep.subr.bf16.mxu0 %v5929
        %6805 = vmatpush1.bf16.msra.mxu0 %v5928
        %6806 = vmatprep.subr.bf16.mxu0 %v5933
        %6807 = vmatpush1.bf16.msra.mxu0 %v5932
        %6808 = vmatprep.subr.bf16.mxu0 %v5937
        %6809 = vmatpush1.bf16.msra.mxu0 %v5936
        %6810 = vmatprep.subr.bf16.mxu0 %v5941
        %6811 = vmatpush1.bf16.msra.mxu0 %v5940
        %6812 = vmatprep.subr.bf16.mxu0 %v5945
        %6813 = vmatpush1.bf16.msra.mxu0 %v5944
        %6814 = vmatprep.subr.bf16.mxu0 %v5949
        %6815 = vmatpush1.bf16.msra.mxu0 %v5948
        %6816 = vmatprep.subr.bf16.mxu0 %v5953
        %6817 = vmatpush1.bf16.msra.mxu0 %v5952
        %6818 = vmatprep.subr.bf16.mxu0 %v5957
        %6819 = vmatpush1.bf16.msra.mxu0 %v5956
        %6820 = vmatprep.subr.bf16.mxu0 %v5961
        %6821 = vmatpush1.bf16.msra.mxu0 %v5960
        %6822 = vmatprep.subr.bf16.mxu0 %v5965
        %6823 = vmatpush1.bf16.msra.mxu0 %v5964
        %6824 = vmatprep.subr.bf16.mxu0 %v5969
        %6825 = vmatpush1.bf16.msra.mxu0 %v5968
        %6826 = vmatprep.mubr.bf16.mxu0 %v3969
        %6827 = vmatmul.mubr.bf16.gmra.mrb[0].mxu0 %v3968
        %v6828 = vpop.f32.mrb[0].mxu0
        %v6829 = vadd.f32 %v6788, %v6828
        %v6830 = vpop.f32.mrb[0].mxu0
        %v6831 = vadd.f32 %v6790, %v6830
        %v6832 = vpop.f32.mrb[0].mxu0
        %v6833 = vpop.f32.mrb[0].mxu0
        %6834 = vdwg.mxu0
        %6835 = vmatprep.subr.bf16.mxu0 %v5973
        %6836 = vmatpush1.bf16.msra.mxu0 %v5972
        %6837 = vmatprep.subr.bf16.mxu0 %v5977
        %6838 = vmatpush1.bf16.msra.mxu0 %v5976
        %6839 = vmatprep.subr.bf16.mxu0 %v5981
        %6840 = vmatpush1.bf16.msra.mxu0 %v5980
        %6841 = vmatprep.subr.bf16.mxu0 %v5985
        %6842 = vmatpush1.bf16.msra.mxu0 %v5984
        %6843 = vmatprep.subr.bf16.mxu0 %v5989
        %6844 = vmatpush1.bf16.msra.mxu0 %v5988
        %6845 = vmatprep.subr.bf16.mxu0 %v5993
        %6846 = vmatpush1.bf16.msra.mxu0 %v5992
        %6847 = vmatprep.subr.bf16.mxu0 %v5997
        %6848 = vmatpush1.bf16.msra.mxu0 %v5996
        %6849 = vmatprep.subr.bf16.mxu0 %v6001
        %6850 = vmatpush1.bf16.msra.mxu0 %v6000
        %6851 = vmatprep.subr.bf16.mxu0 %v6005
        %6852 = vmatpush1.bf16.msra.mxu0 %v6004
        %6853 = vmatprep.subr.bf16.mxu0 %v6009
        %6854 = vmatpush1.bf16.msra.mxu0 %v6008
        %6855 = vmatprep.subr.bf16.mxu0 %v6013
        %6856 = vmatpush1.bf16.msra.mxu0 %v6012
        %6857 = vmatprep.subr.bf16.mxu0 %v6017
        %6858 = vmatpush1.bf16.msra.mxu0 %v6016
        %6859 = vmatprep.subr.bf16.mxu0 %v6021
        %6860 = vmatpush1.bf16.msra.mxu0 %v6020
        %6861 = vmatprep.subr.bf16.mxu0 %v6025
        %6862 = vmatpush1.bf16.msra.mxu0 %v6024
        %6863 = vmatprep.subr.bf16.mxu0 %v6029
        %6864 = vmatpush1.bf16.msra.mxu0 %v6028
        %6865 = vmatprep.subr.bf16.mxu0 %v6033
        %6866 = vmatpush1.bf16.msra.mxu0 %v6032
        %6867 = vmatprep.mubr.bf16.mxu0 %v3971
        %6868 = vmatmul.mubr.bf16.gmra.mrb[0].mxu0 %v3970
        %v6869 = vpop.f32.mrb[0].mxu0
        %v6870 = vadd.f32 %v6829, %v6869
        %v6871 = vpop.f32.mrb[0].mxu0
        %v6872 = vadd.f32 %v6831, %v6871
        %v6873 = vpop.f32.mrb[0].mxu0
        %v6874 = vpop.f32.mrb[0].mxu0
        %6875 = vdwg.mxu0
        %6876 = vmatprep.subr.bf16.mxu0 %v5527
        %6877 = vmatpush1.bf16.msra.mxu0 %v5526
        %6878 = vmatprep.subr.bf16.mxu0 %v5531
        %6879 = vmatpush1.bf16.msra.mxu0 %v5530
        %6880 = vmatprep.subr.bf16.mxu0 %v5535
        %6881 = vmatpush1.bf16.msra.mxu0 %v5534
        %6882 = vmatprep.subr.bf16.mxu0 %v5539
        %6883 = vmatpush1.bf16.msra.mxu0 %v5538
        %6884 = vmatprep.subr.bf16.mxu0 %v5543
        %6885 = vmatpush1.bf16.msra.mxu0 %v5542
        %6886 = vmatprep.subr.bf16.mxu0 %v5547
        %6887 = vmatpush1.bf16.msra.mxu0 %v5546
        %6888 = vmatprep.subr.bf16.mxu0 %v5551
        %6889 = vmatpush1.bf16.msra.mxu0 %v5550
        %6890 = vmatprep.subr.bf16.mxu0 %v5555
        %6891 = vmatpush1.bf16.msra.mxu0 %v5554
        %6892 = vmatprep.subr.bf16.mxu0 %v5559
        %6893 = vmatpush1.bf16.msra.mxu0 %v5558
        %6894 = vmatprep.subr.bf16.mxu0 %v5563
        %6895 = vmatpush1.bf16.msra.mxu0 %v5562
        %6896 = vmatprep.subr.bf16.mxu0 %v5567
        %6897 = vmatpush1.bf16.msra.mxu0 %v5566
        %6898 = vmatprep.subr.bf16.mxu0 %v5571
        %6899 = vmatpush1.bf16.msra.mxu0 %v5570
        %6900 = vmatprep.subr.bf16.mxu0 %v5575
        %6901 = vmatpush1.bf16.msra.mxu0 %v5574
        %6902 = vmatprep.subr.bf16.mxu0 %v5579
        %6903 = vmatpush1.bf16.msra.mxu0 %v5578
        %6904 = vmatprep.subr.bf16.mxu0 %v5583
        %6905 = vmatpush1.bf16.msra.mxu0 %v5582
        %6906 = vmatprep.subr.bf16.mxu0 %v5587
        %6907 = vmatpush1.bf16.msra.mxu0 %v5586
        %6908 = vmatprep.mubr.bf16.mxu0 %v3957
        %6909 = vmatmul.mubr.bf16.gmra.mrb[0].mxu0 %v3956
        %v6910 = vpop.f32.mrb[0].mxu0
        %v6911 = vadd.f32 %v3460, %v6910
        %v6912 = vpop.f32.mrb[0].mxu0
        %v6913 = vadd.f32 %v3464, %v6912
        %v6914 = vpop.f32.mrb[0].mxu0
        %v6915 = vpop.f32.mrb[0].mxu0
        %6916 = vdwg.mxu0
        %6917 = vmatprep.subr.bf16.mxu0 %v5591
        %6918 = vmatpush1.bf16.msra.mxu0 %v5590
        %6919 = vmatprep.subr.bf16.mxu0 %v5595
        %6920 = vmatpush1.bf16.msra.mxu0 %v5594
        %6921 = vmatprep.subr.bf16.mxu0 %v5599
        %6922 = vmatpush1.bf16.msra.mxu0 %v5598
        %6923 = vmatprep.subr.bf16.mxu0 %v5603
        %6924 = vmatpush1.bf16.msra.mxu0 %v5602
        %6925 = vmatprep.subr.bf16.mxu0 %v5607
        %6926 = vmatpush1.bf16.msra.mxu0 %v5606
        %6927 = vmatprep.subr.bf16.mxu0 %v5611
        %6928 = vmatpush1.bf16.msra.mxu0 %v5610
        %6929 = vmatprep.subr.bf16.mxu0 %v5615
        %6930 = vmatpush1.bf16.msra.mxu0 %v5614
        %6931 = vmatprep.subr.bf16.mxu0 %v5619
        %6932 = vmatpush1.bf16.msra.mxu0 %v5618
        %6933 = vmatprep.subr.bf16.mxu0 %v5623
        %6934 = vmatpush1.bf16.msra.mxu0 %v5622
        %6935 = vmatprep.subr.bf16.mxu0 %v5627
        %6936 = vmatpush1.bf16.msra.mxu0 %v5626
        %6937 = vmatprep.subr.bf16.mxu0 %v5631
        %6938 = vmatpush1.bf16.msra.mxu0 %v5630
        %6939 = vmatprep.subr.bf16.mxu0 %v5635
        %6940 = vmatpush1.bf16.msra.mxu0 %v5634
        %6941 = vmatprep.subr.bf16.mxu0 %v5639
        %6942 = vmatpush1.bf16.msra.mxu0 %v5638
        %6943 = vmatprep.subr.bf16.mxu0 %v5643
        %6944 = vmatpush1.bf16.msra.mxu0 %v5642
        %6945 = vmatprep.subr.bf16.mxu0 %v5647
        %6946 = vmatpush1.bf16.msra.mxu0 %v5646
        %6947 = vmatprep.subr.bf16.mxu0 %v5651
        %6948 = vmatpush1.bf16.msra.mxu0 %v5650
        %6949 = vmatprep.mubr.bf16.mxu0 %v3959
        %6950 = vmatmul.mubr.bf16.gmra.mrb[0].mxu0 %v3958
        %v6951 = vpop.f32.mrb[0].mxu0
        %v6952 = vadd.f32 %v6911, %v6951
        %v6953 = vpop.f32.mrb[0].mxu0
        %v6954 = vadd.f32 %v6913, %v6953
        %v6955 = vpop.f32.mrb[0].mxu0
        %v6956 = vpop.f32.mrb[0].mxu0
        %6957 = vdwg.mxu0
        %6958 = vmatprep.subr.bf16.mxu0 %v5655
        %6959 = vmatpush1.bf16.msra.mxu0 %v5654
        %6960 = vmatprep.subr.bf16.mxu0 %v5659
        %6961 = vmatpush1.bf16.msra.mxu0 %v5658
        %6962 = vmatprep.subr.bf16.mxu0 %v5663
        %6963 = vmatpush1.bf16.msra.mxu0 %v5662
        %6964 = vmatprep.subr.bf16.mxu0 %v5667
        %6965 = vmatpush1.bf16.msra.mxu0 %v5666
        %6966 = vmatprep.subr.bf16.mxu0 %v5671
        %6967 = vmatpush1.bf16.msra.mxu0 %v5670
        %6968 = vmatprep.subr.bf16.mxu0 %v5675
        %6969 = vmatpush1.bf16.msra.mxu0 %v5674
        %6970 = vmatprep.subr.bf16.mxu0 %v5679
        %6971 = vmatpush1.bf16.msra.mxu0 %v5678
        %6972 = vmatprep.subr.bf16.mxu0 %v5683
        %6973 = vmatpush1.bf16.msra.mxu0 %v5682
        %6974 = vmatprep.subr.bf16.mxu0 %v5687
        %6975 = vmatpush1.bf16.msra.mxu0 %v5686
        %6976 = vmatprep.subr.bf16.mxu0 %v5691
        %6977 = vmatpush1.bf16.msra.mxu0 %v5690
        %6978 = vmatprep.subr.bf16.mxu0 %v5695
        %6979 = vmatpush1.bf16.msra.mxu0 %v5694
        %6980 = vmatprep.subr.bf16.mxu0 %v5699
        %6981 = vmatpush1.bf16.msra.mxu0 %v5698
        %6982 = vmatprep.subr.bf16.mxu0 %v5703
        %6983 = vmatpush1.bf16.msra.mxu0 %v5702
        %6984 = vmatprep.subr.bf16.mxu0 %v5707
        %6985 = vmatpush1.bf16.msra.mxu0 %v5706
        %6986 = vmatprep.subr.bf16.mxu0 %v5711
        %6987 = vmatpush1.bf16.msra.mxu0 %v5710
        %6988 = vmatprep.subr.bf16.mxu0 %v5715
        %6989 = vmatpush1.bf16.msra.mxu0 %v5714
        %6990 = vmatprep.mubr.bf16.mxu0 %v3961
        %6991 = vmatmul.mubr.bf16.gmra.mrb[0].mxu0 %v3960
        %v6992 = vpop.f32.mrb[0].mxu0
        %v6993 = vadd.f32 %v6952, %v6992
        %v6994 = vpop.f32.mrb[0].mxu0
        %v6995 = vadd.f32 %v6954, %v6994
        %v6996 = vpop.f32.mrb[0].mxu0
        %v6997 = vpop.f32.mrb[0].mxu0
        %6998 = vdwg.mxu0
        %6999 = vmatprep.subr.bf16.mxu0 %v5719
        %7000 = vmatpush1.bf16.msra.mxu0 %v5718
        %7001 = vmatprep.subr.bf16.mxu0 %v5723
        %7002 = vmatpush1.bf16.msra.mxu0 %v5722
        %7003 = vmatprep.subr.bf16.mxu0 %v5727
        %7004 = vmatpush1.bf16.msra.mxu0 %v5726
        %7005 = vmatprep.subr.bf16.mxu0 %v5731
        %7006 = vmatpush1.bf16.msra.mxu0 %v5730
        %7007 = vmatprep.subr.bf16.mxu0 %v5735
        %7008 = vmatpush1.bf16.msra.mxu0 %v5734
        %7009 = vmatprep.subr.bf16.mxu0 %v5739
        %7010 = vmatpush1.bf16.msra.mxu0 %v5738
        %7011 = vmatprep.subr.bf16.mxu0 %v5743
        %7012 = vmatpush1.bf16.msra.mxu0 %v5742
        %7013 = vmatprep.subr.bf16.mxu0 %v5747
        %7014 = vmatpush1.bf16.msra.mxu0 %v5746
        %7015 = vmatprep.subr.bf16.mxu0 %v5751
        %7016 = vmatpush1.bf16.msra.mxu0 %v5750
        %7017 = vmatprep.subr.bf16.mxu0 %v5755
        %7018 = vmatpush1.bf16.msra.mxu0 %v5754
        %7019 = vmatprep.subr.bf16.mxu0 %v5759
        %7020 = vmatpush1.bf16.msra.mxu0 %v5758
        %7021 = vmatprep.subr.bf16.mxu0 %v5763
        %7022 = vmatpush1.bf16.msra.mxu0 %v5762
        %7023 = vmatprep.subr.bf16.mxu0 %v5767
        %7024 = vmatpush1.bf16.msra.mxu0 %v5766
        %7025 = vmatprep.subr.bf16.mxu0 %v5771
        %7026 = vmatpush1.bf16.msra.mxu0 %v5770
        %7027 = vmatprep.subr.bf16.mxu0 %v5775
        %7028 = vmatpush1.bf16.msra.mxu0 %v5774
        %7029 = vmatprep.subr.bf16.mxu0 %v5779
        %7030 = vmatpush1.bf16.msra.mxu0 %v5778
        %7031 = vmatprep.mubr.bf16.mxu0 %v3963
        %7032 = vmatmul.mubr.bf16.gmra.mrb[0].mxu0 %v3962
        %v7033 = vpop.f32.mrb[0].mxu0
        %v7034 = vadd.f32 %v6993, %v7033
        %v7035 = vpop.f32.mrb[0].mxu0
        %v7036 = vadd.f32 %v6995, %v7035
        %v7037 = vpop.f32.mrb[0].mxu0
        %v7038 = vpop.f32.mrb[0].mxu0
        %7039 = vdwg.mxu0
        %7040 = vmatprep.subr.bf16.mxu0 %v5783
        %7041 = vmatpush1.bf16.msra.mxu0 %v5782
        %7042 = vmatprep.subr.bf16.mxu0 %v5787
        %7043 = vmatpush1.bf16.msra.mxu0 %v5786
        %7044 = vmatprep.subr.bf16.mxu0 %v5791
        %7045 = vmatpush1.bf16.msra.mxu0 %v5790
        %7046 = vmatprep.subr.bf16.mxu0 %v5795
        %7047 = vmatpush1.bf16.msra.mxu0 %v5794
        %7048 = vmatprep.subr.bf16.mxu0 %v5799
        %7049 = vmatpush1.bf16.msra.mxu0 %v5798
        %7050 = vmatprep.subr.bf16.mxu0 %v5803
        %7051 = vmatpush1.bf16.msra.mxu0 %v5802
        %7052 = vmatprep.subr.bf16.mxu0 %v5807
        %7053 = vmatpush1.bf16.msra.mxu0 %v5806
        %7054 = vmatprep.subr.bf16.mxu0 %v5811
        %7055 = vmatpush1.bf16.msra.mxu0 %v5810
        %7056 = vmatprep.subr.bf16.mxu0 %v5815
        %7057 = vmatpush1.bf16.msra.mxu0 %v5814
        %7058 = vmatprep.subr.bf16.mxu0 %v5819
        %7059 = vmatpush1.bf16.msra.mxu0 %v5818
        %7060 = vmatprep.subr.bf16.mxu0 %v5823
        %7061 = vmatpush1.bf16.msra.mxu0 %v5822
        %7062 = vmatprep.subr.bf16.mxu0 %v5827
        %7063 = vmatpush1.bf16.msra.mxu0 %v5826
        %7064 = vmatprep.subr.bf16.mxu0 %v5831
        %7065 = vmatpush1.bf16.msra.mxu0 %v5830
        %7066 = vmatprep.subr.bf16.mxu0 %v5835
        %7067 = vmatpush1.bf16.msra.mxu0 %v5834
        %7068 = vmatprep.subr.bf16.mxu0 %v5839
        %7069 = vmatpush1.bf16.msra.mxu0 %v5838
        %7070 = vmatprep.subr.bf16.mxu0 %v5843
        %7071 = vmatpush1.bf16.msra.mxu0 %v5842
        %7072 = vmatprep.mubr.bf16.mxu0 %v3965
        %7073 = vmatmul.mubr.bf16.gmra.mrb[0].mxu0 %v3964
        %v7074 = vpop.f32.mrb[0].mxu0
        %v7075 = vadd.f32 %v7034, %v7074
        %v7076 = vpop.f32.mrb[0].mxu0
        %v7077 = vadd.f32 %v7036, %v7076
        %v7078 = vpop.f32.mrb[0].mxu0
        %v7079 = vpop.f32.mrb[0].mxu0
        %7080 = vdwg.mxu0
        %7081 = vmatprep.subr.bf16.mxu0 %v5847
        %7082 = vmatpush1.bf16.msra.mxu0 %v5846
        %7083 = vmatprep.subr.bf16.mxu0 %v5851
        %7084 = vmatpush1.bf16.msra.mxu0 %v5850
        %7085 = vmatprep.subr.bf16.mxu0 %v5855
        %7086 = vmatpush1.bf16.msra.mxu0 %v5854
        %7087 = vmatprep.subr.bf16.mxu0 %v5859
        %7088 = vmatpush1.bf16.msra.mxu0 %v5858
        %7089 = vmatprep.subr.bf16.mxu0 %v5863
        %7090 = vmatpush1.bf16.msra.mxu0 %v5862
        %7091 = vmatprep.subr.bf16.mxu0 %v5867
        %7092 = vmatpush1.bf16.msra.mxu0 %v5866
        %7093 = vmatprep.subr.bf16.mxu0 %v5871
        %7094 = vmatpush1.bf16.msra.mxu0 %v5870
        %7095 = vmatprep.subr.bf16.mxu0 %v5875
        %7096 = vmatpush1.bf16.msra.mxu0 %v5874
        %7097 = vmatprep.subr.bf16.mxu0 %v5879
        %7098 = vmatpush1.bf16.msra.mxu0 %v5878
        %7099 = vmatprep.subr.bf16.mxu0 %v5883
        %7100 = vmatpush1.bf16.msra.mxu0 %v5882
        %7101 = vmatprep.subr.bf16.mxu0 %v5887
        %7102 = vmatpush1.bf16.msra.mxu0 %v5886
        %7103 = vmatprep.subr.bf16.mxu0 %v5891
        %7104 = vmatpush1.bf16.msra.mxu0 %v5890
        %7105 = vmatprep.subr.bf16.mxu0 %v5895
        %7106 = vmatpush1.bf16.msra.mxu0 %v5894
        %7107 = vmatprep.subr.bf16.mxu0 %v5899
        %7108 = vmatpush1.bf16.msra.mxu0 %v5898
        %7109 = vmatprep.subr.bf16.mxu0 %v5903
        %7110 = vmatpush1.bf16.msra.mxu0 %v5902
        %7111 = vmatprep.subr.bf16.mxu0 %v5907
        %7112 = vmatpush1.bf16.msra.mxu0 %v5906
        %7113 = vmatprep.mubr.bf16.mxu0 %v3967
        %7114 = vmatmul.mubr.bf16.gmra.mrb[0].mxu0 %v3966
        %v7115 = vpop.f32.mrb[0].mxu0
        %v7116 = vadd.f32 %v7075, %v7115
        %v7117 = vpop.f32.mrb[0].mxu0
        %v7118 = vadd.f32 %v7077, %v7117
        %v7119 = vpop.f32.mrb[0].mxu0
        %v7120 = vpop.f32.mrb[0].mxu0
        %7121 = vdwg.mxu0
        %7122 = vmatprep.subr.bf16.mxu0 %v5911
        %7123 = vmatpush1.bf16.msra.mxu0 %v5910
        %7124 = vmatprep.subr.bf16.mxu0 %v5915
        %7125 = vmatpush1.bf16.msra.mxu0 %v5914
        %7126 = vmatprep.subr.bf16.mxu0 %v5919
        %7127 = vmatpush1.bf16.msra.mxu0 %v5918
        %7128 = vmatprep.subr.bf16.mxu0 %v5923
        %7129 = vmatpush1.bf16.msra.mxu0 %v5922
        %7130 = vmatprep.subr.bf16.mxu0 %v5927
        %7131 = vmatpush1.bf16.msra.mxu0 %v5926
        %7132 = vmatprep.subr.bf16.mxu0 %v5931
        %7133 = vmatpush1.bf16.msra.mxu0 %v5930
        %7134 = vmatprep.subr.bf16.mxu0 %v5935
        %7135 = vmatpush1.bf16.msra.mxu0 %v5934
        %7136 = vmatprep.subr.bf16.mxu0 %v5939
        %7137 = vmatpush1.bf16.msra.mxu0 %v5938
        %7138 = vmatprep.subr.bf16.mxu0 %v5943
        %7139 = vmatpush1.bf16.msra.mxu0 %v5942
        %7140 = vmatprep.subr.bf16.mxu0 %v5947
        %7141 = vmatpush1.bf16.msra.mxu0 %v5946
        %7142 = vmatprep.subr.bf16.mxu0 %v5951
        %7143 = vmatpush1.bf16.msra.mxu0 %v5950
        %7144 = vmatprep.subr.bf16.mxu0 %v5955
        %7145 = vmatpush1.bf16.msra.mxu0 %v5954
        %7146 = vmatprep.subr.bf16.mxu0 %v5959
        %7147 = vmatpush1.bf16.msra.mxu0 %v5958
        %7148 = vmatprep.subr.bf16.mxu0 %v5963
        %7149 = vmatpush1.bf16.msra.mxu0 %v5962
        %7150 = vmatprep.subr.bf16.mxu0 %v5967
        %7151 = vmatpush1.bf16.msra.mxu0 %v5966
        %7152 = vmatprep.subr.bf16.mxu0 %v5971
        %7153 = vmatpush1.bf16.msra.mxu0 %v5970
        %7154 = vmatprep.mubr.bf16.mxu0 %v3969
        %7155 = vmatmul.mubr.bf16.gmra.mrb[0].mxu0 %v3968
        %v7156 = vpop.f32.mrb[0].mxu0
        %v7157 = vadd.f32 %v7116, %v7156
        %v7158 = vpop.f32.mrb[0].mxu0
        %v7159 = vadd.f32 %v7118, %v7158
        %v7160 = vpop.f32.mrb[0].mxu0
        %v7161 = vpop.f32.mrb[0].mxu0
        %7162 = vdwg.mxu0
        %7163 = vmatprep.subr.bf16.mxu0 %v5975
        %7164 = vmatpush1.bf16.msra.mxu0 %v5974
        %7165 = vmatprep.subr.bf16.mxu0 %v5979
        %7166 = vmatpush1.bf16.msra.mxu0 %v5978
        %7167 = vmatprep.subr.bf16.mxu0 %v5983
        %7168 = vmatpush1.bf16.msra.mxu0 %v5982
        %7169 = vmatprep.subr.bf16.mxu0 %v5987
        %7170 = vmatpush1.bf16.msra.mxu0 %v5986
        %7171 = vmatprep.subr.bf16.mxu0 %v5991
        %7172 = vmatpush1.bf16.msra.mxu0 %v5990
        %7173 = vmatprep.subr.bf16.mxu0 %v5995
        %7174 = vmatpush1.bf16.msra.mxu0 %v5994
        %7175 = vmatprep.subr.bf16.mxu0 %v5999
        %7176 = vmatpush1.bf16.msra.mxu0 %v5998
        %7177 = vmatprep.subr.bf16.mxu0 %v6003
        %7178 = vmatpush1.bf16.msra.mxu0 %v6002
        %7179 = vmatprep.subr.bf16.mxu0 %v6007
        %7180 = vmatpush1.bf16.msra.mxu0 %v6006
        %7181 = vmatprep.subr.bf16.mxu0 %v6011
        %7182 = vmatpush1.bf16.msra.mxu0 %v6010
        %7183 = vmatprep.subr.bf16.mxu0 %v6015
        %7184 = vmatpush1.bf16.msra.mxu0 %v6014
        %7185 = vmatprep.subr.bf16.mxu0 %v6019
        %7186 = vmatpush1.bf16.msra.mxu0 %v6018
        %7187 = vmatprep.subr.bf16.mxu0 %v6023
        %7188 = vmatpush1.bf16.msra.mxu0 %v6022
        %7189 = vmatprep.subr.bf16.mxu0 %v6027
        %7190 = vmatpush1.bf16.msra.mxu0 %v6026
        %7191 = vmatprep.subr.bf16.mxu0 %v6031
        %7192 = vmatpush1.bf16.msra.mxu0 %v6030
        %7193 = vmatprep.subr.bf16.mxu0 %v6035
        %7194 = vmatpush1.bf16.msra.mxu0 %v6034
        %7195 = vmatprep.mubr.bf16.mxu0 %v3971
        %7196 = vmatmul.mubr.bf16.gmra.mrb[0].mxu0 %v3970
        %v7197 = vpop.f32.mrb[0].mxu0
        %v7198 = vadd.f32 %v7157, %v7197
        %v7199 = vpop.f32.mrb[0].mxu0
        %v7200 = vadd.f32 %v7159, %v7199
        %v7201 = vpop.f32.mrb[0].mxu0
        %v7202 = vpop.f32.mrb[0].mxu0
        %7203 = vdwg.mxu0
        %v7204 = vtanh.pop %v6870
        %v7205 = vtanh.pop %v6872
        %v7206 = vtanh.pop %v7198
        %v7207 = vtanh.pop %v7200
        %v7208 = vpack.c.bf16 %v2803, %v2803
        %v7209 = vpack.c.bf16 %v2804, %v2804
        %v7210 = vpack.c.bf16 %v2805, %v2805
        %v7211 = vpack.c.bf16 %v2806, %v2806
        %v7212 = vpack.c.bf16 %v7204, %v7204
        %v7213 = vpack.c.bf16 %v7205, %v7205
        %v7214 = vpack.c.bf16 %v7206, %v7206
        %v7215 = vpack.c.bf16 %v7207, %v7207
        %v7216 = vld [vmem:[%s6] sm:$0xff]
        %v7217 = vld [vmem:[%s6 + $0x8] sm:$0xff]
        %v7218 = vld [vmem:[%s6 + $0x10] sm:$0xff]
        %v7219 = vld [vmem:[%s6 + $0x18] sm:$0xff]
        %v7220 = vld [vmem:[%s6 + $0x20] sm:$0xff]
        %v7221 = vld [vmem:[%s6 + $0x28] sm:$0xff]
        %v7222 = vld [vmem:[%s6 + $0x30] sm:$0xff]
        %v7223 = vld [vmem:[%s6 + $0x38] sm:$0xff]
        %v7224 = vld [vmem:[%s6 + $0x40] sm:$0xff]
        %v7225 = vld [vmem:[%s6 + $0x48] sm:$0xff]
        %v7226 = vld [vmem:[%s6 + $0x50] sm:$0xff]
        %v7227 = vld [vmem:[%s6 + $0x58] sm:$0xff]
        %v7228 = vld [vmem:[%s6 + $0x60] sm:$0xff]
        %v7229 = vld [vmem:[%s6 + $0x68] sm:$0xff]
        %v7230 = vld [vmem:[%s6 + $0x70] sm:$0xff]
        %v7231 = vld [vmem:[%s6 + $0x78] sm:$0xff]
        %v7232 = vld [vmem:[%s6 + $0x80] sm:$0xff]
        %v7233 = vld [vmem:[%s6 + $0x88] sm:$0xff]
        %v7234 = vld [vmem:[%s6 + $0x90] sm:$0xff]
        %v7235 = vld [vmem:[%s6 + $0x98] sm:$0xff]
        %v7236 = vld [vmem:[%s6 + $0xa0] sm:$0xff]
        %v7237 = vld [vmem:[%s6 + $0xa8] sm:$0xff]
        %v7238 = vld [vmem:[%s6 + $0xb0] sm:$0xff]
        %v7239 = vld [vmem:[%s6 + $0xb8] sm:$0xff]
        %v7240 = vld [vmem:[%s6 + $0xc0] sm:$0xff]
        %v7241 = vld [vmem:[%s6 + $0xc8] sm:$0xff]
        %v7242 = vld [vmem:[%s6 + $0xd0] sm:$0xff]
        %v7243 = vld [vmem:[%s6 + $0xd8] sm:$0xff]
        %v7244 = vld [vmem:[%s6 + $0xe0] sm:$0xff]
        %v7245 = vld [vmem:[%s6 + $0xe8] sm:$0xff]
        %v7246 = vld [vmem:[%s6 + $0xf0] sm:$0xff]
        %v7247 = vld [vmem:[%s6 + $0xf8] sm:$0xff]
        %v7248 = vld [vmem:[%s6 + $0x100] sm:$0xff]
        %v7249 = vld [vmem:[%s6 + $0x108] sm:$0xff]
        %v7250 = vld [vmem:[%s6 + $0x110] sm:$0xff]
        %v7251 = vld [vmem:[%s6 + $0x118] sm:$0xff]
        %v7252 = vld [vmem:[%s6 + $0x120] sm:$0xff]
        %v7253 = vld [vmem:[%s6 + $0x128] sm:$0xff]
        %v7254 = vld [vmem:[%s6 + $0x130] sm:$0xff]
        %v7255 = vld [vmem:[%s6 + $0x138] sm:$0xff]
        %v7256 = vld [vmem:[%s6 + $0x140] sm:$0xff]
        %v7257 = vld [vmem:[%s6 + $0x148] sm:$0xff]
        %v7258 = vld [vmem:[%s6 + $0x150] sm:$0xff]
        %v7259 = vld [vmem:[%s6 + $0x158] sm:$0xff]
        %v7260 = vld [vmem:[%s6 + $0x160] sm:$0xff]
        %v7261 = vld [vmem:[%s6 + $0x168] sm:$0xff]
        %v7262 = vld [vmem:[%s6 + $0x170] sm:$0xff]
        %v7263 = vld [vmem:[%s6 + $0x178] sm:$0xff]
        %v7264 = vld [vmem:[%s6 + $0x180] sm:$0xff]
        %v7265 = vld [vmem:[%s6 + $0x188] sm:$0xff]
        %v7266 = vld [vmem:[%s6 + $0x190] sm:$0xff]
        %v7267 = vld [vmem:[%s6 + $0x198] sm:$0xff]
        %v7268 = vld [vmem:[%s6 + $0x1a0] sm:$0xff]
        %v7269 = vld [vmem:[%s6 + $0x1a8] sm:$0xff]
        %v7270 = vld [vmem:[%s6 + $0x1b0] sm:$0xff]
        %v7271 = vld [vmem:[%s6 + $0x1b8] sm:$0xff]
        %v7272 = vld [vmem:[%s6 + $0x1c0] sm:$0xff]
        %v7273 = vld [vmem:[%s6 + $0x1c8] sm:$0xff]
        %v7274 = vld [vmem:[%s6 + $0x1d0] sm:$0xff]
        %v7275 = vld [vmem:[%s6 + $0x1d8] sm:$0xff]
        %v7276 = vld [vmem:[%s6 + $0x1e0] sm:$0xff]
        %v7277 = vld [vmem:[%s6 + $0x1e8] sm:$0xff]
        %v7278 = vld [vmem:[%s6 + $0x1f0] sm:$0xff]
        %v7279 = vld [vmem:[%s6 + $0x1f8] sm:$0xff]
        %v7280 = vld [vmem:[%s6 + $0x200] sm:$0xff]
        %v7281 = vld [vmem:[%s6 + $0x208] sm:$0xff]
        %v7282 = vld [vmem:[%s6 + $0x210] sm:$0xff]
        %v7283 = vld [vmem:[%s6 + $0x218] sm:$0xff]
        %v7284 = vld [vmem:[%s6 + $0x220] sm:$0xff]
        %v7285 = vld [vmem:[%s6 + $0x228] sm:$0xff]
        %v7286 = vld [vmem:[%s6 + $0x230] sm:$0xff]
        %v7287 = vld [vmem:[%s6 + $0x238] sm:$0xff]
        %v7288 = vld [vmem:[%s6 + $0x240] sm:$0xff]
        %v7289 = vld [vmem:[%s6 + $0x248] sm:$0xff]
        %v7290 = vld [vmem:[%s6 + $0x250] sm:$0xff]
        %v7291 = vld [vmem:[%s6 + $0x258] sm:$0xff]
        %v7292 = vld [vmem:[%s6 + $0x260] sm:$0xff]
        %v7293 = vld [vmem:[%s6 + $0x268] sm:$0xff]
        %v7294 = vld [vmem:[%s6 + $0x270] sm:$0xff]
        %v7295 = vld [vmem:[%s6 + $0x278] sm:$0xff]
        %v7296 = vld [vmem:[%s6 + $0x280] sm:$0xff]
        %v7297 = vld [vmem:[%s6 + $0x288] sm:$0xff]
        %v7298 = vld [vmem:[%s6 + $0x290] sm:$0xff]
        %v7299 = vld [vmem:[%s6 + $0x298] sm:$0xff]
        %v7300 = vld [vmem:[%s6 + $0x2a0] sm:$0xff]
        %v7301 = vld [vmem:[%s6 + $0x2a8] sm:$0xff]
        %v7302 = vld [vmem:[%s6 + $0x2b0] sm:$0xff]
        %v7303 = vld [vmem:[%s6 + $0x2b8] sm:$0xff]
        %v7304 = vld [vmem:[%s6 + $0x2c0] sm:$0xff]
        %v7305 = vld [vmem:[%s6 + $0x2c8] sm:$0xff]
        %v7306 = vld [vmem:[%s6 + $0x2d0] sm:$0xff]
        %v7307 = vld [vmem:[%s6 + $0x2d8] sm:$0xff]
        %v7308 = vld [vmem:[%s6 + $0x2e0] sm:$0xff]
        %v7309 = vld [vmem:[%s6 + $0x2e8] sm:$0xff]
        %v7310 = vld [vmem:[%s6 + $0x2f0] sm:$0xff]
        %v7311 = vld [vmem:[%s6 + $0x2f8] sm:$0xff]
        %v7312 = vld [vmem:[%s6 + $0x300] sm:$0xff]
        %v7313 = vld [vmem:[%s6 + $0x308] sm:$0xff]
        %v7314 = vld [vmem:[%s6 + $0x310] sm:$0xff]
        %v7315 = vld [vmem:[%s6 + $0x318] sm:$0xff]
        %v7316 = vld [vmem:[%s6 + $0x320] sm:$0xff]
        %v7317 = vld [vmem:[%s6 + $0x328] sm:$0xff]
        %v7318 = vld [vmem:[%s6 + $0x330] sm:$0xff]
        %v7319 = vld [vmem:[%s6 + $0x338] sm:$0xff]
        %v7320 = vld [vmem:[%s6 + $0x340] sm:$0xff]
        %v7321 = vld [vmem:[%s6 + $0x348] sm:$0xff]
        %v7322 = vld [vmem:[%s6 + $0x350] sm:$0xff]
        %v7323 = vld [vmem:[%s6 + $0x358] sm:$0xff]
        %v7324 = vld [vmem:[%s6 + $0x360] sm:$0xff]
        %v7325 = vld [vmem:[%s6 + $0x368] sm:$0xff]
        %v7326 = vld [vmem:[%s6 + $0x370] sm:$0xff]
        %v7327 = vld [vmem:[%s6 + $0x378] sm:$0xff]
        %v7328 = vld [vmem:[%s6 + $0x380] sm:$0xff]
        %v7329 = vld [vmem:[%s6 + $0x388] sm:$0xff]
        %v7330 = vld [vmem:[%s6 + $0x390] sm:$0xff]
        %v7331 = vld [vmem:[%s6 + $0x398] sm:$0xff]
        %v7332 = vld [vmem:[%s6 + $0x3a0] sm:$0xff]
        %v7333 = vld [vmem:[%s6 + $0x3a8] sm:$0xff]
        %v7334 = vld [vmem:[%s6 + $0x3b0] sm:$0xff]
        %v7335 = vld [vmem:[%s6 + $0x3b8] sm:$0xff]
        %v7336 = vld [vmem:[%s6 + $0x3c0] sm:$0xff]
        %v7337 = vld [vmem:[%s6 + $0x3c8] sm:$0xff]
        %v7338 = vld [vmem:[%s6 + $0x3d0] sm:$0xff]
        %v7339 = vld [vmem:[%s6 + $0x3d8] sm:$0xff]
        %v7340 = vld [vmem:[%s6 + $0x3e0] sm:$0xff]
        %v7341 = vld [vmem:[%s6 + $0x3e8] sm:$0xff]
        %v7342 = vld [vmem:[%s6 + $0x3f0] sm:$0xff]
        %v7343 = vld [vmem:[%s6 + $0x3f8] sm:$0xff]
        %v7344 = vld [vmem:[%s6 + $0x400] sm:$0xff]
        %v7345 = vld [vmem:[%s6 + $0x408] sm:$0xff]
        %v7346 = vld [vmem:[%s6 + $0x410] sm:$0xff]
        %v7347 = vld [vmem:[%s6 + $0x418] sm:$0xff]
        %v7348 = vld [vmem:[%s6 + $0x420] sm:$0xff]
        %v7349 = vld [vmem:[%s6 + $0x428] sm:$0xff]
        %v7350 = vld [vmem:[%s6 + $0x430] sm:$0xff]
        %v7351 = vld [vmem:[%s6 + $0x438] sm:$0xff]
        %v7352 = vld [vmem:[%s6 + $0x440] sm:$0xff]
        %v7353 = vld [vmem:[%s6 + $0x448] sm:$0xff]
        %v7354 = vld [vmem:[%s6 + $0x450] sm:$0xff]
        %v7355 = vld [vmem:[%s6 + $0x458] sm:$0xff]
        %v7356 = vld [vmem:[%s6 + $0x460] sm:$0xff]
        %v7357 = vld [vmem:[%s6 + $0x468] sm:$0xff]
        %v7358 = vld [vmem:[%s6 + $0x470] sm:$0xff]
        %v7359 = vld [vmem:[%s6 + $0x478] sm:$0xff]
        %v7360 = vld [vmem:[%s6 + $0x480] sm:$0xff]
        %v7361 = vld [vmem:[%s6 + $0x488] sm:$0xff]
        %v7362 = vld [vmem:[%s6 + $0x490] sm:$0xff]
        %v7363 = vld [vmem:[%s6 + $0x498] sm:$0xff]
        %v7364 = vld [vmem:[%s6 + $0x4a0] sm:$0xff]
        %v7365 = vld [vmem:[%s6 + $0x4a8] sm:$0xff]
        %v7366 = vld [vmem:[%s6 + $0x4b0] sm:$0xff]
        %v7367 = vld [vmem:[%s6 + $0x4b8] sm:$0xff]
        %v7368 = vld [vmem:[%s6 + $0x4c0] sm:$0xff]
        %v7369 = vld [vmem:[%s6 + $0x4c8] sm:$0xff]
        %v7370 = vld [vmem:[%s6 + $0x4d0] sm:$0xff]
        %v7371 = vld [vmem:[%s6 + $0x4d8] sm:$0xff]
        %v7372 = vld [vmem:[%s6 + $0x4e0] sm:$0xff]
        %v7373 = vld [vmem:[%s6 + $0x4e8] sm:$0xff]
        %v7374 = vld [vmem:[%s6 + $0x4f0] sm:$0xff]
        %v7375 = vld [vmem:[%s6 + $0x4f8] sm:$0xff]
        %v7376 = vld [vmem:[%s6 + $0x500] sm:$0xff]
        %v7377 = vld [vmem:[%s6 + $0x508] sm:$0xff]
        %v7378 = vld [vmem:[%s6 + $0x510] sm:$0xff]
        %v7379 = vld [vmem:[%s6 + $0x518] sm:$0xff]
        %v7380 = vld [vmem:[%s6 + $0x520] sm:$0xff]
        %v7381 = vld [vmem:[%s6 + $0x528] sm:$0xff]
        %v7382 = vld [vmem:[%s6 + $0x530] sm:$0xff]
        %v7383 = vld [vmem:[%s6 + $0x538] sm:$0xff]
        %v7384 = vld [vmem:[%s6 + $0x540] sm:$0xff]
        %v7385 = vld [vmem:[%s6 + $0x548] sm:$0xff]
        %v7386 = vld [vmem:[%s6 + $0x550] sm:$0xff]
        %v7387 = vld [vmem:[%s6 + $0x558] sm:$0xff]
        %v7388 = vld [vmem:[%s6 + $0x560] sm:$0xff]
        %v7389 = vld [vmem:[%s6 + $0x568] sm:$0xff]
        %v7390 = vld [vmem:[%s6 + $0x570] sm:$0xff]
        %v7391 = vld [vmem:[%s6 + $0x578] sm:$0xff]
        %v7392 = vld [vmem:[%s6 + $0x580] sm:$0xff]
        %v7393 = vld [vmem:[%s6 + $0x588] sm:$0xff]
        %v7394 = vld [vmem:[%s6 + $0x590] sm:$0xff]
        %v7395 = vld [vmem:[%s6 + $0x598] sm:$0xff]
        %v7396 = vld [vmem:[%s6 + $0x5a0] sm:$0xff]
        %v7397 = vld [vmem:[%s6 + $0x5a8] sm:$0xff]
        %v7398 = vld [vmem:[%s6 + $0x5b0] sm:$0xff]
        %v7399 = vld [vmem:[%s6 + $0x5b8] sm:$0xff]
        %v7400 = vld [vmem:[%s6 + $0x5c0] sm:$0xff]
        %v7401 = vld [vmem:[%s6 + $0x5c8] sm:$0xff]
        %v7402 = vld [vmem:[%s6 + $0x5d0] sm:$0xff]
        %v7403 = vld [vmem:[%s6 + $0x5d8] sm:$0xff]
        %v7404 = vld [vmem:[%s6 + $0x5e0] sm:$0xff]
        %v7405 = vld [vmem:[%s6 + $0x5e8] sm:$0xff]
        %v7406 = vld [vmem:[%s6 + $0x5f0] sm:$0xff]
        %v7407 = vld [vmem:[%s6 + $0x5f8] sm:$0xff]
        %v7408 = vld [vmem:[%s6 + $0x600] sm:$0xff]
        %v7409 = vld [vmem:[%s6 + $0x608] sm:$0xff]
        %v7410 = vld [vmem:[%s6 + $0x610] sm:$0xff]
        %v7411 = vld [vmem:[%s6 + $0x618] sm:$0xff]
        %v7412 = vld [vmem:[%s6 + $0x620] sm:$0xff]
        %v7413 = vld [vmem:[%s6 + $0x628] sm:$0xff]
        %v7414 = vld [vmem:[%s6 + $0x630] sm:$0xff]
        %v7415 = vld [vmem:[%s6 + $0x638] sm:$0xff]
        %v7416 = vld [vmem:[%s6 + $0x640] sm:$0xff]
        %v7417 = vld [vmem:[%s6 + $0x648] sm:$0xff]
        %v7418 = vld [vmem:[%s6 + $0x650] sm:$0xff]
        %v7419 = vld [vmem:[%s6 + $0x658] sm:$0xff]
        %v7420 = vld [vmem:[%s6 + $0x660] sm:$0xff]
        %v7421 = vld [vmem:[%s6 + $0x668] sm:$0xff]
        %v7422 = vld [vmem:[%s6 + $0x670] sm:$0xff]
        %v7423 = vld [vmem:[%s6 + $0x678] sm:$0xff]
        %v7424 = vld [vmem:[%s6 + $0x680] sm:$0xff]
        %v7425 = vld [vmem:[%s6 + $0x688] sm:$0xff]
        %v7426 = vld [vmem:[%s6 + $0x690] sm:$0xff]
        %v7427 = vld [vmem:[%s6 + $0x698] sm:$0xff]
        %v7428 = vld [vmem:[%s6 + $0x6a0] sm:$0xff]
        %v7429 = vld [vmem:[%s6 + $0x6a8] sm:$0xff]
        %v7430 = vld [vmem:[%s6 + $0x6b0] sm:$0xff]
        %v7431 = vld [vmem:[%s6 + $0x6b8] sm:$0xff]
        %v7432 = vld [vmem:[%s6 + $0x6c0] sm:$0xff]
        %v7433 = vld [vmem:[%s6 + $0x6c8] sm:$0xff]
        %v7434 = vld [vmem:[%s6 + $0x6d0] sm:$0xff]
        %v7435 = vld [vmem:[%s6 + $0x6d8] sm:$0xff]
        %v7436 = vld [vmem:[%s6 + $0x6e0] sm:$0xff]
        %v7437 = vld [vmem:[%s6 + $0x6e8] sm:$0xff]
        %v7438 = vld [vmem:[%s6 + $0x6f0] sm:$0xff]
        %v7439 = vld [vmem:[%s6 + $0x6f8] sm:$0xff]
        %v7440 = vld [vmem:[%s6 + $0x700] sm:$0xff]
        %v7441 = vld [vmem:[%s6 + $0x708] sm:$0xff]
        %v7442 = vld [vmem:[%s6 + $0x710] sm:$0xff]
        %v7443 = vld [vmem:[%s6 + $0x718] sm:$0xff]
        %v7444 = vld [vmem:[%s6 + $0x720] sm:$0xff]
        %v7445 = vld [vmem:[%s6 + $0x728] sm:$0xff]
        %v7446 = vld [vmem:[%s6 + $0x730] sm:$0xff]
        %v7447 = vld [vmem:[%s6 + $0x738] sm:$0xff]
        %v7448 = vld [vmem:[%s6 + $0x740] sm:$0xff]
        %v7449 = vld [vmem:[%s6 + $0x748] sm:$0xff]
        %v7450 = vld [vmem:[%s6 + $0x750] sm:$0xff]
        %v7451 = vld [vmem:[%s6 + $0x758] sm:$0xff]
        %v7452 = vld [vmem:[%s6 + $0x760] sm:$0xff]
        %v7453 = vld [vmem:[%s6 + $0x768] sm:$0xff]
        %v7454 = vld [vmem:[%s6 + $0x770] sm:$0xff]
        %v7455 = vld [vmem:[%s6 + $0x778] sm:$0xff]
        %v7456 = vld [vmem:[%s6 + $0x780] sm:$0xff]
        %v7457 = vld [vmem:[%s6 + $0x788] sm:$0xff]
        %v7458 = vld [vmem:[%s6 + $0x790] sm:$0xff]
        %v7459 = vld [vmem:[%s6 + $0x798] sm:$0xff]
        %v7460 = vld [vmem:[%s6 + $0x7a0] sm:$0xff]
        %v7461 = vld [vmem:[%s6 + $0x7a8] sm:$0xff]
        %v7462 = vld [vmem:[%s6 + $0x7b0] sm:$0xff]
        %v7463 = vld [vmem:[%s6 + $0x7b8] sm:$0xff]
        %v7464 = vld [vmem:[%s6 + $0x7c0] sm:$0xff]
        %v7465 = vld [vmem:[%s6 + $0x7c8] sm:$0xff]
        %v7466 = vld [vmem:[%s6 + $0x7d0] sm:$0xff]
        %v7467 = vld [vmem:[%s6 + $0x7d8] sm:$0xff]
        %v7468 = vld [vmem:[%s6 + $0x7e0] sm:$0xff]
        %v7469 = vld [vmem:[%s6 + $0x7e8] sm:$0xff]
        %v7470 = vld [vmem:[%s6 + $0x7f0] sm:$0xff]
        %v7471 = vld [vmem:[%s6 + $0x7f8] sm:$0xff]
        %v7472 = vld [vmem:[#allocation10] sm:$0xf]
        %v7474 = vlaneseq
        %v7475 = vshrl.u32 %v7474, 7
        %v7476 = vsub.s32 0, %v7475
        %v7477 = vrot.slane %v7472, %v7476
        %v7478 = vlaneseq
        %v7479 = vshrl.u32 %v7478, 7
        %v7480 = vsub.s32 1, %v7479
        %v7481 = vrot.slane %v7472, %v7480
        %v7482 = vlaneseq
        %v7483 = vshrl.u32 %v7482, 7
        %v7484 = vsub.s32 2, %v7483
        %v7485 = vrot.slane %v7472, %v7484
        %v7486 = vlaneseq
        %v7487 = vshrl.u32 %v7486, 7
        %v7488 = vsub.s32 3, %v7487
        %v7489 = vrot.slane %v7472, %v7488
        %v7750 = vunpack.c.l.b16 %v7216
        %v7751 = vunpack.c.h.b16 %v7216
        %v7752 = vunpack.c.l.b16 %v7217
        %v7753 = vunpack.c.h.b16 %v7217
        %v7754 = vunpack.c.l.b16 %v7218
        %v7755 = vunpack.c.h.b16 %v7218
        %v7756 = vunpack.c.l.b16 %v7219
        %v7757 = vunpack.c.h.b16 %v7219
        %v7758 = vunpack.c.l.b16 %v7220
        %v7759 = vunpack.c.h.b16 %v7220
        %v7760 = vunpack.c.l.b16 %v7221
        %v7761 = vunpack.c.h.b16 %v7221
        %v7762 = vunpack.c.l.b16 %v7222
        %v7763 = vunpack.c.h.b16 %v7222
        %v7764 = vunpack.c.l.b16 %v7223
        %v7765 = vunpack.c.h.b16 %v7223
        %v7766 = vunpack.c.l.b16 %v7224
        %v7767 = vunpack.c.h.b16 %v7224
        %v7768 = vunpack.c.l.b16 %v7225
        %v7769 = vunpack.c.h.b16 %v7225
        %v7770 = vunpack.c.l.b16 %v7226
        %v7771 = vunpack.c.h.b16 %v7226
        %v7772 = vunpack.c.l.b16 %v7227
        %v7773 = vunpack.c.h.b16 %v7227
        %v7774 = vunpack.c.l.b16 %v7228
        %v7775 = vunpack.c.h.b16 %v7228
        %v7776 = vunpack.c.l.b16 %v7229
        %v7777 = vunpack.c.h.b16 %v7229
        %v7778 = vunpack.c.l.b16 %v7230
        %v7779 = vunpack.c.h.b16 %v7230
        %v7780 = vunpack.c.l.b16 %v7231
        %v7781 = vunpack.c.h.b16 %v7231
        %v7782 = vunpack.c.l.b16 %v7232
        %v7783 = vunpack.c.h.b16 %v7232
        %v7784 = vunpack.c.l.b16 %v7233
        %v7785 = vunpack.c.h.b16 %v7233
        %v7786 = vunpack.c.l.b16 %v7234
        %v7787 = vunpack.c.h.b16 %v7234
        %v7788 = vunpack.c.l.b16 %v7235
        %v7789 = vunpack.c.h.b16 %v7235
        %v7790 = vunpack.c.l.b16 %v7236
        %v7791 = vunpack.c.h.b16 %v7236
        %v7792 = vunpack.c.l.b16 %v7237
        %v7793 = vunpack.c.h.b16 %v7237
        %v7794 = vunpack.c.l.b16 %v7238
        %v7795 = vunpack.c.h.b16 %v7238
        %v7796 = vunpack.c.l.b16 %v7239
        %v7797 = vunpack.c.h.b16 %v7239
        %v7798 = vunpack.c.l.b16 %v7240
        %v7799 = vunpack.c.h.b16 %v7240
        %v7800 = vunpack.c.l.b16 %v7241
        %v7801 = vunpack.c.h.b16 %v7241
        %v7802 = vunpack.c.l.b16 %v7242
        %v7803 = vunpack.c.h.b16 %v7242
        %v7804 = vunpack.c.l.b16 %v7243
        %v7805 = vunpack.c.h.b16 %v7243
        %v7806 = vunpack.c.l.b16 %v7244
        %v7807 = vunpack.c.h.b16 %v7244
        %v7808 = vunpack.c.l.b16 %v7245
        %v7809 = vunpack.c.h.b16 %v7245
        %v7810 = vunpack.c.l.b16 %v7246
        %v7811 = vunpack.c.h.b16 %v7246
        %v7812 = vunpack.c.l.b16 %v7247
        %v7813 = vunpack.c.h.b16 %v7247
        %v7814 = vunpack.c.l.b16 %v7248
        %v7815 = vunpack.c.h.b16 %v7248
        %v7816 = vunpack.c.l.b16 %v7249
        %v7817 = vunpack.c.h.b16 %v7249
        %v7818 = vunpack.c.l.b16 %v7250
        %v7819 = vunpack.c.h.b16 %v7250
        %v7820 = vunpack.c.l.b16 %v7251
        %v7821 = vunpack.c.h.b16 %v7251
        %v7822 = vunpack.c.l.b16 %v7252
        %v7823 = vunpack.c.h.b16 %v7252
        %v7824 = vunpack.c.l.b16 %v7253
        %v7825 = vunpack.c.h.b16 %v7253
        %v7826 = vunpack.c.l.b16 %v7254
        %v7827 = vunpack.c.h.b16 %v7254
        %v7828 = vunpack.c.l.b16 %v7255
        %v7829 = vunpack.c.h.b16 %v7255
        %v7830 = vunpack.c.l.b16 %v7256
        %v7831 = vunpack.c.h.b16 %v7256
        %v7832 = vunpack.c.l.b16 %v7257
        %v7833 = vunpack.c.h.b16 %v7257
        %v7834 = vunpack.c.l.b16 %v7258
        %v7835 = vunpack.c.h.b16 %v7258
        %v7836 = vunpack.c.l.b16 %v7259
        %v7837 = vunpack.c.h.b16 %v7259
        %v7838 = vunpack.c.l.b16 %v7260
        %v7839 = vunpack.c.h.b16 %v7260
        %v7840 = vunpack.c.l.b16 %v7261
        %v7841 = vunpack.c.h.b16 %v7261
        %v7842 = vunpack.c.l.b16 %v7262
        %v7843 = vunpack.c.h.b16 %v7262
        %v7844 = vunpack.c.l.b16 %v7263
        %v7845 = vunpack.c.h.b16 %v7263
        %v7846 = vunpack.c.l.b16 %v7264
        %v7847 = vunpack.c.h.b16 %v7264
        %v7848 = vunpack.c.l.b16 %v7265
        %v7849 = vunpack.c.h.b16 %v7265
        %v7850 = vunpack.c.l.b16 %v7266
        %v7851 = vunpack.c.h.b16 %v7266
        %v7852 = vunpack.c.l.b16 %v7267
        %v7853 = vunpack.c.h.b16 %v7267
        %v7854 = vunpack.c.l.b16 %v7268
        %v7855 = vunpack.c.h.b16 %v7268
        %v7856 = vunpack.c.l.b16 %v7269
        %v7857 = vunpack.c.h.b16 %v7269
        %v7858 = vunpack.c.l.b16 %v7270
        %v7859 = vunpack.c.h.b16 %v7270
        %v7860 = vunpack.c.l.b16 %v7271
        %v7861 = vunpack.c.h.b16 %v7271
        %v7862 = vunpack.c.l.b16 %v7272
        %v7863 = vunpack.c.h.b16 %v7272
        %v7864 = vunpack.c.l.b16 %v7273
        %v7865 = vunpack.c.h.b16 %v7273
        %v7866 = vunpack.c.l.b16 %v7274
        %v7867 = vunpack.c.h.b16 %v7274
        %v7868 = vunpack.c.l.b16 %v7275
        %v7869 = vunpack.c.h.b16 %v7275
        %v7870 = vunpack.c.l.b16 %v7276
        %v7871 = vunpack.c.h.b16 %v7276
        %v7872 = vunpack.c.l.b16 %v7277
        %v7873 = vunpack.c.h.b16 %v7277
        %v7874 = vunpack.c.l.b16 %v7278
        %v7875 = vunpack.c.h.b16 %v7278
        %v7876 = vunpack.c.l.b16 %v7279
        %v7877 = vunpack.c.h.b16 %v7279
        %v7878 = vunpack.c.l.b16 %v7280
        %v7879 = vunpack.c.h.b16 %v7280
        %v7880 = vunpack.c.l.b16 %v7281
        %v7881 = vunpack.c.h.b16 %v7281
        %v7882 = vunpack.c.l.b16 %v7282
        %v7883 = vunpack.c.h.b16 %v7282
        %v7884 = vunpack.c.l.b16 %v7283
        %v7885 = vunpack.c.h.b16 %v7283
        %v7886 = vunpack.c.l.b16 %v7284
        %v7887 = vunpack.c.h.b16 %v7284
        %v7888 = vunpack.c.l.b16 %v7285
        %v7889 = vunpack.c.h.b16 %v7285
        %v7890 = vunpack.c.l.b16 %v7286
        %v7891 = vunpack.c.h.b16 %v7286
        %v7892 = vunpack.c.l.b16 %v7287
        %v7893 = vunpack.c.h.b16 %v7287
        %v7894 = vunpack.c.l.b16 %v7288
        %v7895 = vunpack.c.h.b16 %v7288
        %v7896 = vunpack.c.l.b16 %v7289
        %v7897 = vunpack.c.h.b16 %v7289
        %v7898 = vunpack.c.l.b16 %v7290
        %v7899 = vunpack.c.h.b16 %v7290
        %v7900 = vunpack.c.l.b16 %v7291
        %v7901 = vunpack.c.h.b16 %v7291
        %v7902 = vunpack.c.l.b16 %v7292
        %v7903 = vunpack.c.h.b16 %v7292
        %v7904 = vunpack.c.l.b16 %v7293
        %v7905 = vunpack.c.h.b16 %v7293
        %v7906 = vunpack.c.l.b16 %v7294
        %v7907 = vunpack.c.h.b16 %v7294
        %v7908 = vunpack.c.l.b16 %v7295
        %v7909 = vunpack.c.h.b16 %v7295
        %v7910 = vunpack.c.l.b16 %v7296
        %v7911 = vunpack.c.h.b16 %v7296
        %v7912 = vunpack.c.l.b16 %v7297
        %v7913 = vunpack.c.h.b16 %v7297
        %v7914 = vunpack.c.l.b16 %v7298
        %v7915 = vunpack.c.h.b16 %v7298
        %v7916 = vunpack.c.l.b16 %v7299
        %v7917 = vunpack.c.h.b16 %v7299
        %v7918 = vunpack.c.l.b16 %v7300
        %v7919 = vunpack.c.h.b16 %v7300
        %v7920 = vunpack.c.l.b16 %v7301
        %v7921 = vunpack.c.h.b16 %v7301
        %v7922 = vunpack.c.l.b16 %v7302
        %v7923 = vunpack.c.h.b16 %v7302
        %v7924 = vunpack.c.l.b16 %v7303
        %v7925 = vunpack.c.h.b16 %v7303
        %v7926 = vunpack.c.l.b16 %v7304
        %v7927 = vunpack.c.h.b16 %v7304
        %v7928 = vunpack.c.l.b16 %v7305
        %v7929 = vunpack.c.h.b16 %v7305
        %v7930 = vunpack.c.l.b16 %v7306
        %v7931 = vunpack.c.h.b16 %v7306
        %v7932 = vunpack.c.l.b16 %v7307
        %v7933 = vunpack.c.h.b16 %v7307
        %v7934 = vunpack.c.l.b16 %v7308
        %v7935 = vunpack.c.h.b16 %v7308
        %v7936 = vunpack.c.l.b16 %v7309
        %v7937 = vunpack.c.h.b16 %v7309
        %v7938 = vunpack.c.l.b16 %v7310
        %v7939 = vunpack.c.h.b16 %v7310
        %v7940 = vunpack.c.l.b16 %v7311
        %v7941 = vunpack.c.h.b16 %v7311
        %v7942 = vunpack.c.l.b16 %v7312
        %v7943 = vunpack.c.h.b16 %v7312
        %v7944 = vunpack.c.l.b16 %v7313
        %v7945 = vunpack.c.h.b16 %v7313
        %v7946 = vunpack.c.l.b16 %v7314
        %v7947 = vunpack.c.h.b16 %v7314
        %v7948 = vunpack.c.l.b16 %v7315
        %v7949 = vunpack.c.h.b16 %v7315
        %v7950 = vunpack.c.l.b16 %v7316
        %v7951 = vunpack.c.h.b16 %v7316
        %v7952 = vunpack.c.l.b16 %v7317
        %v7953 = vunpack.c.h.b16 %v7317
        %v7954 = vunpack.c.l.b16 %v7318
        %v7955 = vunpack.c.h.b16 %v7318
        %v7956 = vunpack.c.l.b16 %v7319
        %v7957 = vunpack.c.h.b16 %v7319
        %v7958 = vunpack.c.l.b16 %v7320
        %v7959 = vunpack.c.h.b16 %v7320
        %v7960 = vunpack.c.l.b16 %v7321
        %v7961 = vunpack.c.h.b16 %v7321
        %v7962 = vunpack.c.l.b16 %v7322
        %v7963 = vunpack.c.h.b16 %v7322
        %v7964 = vunpack.c.l.b16 %v7323
        %v7965 = vunpack.c.h.b16 %v7323
        %v7966 = vunpack.c.l.b16 %v7324
        %v7967 = vunpack.c.h.b16 %v7324
        %v7968 = vunpack.c.l.b16 %v7325
        %v7969 = vunpack.c.h.b16 %v7325
        %v7970 = vunpack.c.l.b16 %v7326
        %v7971 = vunpack.c.h.b16 %v7326
        %v7972 = vunpack.c.l.b16 %v7327
        %v7973 = vunpack.c.h.b16 %v7327
        %v7974 = vunpack.c.l.b16 %v7328
        %v7975 = vunpack.c.h.b16 %v7328
        %v7976 = vunpack.c.l.b16 %v7329
        %v7977 = vunpack.c.h.b16 %v7329
        %v7978 = vunpack.c.l.b16 %v7330
        %v7979 = vunpack.c.h.b16 %v7330
        %v7980 = vunpack.c.l.b16 %v7331
        %v7981 = vunpack.c.h.b16 %v7331
        %v7982 = vunpack.c.l.b16 %v7332
        %v7983 = vunpack.c.h.b16 %v7332
        %v7984 = vunpack.c.l.b16 %v7333
        %v7985 = vunpack.c.h.b16 %v7333
        %v7986 = vunpack.c.l.b16 %v7334
        %v7987 = vunpack.c.h.b16 %v7334
        %v7988 = vunpack.c.l.b16 %v7335
        %v7989 = vunpack.c.h.b16 %v7335
        %v7990 = vunpack.c.l.b16 %v7336
        %v7991 = vunpack.c.h.b16 %v7336
        %v7992 = vunpack.c.l.b16 %v7337
        %v7993 = vunpack.c.h.b16 %v7337
        %v7994 = vunpack.c.l.b16 %v7338
        %v7995 = vunpack.c.h.b16 %v7338
        %v7996 = vunpack.c.l.b16 %v7339
        %v7997 = vunpack.c.h.b16 %v7339
        %v7998 = vunpack.c.l.b16 %v7340
        %v7999 = vunpack.c.h.b16 %v7340
        %v8000 = vunpack.c.l.b16 %v7341
        %v8001 = vunpack.c.h.b16 %v7341
        %v8002 = vunpack.c.l.b16 %v7342
        %v8003 = vunpack.c.h.b16 %v7342
        %v8004 = vunpack.c.l.b16 %v7343
        %v8005 = vunpack.c.h.b16 %v7343
        %v8006 = vunpack.c.l.b16 %v7344
        %v8007 = vunpack.c.h.b16 %v7344
        %v8008 = vunpack.c.l.b16 %v7345
        %v8009 = vunpack.c.h.b16 %v7345
        %v8010 = vunpack.c.l.b16 %v7346
        %v8011 = vunpack.c.h.b16 %v7346
        %v8012 = vunpack.c.l.b16 %v7347
        %v8013 = vunpack.c.h.b16 %v7347
        %v8014 = vunpack.c.l.b16 %v7348
        %v8015 = vunpack.c.h.b16 %v7348
        %v8016 = vunpack.c.l.b16 %v7349
        %v8017 = vunpack.c.h.b16 %v7349
        %v8018 = vunpack.c.l.b16 %v7350
        %v8019 = vunpack.c.h.b16 %v7350
        %v8020 = vunpack.c.l.b16 %v7351
        %v8021 = vunpack.c.h.b16 %v7351
        %v8022 = vunpack.c.l.b16 %v7352
        %v8023 = vunpack.c.h.b16 %v7352
        %v8024 = vunpack.c.l.b16 %v7353
        %v8025 = vunpack.c.h.b16 %v7353
        %v8026 = vunpack.c.l.b16 %v7354
        %v8027 = vunpack.c.h.b16 %v7354
        %v8028 = vunpack.c.l.b16 %v7355
        %v8029 = vunpack.c.h.b16 %v7355
        %v8030 = vunpack.c.l.b16 %v7356
        %v8031 = vunpack.c.h.b16 %v7356
        %v8032 = vunpack.c.l.b16 %v7357
        %v8033 = vunpack.c.h.b16 %v7357
        %v8034 = vunpack.c.l.b16 %v7358
        %v8035 = vunpack.c.h.b16 %v7358
        %v8036 = vunpack.c.l.b16 %v7359
        %v8037 = vunpack.c.h.b16 %v7359
        %v8038 = vunpack.c.l.b16 %v7360
        %v8039 = vunpack.c.h.b16 %v7360
        %v8040 = vunpack.c.l.b16 %v7361
        %v8041 = vunpack.c.h.b16 %v7361
        %v8042 = vunpack.c.l.b16 %v7362
        %v8043 = vunpack.c.h.b16 %v7362
        %v8044 = vunpack.c.l.b16 %v7363
        %v8045 = vunpack.c.h.b16 %v7363
        %v8046 = vunpack.c.l.b16 %v7364
        %v8047 = vunpack.c.h.b16 %v7364
        %v8048 = vunpack.c.l.b16 %v7365
        %v8049 = vunpack.c.h.b16 %v7365
        %v8050 = vunpack.c.l.b16 %v7366
        %v8051 = vunpack.c.h.b16 %v7366
        %v8052 = vunpack.c.l.b16 %v7367
        %v8053 = vunpack.c.h.b16 %v7367
        %v8054 = vunpack.c.l.b16 %v7368
        %v8055 = vunpack.c.h.b16 %v7368
        %v8056 = vunpack.c.l.b16 %v7369
        %v8057 = vunpack.c.h.b16 %v7369
        %v8058 = vunpack.c.l.b16 %v7370
        %v8059 = vunpack.c.h.b16 %v7370
        %v8060 = vunpack.c.l.b16 %v7371
        %v8061 = vunpack.c.h.b16 %v7371
        %v8062 = vunpack.c.l.b16 %v7372
        %v8063 = vunpack.c.h.b16 %v7372
        %v8064 = vunpack.c.l.b16 %v7373
        %v8065 = vunpack.c.h.b16 %v7373
        %v8066 = vunpack.c.l.b16 %v7374
        %v8067 = vunpack.c.h.b16 %v7374
        %v8068 = vunpack.c.l.b16 %v7375
        %v8069 = vunpack.c.h.b16 %v7375
        %v8070 = vunpack.c.l.b16 %v7376
        %v8071 = vunpack.c.h.b16 %v7376
        %v8072 = vunpack.c.l.b16 %v7377
        %v8073 = vunpack.c.h.b16 %v7377
        %v8074 = vunpack.c.l.b16 %v7378
        %v8075 = vunpack.c.h.b16 %v7378
        %v8076 = vunpack.c.l.b16 %v7379
        %v8077 = vunpack.c.h.b16 %v7379
        %v8078 = vunpack.c.l.b16 %v7380
        %v8079 = vunpack.c.h.b16 %v7380
        %v8080 = vunpack.c.l.b16 %v7381
        %v8081 = vunpack.c.h.b16 %v7381
        %v8082 = vunpack.c.l.b16 %v7382
        %v8083 = vunpack.c.h.b16 %v7382
        %v8084 = vunpack.c.l.b16 %v7383
        %v8085 = vunpack.c.h.b16 %v7383
        %v8086 = vunpack.c.l.b16 %v7384
        %v8087 = vunpack.c.h.b16 %v7384
        %v8088 = vunpack.c.l.b16 %v7385
        %v8089 = vunpack.c.h.b16 %v7385
        %v8090 = vunpack.c.l.b16 %v7386
        %v8091 = vunpack.c.h.b16 %v7386
        %v8092 = vunpack.c.l.b16 %v7387
        %v8093 = vunpack.c.h.b16 %v7387
        %v8094 = vunpack.c.l.b16 %v7388
        %v8095 = vunpack.c.h.b16 %v7388
        %v8096 = vunpack.c.l.b16 %v7389
        %v8097 = vunpack.c.h.b16 %v7389
        %v8098 = vunpack.c.l.b16 %v7390
        %v8099 = vunpack.c.h.b16 %v7390
        %v8100 = vunpack.c.l.b16 %v7391
        %v8101 = vunpack.c.h.b16 %v7391
        %v8102 = vunpack.c.l.b16 %v7392
        %v8103 = vunpack.c.h.b16 %v7392
        %v8104 = vunpack.c.l.b16 %v7393
        %v8105 = vunpack.c.h.b16 %v7393
        %v8106 = vunpack.c.l.b16 %v7394
        %v8107 = vunpack.c.h.b16 %v7394
        %v8108 = vunpack.c.l.b16 %v7395
        %v8109 = vunpack.c.h.b16 %v7395
        %v8110 = vunpack.c.l.b16 %v7396
        %v8111 = vunpack.c.h.b16 %v7396
        %v8112 = vunpack.c.l.b16 %v7397
        %v8113 = vunpack.c.h.b16 %v7397
        %v8114 = vunpack.c.l.b16 %v7398
        %v8115 = vunpack.c.h.b16 %v7398
        %v8116 = vunpack.c.l.b16 %v7399
        %v8117 = vunpack.c.h.b16 %v7399
        %v8118 = vunpack.c.l.b16 %v7400
        %v8119 = vunpack.c.h.b16 %v7400
        %v8120 = vunpack.c.l.b16 %v7401
        %v8121 = vunpack.c.h.b16 %v7401
        %v8122 = vunpack.c.l.b16 %v7402
        %v8123 = vunpack.c.h.b16 %v7402
        %v8124 = vunpack.c.l.b16 %v7403
        %v8125 = vunpack.c.h.b16 %v7403
        %v8126 = vunpack.c.l.b16 %v7404
        %v8127 = vunpack.c.h.b16 %v7404
        %v8128 = vunpack.c.l.b16 %v7405
        %v8129 = vunpack.c.h.b16 %v7405
        %v8130 = vunpack.c.l.b16 %v7406
        %v8131 = vunpack.c.h.b16 %v7406
        %v8132 = vunpack.c.l.b16 %v7407
        %v8133 = vunpack.c.h.b16 %v7407
        %v8134 = vunpack.c.l.b16 %v7408
        %v8135 = vunpack.c.h.b16 %v7408
        %v8136 = vunpack.c.l.b16 %v7409
        %v8137 = vunpack.c.h.b16 %v7409
        %v8138 = vunpack.c.l.b16 %v7410
        %v8139 = vunpack.c.h.b16 %v7410
        %v8140 = vunpack.c.l.b16 %v7411
        %v8141 = vunpack.c.h.b16 %v7411
        %v8142 = vunpack.c.l.b16 %v7412
        %v8143 = vunpack.c.h.b16 %v7412
        %v8144 = vunpack.c.l.b16 %v7413
        %v8145 = vunpack.c.h.b16 %v7413
        %v8146 = vunpack.c.l.b16 %v7414
        %v8147 = vunpack.c.h.b16 %v7414
        %v8148 = vunpack.c.l.b16 %v7415
        %v8149 = vunpack.c.h.b16 %v7415
        %v8150 = vunpack.c.l.b16 %v7416
        %v8151 = vunpack.c.h.b16 %v7416
        %v8152 = vunpack.c.l.b16 %v7417
        %v8153 = vunpack.c.h.b16 %v7417
        %v8154 = vunpack.c.l.b16 %v7418
        %v8155 = vunpack.c.h.b16 %v7418
        %v8156 = vunpack.c.l.b16 %v7419
        %v8157 = vunpack.c.h.b16 %v7419
        %v8158 = vunpack.c.l.b16 %v7420
        %v8159 = vunpack.c.h.b16 %v7420
        %v8160 = vunpack.c.l.b16 %v7421
        %v8161 = vunpack.c.h.b16 %v7421
        %v8162 = vunpack.c.l.b16 %v7422
        %v8163 = vunpack.c.h.b16 %v7422
        %v8164 = vunpack.c.l.b16 %v7423
        %v8165 = vunpack.c.h.b16 %v7423
        %v8166 = vunpack.c.l.b16 %v7424
        %v8167 = vunpack.c.h.b16 %v7424
        %v8168 = vunpack.c.l.b16 %v7425
        %v8169 = vunpack.c.h.b16 %v7425
        %v8170 = vunpack.c.l.b16 %v7426
        %v8171 = vunpack.c.h.b16 %v7426
        %v8172 = vunpack.c.l.b16 %v7427
        %v8173 = vunpack.c.h.b16 %v7427
        %v8174 = vunpack.c.l.b16 %v7428
        %v8175 = vunpack.c.h.b16 %v7428
        %v8176 = vunpack.c.l.b16 %v7429
        %v8177 = vunpack.c.h.b16 %v7429
        %v8178 = vunpack.c.l.b16 %v7430
        %v8179 = vunpack.c.h.b16 %v7430
        %v8180 = vunpack.c.l.b16 %v7431
        %v8181 = vunpack.c.h.b16 %v7431
        %v8182 = vunpack.c.l.b16 %v7432
        %v8183 = vunpack.c.h.b16 %v7432
        %v8184 = vunpack.c.l.b16 %v7433
        %v8185 = vunpack.c.h.b16 %v7433
        %v8186 = vunpack.c.l.b16 %v7434
        %v8187 = vunpack.c.h.b16 %v7434
        %v8188 = vunpack.c.l.b16 %v7435
        %v8189 = vunpack.c.h.b16 %v7435
        %v8190 = vunpack.c.l.b16 %v7436
        %v8191 = vunpack.c.h.b16 %v7436
        %v8192 = vunpack.c.l.b16 %v7437
        %v8193 = vunpack.c.h.b16 %v7437
        %v8194 = vunpack.c.l.b16 %v7438
        %v8195 = vunpack.c.h.b16 %v7438
        %v8196 = vunpack.c.l.b16 %v7439
        %v8197 = vunpack.c.h.b16 %v7439
        %v8198 = vunpack.c.l.b16 %v7440
        %v8199 = vunpack.c.h.b16 %v7440
        %v8200 = vunpack.c.l.b16 %v7441
        %v8201 = vunpack.c.h.b16 %v7441
        %v8202 = vunpack.c.l.b16 %v7442
        %v8203 = vunpack.c.h.b16 %v7442
        %v8204 = vunpack.c.l.b16 %v7443
        %v8205 = vunpack.c.h.b16 %v7443
        %v8206 = vunpack.c.l.b16 %v7444
        %v8207 = vunpack.c.h.b16 %v7444
        %v8208 = vunpack.c.l.b16 %v7445
        %v8209 = vunpack.c.h.b16 %v7445
        %v8210 = vunpack.c.l.b16 %v7446
        %v8211 = vunpack.c.h.b16 %v7446
        %v8212 = vunpack.c.l.b16 %v7447
        %v8213 = vunpack.c.h.b16 %v7447
        %v8214 = vunpack.c.l.b16 %v7448
        %v8215 = vunpack.c.h.b16 %v7448
        %v8216 = vunpack.c.l.b16 %v7449
        %v8217 = vunpack.c.h.b16 %v7449
        %v8218 = vunpack.c.l.b16 %v7450
        %v8219 = vunpack.c.h.b16 %v7450
        %v8220 = vunpack.c.l.b16 %v7451
        %v8221 = vunpack.c.h.b16 %v7451
        %v8222 = vunpack.c.l.b16 %v7452
        %v8223 = vunpack.c.h.b16 %v7452
        %v8224 = vunpack.c.l.b16 %v7453
        %v8225 = vunpack.c.h.b16 %v7453
        %v8226 = vunpack.c.l.b16 %v7454
        %v8227 = vunpack.c.h.b16 %v7454
        %v8228 = vunpack.c.l.b16 %v7455
        %v8229 = vunpack.c.h.b16 %v7455
        %v8230 = vunpack.c.l.b16 %v7456
        %v8231 = vunpack.c.h.b16 %v7456
        %v8232 = vunpack.c.l.b16 %v7457
        %v8233 = vunpack.c.h.b16 %v7457
        %v8234 = vunpack.c.l.b16 %v7458
        %v8235 = vunpack.c.h.b16 %v7458
        %v8236 = vunpack.c.l.b16 %v7459
        %v8237 = vunpack.c.h.b16 %v7459
        %v8238 = vunpack.c.l.b16 %v7460
        %v8239 = vunpack.c.h.b16 %v7460
        %v8240 = vunpack.c.l.b16 %v7461
        %v8241 = vunpack.c.h.b16 %v7461
        %v8242 = vunpack.c.l.b16 %v7462
        %v8243 = vunpack.c.h.b16 %v7462
        %v8244 = vunpack.c.l.b16 %v7463
        %v8245 = vunpack.c.h.b16 %v7463
        %v8246 = vunpack.c.l.b16 %v7464
        %v8247 = vunpack.c.h.b16 %v7464
        %v8248 = vunpack.c.l.b16 %v7465
        %v8249 = vunpack.c.h.b16 %v7465
        %v8250 = vunpack.c.l.b16 %v7466
        %v8251 = vunpack.c.h.b16 %v7466
        %v8252 = vunpack.c.l.b16 %v7467
        %v8253 = vunpack.c.h.b16 %v7467
        %v8254 = vunpack.c.l.b16 %v7468
        %v8255 = vunpack.c.h.b16 %v7468
        %v8256 = vunpack.c.l.b16 %v7469
        %v8257 = vunpack.c.h.b16 %v7469
        %v8258 = vunpack.c.l.b16 %v7470
        %v8259 = vunpack.c.h.b16 %v7470
        %v8260 = vunpack.c.l.b16 %v7471
        %v8261 = vunpack.c.h.b16 %v7471
        %v8262 = vpack.c.b16 %v7754, %v7750
        %v8263 = vpack.c.b16 %v7755, %v7751
        %v8264 = vpack.c.b16 %v7756, %v7752
        %v8265 = vpack.c.b16 %v7757, %v7753
        %v8266 = vpack.c.b16 %v7762, %v7758
        %v8267 = vpack.c.b16 %v7763, %v7759
        %v8268 = vpack.c.b16 %v7764, %v7760
        %v8269 = vpack.c.b16 %v7765, %v7761
        %v8270 = vpack.c.b16 %v7770, %v7766
        %v8271 = vpack.c.b16 %v7771, %v7767
        %v8272 = vpack.c.b16 %v7772, %v7768
        %v8273 = vpack.c.b16 %v7773, %v7769
        %v8274 = vpack.c.b16 %v7778, %v7774
        %v8275 = vpack.c.b16 %v7779, %v7775
        %v8276 = vpack.c.b16 %v7780, %v7776
        %v8277 = vpack.c.b16 %v7781, %v7777
        %v8278 = vpack.c.b16 %v7786, %v7782
        %v8279 = vpack.c.b16 %v7787, %v7783
        %v8280 = vpack.c.b16 %v7788, %v7784
        %v8281 = vpack.c.b16 %v7789, %v7785
        %v8282 = vpack.c.b16 %v7794, %v7790
        %v8283 = vpack.c.b16 %v7795, %v7791
        %v8284 = vpack.c.b16 %v7796, %v7792
        %v8285 = vpack.c.b16 %v7797, %v7793
        %v8286 = vpack.c.b16 %v7802, %v7798
        %v8287 = vpack.c.b16 %v7803, %v7799
        %v8288 = vpack.c.b16 %v7804, %v7800
        %v8289 = vpack.c.b16 %v7805, %v7801
        %v8290 = vpack.c.b16 %v7810, %v7806
        %v8291 = vpack.c.b16 %v7811, %v7807
        %v8292 = vpack.c.b16 %v7812, %v7808
        %v8293 = vpack.c.b16 %v7813, %v7809
        %v8294 = vpack.c.b16 %v7818, %v7814
        %v8295 = vpack.c.b16 %v7819, %v7815
        %v8296 = vpack.c.b16 %v7820, %v7816
        %v8297 = vpack.c.b16 %v7821, %v7817
        %v8298 = vpack.c.b16 %v7826, %v7822
        %v8299 = vpack.c.b16 %v7827, %v7823
        %v8300 = vpack.c.b16 %v7828, %v7824
        %v8301 = vpack.c.b16 %v7829, %v7825
        %v8302 = vpack.c.b16 %v7834, %v7830
        %v8303 = vpack.c.b16 %v7835, %v7831
        %v8304 = vpack.c.b16 %v7836, %v7832
        %v8305 = vpack.c.b16 %v7837, %v7833
        %v8306 = vpack.c.b16 %v7842, %v7838
        %v8307 = vpack.c.b16 %v7843, %v7839
        %v8308 = vpack.c.b16 %v7844, %v7840
        %v8309 = vpack.c.b16 %v7845, %v7841
        %v8310 = vpack.c.b16 %v7850, %v7846
        %v8311 = vpack.c.b16 %v7851, %v7847
        %v8312 = vpack.c.b16 %v7852, %v7848
        %v8313 = vpack.c.b16 %v7853, %v7849
        %v8314 = vpack.c.b16 %v7858, %v7854
        %v8315 = vpack.c.b16 %v7859, %v7855
        %v8316 = vpack.c.b16 %v7860, %v7856
        %v8317 = vpack.c.b16 %v7861, %v7857
        %v8318 = vpack.c.b16 %v7866, %v7862
        %v8319 = vpack.c.b16 %v7867, %v7863
        %v8320 = vpack.c.b16 %v7868, %v7864
        %v8321 = vpack.c.b16 %v7869, %v7865
        %v8322 = vpack.c.b16 %v7874, %v7870
        %v8323 = vpack.c.b16 %v7875, %v7871
        %v8324 = vpack.c.b16 %v7876, %v7872
        %v8325 = vpack.c.b16 %v7877, %v7873
        %v8326 = vpack.c.b16 %v7882, %v7878
        %v8327 = vpack.c.b16 %v7883, %v7879
        %v8328 = vpack.c.b16 %v7884, %v7880
        %v8329 = vpack.c.b16 %v7885, %v7881
        %v8330 = vpack.c.b16 %v7890, %v7886
        %v8331 = vpack.c.b16 %v7891, %v7887
        %v8332 = vpack.c.b16 %v7892, %v7888
        %v8333 = vpack.c.b16 %v7893, %v7889
        %v8334 = vpack.c.b16 %v7898, %v7894
        %v8335 = vpack.c.b16 %v7899, %v7895
        %v8336 = vpack.c.b16 %v7900, %v7896
        %v8337 = vpack.c.b16 %v7901, %v7897
        %v8338 = vpack.c.b16 %v7906, %v7902
        %v8339 = vpack.c.b16 %v7907, %v7903
        %v8340 = vpack.c.b16 %v7908, %v7904
        %v8341 = vpack.c.b16 %v7909, %v7905
        %v8342 = vpack.c.b16 %v7914, %v7910
        %v8343 = vpack.c.b16 %v7915, %v7911
        %v8344 = vpack.c.b16 %v7916, %v7912
        %v8345 = vpack.c.b16 %v7917, %v7913
        %v8346 = vpack.c.b16 %v7922, %v7918
        %v8347 = vpack.c.b16 %v7923, %v7919
        %v8348 = vpack.c.b16 %v7924, %v7920
        %v8349 = vpack.c.b16 %v7925, %v7921
        %v8350 = vpack.c.b16 %v7930, %v7926
        %v8351 = vpack.c.b16 %v7931, %v7927
        %v8352 = vpack.c.b16 %v7932, %v7928
        %v8353 = vpack.c.b16 %v7933, %v7929
        %v8354 = vpack.c.b16 %v7938, %v7934
        %v8355 = vpack.c.b16 %v7939, %v7935
        %v8356 = vpack.c.b16 %v7940, %v7936
        %v8357 = vpack.c.b16 %v7941, %v7937
        %v8358 = vpack.c.b16 %v7946, %v7942
        %v8359 = vpack.c.b16 %v7947, %v7943
        %v8360 = vpack.c.b16 %v7948, %v7944
        %v8361 = vpack.c.b16 %v7949, %v7945
        %v8362 = vpack.c.b16 %v7954, %v7950
        %v8363 = vpack.c.b16 %v7955, %v7951
        %v8364 = vpack.c.b16 %v7956, %v7952
        %v8365 = vpack.c.b16 %v7957, %v7953
        %v8366 = vpack.c.b16 %v7962, %v7958
        %v8367 = vpack.c.b16 %v7963, %v7959
        %v8368 = vpack.c.b16 %v7964, %v7960
        %v8369 = vpack.c.b16 %v7965, %v7961
        %v8370 = vpack.c.b16 %v7970, %v7966
        %v8371 = vpack.c.b16 %v7971, %v7967
        %v8372 = vpack.c.b16 %v7972, %v7968
        %v8373 = vpack.c.b16 %v7973, %v7969
        %v8374 = vpack.c.b16 %v7978, %v7974
        %v8375 = vpack.c.b16 %v7979, %v7975
        %v8376 = vpack.c.b16 %v7980, %v7976
        %v8377 = vpack.c.b16 %v7981, %v7977
        %v8378 = vpack.c.b16 %v7986, %v7982
        %v8379 = vpack.c.b16 %v7987, %v7983
        %v8380 = vpack.c.b16 %v7988, %v7984
        %v8381 = vpack.c.b16 %v7989, %v7985
        %v8382 = vpack.c.b16 %v7994, %v7990
        %v8383 = vpack.c.b16 %v7995, %v7991
        %v8384 = vpack.c.b16 %v7996, %v7992
        %v8385 = vpack.c.b16 %v7997, %v7993
        %v8386 = vpack.c.b16 %v8002, %v7998
        %v8387 = vpack.c.b16 %v8003, %v7999
        %v8388 = vpack.c.b16 %v8004, %v8000
        %v8389 = vpack.c.b16 %v8005, %v8001
        %v8390 = vpack.c.b16 %v8010, %v8006
        %v8391 = vpack.c.b16 %v8011, %v8007
        %v8392 = vpack.c.b16 %v8012, %v8008
        %v8393 = vpack.c.b16 %v8013, %v8009
        %v8394 = vpack.c.b16 %v8018, %v8014
        %v8395 = vpack.c.b16 %v8019, %v8015
        %v8396 = vpack.c.b16 %v8020, %v8016
        %v8397 = vpack.c.b16 %v8021, %v8017
        %v8398 = vpack.c.b16 %v8026, %v8022
        %v8399 = vpack.c.b16 %v8027, %v8023
        %v8400 = vpack.c.b16 %v8028, %v8024
        %v8401 = vpack.c.b16 %v8029, %v8025
        %v8402 = vpack.c.b16 %v8034, %v8030
        %v8403 = vpack.c.b16 %v8035, %v8031
        %v8404 = vpack.c.b16 %v8036, %v8032
        %v8405 = vpack.c.b16 %v8037, %v8033
        %v8406 = vpack.c.b16 %v8042, %v8038
        %v8407 = vpack.c.b16 %v8043, %v8039
        %v8408 = vpack.c.b16 %v8044, %v8040
        %v8409 = vpack.c.b16 %v8045, %v8041
        %v8410 = vpack.c.b16 %v8050, %v8046
        %v8411 = vpack.c.b16 %v8051, %v8047
        %v8412 = vpack.c.b16 %v8052, %v8048
        %v8413 = vpack.c.b16 %v8053, %v8049
        %v8414 = vpack.c.b16 %v8058, %v8054
        %v8415 = vpack.c.b16 %v8059, %v8055
        %v8416 = vpack.c.b16 %v8060, %v8056
        %v8417 = vpack.c.b16 %v8061, %v8057
        %v8418 = vpack.c.b16 %v8066, %v8062
        %v8419 = vpack.c.b16 %v8067, %v8063
        %v8420 = vpack.c.b16 %v8068, %v8064
        %v8421 = vpack.c.b16 %v8069, %v8065
        %v8422 = vpack.c.b16 %v8074, %v8070
        %v8423 = vpack.c.b16 %v8075, %v8071
        %v8424 = vpack.c.b16 %v8076, %v8072
        %v8425 = vpack.c.b16 %v8077, %v8073
        %v8426 = vpack.c.b16 %v8082, %v8078
        %v8427 = vpack.c.b16 %v8083, %v8079
        %v8428 = vpack.c.b16 %v8084, %v8080
        %v8429 = vpack.c.b16 %v8085, %v8081
        %v8430 = vpack.c.b16 %v8090, %v8086
        %v8431 = vpack.c.b16 %v8091, %v8087
        %v8432 = vpack.c.b16 %v8092, %v8088
        %v8433 = vpack.c.b16 %v8093, %v8089
        %v8434 = vpack.c.b16 %v8098, %v8094
        %v8435 = vpack.c.b16 %v8099, %v8095
        %v8436 = vpack.c.b16 %v8100, %v8096
        %v8437 = vpack.c.b16 %v8101, %v8097
        %v8438 = vpack.c.b16 %v8106, %v8102
        %v8439 = vpack.c.b16 %v8107, %v8103
        %v8440 = vpack.c.b16 %v8108, %v8104
        %v8441 = vpack.c.b16 %v8109, %v8105
        %v8442 = vpack.c.b16 %v8114, %v8110
        %v8443 = vpack.c.b16 %v8115, %v8111
        %v8444 = vpack.c.b16 %v8116, %v8112
        %v8445 = vpack.c.b16 %v8117, %v8113
        %v8446 = vpack.c.b16 %v8122, %v8118
        %v8447 = vpack.c.b16 %v8123, %v8119
        %v8448 = vpack.c.b16 %v8124, %v8120
        %v8449 = vpack.c.b16 %v8125, %v8121
        %v8450 = vpack.c.b16 %v8130, %v8126
        %v8451 = vpack.c.b16 %v8131, %v8127
        %v8452 = vpack.c.b16 %v8132, %v8128
        %v8453 = vpack.c.b16 %v8133, %v8129
        %v8454 = vpack.c.b16 %v8138, %v8134
        %v8455 = vpack.c.b16 %v8139, %v8135
        %v8456 = vpack.c.b16 %v8140, %v8136
        %v8457 = vpack.c.b16 %v8141, %v8137
        %v8458 = vpack.c.b16 %v8146, %v8142
        %v8459 = vpack.c.b16 %v8147, %v8143
        %v8460 = vpack.c.b16 %v8148, %v8144
        %v8461 = vpack.c.b16 %v8149, %v8145
        %v8462 = vpack.c.b16 %v8154, %v8150
        %v8463 = vpack.c.b16 %v8155, %v8151
        %v8464 = vpack.c.b16 %v8156, %v8152
        %v8465 = vpack.c.b16 %v8157, %v8153
        %v8466 = vpack.c.b16 %v8162, %v8158
        %v8467 = vpack.c.b16 %v8163, %v8159
        %v8468 = vpack.c.b16 %v8164, %v8160
        %v8469 = vpack.c.b16 %v8165, %v8161
        %v8470 = vpack.c.b16 %v8170, %v8166
        %v8471 = vpack.c.b16 %v8171, %v8167
        %v8472 = vpack.c.b16 %v8172, %v8168
        %v8473 = vpack.c.b16 %v8173, %v8169
        %v8474 = vpack.c.b16 %v8178, %v8174
        %v8475 = vpack.c.b16 %v8179, %v8175
        %v8476 = vpack.c.b16 %v8180, %v8176
        %v8477 = vpack.c.b16 %v8181, %v8177
        %v8478 = vpack.c.b16 %v8186, %v8182
        %v8479 = vpack.c.b16 %v8187, %v8183
        %v8480 = vpack.c.b16 %v8188, %v8184
        %v8481 = vpack.c.b16 %v8189, %v8185
        %v8482 = vpack.c.b16 %v8194, %v8190
        %v8483 = vpack.c.b16 %v8195, %v8191
        %v8484 = vpack.c.b16 %v8196, %v8192
        %v8485 = vpack.c.b16 %v8197, %v8193
        %v8486 = vpack.c.b16 %v8202, %v8198
        %v8487 = vpack.c.b16 %v8203, %v8199
        %v8488 = vpack.c.b16 %v8204, %v8200
        %v8489 = vpack.c.b16 %v8205, %v8201
        %v8490 = vpack.c.b16 %v8210, %v8206
        %v8491 = vpack.c.b16 %v8211, %v8207
        %v8492 = vpack.c.b16 %v8212, %v8208
        %v8493 = vpack.c.b16 %v8213, %v8209
        %v8494 = vpack.c.b16 %v8218, %v8214
        %v8495 = vpack.c.b16 %v8219, %v8215
        %v8496 = vpack.c.b16 %v8220, %v8216
        %v8497 = vpack.c.b16 %v8221, %v8217
        %v8498 = vpack.c.b16 %v8226, %v8222
        %v8499 = vpack.c.b16 %v8227, %v8223
        %v8500 = vpack.c.b16 %v8228, %v8224
        %v8501 = vpack.c.b16 %v8229, %v8225
        %v8502 = vpack.c.b16 %v8234, %v8230
        %v8503 = vpack.c.b16 %v8235, %v8231
        %v8504 = vpack.c.b16 %v8236, %v8232
        %v8505 = vpack.c.b16 %v8237, %v8233
        %v8506 = vpack.c.b16 %v8242, %v8238
        %v8507 = vpack.c.b16 %v8243, %v8239
        %v8508 = vpack.c.b16 %v8244, %v8240
        %v8509 = vpack.c.b16 %v8245, %v8241
        %v8510 = vpack.c.b16 %v8250, %v8246
        %v8511 = vpack.c.b16 %v8251, %v8247
        %v8512 = vpack.c.b16 %v8252, %v8248
        %v8513 = vpack.c.b16 %v8253, %v8249
        %v8514 = vpack.c.b16 %v8258, %v8254
        %v8515 = vpack.c.b16 %v8259, %v8255
        %v8516 = vpack.c.b16 %v8260, %v8256
        %v8517 = vpack.c.b16 %v8261, %v8257
        %8774 = vmatprep.subr.bf16.mxu0 %v8263
        %8775 = vmatpush1.bf16.msra.mxu0 %v8262
        %8776 = vmatprep.subr.bf16.mxu0 %v8267
        %8777 = vmatpush1.bf16.msra.mxu0 %v8266
        %8778 = vmatprep.subr.bf16.mxu0 %v8271
        %8779 = vmatpush1.bf16.msra.mxu0 %v8270
        %8780 = vmatprep.subr.bf16.mxu0 %v8275
        %8781 = vmatpush1.bf16.msra.mxu0 %v8274
        %8782 = vmatprep.subr.bf16.mxu0 %v8279
        %8783 = vmatpush1.bf16.msra.mxu0 %v8278
        %8784 = vmatprep.subr.bf16.mxu0 %v8283
        %8785 = vmatpush1.bf16.msra.mxu0 %v8282
        %8786 = vmatprep.subr.bf16.mxu0 %v8287
        %8787 = vmatpush1.bf16.msra.mxu0 %v8286
        %8788 = vmatprep.subr.bf16.mxu0 %v8291
        %8789 = vmatpush1.bf16.msra.mxu0 %v8290
        %8790 = vmatprep.subr.bf16.mxu0 %v8295
        %8791 = vmatpush1.bf16.msra.mxu0 %v8294
        %8792 = vmatprep.subr.bf16.mxu0 %v8299
        %8793 = vmatpush1.bf16.msra.mxu0 %v8298
        %8794 = vmatprep.subr.bf16.mxu0 %v8303
        %8795 = vmatpush1.bf16.msra.mxu0 %v8302
        %8796 = vmatprep.subr.bf16.mxu0 %v8307
        %8797 = vmatpush1.bf16.msra.mxu0 %v8306
        %8798 = vmatprep.subr.bf16.mxu0 %v8311
        %8799 = vmatpush1.bf16.msra.mxu0 %v8310
        %8800 = vmatprep.subr.bf16.mxu0 %v8315
        %8801 = vmatpush1.bf16.msra.mxu0 %v8314
        %8802 = vmatprep.subr.bf16.mxu0 %v8319
        %8803 = vmatpush1.bf16.msra.mxu0 %v8318
        %8804 = vmatprep.subr.bf16.mxu0 %v8323
        %8805 = vmatpush1.bf16.msra.mxu0 %v8322
        %8806 = vmatprep.mubr.bf16.mxu0 %v7209
        %8807 = vmatmul.mubr.bf16.gmra.mrb[0].mxu0 %v7208
        %v8808 = vpop.f32.mrb[0].mxu0
        %v8809 = vadd.f32 %v7477, %v8808
        %v8810 = vpop.f32.mrb[0].mxu0
        %v8811 = vadd.f32 %v7481, %v8810
        %v8812 = vpop.f32.mrb[0].mxu0
        %v8813 = vpop.f32.mrb[0].mxu0
        %8814 = vdwg.mxu0
        %8815 = vmatprep.subr.bf16.mxu0 %v8327
        %8816 = vmatpush1.bf16.msra.mxu0 %v8326
        %8817 = vmatprep.subr.bf16.mxu0 %v8331
        %8818 = vmatpush1.bf16.msra.mxu0 %v8330
        %8819 = vmatprep.subr.bf16.mxu0 %v8335
        %8820 = vmatpush1.bf16.msra.mxu0 %v8334
        %8821 = vmatprep.subr.bf16.mxu0 %v8339
        %8822 = vmatpush1.bf16.msra.mxu0 %v8338
        %8823 = vmatprep.subr.bf16.mxu0 %v8343
        %8824 = vmatpush1.bf16.msra.mxu0 %v8342
        %8825 = vmatprep.subr.bf16.mxu0 %v8347
        %8826 = vmatpush1.bf16.msra.mxu0 %v8346
        %8827 = vmatprep.subr.bf16.mxu0 %v8351
        %8828 = vmatpush1.bf16.msra.mxu0 %v8350
        %8829 = vmatprep.subr.bf16.mxu0 %v8355
        %8830 = vmatpush1.bf16.msra.mxu0 %v8354
        %8831 = vmatprep.subr.bf16.mxu0 %v8359
        %8832 = vmatpush1.bf16.msra.mxu0 %v8358
        %8833 = vmatprep.subr.bf16.mxu0 %v8363
        %8834 = vmatpush1.bf16.msra.mxu0 %v8362
        %8835 = vmatprep.subr.bf16.mxu0 %v8367
        %8836 = vmatpush1.bf16.msra.mxu0 %v8366
        %8837 = vmatprep.subr.bf16.mxu0 %v8371
        %8838 = vmatpush1.bf16.msra.mxu0 %v8370
        %8839 = vmatprep.subr.bf16.mxu0 %v8375
        %8840 = vmatpush1.bf16.msra.mxu0 %v8374
        %8841 = vmatprep.subr.bf16.mxu0 %v8379
        %8842 = vmatpush1.bf16.msra.mxu0 %v8378
        %8843 = vmatprep.subr.bf16.mxu0 %v8383
        %8844 = vmatpush1.bf16.msra.mxu0 %v8382
        %8845 = vmatprep.subr.bf16.mxu0 %v8387
        %8846 = vmatpush1.bf16.msra.mxu0 %v8386
        %8847 = vmatprep.mubr.bf16.mxu0 %v7211
        %8848 = vmatmul.mubr.bf16.gmra.mrb[0].mxu0 %v7210
        %v8849 = vpop.f32.mrb[0].mxu0
        %v8850 = vadd.f32 %v8809, %v8849
        %v8851 = vpop.f32.mrb[0].mxu0
        %v8852 = vadd.f32 %v8811, %v8851
        %v8853 = vpop.f32.mrb[0].mxu0
        %v8854 = vpop.f32.mrb[0].mxu0
        %8855 = vdwg.mxu0
        %8856 = vmatprep.subr.bf16.mxu0 %v8391
        %8857 = vmatpush1.bf16.msra.mxu0 %v8390
        %8858 = vmatprep.subr.bf16.mxu0 %v8395
        %8859 = vmatpush1.bf16.msra.mxu0 %v8394
        %8860 = vmatprep.subr.bf16.mxu0 %v8399
        %8861 = vmatpush1.bf16.msra.mxu0 %v8398
        %8862 = vmatprep.subr.bf16.mxu0 %v8403
        %8863 = vmatpush1.bf16.msra.mxu0 %v8402
        %8864 = vmatprep.subr.bf16.mxu0 %v8407
        %8865 = vmatpush1.bf16.msra.mxu0 %v8406
        %8866 = vmatprep.subr.bf16.mxu0 %v8411
        %8867 = vmatpush1.bf16.msra.mxu0 %v8410
        %8868 = vmatprep.subr.bf16.mxu0 %v8415
        %8869 = vmatpush1.bf16.msra.mxu0 %v8414
        %8870 = vmatprep.subr.bf16.mxu0 %v8419
        %8871 = vmatpush1.bf16.msra.mxu0 %v8418
        %8872 = vmatprep.subr.bf16.mxu0 %v8423
        %8873 = vmatpush1.bf16.msra.mxu0 %v8422
        %8874 = vmatprep.subr.bf16.mxu0 %v8427
        %8875 = vmatpush1.bf16.msra.mxu0 %v8426
        %8876 = vmatprep.subr.bf16.mxu0 %v8431
        %8877 = vmatpush1.bf16.msra.mxu0 %v8430
        %8878 = vmatprep.subr.bf16.mxu0 %v8435
        %8879 = vmatpush1.bf16.msra.mxu0 %v8434
        %8880 = vmatprep.subr.bf16.mxu0 %v8439
        %8881 = vmatpush1.bf16.msra.mxu0 %v8438
        %8882 = vmatprep.subr.bf16.mxu0 %v8443
        %8883 = vmatpush1.bf16.msra.mxu0 %v8442
        %8884 = vmatprep.subr.bf16.mxu0 %v8447
        %8885 = vmatpush1.bf16.msra.mxu0 %v8446
        %8886 = vmatprep.subr.bf16.mxu0 %v8451
        %8887 = vmatpush1.bf16.msra.mxu0 %v8450
        %8888 = vmatprep.mubr.bf16.mxu0 %v7213
        %8889 = vmatmul.mubr.bf16.gmra.mrb[0].mxu0 %v7212
        %v8890 = vpop.f32.mrb[0].mxu0
        %v8891 = vadd.f32 %v8850, %v8890
        %v8892 = vpop.f32.mrb[0].mxu0
        %v8893 = vadd.f32 %v8852, %v8892
        %v8894 = vpop.f32.mrb[0].mxu0
        %v8895 = vpop.f32.mrb[0].mxu0
        %8896 = vdwg.mxu0
        %8897 = vmatprep.subr.bf16.mxu0 %v8455
        %8898 = vmatpush1.bf16.msra.mxu0 %v8454
        %8899 = vmatprep.subr.bf16.mxu0 %v8459
        %8900 = vmatpush1.bf16.msra.mxu0 %v8458
        %8901 = vmatprep.subr.bf16.mxu0 %v8463
        %8902 = vmatpush1.bf16.msra.mxu0 %v8462
        %8903 = vmatprep.subr.bf16.mxu0 %v8467
        %8904 = vmatpush1.bf16.msra.mxu0 %v8466
        %8905 = vmatprep.subr.bf16.mxu0 %v8471
        %8906 = vmatpush1.bf16.msra.mxu0 %v8470
        %8907 = vmatprep.subr.bf16.mxu0 %v8475
        %8908 = vmatpush1.bf16.msra.mxu0 %v8474
        %8909 = vmatprep.subr.bf16.mxu0 %v8479
        %8910 = vmatpush1.bf16.msra.mxu0 %v8478
        %8911 = vmatprep.subr.bf16.mxu0 %v8483
        %8912 = vmatpush1.bf16.msra.mxu0 %v8482
        %8913 = vmatprep.subr.bf16.mxu0 %v8487
        %8914 = vmatpush1.bf16.msra.mxu0 %v8486
        %8915 = vmatprep.subr.bf16.mxu0 %v8491
        %8916 = vmatpush1.bf16.msra.mxu0 %v8490
        %8917 = vmatprep.subr.bf16.mxu0 %v8495
        %8918 = vmatpush1.bf16.msra.mxu0 %v8494
        %8919 = vmatprep.subr.bf16.mxu0 %v8499
        %8920 = vmatpush1.bf16.msra.mxu0 %v8498
        %8921 = vmatprep.subr.bf16.mxu0 %v8503
        %8922 = vmatpush1.bf16.msra.mxu0 %v8502
        %8923 = vmatprep.subr.bf16.mxu0 %v8507
        %8924 = vmatpush1.bf16.msra.mxu0 %v8506
        %8925 = vmatprep.subr.bf16.mxu0 %v8511
        %8926 = vmatpush1.bf16.msra.mxu0 %v8510
        %8927 = vmatprep.subr.bf16.mxu0 %v8515
        %8928 = vmatpush1.bf16.msra.mxu0 %v8514
        %8929 = vmatprep.mubr.bf16.mxu0 %v7215
        %8930 = vmatmul.mubr.bf16.gmra.mrb[0].mxu0 %v7214
        %v8931 = vpop.f32.mrb[0].mxu0
        %v8932 = vadd.f32 %v8891, %v8931
        %v8933 = vpop.f32.mrb[0].mxu0
        %v8934 = vadd.f32 %v8893, %v8933
        %v8935 = vpop.f32.mrb[0].mxu0
        %v8936 = vpop.f32.mrb[0].mxu0
        %8937 = vdwg.mxu0
        %8938 = vmatprep.subr.bf16.mxu0 %v8265
        %8939 = vmatpush1.bf16.msra.mxu0 %v8264
        %8940 = vmatprep.subr.bf16.mxu0 %v8269
        %8941 = vmatpush1.bf16.msra.mxu0 %v8268
        %8942 = vmatprep.subr.bf16.mxu0 %v8273
        %8943 = vmatpush1.bf16.msra.mxu0 %v8272
        %8944 = vmatprep.subr.bf16.mxu0 %v8277
        %8945 = vmatpush1.bf16.msra.mxu0 %v8276
        %8946 = vmatprep.subr.bf16.mxu0 %v8281
        %8947 = vmatpush1.bf16.msra.mxu0 %v8280
        %8948 = vmatprep.subr.bf16.mxu0 %v8285
        %8949 = vmatpush1.bf16.msra.mxu0 %v8284
        %8950 = vmatprep.subr.bf16.mxu0 %v8289
        %8951 = vmatpush1.bf16.msra.mxu0 %v8288
        %8952 = vmatprep.subr.bf16.mxu0 %v8293
        %8953 = vmatpush1.bf16.msra.mxu0 %v8292
        %8954 = vmatprep.subr.bf16.mxu0 %v8297
        %8955 = vmatpush1.bf16.msra.mxu0 %v8296
        %8956 = vmatprep.subr.bf16.mxu0 %v8301
        %8957 = vmatpush1.bf16.msra.mxu0 %v8300
        %8958 = vmatprep.subr.bf16.mxu0 %v8305
        %8959 = vmatpush1.bf16.msra.mxu0 %v8304
        %8960 = vmatprep.subr.bf16.mxu0 %v8309
        %8961 = vmatpush1.bf16.msra.mxu0 %v8308
        %8962 = vmatprep.subr.bf16.mxu0 %v8313
        %8963 = vmatpush1.bf16.msra.mxu0 %v8312
        %8964 = vmatprep.subr.bf16.mxu0 %v8317
        %8965 = vmatpush1.bf16.msra.mxu0 %v8316
        %8966 = vmatprep.subr.bf16.mxu0 %v8321
        %8967 = vmatpush1.bf16.msra.mxu0 %v8320
        %8968 = vmatprep.subr.bf16.mxu0 %v8325
        %8969 = vmatpush1.bf16.msra.mxu0 %v8324
        %8970 = vmatprep.mubr.bf16.mxu0 %v7209
        %8971 = vmatmul.mubr.bf16.gmra.mrb[0].mxu0 %v7208
        %v8972 = vpop.f32.mrb[0].mxu0
        %v8973 = vadd.f32 %v7485, %v8972
        %v8974 = vpop.f32.mrb[0].mxu0
        %v8975 = vadd.f32 %v7489, %v8974
        %v8976 = vpop.f32.mrb[0].mxu0
        %v8977 = vpop.f32.mrb[0].mxu0
        %8978 = vdwg.mxu0
        %8979 = vmatprep.subr.bf16.mxu0 %v8329
        %8980 = vmatpush1.bf16.msra.mxu0 %v8328
        %8981 = vmatprep.subr.bf16.mxu0 %v8333
        %8982 = vmatpush1.bf16.msra.mxu0 %v8332
        %8983 = vmatprep.subr.bf16.mxu0 %v8337
        %8984 = vmatpush1.bf16.msra.mxu0 %v8336
        %8985 = vmatprep.subr.bf16.mxu0 %v8341
        %8986 = vmatpush1.bf16.msra.mxu0 %v8340
        %8987 = vmatprep.subr.bf16.mxu0 %v8345
        %8988 = vmatpush1.bf16.msra.mxu0 %v8344
        %8989 = vmatprep.subr.bf16.mxu0 %v8349
        %8990 = vmatpush1.bf16.msra.mxu0 %v8348
        %8991 = vmatprep.subr.bf16.mxu0 %v8353
        %8992 = vmatpush1.bf16.msra.mxu0 %v8352
        %8993 = vmatprep.subr.bf16.mxu0 %v8357
        %8994 = vmatpush1.bf16.msra.mxu0 %v8356
        %8995 = vmatprep.subr.bf16.mxu0 %v8361
        %8996 = vmatpush1.bf16.msra.mxu0 %v8360
        %8997 = vmatprep.subr.bf16.mxu0 %v8365
        %8998 = vmatpush1.bf16.msra.mxu0 %v8364
        %8999 = vmatprep.subr.bf16.mxu0 %v8369
        %9000 = vmatpush1.bf16.msra.mxu0 %v8368
        %9001 = vmatprep.subr.bf16.mxu0 %v8373
        %9002 = vmatpush1.bf16.msra.mxu0 %v8372
        %9003 = vmatprep.subr.bf16.mxu0 %v8377
        %9004 = vmatpush1.bf16.msra.mxu0 %v8376
        %9005 = vmatprep.subr.bf16.mxu0 %v8381
        %9006 = vmatpush1.bf16.msra.mxu0 %v8380
        %9007 = vmatprep.subr.bf16.mxu0 %v8385
        %9008 = vmatpush1.bf16.msra.mxu0 %v8384
        %9009 = vmatprep.subr.bf16.mxu0 %v8389
        %9010 = vmatpush1.bf16.msra.mxu0 %v8388
        %9011 = vmatprep.mubr.bf16.mxu0 %v7211
        %9012 = vmatmul.mubr.bf16.gmra.mrb[0].mxu0 %v7210
        %v9013 = vpop.f32.mrb[0].mxu0
        %v9014 = vadd.f32 %v8973, %v9013
        %v9015 = vpop.f32.mrb[0].mxu0
        %v9016 = vadd.f32 %v8975, %v9015
        %v9017 = vpop.f32.mrb[0].mxu0
        %v9018 = vpop.f32.mrb[0].mxu0
        %9019 = vdwg.mxu0
        %9020 = vmatprep.subr.bf16.mxu0 %v8393
        %9021 = vmatpush1.bf16.msra.mxu0 %v8392
        %9022 = vmatprep.subr.bf16.mxu0 %v8397
        %9023 = vmatpush1.bf16.msra.mxu0 %v8396
        %9024 = vmatprep.subr.bf16.mxu0 %v8401
        %9025 = vmatpush1.bf16.msra.mxu0 %v8400
        %9026 = vmatprep.subr.bf16.mxu0 %v8405
        %9027 = vmatpush1.bf16.msra.mxu0 %v8404
        %9028 = vmatprep.subr.bf16.mxu0 %v8409
        %9029 = vmatpush1.bf16.msra.mxu0 %v8408
        %9030 = vmatprep.subr.bf16.mxu0 %v8413
        %9031 = vmatpush1.bf16.msra.mxu0 %v8412
        %9032 = vmatprep.subr.bf16.mxu0 %v8417
        %9033 = vmatpush1.bf16.msra.mxu0 %v8416
        %9034 = vmatprep.subr.bf16.mxu0 %v8421
        %9035 = vmatpush1.bf16.msra.mxu0 %v8420
        %9036 = vmatprep.subr.bf16.mxu0 %v8425
        %9037 = vmatpush1.bf16.msra.mxu0 %v8424
        %9038 = vmatprep.subr.bf16.mxu0 %v8429
        %9039 = vmatpush1.bf16.msra.mxu0 %v8428
        %9040 = vmatprep.subr.bf16.mxu0 %v8433
        %9041 = vmatpush1.bf16.msra.mxu0 %v8432
        %9042 = vmatprep.subr.bf16.mxu0 %v8437
        %9043 = vmatpush1.bf16.msra.mxu0 %v8436
        %9044 = vmatprep.subr.bf16.mxu0 %v8441
        %9045 = vmatpush1.bf16.msra.mxu0 %v8440
        %9046 = vmatprep.subr.bf16.mxu0 %v8445
        %9047 = vmatpush1.bf16.msra.mxu0 %v8444
        %9048 = vmatprep.subr.bf16.mxu0 %v8449
        %9049 = vmatpush1.bf16.msra.mxu0 %v8448
        %9050 = vmatprep.subr.bf16.mxu0 %v8453
        %9051 = vmatpush1.bf16.msra.mxu0 %v8452
        %9052 = vmatprep.mubr.bf16.mxu0 %v7213
        %9053 = vmatmul.mubr.bf16.gmra.mrb[0].mxu0 %v7212
        %v9054 = vpop.f32.mrb[0].mxu0
        %v9055 = vadd.f32 %v9014, %v9054
        %v9056 = vpop.f32.mrb[0].mxu0
        %v9057 = vadd.f32 %v9016, %v9056
        %v9058 = vpop.f32.mrb[0].mxu0
        %v9059 = vpop.f32.mrb[0].mxu0
        %9060 = vdwg.mxu0
        %9061 = vmatprep.subr.bf16.mxu0 %v8457
        %9062 = vmatpush1.bf16.msra.mxu0 %v8456
        %9063 = vmatprep.subr.bf16.mxu0 %v8461
        %9064 = vmatpush1.bf16.msra.mxu0 %v8460
        %9065 = vmatprep.subr.bf16.mxu0 %v8465
        %9066 = vmatpush1.bf16.msra.mxu0 %v8464
        %9067 = vmatprep.subr.bf16.mxu0 %v8469
        %9068 = vmatpush1.bf16.msra.mxu0 %v8468
        %9069 = vmatprep.subr.bf16.mxu0 %v8473
        %9070 = vmatpush1.bf16.msra.mxu0 %v8472
        %9071 = vmatprep.subr.bf16.mxu0 %v8477
        %9072 = vmatpush1.bf16.msra.mxu0 %v8476
        %9073 = vmatprep.subr.bf16.mxu0 %v8481
        %9074 = vmatpush1.bf16.msra.mxu0 %v8480
        %9075 = vmatprep.subr.bf16.mxu0 %v8485
        %9076 = vmatpush1.bf16.msra.mxu0 %v8484
        %9077 = vmatprep.subr.bf16.mxu0 %v8489
        %9078 = vmatpush1.bf16.msra.mxu0 %v8488
        %9079 = vmatprep.subr.bf16.mxu0 %v8493
        %9080 = vmatpush1.bf16.msra.mxu0 %v8492
        %9081 = vmatprep.subr.bf16.mxu0 %v8497
        %9082 = vmatpush1.bf16.msra.mxu0 %v8496
        %9083 = vmatprep.subr.bf16.mxu0 %v8501
        %9084 = vmatpush1.bf16.msra.mxu0 %v8500
        %9085 = vmatprep.subr.bf16.mxu0 %v8505
        %9086 = vmatpush1.bf16.msra.mxu0 %v8504
        %9087 = vmatprep.subr.bf16.mxu0 %v8509
        %9088 = vmatpush1.bf16.msra.mxu0 %v8508
        %9089 = vmatprep.subr.bf16.mxu0 %v8513
        %9090 = vmatpush1.bf16.msra.mxu0 %v8512
        %9091 = vmatprep.subr.bf16.mxu0 %v8517
        %9092 = vmatpush1.bf16.msra.mxu0 %v8516
        %9093 = vmatprep.mubr.bf16.mxu0 %v7215
        %9094 = vmatmul.mubr.bf16.gmra.mrb[0].mxu0 %v7214
        %v9095 = vpop.f32.mrb[0].mxu0
        %v9096 = vadd.f32 %v9055, %v9095
        %v9097 = vpop.f32.mrb[0].mxu0
        %v9098 = vadd.f32 %v9057, %v9097
        %v9099 = vpop.f32.mrb[0].mxu0
        %v9100 = vpop.f32.mrb[0].mxu0
        %9101 = vdwg.mxu0
        %v9102 = vtanh.pop %v8932
        %v9103 = vtanh.pop %v8934
        %v9104 = vtanh.pop %v9096
        %v9105 = vtanh.pop %v9098
        %v9106 = vpack.c.bf16 %v9102, %v9102
        %v9107 = vpack.c.bf16 %v9103, %v9103
        %v9108 = vpack.c.bf16 %v9104, %v9104
        %v9109 = vpack.c.bf16 %v9105, %v9105
        %v9110 = vld [vmem:[#allocation12] sm:$0xf]
        %v9111 = vld [vmem:[#allocation12 + $0x4] sm:$0xf]
        %v9112 = vld [vmem:[#allocation12 + $0x8] sm:$0xf]
        %v9113 = vld [vmem:[#allocation12 + $0xc] sm:$0xf]
        %v9114 = vld [vmem:[#allocation12 + $0x10] sm:$0xf]
        %v9115 = vld [vmem:[#allocation12 + $0x14] sm:$0xf]
        %v9116 = vld [vmem:[#allocation12 + $0x18] sm:$0xf]
        %v9117 = vld [vmem:[#allocation12 + $0x1c] sm:$0xf]
        %v9118 = vld [vmem:[#allocation12 + $0x20] sm:$0xf]
        %v9119 = vld [vmem:[#allocation12 + $0x24] sm:$0xf]
        %v9120 = vld [vmem:[#allocation12 + $0x28] sm:$0xf]
        %v9121 = vld [vmem:[#allocation12 + $0x2c] sm:$0xf]
        %v9122 = vld [vmem:[#allocation12 + $0x30] sm:$0xf]
        %v9123 = vld [vmem:[#allocation12 + $0x34] sm:$0xf]
        %v9124 = vld [vmem:[#allocation12 + $0x38] sm:$0xf]
        %v9125 = vld [vmem:[#allocation12 + $0x3c] sm:$0xf]
        %v9126 = vld [vmem:[#allocation12 + $0x40] sm:$0xf]
        %v9127 = vld [vmem:[#allocation12 + $0x44] sm:$0xf]
        %v9128 = vld [vmem:[#allocation12 + $0x48] sm:$0xf]
        %v9129 = vld [vmem:[#allocation12 + $0x4c] sm:$0xf]
        %v9130 = vld [vmem:[#allocation12 + $0x50] sm:$0xf]
        %v9131 = vld [vmem:[#allocation12 + $0x54] sm:$0xf]
        %v9132 = vld [vmem:[#allocation12 + $0x58] sm:$0xf]
        %v9133 = vld [vmem:[#allocation12 + $0x5c] sm:$0xf]
        %v9134 = vld [vmem:[#allocation12 + $0x60] sm:$0xf]
        %v9135 = vld [vmem:[#allocation12 + $0x64] sm:$0xf]
        %v9136 = vld [vmem:[#allocation12 + $0x68] sm:$0xf]
        %v9137 = vld [vmem:[#allocation12 + $0x6c] sm:$0xf]
        %v9138 = vld [vmem:[#allocation12 + $0x70] sm:$0xf]
        %v9139 = vld [vmem:[#allocation12 + $0x74] sm:$0xf]
        %v9140 = vld [vmem:[#allocation12 + $0x78] sm:$0xf]
        %v9141 = vld [vmem:[#allocation12 + $0x7c] sm:$0xf]
        %v9142 = vld [vmem:[#allocation12 + $0x80] sm:$0xf]
        %v9143 = vld [vmem:[#allocation12 + $0x84] sm:$0xf]
        %v9144 = vld [vmem:[#allocation12 + $0x88] sm:$0xf]
        %v9145 = vld [vmem:[#allocation12 + $0x8c] sm:$0xf]
        %v9146 = vld [vmem:[#allocation12 + $0x90] sm:$0xf]
        %v9147 = vld [vmem:[#allocation12 + $0x94] sm:$0xf]
        %v9148 = vld [vmem:[#allocation12 + $0x98] sm:$0xf]
        %v9149 = vld [vmem:[#allocation12 + $0x9c] sm:$0xf]
        %v9150 = vld [vmem:[#allocation12 + $0xa0] sm:$0xf]
        %v9151 = vld [vmem:[#allocation12 + $0xa4] sm:$0xf]
        %v9152 = vld [vmem:[#allocation12 + $0xa8] sm:$0xf]
        %v9153 = vld [vmem:[#allocation12 + $0xac] sm:$0xf]
        %v9154 = vld [vmem:[#allocation12 + $0xb0] sm:$0xf]
        %v9155 = vld [vmem:[#allocation12 + $0xb4] sm:$0xf]
        %v9156 = vld [vmem:[#allocation12 + $0xb8] sm:$0xf]
        %v9157 = vld [vmem:[#allocation12 + $0xbc] sm:$0xf]
        %v9158 = vld [vmem:[#allocation12 + $0xc0] sm:$0xf]
        %v9159 = vld [vmem:[#allocation12 + $0xc4] sm:$0xf]
        %v9160 = vld [vmem:[#allocation12 + $0xc8] sm:$0xf]
        %v9161 = vld [vmem:[#allocation12 + $0xcc] sm:$0xf]
        %v9162 = vld [vmem:[#allocation12 + $0xd0] sm:$0xf]
        %v9163 = vld [vmem:[#allocation12 + $0xd4] sm:$0xf]
        %v9164 = vld [vmem:[#allocation12 + $0xd8] sm:$0xf]
        %v9165 = vld [vmem:[#allocation12 + $0xdc] sm:$0xf]
        %v9166 = vld [vmem:[#allocation12 + $0xe0] sm:$0xf]
        %v9167 = vld [vmem:[#allocation12 + $0xe4] sm:$0xf]
        %v9168 = vld [vmem:[#allocation12 + $0xe8] sm:$0xf]
        %v9169 = vld [vmem:[#allocation12 + $0xec] sm:$0xf]
        %v9170 = vld [vmem:[#allocation12 + $0xf0] sm:$0xf]
        %v9171 = vld [vmem:[#allocation12 + $0xf4] sm:$0xf]
        %v9172 = vld [vmem:[#allocation12 + $0xf8] sm:$0xf]
        %v9173 = vld [vmem:[#allocation12 + $0xfc] sm:$0xf]
        %v9174 = vld [vmem:[#allocation13] sm:$0x1]
        %v9176 = vlaneseq
        %v9177 = vshrl.u32 %v9176, 7
        %v9178 = vsub.s32 0, %v9177
        %v9179 = vrot.slane %v9174, %v9178
        %v9245 = vunpack.c.l.b16 %v9110
        %v9246 = vunpack.c.l.b16 %v9111
        %v9247 = vunpack.c.l.b16 %v9112
        %v9248 = vunpack.c.l.b16 %v9113
        %v9249 = vunpack.c.l.b16 %v9114
        %v9250 = vunpack.c.l.b16 %v9115
        %v9251 = vunpack.c.l.b16 %v9116
        %v9252 = vunpack.c.l.b16 %v9117
        %v9253 = vunpack.c.l.b16 %v9118
        %v9254 = vunpack.c.l.b16 %v9119
        %v9255 = vunpack.c.l.b16 %v9120
        %v9256 = vunpack.c.l.b16 %v9121
        %v9257 = vunpack.c.l.b16 %v9122
        %v9258 = vunpack.c.l.b16 %v9123
        %v9259 = vunpack.c.l.b16 %v9124
        %v9260 = vunpack.c.l.b16 %v9125
        %v9261 = vunpack.c.l.b16 %v9126
        %v9262 = vunpack.c.l.b16 %v9127
        %v9263 = vunpack.c.l.b16 %v9128
        %v9264 = vunpack.c.l.b16 %v9129
        %v9265 = vunpack.c.l.b16 %v9130
        %v9266 = vunpack.c.l.b16 %v9131
        %v9267 = vunpack.c.l.b16 %v9132
        %v9268 = vunpack.c.l.b16 %v9133
        %v9269 = vunpack.c.l.b16 %v9134
        %v9270 = vunpack.c.l.b16 %v9135
        %v9271 = vunpack.c.l.b16 %v9136
        %v9272 = vunpack.c.l.b16 %v9137
        %v9273 = vunpack.c.l.b16 %v9138
        %v9274 = vunpack.c.l.b16 %v9139
        %v9275 = vunpack.c.l.b16 %v9140
        %v9276 = vunpack.c.l.b16 %v9141
        %v9277 = vunpack.c.l.b16 %v9142
        %v9278 = vunpack.c.l.b16 %v9143
        %v9279 = vunpack.c.l.b16 %v9144
        %v9280 = vunpack.c.l.b16 %v9145
        %v9281 = vunpack.c.l.b16 %v9146
        %v9282 = vunpack.c.l.b16 %v9147
        %v9283 = vunpack.c.l.b16 %v9148
        %v9284 = vunpack.c.l.b16 %v9149
        %v9285 = vunpack.c.l.b16 %v9150
        %v9286 = vunpack.c.l.b16 %v9151
        %v9287 = vunpack.c.l.b16 %v9152
        %v9288 = vunpack.c.l.b16 %v9153
        %v9289 = vunpack.c.l.b16 %v9154
        %v9290 = vunpack.c.l.b16 %v9155
        %v9291 = vunpack.c.l.b16 %v9156
        %v9292 = vunpack.c.l.b16 %v9157
        %v9293 = vunpack.c.l.b16 %v9158
        %v9294 = vunpack.c.l.b16 %v9159
        %v9295 = vunpack.c.l.b16 %v9160
        %v9296 = vunpack.c.l.b16 %v9161
        %v9297 = vunpack.c.l.b16 %v9162
        %v9298 = vunpack.c.l.b16 %v9163
        %v9299 = vunpack.c.l.b16 %v9164
        %v9300 = vunpack.c.l.b16 %v9165
        %v9301 = vunpack.c.l.b16 %v9166
        %v9302 = vunpack.c.l.b16 %v9167
        %v9303 = vunpack.c.l.b16 %v9168
        %v9304 = vunpack.c.l.b16 %v9169
        %v9305 = vunpack.c.l.b16 %v9170
        %v9306 = vunpack.c.l.b16 %v9171
        %v9307 = vunpack.c.l.b16 %v9172
        %v9308 = vunpack.c.l.b16 %v9173
        %v9309 = vpack.c.b16 %v9246, %v9245
        %v9310 = vpack.c.b16 %v9248, %v9247
        %v9311 = vpack.c.b16 %v9250, %v9249
        %v9312 = vpack.c.b16 %v9252, %v9251
        %v9313 = vpack.c.b16 %v9254, %v9253
        %v9314 = vpack.c.b16 %v9256, %v9255
        %v9315 = vpack.c.b16 %v9258, %v9257
        %v9316 = vpack.c.b16 %v9260, %v9259
        %v9317 = vpack.c.b16 %v9262, %v9261
        %v9318 = vpack.c.b16 %v9264, %v9263
        %v9319 = vpack.c.b16 %v9266, %v9265
        %v9320 = vpack.c.b16 %v9268, %v9267
        %v9321 = vpack.c.b16 %v9270, %v9269
        %v9322 = vpack.c.b16 %v9272, %v9271
        %v9323 = vpack.c.b16 %v9274, %v9273
        %v9324 = vpack.c.b16 %v9276, %v9275
        %v9325 = vpack.c.b16 %v9278, %v9277
        %v9326 = vpack.c.b16 %v9280, %v9279
        %v9327 = vpack.c.b16 %v9282, %v9281
        %v9328 = vpack.c.b16 %v9284, %v9283
        %v9329 = vpack.c.b16 %v9286, %v9285
        %v9330 = vpack.c.b16 %v9288, %v9287
        %v9331 = vpack.c.b16 %v9290, %v9289
        %v9332 = vpack.c.b16 %v9292, %v9291
        %v9333 = vpack.c.b16 %v9294, %v9293
        %v9334 = vpack.c.b16 %v9296, %v9295
        %v9335 = vpack.c.b16 %v9298, %v9297
        %v9336 = vpack.c.b16 %v9300, %v9299
        %v9337 = vpack.c.b16 %v9302, %v9301
        %v9338 = vpack.c.b16 %v9304, %v9303
        %v9339 = vpack.c.b16 %v9306, %v9305
        %v9340 = vpack.c.b16 %v9308, %v9307
        %9373 = vmatprep.subr.bf16.mxu0 0
        %9374 = vmatpush1.bf16.msra.mxu0 %v9309
        %9375 = vmatprep.subr.bf16.mxu0 0
        %9376 = vmatpush1.bf16.msra.mxu0 %v9310
        %9377 = vmatprep.subr.bf16.mxu0 0
        %9378 = vmatpush1.bf16.msra.mxu0 %v9311
        %9379 = vmatprep.subr.bf16.mxu0 0
        %9380 = vmatpush1.bf16.msra.mxu0 %v9312
        %9381 = vmatprep.subr.bf16.mxu0 0
        %9382 = vmatpush1.bf16.msra.mxu0 %v9313
        %9383 = vmatprep.subr.bf16.mxu0 0
        %9384 = vmatpush1.bf16.msra.mxu0 %v9314
        %9385 = vmatprep.subr.bf16.mxu0 0
        %9386 = vmatpush1.bf16.msra.mxu0 %v9315
        %9387 = vmatprep.subr.bf16.mxu0 0
        %9388 = vmatpush1.bf16.msra.mxu0 %v9316
        %9389 = vmatprep.subr.bf16.mxu0 0
        %9390 = vmatpush1.bf16.msra.mxu0 %v9317
        %9391 = vmatprep.subr.bf16.mxu0 0
        %9392 = vmatpush1.bf16.msra.mxu0 %v9318
        %9393 = vmatprep.subr.bf16.mxu0 0
        %9394 = vmatpush1.bf16.msra.mxu0 %v9319
        %9395 = vmatprep.subr.bf16.mxu0 0
        %9396 = vmatpush1.bf16.msra.mxu0 %v9320
        %9397 = vmatprep.subr.bf16.mxu0 0
        %9398 = vmatpush1.bf16.msra.mxu0 %v9321
        %9399 = vmatprep.subr.bf16.mxu0 0
        %9400 = vmatpush1.bf16.msra.mxu0 %v9322
        %9401 = vmatprep.subr.bf16.mxu0 0
        %9402 = vmatpush1.bf16.msra.mxu0 %v9323
        %9403 = vmatprep.subr.bf16.mxu0 0
        %9404 = vmatpush1.bf16.msra.mxu0 %v9324
        %9405 = vmatprep.mubr.bf16.mxu0 %v9107
        %9406 = vmatmul.mubr.bf16.gmra.mrb[0].mxu0 %v9106
        %v9407 = vpop.f32.mrb[0].mxu0
        %v9408 = vadd.f32 %v9179, %v9407
        %v9409 = vpop.f32.mrb[0].mxu0
        %v9410 = vpop.f32.mrb[0].mxu0
        %v9411 = vpop.f32.mrb[0].mxu0
        %9412 = vdwg.mxu0
        %9413 = vmatprep.subr.bf16.mxu0 0
        %9414 = vmatpush1.bf16.msra.mxu0 %v9325
        %9415 = vmatprep.subr.bf16.mxu0 0
        %9416 = vmatpush1.bf16.msra.mxu0 %v9326
        %9417 = vmatprep.subr.bf16.mxu0 0
        %9418 = vmatpush1.bf16.msra.mxu0 %v9327
        %9419 = vmatprep.subr.bf16.mxu0 0
        %9420 = vmatpush1.bf16.msra.mxu0 %v9328
        %9421 = vmatprep.subr.bf16.mxu0 0
        %9422 = vmatpush1.bf16.msra.mxu0 %v9329
        %9423 = vmatprep.subr.bf16.mxu0 0
        %9424 = vmatpush1.bf16.msra.mxu0 %v9330
        %9425 = vmatprep.subr.bf16.mxu0 0
        %9426 = vmatpush1.bf16.msra.mxu0 %v9331
        %9427 = vmatprep.subr.bf16.mxu0 0
        %9428 = vmatpush1.bf16.msra.mxu0 %v9332
        %9429 = vmatprep.subr.bf16.mxu0 0
        %9430 = vmatpush1.bf16.msra.mxu0 %v9333
        %9431 = vmatprep.subr.bf16.mxu0 0
        %9432 = vmatpush1.bf16.msra.mxu0 %v9334
        %9433 = vmatprep.subr.bf16.mxu0 0
        %9434 = vmatpush1.bf16.msra.mxu0 %v9335
        %9435 = vmatprep.subr.bf16.mxu0 0
        %9436 = vmatpush1.bf16.msra.mxu0 %v9336
        %9437 = vmatprep.subr.bf16.mxu0 0
        %9438 = vmatpush1.bf16.msra.mxu0 %v9337
        %9439 = vmatprep.subr.bf16.mxu0 0
        %9440 = vmatpush1.bf16.msra.mxu0 %v9338
        %9441 = vmatprep.subr.bf16.mxu0 0
        %9442 = vmatpush1.bf16.msra.mxu0 %v9339
        %9443 = vmatprep.subr.bf16.mxu0 0
        %9444 = vmatpush1.bf16.msra.mxu0 %v9340
        %9445 = vmatprep.mubr.bf16.mxu0 %v9109
        %9446 = vmatmul.mubr.bf16.gmra.mrb[0].mxu0 %v9108
        %v9447 = vpop.f32.mrb[0].mxu0
        %v9448 = vadd.f32 %v9408, %v9447
        %v9449 = vpop.f32.mrb[0].mxu0
        %v9450 = vpop.f32.mrb[0].mxu0
        %v9451 = vpop.f32.mrb[0].mxu0
        %9452 = vdwg.mxu0
        %9453 = vmax.xlane.f32.xlu0 %v9448
        %v9454 = vpop.xlane.xlu0 %9453
        %v9455 = vsub.f32 %v9448, %v9454
        %v9456 = vmul.f32 %v9455, 1.442695
        %v9457 = vpow.pop %v9456
        %9458 = vadd.xlane.f32.xlu0 %v9457
        %v9459 = vpop.xlane.xlu0 %9458
        %v9460 = vrcp.pop %v9459
        %v9461 = vmul.f32 %v9457, %v9460
        %9462 = vst [vmem:[%s494] sm:$0xff] %v9461
        %p9463 = scmp.lt.s32.totalorder %s28, 1
        %s9464 = scalar_select %p9463, %s28, 1
        %s9465 = smul.addr %s9464, 8
        %s9466 = scalar_lea.vmem %s10, %s9465
        // Predicated region
        $region93: #{model4_1_forward.1} parent=59 // pred_check
          %p9467 = pneg %p266
        $region94: #{model4_1_forward.1} parent=59 // pred_check_branch
          %9469 = sbr.rel (%p9467) target = $region96
        $region95: #{model4_1_forward.1} parent=59 // pred_region
          _
        $region96: #{model4_1_forward.1} parent=59 // pred_fallthru
          _
      $region60: #{model4_1_forward.1} parent=5 // pred_fallthru
        _
      %p9470 = scmp.le.s32.totalorder 2, %s23
      // Predicated region
      $region97: #{model4_1_forward.1} parent=5 // pred_check
        %p9471 = pneg %p9470
      $region98: #{model4_1_forward.1} parent=5 // pred_check_branch
        %9473 = sbr.rel (%p9471) target = $region100
      $region99: #{model4_1_forward.1} parent=5 // pred_region
        %s9474 = ssub.s32 %s23, 2
        // Predicated region
        $region101: #{model4_1_forward.1} parent=99 // pred_check
          %p9475 = pneg %p272
        $region102: #{model4_1_forward.1} parent=99 // pred_check_branch
          %9477 = sbr.rel (%p9475) target = $region104
        $region103: #{model4_1_forward.1} parent=99 // pred_region
          %p9478 = scmp.lt.s32.totalorder %s29, 1
          %s9479 = scalar_select %p9478, %s29, 1
          %s9480 = smul.addr %s9479, 8
          %s9481 = scalar_lea.vmem %s10, %s9480
        $region104: #{model4_1_forward.1} parent=99 // pred_fallthru
          _
      $region100: #{model4_1_forward.1} parent=5 // pred_fallthru
        _
    $region6: #{model4_1_forward.1} parent=1 // loop_footer
      %s27 = sadd.s32 1, %s23
    $region7: #{model4_1_forward.1} parent=1 // loop_footer_branch
      %22 = sbr.rel target = $region3
    $region8: #{model4_1_forward.1} parent=1 // loop_exit
      _
    %9482 = vsyncpa [#allocation3], 1
    %s9483 = scalar_lea.sflag [#allocation3], 1
    %9484 = vsyncpa %s9483, 1
    %9485 = vsyncpa [#allocation5], 1
    %9486 = vsyncpa [#allocation8], 1
    %9487 = vsyncpa [#allocation11], 1
    %9488 = vsyncpa [#allocation14], 1

</llo_original>
